<compile_context>
chip_gen: v7x
topology: tpu7x:2x2x1
jax: 0.10.0
libtpu: 0.0.40
codegen_flags: <defaults>
</compile_context>

<pallas_src>
import functools

import jax
import jax.numpy as jnp
from jax.experimental import pallas as pl
from jax.experimental.pallas import tpu as pltpu


FC_DIM = 256           # self.fc_dim
TEMP_SIZE = 8          # self.temp_size
FEAT_CH = 832          # I3D mixed_4f output channels
GLOBAL_CH = 1024       # I3D mixed_5c output channels
HIDDEN = 512           # fc / bn / cls hidden width
CLS_PAD = 128          # pad num_class up to one full lane tile
BN_EPS = 1e-5
LEAKY_SLOPE = 0.01     # PyTorch LeakyReLU default negative_slope


# ----------------------------------------------------------------------------
# Pallas kernels
# ----------------------------------------------------------------------------
def _trunk_kernel(x_ref, catw_ref, catb_ref, gw_ref, gb_ref, l1w_ref, l1b_ref,
                  o_ref):
    # x: (M, 1664) spatially-pooled concat features.  Three chained pointwise
    # (1x1x1) convs: cat (1664->832) -> Global stand-in (832->1024) -> layer1
    # (1024->256).  Everything stays in VMEM; f32 MXU accumulation.
    h = jnp.dot(x_ref[...], catw_ref[...],
                preferred_element_type=jnp.float32) + catb_ref[...]
    h = jnp.dot(h, gw_ref[...],
                preferred_element_type=jnp.float32) + gb_ref[...]
    h = jnp.dot(h, l1w_ref[...],
                preferred_element_type=jnp.float32) + l1b_ref[...]
    o_ref[...] = h.astype(o_ref.dtype)


def trunk_forward(pooled, cat_w, cat_b, global_w, global_b, l1_w, l1_b):
    M, K = pooled.shape
    return pl.pallas_call(
        _trunk_kernel,
        out_shape=jax.ShapeDtypeStruct((M, FC_DIM), pooled.dtype),
        grid_spec=pltpu.PrefetchScalarGridSpec(
            num_scalar_prefetch=0,
            grid=(1,),
            in_specs=[
                pl.BlockSpec((M, K), lambda i: (0, 0)),
                pl.BlockSpec((K, FEAT_CH), lambda i: (0, 0)),
                pl.BlockSpec((1, FEAT_CH), lambda i: (0, 0)),
                pl.BlockSpec((FEAT_CH, GLOBAL_CH), lambda i: (0, 0)),
                pl.BlockSpec((1, GLOBAL_CH), lambda i: (0, 0)),
                pl.BlockSpec((GLOBAL_CH, FC_DIM), lambda i: (0, 0)),
                pl.BlockSpec((1, FC_DIM), lambda i: (0, 0)),
            ],
            out_specs=pl.BlockSpec((M, FC_DIM), lambda i: (0, 0)),
        ),
        compiler_params=pltpu.CompilerParams(
            dimension_semantics=("arbitrary",),
            vmem_limit_bytes=48 << 20,   # headroom under v7x's 64 MiB/TC VMEM
        ),
    )(pooled, cat_w, cat_b, global_w, global_b, l1_w, l1_b)


def _head_kernel(x_ref, wfc_ref, bfc_ref, wcls_ref, bcls_ref, out_ref, feat_ref):
    # fc (BatchNorm1d eval already folded into wfc/bfc in prepare step).
    h = jnp.dot(x_ref[...], wfc_ref[...],
                preferred_element_type=jnp.float32) + bfc_ref[...]
    # LeakyReLU (PyTorch default negative_slope = 0.01).
    feat = jnp.where(h > 0, h, LEAKY_SLOPE * h)
    feat_ref[...] = feat.astype(feat_ref.dtype)
    # cls; output channels are zero-padded to 128 lanes -> unmasked stores.
    # cls is computed from the f32 `feat` (before the output cast).
    o = jnp.dot(feat, wcls_ref[...],
                preferred_element_type=jnp.float32) + bcls_ref[...]
    out_ref[...] = o.astype(out_ref.dtype)


def head_forward(flat, fc_w, fc_b, cls_w, cls_b):
    N, F = flat.shape
    H = fc_w.shape[1]
    C = cls_w.shape[1]
    out, feat = pl.pallas_call(
        _head_kernel,
        out_shape=(jax.ShapeDtypeStruct((N, C), flat.dtype),
                   jax.ShapeDtypeStruct((N, H), flat.dtype)),
        grid_spec=pltpu.PrefetchScalarGridSpec(
            num_scalar_prefetch=0,
            grid=(1,),
            in_specs=[
                pl.BlockSpec((N, F), lambda i: (0, 0)),
                pl.BlockSpec((F, H), lambda i: (0, 0)),
                pl.BlockSpec((1, H), lambda i: (0, 0)),
                pl.BlockSpec((H, C), lambda i: (0, 0)),
                pl.BlockSpec((1, C), lambda i: (0, 0)),
            ],
            out_specs=(pl.BlockSpec((N, C), lambda i: (0, 0)),
                       pl.BlockSpec((N, H), lambda i: (0, 0))),
        ),
        compiler_params=pltpu.CompilerParams(
            dimension_semantics=("arbitrary",),
            vmem_limit_bytes=48 << 20,
        ),
    )(flat, fc_w, fc_b, cls_w, cls_b)
    return out, feat


# ----------------------------------------------------------------------------
# RGBAction head parameters (deterministic init in-script).
# ----------------------------------------------------------------------------
def init_params(num_class, key):
    keys = jax.random.split(key, 12)

    def w(k, shape, scale=0.02):
        return (scale * jax.random.normal(k, shape)).astype(jnp.float32)

    params = {
        # self.cat : Conv3d(1664, 832, 1)  (stored as [Cin, Cout] for matmul)
        "cat_w": w(keys[0], (2 * FEAT_CH, FEAT_CH)),
        "cat_b": w(keys[1], (FEAT_CH,)),
        # stand-in for self.Global's mixed_5b/5c (832 -> 1024)
        "global_w": w(keys[2], (FEAT_CH, GLOBAL_CH)),
        "global_b": w(keys[3], (GLOBAL_CH,)),
        # self.layer1 : Conv3d(1024, 256, 1)
        "l1_w": w(keys[4], (GLOBAL_CH, FC_DIM)),
        "l1_b": w(keys[5], (FC_DIM,)),
        # self.fc : Linear(256 * 8, 512)   (stored as [in, out])
        "fc_w": w(keys[6], (FC_DIM * TEMP_SIZE, HIDDEN)),
        "fc_b": w(keys[7], (HIDDEN,)),
        # self.bn : BatchNorm1d(512) (eval mode)
        "bn_gamma": 1.0 + w(keys[8], (HIDDEN,), 0.01),
        "bn_beta": w(keys[9], (HIDDEN,), 0.01),
        "bn_mean": jnp.zeros((HIDDEN,), jnp.float32),
        "bn_var": jnp.ones((HIDDEN,), jnp.float32),
        # self.cls : Linear(512, num_class)
        "cls_w": w(keys[10], (HIDDEN, num_class)),
        "cls_b": w(keys[11], (num_class,)),
    }
    return params


def prepare_inference_params(params):
    """One-time weight preparation (outside the jitted forward).

    Folds BatchNorm1d (eval, eps=1e-5) into fc, pre-permutes the fc weight rows
    to match PyTorch's NCTHW flatten order (c*T + t) so the activations need no
    transpose, and zero-pads cls to 128 output lanes for lane-dense stores.
    """
    bn_scale = params["bn_gamma"] / jnp.sqrt(params["bn_var"] + BN_EPS)
    bn_shift = params["bn_beta"] - params["bn_mean"] * bn_scale

    fc_w_eff = params["fc_w"] * bn_scale[None, :]
    # Permute rows (c*T + t) -> (t*FC_DIM + c) so a contiguous reshape of the
    # trunk output [N*T, 256] -> [N, T*256] is exactly PyTorch's .view(N, -1).
    fc_w_eff = fc_w_eff.reshape(FC_DIM, TEMP_SIZE, HIDDEN)
    fc_w_eff = jnp.transpose(fc_w_eff, (1, 0, 2)).reshape(TEMP_SIZE * FC_DIM,
                                                          HIDDEN)
    fc_b_eff = params["fc_b"] * bn_scale + bn_shift

    num_class = params["cls_b"].shape[0]
    cls_w_pad = jnp.zeros((HIDDEN, CLS_PAD), params["cls_w"].dtype)
    cls_w_pad = cls_w_pad.at[:, :num_class].set(params["cls_w"])
    cls_b_pad = jnp.zeros((CLS_PAD,), params["cls_b"].dtype)
    cls_b_pad = cls_b_pad.at[:num_class].set(params["cls_b"])

    return {
        "cat_w": params["cat_w"],
        "cat_b": params["cat_b"].reshape(1, FEAT_CH),
        "global_w": params["global_w"],
        "global_b": params["global_b"].reshape(1, GLOBAL_CH),
        "l1_w": params["l1_w"],
        "l1_b": params["l1_b"].reshape(1, FC_DIM),
        "fc_w": fc_w_eff,
        "fc_b": fc_b_eff.reshape(1, HIDDEN),
        "cls_w": cls_w_pad,
        "cls_b": cls_b_pad.reshape(1, CLS_PAD),
    }


# ----------------------------------------------------------------------------
# Forward pass
# ----------------------------------------------------------------------------
@functools.partial(jax.jit, static_argnames=("num_class",))
def rgb_action_forward(iparams, global_feat, roi_feat, *, num_class):
    """global_feat / roi_feat: [N, T, 832, H, W] backbone feature maps (NTCHW)."""
    N, T, C, H, W = global_feat.shape

    # torch.cat((globalFeat, roiFeat), 2) followed by linear 1x1x1 convs and a
    # global average pool (the stand-in self.Global).  Since every op up to the
    # pool is pointwise-linear, pool first:  mean(xW + b) == mean(x)W + b.
    pooled_g = jnp.mean(global_feat, axis=(3, 4))                 # [N, T, 832]
    pooled_r = jnp.mean(roi_feat, axis=(3, 4))                    # [N, T, 832]
    pooled = jnp.concatenate([pooled_g, pooled_r], axis=2)        # [N, T, 1664]
    pooled = pooled.reshape(N * T, 2 * C)                         # [N*T, 1664]

    # cat -> Global stand-in -> layer1, fused in one Pallas kernel.
    st = trunk_forward(pooled, iparams["cat_w"], iparams["cat_b"],
                       iparams["global_w"], iparams["global_b"],
                       iparams["l1_w"], iparams["l1_b"])          # [N*T, 256]

    # dropout(p=0.3): identity at inference.
    # fc weight rows were pre-permuted, so a plain contiguous reshape matches
    # PyTorch's NCTHW .view(N, -1) flatten (index = c*T + t).
    flat = st.reshape(N, T * FC_DIM)                              # [N, 2048]

    # fc -> bn(eval, folded) -> LeakyReLU -> cls, fused in one Pallas kernel.
    out_pad, feat_out = head_forward(flat, iparams["fc_w"], iparams["fc_b"],
                                     iparams["cls_w"], iparams["cls_b"])
    out = out_pad[:, :num_class]
    return out, feat_out


# ----------------------------------------------------------------------------
# Pure-JAX reference (mirrors the PyTorch head, incl. NCTHW flatten order).
# ----------------------------------------------------------------------------
def reference_forward(params, global_feat, roi_feat):
    hp = jax.lax.Precision.HIGHEST
    N, T, C, H, W = global_feat.shape
    pooled = jnp.concatenate(
        [jnp.mean(global_feat, axis=(3, 4)), jnp.mean(roi_feat, axis=(3, 4))],
        axis=2).reshape(N * T, 2 * C)
    h = jnp.dot(pooled, params["cat_w"], precision=hp) + params["cat_b"]
    h = jnp.dot(h, params["global_w"], precision=hp) + params["global_b"]
    st = jnp.dot(h, params["l1_w"], precision=hp) + params["l1_b"]
    # PyTorch: [N, 256, T, 1, 1].view(N, -1) -> flat index = c*T + t.
    flat = jnp.transpose(st.reshape(N, T, FC_DIM), (0, 2, 1)).reshape(N, -1)
    pre = jnp.dot(flat, params["fc_w"], precision=hp) + params["fc_b"]
    scale = params["bn_gamma"] / jnp.sqrt(params["bn_var"] + BN_EPS)
    pre = (pre - params["bn_mean"]) * scale + params["bn_beta"]
    feat = jnp.where(pre > 0, pre, LEAKY_SLOPE * pre)
    out = jnp.dot(feat, params["cls_w"], precision=hp) + params["cls_b"]
    return out, feat


if __name__ == "__main__":
    num_class = 10
    N, T, H, W = 2, TEMP_SIZE, 8, 8

    key = jax.random.PRNGKey(0)
    kp, kg, kr = jax.random.split(key, 3)

    params = init_params(num_class, kp)
    iparams = prepare_inference_params(params)   # one-time weight prep
    global_feat = jax.random.normal(kg, (N, T, FEAT_CH, H, W), dtype=jnp.float32)
    roi_feat = jax.random.normal(kr, (N, T, FEAT_CH, H, W), dtype=jnp.float32)

    out, feat = rgb_action_forward(iparams, global_feat, roi_feat,
                                   num_class=num_class)
    jax.block_until_ready((out, feat))

    assert out.shape == (N, num_class), out.shape
    assert feat.shape == (N, HIDDEN), feat.shape
    assert bool(jnp.all(jnp.isfinite(out))) and bool(jnp.all(jnp.isfinite(feat)))

    # Numerical check against the pure-JAX reference.
    out_ref, feat_ref = reference_forward(params, global_feat, roi_feat)
    assert bool(jnp.allclose(out, out_ref, rtol=1e-2, atol=2e-3)), (
        float(jnp.max(jnp.abs(out - out_ref))))
    assert bool(jnp.allclose(feat, feat_ref, rtol=1e-2, atol=2e-3)), (
        float(jnp.max(jnp.abs(feat - feat_ref))))

    print("KERNEL_OK")
</pallas_src>

<mosaic_0001>
module attributes {stable_mosaic.version = 11 : i64} {
  func.func @_trunk_kernel(%arg0: i32, %arg1: memref<16x1664xf32, #tpu.memory_space<vmem>>, %arg2: memref<1664x832xf32, #tpu.memory_space<vmem>>, %arg3: memref<1x832xf32, #tpu.memory_space<vmem>>, %arg4: memref<832x1024xf32, #tpu.memory_space<vmem>>, %arg5: memref<1x1024xf32, #tpu.memory_space<vmem>>, %arg6: memref<1024x256xf32, #tpu.memory_space<vmem>>, %arg7: memref<1x256xf32, #tpu.memory_space<vmem>>, %arg8: memref<16x256xf32, #tpu.memory_space<vmem>>) attributes {dimension_semantics = [#tpu.dimension_semantics<arbitrary>], iteration_bounds = array<i64: 1>, scalar_prefetch = 0 : i64, scratch_operands = 0 : i64, tpu.core_type = #tpu.core_type<tc>, window_params = [{pipeline_mode = #tpu.pipeline_mode<synchronous>, transform_indices = @transform_0, window_bounds = array<i64: 16, 1664>}, {pipeline_mode = #tpu.pipeline_mode<synchronous>, transform_indices = @transform_1, window_bounds = array<i64: 1664, 832>}, {pipeline_mode = #tpu.pipeline_mode<synchronous>, transform_indices = @transform_2, window_bounds = array<i64: 1, 832>}, {pipeline_mode = #tpu.pipeline_mode<synchronous>, transform_indices = @transform_3, window_bounds = array<i64: 832, 1024>}, {pipeline_mode = #tpu.pipeline_mode<synchronous>, transform_indices = @transform_4, window_bounds = array<i64: 1, 1024>}, {pipeline_mode = #tpu.pipeline_mode<synchronous>, transform_indices = @transform_5, window_bounds = array<i64: 1024, 256>}, {pipeline_mode = #tpu.pipeline_mode<synchronous>, transform_indices = @transform_6, window_bounds = array<i64: 1, 256>}, {pipeline_mode = #tpu.pipeline_mode<synchronous>, transform_indices = @transform_7, window_bounds = array<i64: 16, 256>}]} {
    %c0 = arith.constant 0 : index
    %c0_0 = arith.constant 0 : index
    %0 = vector.load %arg1[%c0, %c0_0] : memref<16x1664xf32, #tpu.memory_space<vmem>>, vector<16x1664xf32>
    %c0_1 = arith.constant 0 : index
    %c0_2 = arith.constant 0 : index
    %1 = vector.load %arg2[%c0_1, %c0_2] : memref<1664x832xf32, #tpu.memory_space<vmem>>, vector<1664x832xf32>
    %cst = arith.constant dense<0.000000e+00> : vector<16x832xf32>
    %2 = tpu.matmul %0, %1, %cst {dimension_numbers = #tpu.dot_dimension_numbers<[1], [0], [0], [1], [0, 0, 1, 1], [], []>} : vector<16x1664xf32>, vector<1664x832xf32>, vector<16x832xf32> -> vector<16x832xf32>
    %c0_3 = arith.constant 0 : index
    %c0_4 = arith.constant 0 : index
    %3 = vector.load %arg3[%c0_3, %c0_4] : memref<1x832xf32, #tpu.memory_space<vmem>>, vector<1x832xf32>
    %4 = vector.broadcast %3 : vector<1x832xf32> to vector<16x832xf32>
    %5 = arith.addf %2, %4 : vector<16x832xf32>
    %c0_5 = arith.constant 0 : index
    %c0_6 = arith.constant 0 : index
    %6 = vector.load %arg4[%c0_5, %c0_6] : memref<832x1024xf32, #tpu.memory_space<vmem>>, vector<832x1024xf32>
    %cst_7 = arith.constant dense<0.000000e+00> : vector<16x1024xf32>
    %7 = tpu.matmul %5, %6, %cst_7 {dimension_numbers = #tpu.dot_dimension_numbers<[1], [0], [0], [1], [0, 0, 1, 1], [], []>} : vector<16x832xf32>, vector<832x1024xf32>, vector<16x1024xf32> -> vector<16x1024xf32>
    %c0_8 = arith.constant 0 : index
    %c0_9 = arith.constant 0 : index
    %8 = vector.load %arg5[%c0_8, %c0_9] : memref<1x1024xf32, #tpu.memory_space<vmem>>, vector<1x1024xf32>
    %9 = vector.broadcast %8 : vector<1x1024xf32> to vector<16x1024xf32>
    %10 = arith.addf %7, %9 : vector<16x1024xf32>
    %c0_10 = arith.constant 0 : index
    %c0_11 = arith.constant 0 : index
    %11 = vector.load %arg6[%c0_10, %c0_11] : memref<1024x256xf32, #tpu.memory_space<vmem>>, vector<1024x256xf32>
    %cst_12 = arith.constant dense<0.000000e+00> : vector<16x256xf32>
    %12 = tpu.matmul %10, %11, %cst_12 {dimension_numbers = #tpu.dot_dimension_numbers<[1], [0], [0], [1], [0, 0, 1, 1], [], []>} : vector<16x1024xf32>, vector<1024x256xf32>, vector<16x256xf32> -> vector<16x256xf32>
    %c0_13 = arith.constant 0 : index
    %c0_14 = arith.constant 0 : index
    %13 = vector.load %arg7[%c0_13, %c0_14] : memref<1x256xf32, #tpu.memory_space<vmem>>, vector<1x256xf32>
    %14 = vector.broadcast %13 : vector<1x256xf32> to vector<16x256xf32>
    %15 = arith.addf %12, %14 : vector<16x256xf32>
    %c0_15 = arith.constant 0 : index
    %c0_16 = arith.constant 0 : index
    %16 = vector.load %arg8[%c0_15, %c0_16] : memref<16x256xf32, #tpu.memory_space<vmem>>, vector<16x256xf32>
    tpu.vector_store %arg8[%c0_15, %c0_16], %15 {strides = array<i32>} : memref<16x256xf32, #tpu.memory_space<vmem>>, vector<16x256xf32>,
    return
  }
  func.func @transform_0(%arg0: i32) -> (i32, i32) {
    %c0_i32 = arith.constant 0 : i32
    %c0_i32_0 = arith.constant 0 : i32
    %c0_i32_1 = arith.constant 0 : i32
    return %c0_i32, %c0_i32_0 : i32, i32
  }
  func.func @transform_1(%arg0: i32) -> (i32, i32) {
    %c0_i32 = arith.constant 0 : i32
    %c0_i32_0 = arith.constant 0 : i32
    %c0_i32_1 = arith.constant 0 : i32
    return %c0_i32, %c0_i32_0 : i32, i32
  }
  func.func @transform_2(%arg0: i32) -> (i32, i32) {
    %c0_i32 = arith.constant 0 : i32
    %c0_i32_0 = arith.constant 0 : i32
    %c0_i32_1 = arith.constant 0 : i32
    return %c0_i32, %c0_i32_0 : i32, i32
  }
  func.func @transform_3(%arg0: i32) -> (i32, i32) {
    %c0_i32 = arith.constant 0 : i32
    %c0_i32_0 = arith.constant 0 : i32
    %c0_i32_1 = arith.constant 0 : i32
    return %c0_i32, %c0_i32_0 : i32, i32
  }
  func.func @transform_4(%arg0: i32) -> (i32, i32) {
    %c0_i32 = arith.constant 0 : i32
    %c0_i32_0 = arith.constant 0 : i32
    %c0_i32_1 = arith.constant 0 : i32
    return %c0_i32, %c0_i32_0 : i32, i32
  }
  func.func @transform_5(%arg0: i32) -> (i32, i32) {
    %c0_i32 = arith.constant 0 : i32
    %c0_i32_0 = arith.constant 0 : i32
    %c0_i32_1 = arith.constant 0 : i32
    return %c0_i32, %c0_i32_0 : i32, i32
  }
  func.func @transform_6(%arg0: i32) -> (i32, i32) {
    %c0_i32 = arith.constant 0 : i32
    %c0_i32_0 = arith.constant 0 : i32
    %c0_i32_1 = arith.constant 0 : i32
    return %c0_i32, %c0_i32_0 : i32, i32
  }
  func.func @transform_7(%arg0: i32) -> (i32, i32) {
    %c0_i32 = arith.constant 0 : i32
    %c0_i32_0 = arith.constant 0 : i32
    %c0_i32_1 = arith.constant 0 : i32
    return %c0_i32, %c0_i32_0 : i32, i32
  }
}

module attributes {stable_mosaic.version = 11 : i64} {
  func.func @_head_kernel(%arg0: i32, %arg1: memref<2x2048xf32, #tpu.memory_space<vmem>>, %arg2: memref<2048x512xf32, #tpu.memory_space<vmem>>, %arg3: memref<1x512xf32, #tpu.memory_space<vmem>>, %arg4: memref<512x128xf32, #tpu.memory_space<vmem>>, %arg5: memref<1x128xf32, #tpu.memory_space<vmem>>, %arg6: memref<2x128xf32, #tpu.memory_space<vmem>>, %arg7: memref<2x512xf32, #tpu.memory_space<vmem>>) attributes {dimension_semantics = [#tpu.dimension_semantics<arbitrary>], iteration_bounds = array<i64: 1>, scalar_prefetch = 0 : i64, scratch_operands = 0 : i64, tpu.core_type = #tpu.core_type<tc>, window_params = [{pipeline_mode = #tpu.pipeline_mode<synchronous>, transform_indices = @transform_0, window_bounds = array<i64: 2, 2048>}, {pipeline_mode = #tpu.pipeline_mode<synchronous>, transform_indices = @transform_1, window_bounds = array<i64: 2048, 512>}, {pipeline_mode = #tpu.pipeline_mode<synchronous>, transform_indices = @transform_2, window_bounds = array<i64: 1, 512>}, {pipeline_mode = #tpu.pipeline_mode<synchronous>, transform_indices = @transform_3, window_bounds = array<i64: 512, 128>}, {pipeline_mode = #tpu.pipeline_mode<synchronous>, transform_indices = @transform_4, window_bounds = array<i64: 1, 128>}, {pipeline_mode = #tpu.pipeline_mode<synchronous>, transform_indices = @transform_5, window_bounds = array<i64: 2, 128>}, {pipeline_mode = #tpu.pipeline_mode<synchronous>, transform_indices = @transform_6, window_bounds = array<i64: 2, 512>}]} {
    %c0 = arith.constant 0 : index
    %c0_0 = arith.constant 0 : index
    %0 = vector.load %arg1[%c0, %c0_0] : memref<2x2048xf32, #tpu.memory_space<vmem>>, vector<2x2048xf32>
    %c0_1 = arith.constant 0 : index
    %c0_2 = arith.constant 0 : index
    %1 = vector.load %arg2[%c0_1, %c0_2] : memref<2048x512xf32, #tpu.memory_space<vmem>>, vector<2048x512xf32>
    %cst = arith.constant dense<0.000000e+00> : vector<2x512xf32>
    %2 = tpu.matmul %0, %1, %cst {dimension_numbers = #tpu.dot_dimension_numbers<[1], [0], [0], [1], [0, 0, 1, 1], [], []>} : vector<2x2048xf32>, vector<2048x512xf32>, vector<2x512xf32> -> vector<2x512xf32>
    %c0_3 = arith.constant 0 : index
    %c0_4 = arith.constant 0 : index
    %3 = vector.load %arg3[%c0_3, %c0_4] : memref<1x512xf32, #tpu.memory_space<vmem>>, vector<1x512xf32>
    %4 = vector.broadcast %3 : vector<1x512xf32> to vector<2x512xf32>
    %5 = arith.addf %2, %4 : vector<2x512xf32>
    %cst_5 = arith.constant 0.000000e+00 : f32
    %6 = vector.broadcast %cst_5 : f32 to vector<2x512xf32>
    %7 = arith.cmpf ogt, %5, %6 : vector<2x512xf32>
    %cst_6 = arith.constant 0.00999999977 : f32
    %8 = vector.broadcast %cst_6 : f32 to vector<2x512xf32>
    %9 = arith.mulf %8, %5 : vector<2x512xf32>
    %10 = arith.select %7, %5, %9 : vector<2x512xi1>, vector<2x512xf32>
    %c0_7 = arith.constant 0 : index
    %c0_8 = arith.constant 0 : index
    %11 = vector.load %arg7[%c0_7, %c0_8] : memref<2x512xf32, #tpu.memory_space<vmem>>, vector<2x512xf32>
    tpu.vector_store %arg7[%c0_7, %c0_8], %10 {strides = array<i32>} : memref<2x512xf32, #tpu.memory_space<vmem>>, vector<2x512xf32>,
    %c0_9 = arith.constant 0 : index
    %c0_10 = arith.constant 0 : index
    %12 = vector.load %arg4[%c0_9, %c0_10] : memref<512x128xf32, #tpu.memory_space<vmem>>, vector<512x128xf32>
    %cst_11 = arith.constant dense<0.000000e+00> : vector<2x128xf32>
    %13 = tpu.matmul %10, %12, %cst_11 {dimension_numbers = #tpu.dot_dimension_numbers<[1], [0], [0], [1], [0, 0, 1, 1], [], []>} : vector<2x512xf32>, vector<512x128xf32>, vector<2x128xf32> -> vector<2x128xf32>
    %c0_12 = arith.constant 0 : index
    %c0_13 = arith.constant 0 : index
    %14 = vector.load %arg5[%c0_12, %c0_13] : memref<1x128xf32, #tpu.memory_space<vmem>>, vector<1x128xf32>
    %15 = vector.broadcast %14 : vector<1x128xf32> to vector<2x128xf32>
    %16 = arith.addf %13, %15 : vector<2x128xf32>
    %c0_14 = arith.constant 0 : index
    %c0_15 = arith.constant 0 : index
    %17 = vector.load %arg6[%c0_14, %c0_15] : memref<2x128xf32, #tpu.memory_space<vmem>>, vector<2x128xf32>
    tpu.vector_store %arg6[%c0_14, %c0_15], %16 {strides = array<i32>} : memref<2x128xf32, #tpu.memory_space<vmem>>, vector<2x128xf32>,
    return
  }
  func.func @transform_0(%arg0: i32) -> (i32, i32) {
    %c0_i32 = arith.constant 0 : i32
    %c0_i32_0 = arith.constant 0 : i32
    %c0_i32_1 = arith.constant 0 : i32
    return %c0_i32, %c0_i32_0 : i32, i32
  }
  func.func @transform_1(%arg0: i32) -> (i32, i32) {
    %c0_i32 = arith.constant 0 : i32
    %c0_i32_0 = arith.constant 0 : i32
    %c0_i32_1 = arith.constant 0 : i32
    return %c0_i32, %c0_i32_0 : i32, i32
  }
  func.func @transform_2(%arg0: i32) -> (i32, i32) {
    %c0_i32 = arith.constant 0 : i32
    %c0_i32_0 = arith.constant 0 : i32
    %c0_i32_1 = arith.constant 0 : i32
    return %c0_i32, %c0_i32_0 : i32, i32
  }
  func.func @transform_3(%arg0: i32) -> (i32, i32) {
    %c0_i32 = arith.constant 0 : i32
    %c0_i32_0 = arith.constant 0 : i32
    %c0_i32_1 = arith.constant 0 : i32
    return %c0_i32, %c0_i32_0 : i32, i32
  }
  func.func @transform_4(%arg0: i32) -> (i32, i32) {
    %c0_i32 = arith.constant 0 : i32
    %c0_i32_0 = arith.constant 0 : i32
    %c0_i32_1 = arith.constant 0 : i32
    return %c0_i32, %c0_i32_0 : i32, i32
  }
  func.func @transform_5(%arg0: i32) -> (i32, i32) {
    %c0_i32 = arith.constant 0 : i32
    %c0_i32_0 = arith.constant 0 : i32
    %c0_i32_1 = arith.constant 0 : i32
    return %c0_i32, %c0_i32_0 : i32, i32
  }
  func.func @transform_6(%arg0: i32) -> (i32, i32) {
    %c0_i32 = arith.constant 0 : i32
    %c0_i32_0 = arith.constant 0 : i32
    %c0_i32_1 = arith.constant 0 : i32
    return %c0_i32, %c0_i32_0 : i32, i32
  }
}

</mosaic_0001>

<llo_original>
// kernel: rgb_action_forward.3
$region0: #{rgb_action_forward.3}
  #allocation0 [shape = 'u32[]', space=smem, size = 0x4, offset = 0x4, fixed_abs, tag = 'smem constant byte address 0x4 - core index']
  #allocation1 [shape = 'u32[144,128]{1,0:T(1,128)}', space=vmem, size = 0x12000, scoped, tag = 'internal scratch']
  %s0 = inlined_call_operand.vmem [shape: f32[2,2048], index: 0, kind: input, shape index: {}]
  %s1 = inlined_call_operand.vmem [shape: f32[2048,512], index: 1, kind: input, shape index: {}]
  %s2 = inlined_call_operand.vmem [shape: f32[1,512], index: 2, kind: input, shape index: {}]
  %s3 = inlined_call_operand.vmem [shape: f32[512,128], index: 3, kind: input, shape index: {}]
  %s4 = inlined_call_operand.vmem [shape: f32[1,128], index: 4, kind: input, shape index: {}]
  %s5 = inlined_call_operand.hbm [shape: f32[2,128], index: 5, kind: output, shape index: {0}]
  %s6 = inlined_call_operand.hbm [shape: f32[2,512], index: 6, kind: output, shape index: {1}]
  %7 = xla_tuple %s5, %s6
  %s8 = sld [smem:[#allocation0]]
  $region38: #{rgb_action_forward.3} parent=0
    _
  %s10 = ssub.s32 1, %s8
  %s11 = scalar_select 0, %s10, %s8
  $region1: #{rgb_action_forward.3} parent=0
    #allocation2 [shape = 'u8[1024]{0}', space=vmem, size = 0x400, scoped, tag = 'output window, operand 0, single buffered']
    #allocation3 [shape = 's32[1]{0}', space=sflag, size = 0x4, scoped, tag = 'scoped memory for rgb_action_forward.3']
    #allocation4 [shape = 'u8[4096]{0}', space=vmem, size = 0x1000, scoped, tag = 'output window, operand 1, single buffered']
    #allocation5 [shape = 's32[1]{0}', space=sflag, size = 0x4, scoped, tag = 'scoped memory for rgb_action_forward.3']
    %12 = vsyncpa [#allocation3], 0
    %13 = vsyncpa [#allocation5], 0
    // Predicated region
    $region2: #{rgb_action_forward.3} parent=1 // pred_check
      _
    $region3: #{rgb_action_forward.3} parent=1 // pred_check_branch
      %15 = sbr.rel (0) target = $region5
    $region4: #{rgb_action_forward.3} parent=1 // pred_region
      _
    $region5: #{rgb_action_forward.3} parent=1 // pred_fallthru
      _
    // Predicated region
    $region6: #{rgb_action_forward.3} parent=1 // pred_check
      _
    $region7: #{rgb_action_forward.3} parent=1 // pred_check_branch
      %17 = sbr.rel (0) target = $region9
    $region8: #{rgb_action_forward.3} parent=1 // pred_region
      _
    $region9: #{rgb_action_forward.3} parent=1 // pred_fallthru
      _
    // Predicated region
    $region10: #{rgb_action_forward.3} parent=1 // pred_check
      _
    $region11: #{rgb_action_forward.3} parent=1 // pred_check_branch
      %19 = sbr.rel (0) target = $region13
    $region12: #{rgb_action_forward.3} parent=1 // pred_region
      _
    $region13: #{rgb_action_forward.3} parent=1 // pred_fallthru
      _
    // Predicated region
    $region14: #{rgb_action_forward.3} parent=1 // pred_check
      _
    $region15: #{rgb_action_forward.3} parent=1 // pred_check_branch
      %21 = sbr.rel (0) target = $region17
    $region16: #{rgb_action_forward.3} parent=1 // pred_region
      _
    $region17: #{rgb_action_forward.3} parent=1 // pred_fallthru
      _
    // Predicated region
    $region18: #{rgb_action_forward.3} parent=1 // pred_check
      _
    $region19: #{rgb_action_forward.3} parent=1 // pred_check_branch
      %23 = sbr.rel (0) target = $region21
    $region20: #{rgb_action_forward.3} parent=1 // pred_region
      _
    $region21: #{rgb_action_forward.3} parent=1 // pred_fallthru
      _
    %v24 = vld [vmem:[%s0] sm:$0xff]
    %v25 = vld [vmem:[%s0 + $0x8] sm:$0xff]
    %v26 = vld [vmem:[%s0 + $0x10] sm:$0xff]
    %v27 = vld [vmem:[%s0 + $0x18] sm:$0xff]
    %v28 = vld [vmem:[%s1] sm:$0xff]
    %v29 = vld [vmem:[%s1 + $0x8] sm:$0xff]
    %v30 = vld [vmem:[%s1 + $0x10] sm:$0xff]
    %v31 = vld [vmem:[%s1 + $0x18] sm:$0xff]
    %v32 = vld [vmem:[%s1 + $0x20] sm:$0xff]
    %v33 = vld [vmem:[%s1 + $0x28] sm:$0xff]
    %v34 = vld [vmem:[%s1 + $0x30] sm:$0xff]
    %v35 = vld [vmem:[%s1 + $0x38] sm:$0xff]
    %v36 = vld [vmem:[%s1 + $0x40] sm:$0xff]
    %v37 = vld [vmem:[%s1 + $0x48] sm:$0xff]
    %v38 = vld [vmem:[%s1 + $0x50] sm:$0xff]
    %v39 = vld [vmem:[%s1 + $0x58] sm:$0xff]
    %v40 = vld [vmem:[%s1 + $0x60] sm:$0xff]
    %v41 = vld [vmem:[%s1 + $0x68] sm:$0xff]
    %v42 = vld [vmem:[%s1 + $0x70] sm:$0xff]
    %v43 = vld [vmem:[%s1 + $0x78] sm:$0xff]
    %v44 = vld [vmem:[%s1 + $0x80] sm:$0xff]
    %v45 = vld [vmem:[%s1 + $0x88] sm:$0xff]
    %v46 = vld [vmem:[%s1 + $0x90] sm:$0xff]
    %v47 = vld [vmem:[%s1 + $0x98] sm:$0xff]
    %v48 = vld [vmem:[%s1 + $0xa0] sm:$0xff]
    %v49 = vld [vmem:[%s1 + $0xa8] sm:$0xff]
    %v50 = vld [vmem:[%s1 + $0xb0] sm:$0xff]
    %v51 = vld [vmem:[%s1 + $0xb8] sm:$0xff]
    %v52 = vld [vmem:[%s1 + $0xc0] sm:$0xff]
    %v53 = vld [vmem:[%s1 + $0xc8] sm:$0xff]
    %v54 = vld [vmem:[%s1 + $0xd0] sm:$0xff]
    %v55 = vld [vmem:[%s1 + $0xd8] sm:$0xff]
    %v56 = vld [vmem:[%s1 + $0xe0] sm:$0xff]
    %v57 = vld [vmem:[%s1 + $0xe8] sm:$0xff]
    %v58 = vld [vmem:[%s1 + $0xf0] sm:$0xff]
    %v59 = vld [vmem:[%s1 + $0xf8] sm:$0xff]
    %v60 = vld [vmem:[%s1 + $0x100] sm:$0xff]
    %v61 = vld [vmem:[%s1 + $0x108] sm:$0xff]
    %v62 = vld [vmem:[%s1 + $0x110] sm:$0xff]
    %v63 = vld [vmem:[%s1 + $0x118] sm:$0xff]
    %v64 = vld [vmem:[%s1 + $0x120] sm:$0xff]
    %v65 = vld [vmem:[%s1 + $0x128] sm:$0xff]
    %v66 = vld [vmem:[%s1 + $0x130] sm:$0xff]
    %v67 = vld [vmem:[%s1 + $0x138] sm:$0xff]
    %v68 = vld [vmem:[%s1 + $0x140] sm:$0xff]
    %v69 = vld [vmem:[%s1 + $0x148] sm:$0xff]
    %v70 = vld [vmem:[%s1 + $0x150] sm:$0xff]
    %v71 = vld [vmem:[%s1 + $0x158] sm:$0xff]
    %v72 = vld [vmem:[%s1 + $0x160] sm:$0xff]
    %v73 = vld [vmem:[%s1 + $0x168] sm:$0xff]
    %v74 = vld [vmem:[%s1 + $0x170] sm:$0xff]
    %v75 = vld [vmem:[%s1 + $0x178] sm:$0xff]
    %v76 = vld [vmem:[%s1 + $0x180] sm:$0xff]
    %v77 = vld [vmem:[%s1 + $0x188] sm:$0xff]
    %v78 = vld [vmem:[%s1 + $0x190] sm:$0xff]
    %v79 = vld [vmem:[%s1 + $0x198] sm:$0xff]
    %v80 = vld [vmem:[%s1 + $0x1a0] sm:$0xff]
    %v81 = vld [vmem:[%s1 + $0x1a8] sm:$0xff]
    %v82 = vld [vmem:[%s1 + $0x1b0] sm:$0xff]
    %v83 = vld [vmem:[%s1 + $0x1b8] sm:$0xff]
    %v84 = vld [vmem:[%s1 + $0x1c0] sm:$0xff]
    %v85 = vld [vmem:[%s1 + $0x1c8] sm:$0xff]
    %v86 = vld [vmem:[%s1 + $0x1d0] sm:$0xff]
    %v87 = vld [vmem:[%s1 + $0x1d8] sm:$0xff]
    %v88 = vld [vmem:[%s1 + $0x1e0] sm:$0xff]
    %v89 = vld [vmem:[%s1 + $0x1e8] sm:$0xff]
    %v90 = vld [vmem:[%s1 + $0x1f0] sm:$0xff]
    %v91 = vld [vmem:[%s1 + $0x1f8] sm:$0xff]
    %v92 = vld [vmem:[%s1 + $0x200] sm:$0xff]
    %v93 = vld [vmem:[%s1 + $0x208] sm:$0xff]
    %v94 = vld [vmem:[%s1 + $0x210] sm:$0xff]
    %v95 = vld [vmem:[%s1 + $0x218] sm:$0xff]
    %v96 = vld [vmem:[%s1 + $0x220] sm:$0xff]
    %v97 = vld [vmem:[%s1 + $0x228] sm:$0xff]
    %v98 = vld [vmem:[%s1 + $0x230] sm:$0xff]
    %v99 = vld [vmem:[%s1 + $0x238] sm:$0xff]
    %v100 = vld [vmem:[%s1 + $0x240] sm:$0xff]
    %v101 = vld [vmem:[%s1 + $0x248] sm:$0xff]
    %v102 = vld [vmem:[%s1 + $0x250] sm:$0xff]
    %v103 = vld [vmem:[%s1 + $0x258] sm:$0xff]
    %v104 = vld [vmem:[%s1 + $0x260] sm:$0xff]
    %v105 = vld [vmem:[%s1 + $0x268] sm:$0xff]
    %v106 = vld [vmem:[%s1 + $0x270] sm:$0xff]
    %v107 = vld [vmem:[%s1 + $0x278] sm:$0xff]
    %v108 = vld [vmem:[%s1 + $0x280] sm:$0xff]
    %v109 = vld [vmem:[%s1 + $0x288] sm:$0xff]
    %v110 = vld [vmem:[%s1 + $0x290] sm:$0xff]
    %v111 = vld [vmem:[%s1 + $0x298] sm:$0xff]
    %v112 = vld [vmem:[%s1 + $0x2a0] sm:$0xff]
    %v113 = vld [vmem:[%s1 + $0x2a8] sm:$0xff]
    %v114 = vld [vmem:[%s1 + $0x2b0] sm:$0xff]
    %v115 = vld [vmem:[%s1 + $0x2b8] sm:$0xff]
    %v116 = vld [vmem:[%s1 + $0x2c0] sm:$0xff]
    %v117 = vld [vmem:[%s1 + $0x2c8] sm:$0xff]
    %v118 = vld [vmem:[%s1 + $0x2d0] sm:$0xff]
    %v119 = vld [vmem:[%s1 + $0x2d8] sm:$0xff]
    %v120 = vld [vmem:[%s1 + $0x2e0] sm:$0xff]
    %v121 = vld [vmem:[%s1 + $0x2e8] sm:$0xff]
    %v122 = vld [vmem:[%s1 + $0x2f0] sm:$0xff]
    %v123 = vld [vmem:[%s1 + $0x2f8] sm:$0xff]
    %v124 = vld [vmem:[%s1 + $0x300] sm:$0xff]
    %v125 = vld [vmem:[%s1 + $0x308] sm:$0xff]
    %v126 = vld [vmem:[%s1 + $0x310] sm:$0xff]
    %v127 = vld [vmem:[%s1 + $0x318] sm:$0xff]
    %v128 = vld [vmem:[%s1 + $0x320] sm:$0xff]
    %v129 = vld [vmem:[%s1 + $0x328] sm:$0xff]
    %v130 = vld [vmem:[%s1 + $0x330] sm:$0xff]
    %v131 = vld [vmem:[%s1 + $0x338] sm:$0xff]
    %v132 = vld [vmem:[%s1 + $0x340] sm:$0xff]
    %v133 = vld [vmem:[%s1 + $0x348] sm:$0xff]
    %v134 = vld [vmem:[%s1 + $0x350] sm:$0xff]
    %v135 = vld [vmem:[%s1 + $0x358] sm:$0xff]
    %v136 = vld [vmem:[%s1 + $0x360] sm:$0xff]
    %v137 = vld [vmem:[%s1 + $0x368] sm:$0xff]
    %v138 = vld [vmem:[%s1 + $0x370] sm:$0xff]
    %v139 = vld [vmem:[%s1 + $0x378] sm:$0xff]
    %v140 = vld [vmem:[%s1 + $0x380] sm:$0xff]
    %v141 = vld [vmem:[%s1 + $0x388] sm:$0xff]
    %v142 = vld [vmem:[%s1 + $0x390] sm:$0xff]
    %v143 = vld [vmem:[%s1 + $0x398] sm:$0xff]
    %v144 = vld [vmem:[%s1 + $0x3a0] sm:$0xff]
    %v145 = vld [vmem:[%s1 + $0x3a8] sm:$0xff]
    %v146 = vld [vmem:[%s1 + $0x3b0] sm:$0xff]
    %v147 = vld [vmem:[%s1 + $0x3b8] sm:$0xff]
    %v148 = vld [vmem:[%s1 + $0x3c0] sm:$0xff]
    %v149 = vld [vmem:[%s1 + $0x3c8] sm:$0xff]
    %v150 = vld [vmem:[%s1 + $0x3d0] sm:$0xff]
    %v151 = vld [vmem:[%s1 + $0x3d8] sm:$0xff]
    %v152 = vld [vmem:[%s1 + $0x3e0] sm:$0xff]
    %v153 = vld [vmem:[%s1 + $0x3e8] sm:$0xff]
    %v154 = vld [vmem:[%s1 + $0x3f0] sm:$0xff]
    %v155 = vld [vmem:[%s1 + $0x3f8] sm:$0xff]
    %v156 = vld [vmem:[%s1 + $0x400] sm:$0xff]
    %v157 = vld [vmem:[%s1 + $0x408] sm:$0xff]
    %v158 = vld [vmem:[%s1 + $0x410] sm:$0xff]
    %v159 = vld [vmem:[%s1 + $0x418] sm:$0xff]
    %v160 = vld [vmem:[%s1 + $0x420] sm:$0xff]
    %v161 = vld [vmem:[%s1 + $0x428] sm:$0xff]
    %v162 = vld [vmem:[%s1 + $0x430] sm:$0xff]
    %v163 = vld [vmem:[%s1 + $0x438] sm:$0xff]
    %v164 = vld [vmem:[%s1 + $0x440] sm:$0xff]
    %v165 = vld [vmem:[%s1 + $0x448] sm:$0xff]
    %v166 = vld [vmem:[%s1 + $0x450] sm:$0xff]
    %v167 = vld [vmem:[%s1 + $0x458] sm:$0xff]
    %v168 = vld [vmem:[%s1 + $0x460] sm:$0xff]
    %v169 = vld [vmem:[%s1 + $0x468] sm:$0xff]
    %v170 = vld [vmem:[%s1 + $0x470] sm:$0xff]
    %v171 = vld [vmem:[%s1 + $0x478] sm:$0xff]
    %v172 = vld [vmem:[%s1 + $0x480] sm:$0xff]
    %v173 = vld [vmem:[%s1 + $0x488] sm:$0xff]
    %v174 = vld [vmem:[%s1 + $0x490] sm:$0xff]
    %v175 = vld [vmem:[%s1 + $0x498] sm:$0xff]
    %v176 = vld [vmem:[%s1 + $0x4a0] sm:$0xff]
    %v177 = vld [vmem:[%s1 + $0x4a8] sm:$0xff]
    %v178 = vld [vmem:[%s1 + $0x4b0] sm:$0xff]
    %v179 = vld [vmem:[%s1 + $0x4b8] sm:$0xff]
    %v180 = vld [vmem:[%s1 + $0x4c0] sm:$0xff]
    %v181 = vld [vmem:[%s1 + $0x4c8] sm:$0xff]
    %v182 = vld [vmem:[%s1 + $0x4d0] sm:$0xff]
    %v183 = vld [vmem:[%s1 + $0x4d8] sm:$0xff]
    %v184 = vld [vmem:[%s1 + $0x4e0] sm:$0xff]
    %v185 = vld [vmem:[%s1 + $0x4e8] sm:$0xff]
    %v186 = vld [vmem:[%s1 + $0x4f0] sm:$0xff]
    %v187 = vld [vmem:[%s1 + $0x4f8] sm:$0xff]
    %v188 = vld [vmem:[%s1 + $0x500] sm:$0xff]
    %v189 = vld [vmem:[%s1 + $0x508] sm:$0xff]
    %v190 = vld [vmem:[%s1 + $0x510] sm:$0xff]
    %v191 = vld [vmem:[%s1 + $0x518] sm:$0xff]
    %v192 = vld [vmem:[%s1 + $0x520] sm:$0xff]
    %v193 = vld [vmem:[%s1 + $0x528] sm:$0xff]
    %v194 = vld [vmem:[%s1 + $0x530] sm:$0xff]
    %v195 = vld [vmem:[%s1 + $0x538] sm:$0xff]
    %v196 = vld [vmem:[%s1 + $0x540] sm:$0xff]
    %v197 = vld [vmem:[%s1 + $0x548] sm:$0xff]
    %v198 = vld [vmem:[%s1 + $0x550] sm:$0xff]
    %v199 = vld [vmem:[%s1 + $0x558] sm:$0xff]
    %v200 = vld [vmem:[%s1 + $0x560] sm:$0xff]
    %v201 = vld [vmem:[%s1 + $0x568] sm:$0xff]
    %v202 = vld [vmem:[%s1 + $0x570] sm:$0xff]
    %v203 = vld [vmem:[%s1 + $0x578] sm:$0xff]
    %v204 = vld [vmem:[%s1 + $0x580] sm:$0xff]
    %v205 = vld [vmem:[%s1 + $0x588] sm:$0xff]
    %v206 = vld [vmem:[%s1 + $0x590] sm:$0xff]
    %v207 = vld [vmem:[%s1 + $0x598] sm:$0xff]
    %v208 = vld [vmem:[%s1 + $0x5a0] sm:$0xff]
    %v209 = vld [vmem:[%s1 + $0x5a8] sm:$0xff]
    %v210 = vld [vmem:[%s1 + $0x5b0] sm:$0xff]
    %v211 = vld [vmem:[%s1 + $0x5b8] sm:$0xff]
    %v212 = vld [vmem:[%s1 + $0x5c0] sm:$0xff]
    %v213 = vld [vmem:[%s1 + $0x5c8] sm:$0xff]
    %v214 = vld [vmem:[%s1 + $0x5d0] sm:$0xff]
    %v215 = vld [vmem:[%s1 + $0x5d8] sm:$0xff]
    %v216 = vld [vmem:[%s1 + $0x5e0] sm:$0xff]
    %v217 = vld [vmem:[%s1 + $0x5e8] sm:$0xff]
    %v218 = vld [vmem:[%s1 + $0x5f0] sm:$0xff]
    %v219 = vld [vmem:[%s1 + $0x5f8] sm:$0xff]
    %v220 = vld [vmem:[%s1 + $0x600] sm:$0xff]
    %v221 = vld [vmem:[%s1 + $0x608] sm:$0xff]
    %v222 = vld [vmem:[%s1 + $0x610] sm:$0xff]
    %v223 = vld [vmem:[%s1 + $0x618] sm:$0xff]
    %v224 = vld [vmem:[%s1 + $0x620] sm:$0xff]
    %v225 = vld [vmem:[%s1 + $0x628] sm:$0xff]
    %v226 = vld [vmem:[%s1 + $0x630] sm:$0xff]
    %v227 = vld [vmem:[%s1 + $0x638] sm:$0xff]
    %v228 = vld [vmem:[%s1 + $0x640] sm:$0xff]
    %v229 = vld [vmem:[%s1 + $0x648] sm:$0xff]
    %v230 = vld [vmem:[%s1 + $0x650] sm:$0xff]
    %v231 = vld [vmem:[%s1 + $0x658] sm:$0xff]
    %v232 = vld [vmem:[%s1 + $0x660] sm:$0xff]
    %v233 = vld [vmem:[%s1 + $0x668] sm:$0xff]
    %v234 = vld [vmem:[%s1 + $0x670] sm:$0xff]
    %v235 = vld [vmem:[%s1 + $0x678] sm:$0xff]
    %v236 = vld [vmem:[%s1 + $0x680] sm:$0xff]
    %v237 = vld [vmem:[%s1 + $0x688] sm:$0xff]
    %v238 = vld [vmem:[%s1 + $0x690] sm:$0xff]
    %v239 = vld [vmem:[%s1 + $0x698] sm:$0xff]
    %v240 = vld [vmem:[%s1 + $0x6a0] sm:$0xff]
    %v241 = vld [vmem:[%s1 + $0x6a8] sm:$0xff]
    %v242 = vld [vmem:[%s1 + $0x6b0] sm:$0xff]
    %v243 = vld [vmem:[%s1 + $0x6b8] sm:$0xff]
    %v244 = vld [vmem:[%s1 + $0x6c0] sm:$0xff]
    %v245 = vld [vmem:[%s1 + $0x6c8] sm:$0xff]
    %v246 = vld [vmem:[%s1 + $0x6d0] sm:$0xff]
    %v247 = vld [vmem:[%s1 + $0x6d8] sm:$0xff]
    %v248 = vld [vmem:[%s1 + $0x6e0] sm:$0xff]
    %v249 = vld [vmem:[%s1 + $0x6e8] sm:$0xff]
    %v250 = vld [vmem:[%s1 + $0x6f0] sm:$0xff]
    %v251 = vld [vmem:[%s1 + $0x6f8] sm:$0xff]
    %v252 = vld [vmem:[%s1 + $0x700] sm:$0xff]
    %v253 = vld [vmem:[%s1 + $0x708] sm:$0xff]
    %v254 = vld [vmem:[%s1 + $0x710] sm:$0xff]
    %v255 = vld [vmem:[%s1 + $0x718] sm:$0xff]
    %v256 = vld [vmem:[%s1 + $0x720] sm:$0xff]
    %v257 = vld [vmem:[%s1 + $0x728] sm:$0xff]
    %v258 = vld [vmem:[%s1 + $0x730] sm:$0xff]
    %v259 = vld [vmem:[%s1 + $0x738] sm:$0xff]
    %v260 = vld [vmem:[%s1 + $0x740] sm:$0xff]
    %v261 = vld [vmem:[%s1 + $0x748] sm:$0xff]
    %v262 = vld [vmem:[%s1 + $0x750] sm:$0xff]
    %v263 = vld [vmem:[%s1 + $0x758] sm:$0xff]
    %v264 = vld [vmem:[%s1 + $0x760] sm:$0xff]
    %v265 = vld [vmem:[%s1 + $0x768] sm:$0xff]
    %v266 = vld [vmem:[%s1 + $0x770] sm:$0xff]
    %v267 = vld [vmem:[%s1 + $0x778] sm:$0xff]
    %v268 = vld [vmem:[%s1 + $0x780] sm:$0xff]
    %v269 = vld [vmem:[%s1 + $0x788] sm:$0xff]
    %v270 = vld [vmem:[%s1 + $0x790] sm:$0xff]
    %v271 = vld [vmem:[%s1 + $0x798] sm:$0xff]
    %v272 = vld [vmem:[%s1 + $0x7a0] sm:$0xff]
    %v273 = vld [vmem:[%s1 + $0x7a8] sm:$0xff]
    %v274 = vld [vmem:[%s1 + $0x7b0] sm:$0xff]
    %v275 = vld [vmem:[%s1 + $0x7b8] sm:$0xff]
    %v276 = vld [vmem:[%s1 + $0x7c0] sm:$0xff]
    %v277 = vld [vmem:[%s1 + $0x7c8] sm:$0xff]
    %v278 = vld [vmem:[%s1 + $0x7d0] sm:$0xff]
    %v279 = vld [vmem:[%s1 + $0x7d8] sm:$0xff]
    %v280 = vld [vmem:[%s1 + $0x7e0] sm:$0xff]
    %v281 = vld [vmem:[%s1 + $0x7e8] sm:$0xff]
    %v282 = vld [vmem:[%s1 + $0x7f0] sm:$0xff]
    %v283 = vld [vmem:[%s1 + $0x7f8] sm:$0xff]
    %v284 = vld [vmem:[%s1 + $0x800] sm:$0xff]
    %v285 = vld [vmem:[%s1 + $0x808] sm:$0xff]
    %v286 = vld [vmem:[%s1 + $0x810] sm:$0xff]
    %v287 = vld [vmem:[%s1 + $0x818] sm:$0xff]
    %v288 = vld [vmem:[%s1 + $0x820] sm:$0xff]
    %v289 = vld [vmem:[%s1 + $0x828] sm:$0xff]
    %v290 = vld [vmem:[%s1 + $0x830] sm:$0xff]
    %v291 = vld [vmem:[%s1 + $0x838] sm:$0xff]
    %v292 = vld [vmem:[%s1 + $0x840] sm:$0xff]
    %v293 = vld [vmem:[%s1 + $0x848] sm:$0xff]
    %v294 = vld [vmem:[%s1 + $0x850] sm:$0xff]
    %v295 = vld [vmem:[%s1 + $0x858] sm:$0xff]
    %v296 = vld [vmem:[%s1 + $0x860] sm:$0xff]
    %v297 = vld [vmem:[%s1 + $0x868] sm:$0xff]
    %v298 = vld [vmem:[%s1 + $0x870] sm:$0xff]
    %v299 = vld [vmem:[%s1 + $0x878] sm:$0xff]
    %v300 = vld [vmem:[%s1 + $0x880] sm:$0xff]
    %v301 = vld [vmem:[%s1 + $0x888] sm:$0xff]
    %v302 = vld [vmem:[%s1 + $0x890] sm:$0xff]
    %v303 = vld [vmem:[%s1 + $0x898] sm:$0xff]
    %v304 = vld [vmem:[%s1 + $0x8a0] sm:$0xff]
    %v305 = vld [vmem:[%s1 + $0x8a8] sm:$0xff]
    %v306 = vld [vmem:[%s1 + $0x8b0] sm:$0xff]
    %v307 = vld [vmem:[%s1 + $0x8b8] sm:$0xff]
    %v308 = vld [vmem:[%s1 + $0x8c0] sm:$0xff]
    %v309 = vld [vmem:[%s1 + $0x8c8] sm:$0xff]
    %v310 = vld [vmem:[%s1 + $0x8d0] sm:$0xff]
    %v311 = vld [vmem:[%s1 + $0x8d8] sm:$0xff]
    %v312 = vld [vmem:[%s1 + $0x8e0] sm:$0xff]
    %v313 = vld [vmem:[%s1 + $0x8e8] sm:$0xff]
    %v314 = vld [vmem:[%s1 + $0x8f0] sm:$0xff]
    %v315 = vld [vmem:[%s1 + $0x8f8] sm:$0xff]
    %v316 = vld [vmem:[%s1 + $0x900] sm:$0xff]
    %v317 = vld [vmem:[%s1 + $0x908] sm:$0xff]
    %v318 = vld [vmem:[%s1 + $0x910] sm:$0xff]
    %v319 = vld [vmem:[%s1 + $0x918] sm:$0xff]
    %v320 = vld [vmem:[%s1 + $0x920] sm:$0xff]
    %v321 = vld [vmem:[%s1 + $0x928] sm:$0xff]
    %v322 = vld [vmem:[%s1 + $0x930] sm:$0xff]
    %v323 = vld [vmem:[%s1 + $0x938] sm:$0xff]
    %v324 = vld [vmem:[%s1 + $0x940] sm:$0xff]
    %v325 = vld [vmem:[%s1 + $0x948] sm:$0xff]
    %v326 = vld [vmem:[%s1 + $0x950] sm:$0xff]
    %v327 = vld [vmem:[%s1 + $0x958] sm:$0xff]
    %v328 = vld [vmem:[%s1 + $0x960] sm:$0xff]
    %v329 = vld [vmem:[%s1 + $0x968] sm:$0xff]
    %v330 = vld [vmem:[%s1 + $0x970] sm:$0xff]
    %v331 = vld [vmem:[%s1 + $0x978] sm:$0xff]
    %v332 = vld [vmem:[%s1 + $0x980] sm:$0xff]
    %v333 = vld [vmem:[%s1 + $0x988] sm:$0xff]
    %v334 = vld [vmem:[%s1 + $0x990] sm:$0xff]
    %v335 = vld [vmem:[%s1 + $0x998] sm:$0xff]
    %v336 = vld [vmem:[%s1 + $0x9a0] sm:$0xff]
    %v337 = vld [vmem:[%s1 + $0x9a8] sm:$0xff]
    %v338 = vld [vmem:[%s1 + $0x9b0] sm:$0xff]
    %v339 = vld [vmem:[%s1 + $0x9b8] sm:$0xff]
    %v340 = vld [vmem:[%s1 + $0x9c0] sm:$0xff]
    %v341 = vld [vmem:[%s1 + $0x9c8] sm:$0xff]
    %v342 = vld [vmem:[%s1 + $0x9d0] sm:$0xff]
    %v343 = vld [vmem:[%s1 + $0x9d8] sm:$0xff]
    %v344 = vld [vmem:[%s1 + $0x9e0] sm:$0xff]
    %v345 = vld [vmem:[%s1 + $0x9e8] sm:$0xff]
    %v346 = vld [vmem:[%s1 + $0x9f0] sm:$0xff]
    %v347 = vld [vmem:[%s1 + $0x9f8] sm:$0xff]
    %v348 = vld [vmem:[%s1 + $0xa00] sm:$0xff]
    %v349 = vld [vmem:[%s1 + $0xa08] sm:$0xff]
    %v350 = vld [vmem:[%s1 + $0xa10] sm:$0xff]
    %v351 = vld [vmem:[%s1 + $0xa18] sm:$0xff]
    %v352 = vld [vmem:[%s1 + $0xa20] sm:$0xff]
    %v353 = vld [vmem:[%s1 + $0xa28] sm:$0xff]
    %v354 = vld [vmem:[%s1 + $0xa30] sm:$0xff]
    %v355 = vld [vmem:[%s1 + $0xa38] sm:$0xff]
    %v356 = vld [vmem:[%s1 + $0xa40] sm:$0xff]
    %v357 = vld [vmem:[%s1 + $0xa48] sm:$0xff]
    %v358 = vld [vmem:[%s1 + $0xa50] sm:$0xff]
    %v359 = vld [vmem:[%s1 + $0xa58] sm:$0xff]
    %v360 = vld [vmem:[%s1 + $0xa60] sm:$0xff]
    %v361 = vld [vmem:[%s1 + $0xa68] sm:$0xff]
    %v362 = vld [vmem:[%s1 + $0xa70] sm:$0xff]
    %v363 = vld [vmem:[%s1 + $0xa78] sm:$0xff]
    %v364 = vld [vmem:[%s1 + $0xa80] sm:$0xff]
    %v365 = vld [vmem:[%s1 + $0xa88] sm:$0xff]
    %v366 = vld [vmem:[%s1 + $0xa90] sm:$0xff]
    %v367 = vld [vmem:[%s1 + $0xa98] sm:$0xff]
    %v368 = vld [vmem:[%s1 + $0xaa0] sm:$0xff]
    %v369 = vld [vmem:[%s1 + $0xaa8] sm:$0xff]
    %v370 = vld [vmem:[%s1 + $0xab0] sm:$0xff]
    %v371 = vld [vmem:[%s1 + $0xab8] sm:$0xff]
    %v372 = vld [vmem:[%s1 + $0xac0] sm:$0xff]
    %v373 = vld [vmem:[%s1 + $0xac8] sm:$0xff]
    %v374 = vld [vmem:[%s1 + $0xad0] sm:$0xff]
    %v375 = vld [vmem:[%s1 + $0xad8] sm:$0xff]
    %v376 = vld [vmem:[%s1 + $0xae0] sm:$0xff]
    %v377 = vld [vmem:[%s1 + $0xae8] sm:$0xff]
    %v378 = vld [vmem:[%s1 + $0xaf0] sm:$0xff]
    %v379 = vld [vmem:[%s1 + $0xaf8] sm:$0xff]
    %v380 = vld [vmem:[%s1 + $0xb00] sm:$0xff]
    %v381 = vld [vmem:[%s1 + $0xb08] sm:$0xff]
    %v382 = vld [vmem:[%s1 + $0xb10] sm:$0xff]
    %v383 = vld [vmem:[%s1 + $0xb18] sm:$0xff]
    %v384 = vld [vmem:[%s1 + $0xb20] sm:$0xff]
    %v385 = vld [vmem:[%s1 + $0xb28] sm:$0xff]
    %v386 = vld [vmem:[%s1 + $0xb30] sm:$0xff]
    %v387 = vld [vmem:[%s1 + $0xb38] sm:$0xff]
    %v388 = vld [vmem:[%s1 + $0xb40] sm:$0xff]
    %v389 = vld [vmem:[%s1 + $0xb48] sm:$0xff]
    %v390 = vld [vmem:[%s1 + $0xb50] sm:$0xff]
    %v391 = vld [vmem:[%s1 + $0xb58] sm:$0xff]
    %v392 = vld [vmem:[%s1 + $0xb60] sm:$0xff]
    %v393 = vld [vmem:[%s1 + $0xb68] sm:$0xff]
    %v394 = vld [vmem:[%s1 + $0xb70] sm:$0xff]
    %v395 = vld [vmem:[%s1 + $0xb78] sm:$0xff]
    %v396 = vld [vmem:[%s1 + $0xb80] sm:$0xff]
    %v397 = vld [vmem:[%s1 + $0xb88] sm:$0xff]
    %v398 = vld [vmem:[%s1 + $0xb90] sm:$0xff]
    %v399 = vld [vmem:[%s1 + $0xb98] sm:$0xff]
    %v400 = vld [vmem:[%s1 + $0xba0] sm:$0xff]
    %v401 = vld [vmem:[%s1 + $0xba8] sm:$0xff]
    %v402 = vld [vmem:[%s1 + $0xbb0] sm:$0xff]
    %v403 = vld [vmem:[%s1 + $0xbb8] sm:$0xff]
    %v404 = vld [vmem:[%s1 + $0xbc0] sm:$0xff]
    %v405 = vld [vmem:[%s1 + $0xbc8] sm:$0xff]
    %v406 = vld [vmem:[%s1 + $0xbd0] sm:$0xff]
    %v407 = vld [vmem:[%s1 + $0xbd8] sm:$0xff]
    %v408 = vld [vmem:[%s1 + $0xbe0] sm:$0xff]
    %v409 = vld [vmem:[%s1 + $0xbe8] sm:$0xff]
    %v410 = vld [vmem:[%s1 + $0xbf0] sm:$0xff]
    %v411 = vld [vmem:[%s1 + $0xbf8] sm:$0xff]
    %v412 = vld [vmem:[%s1 + $0xc00] sm:$0xff]
    %v413 = vld [vmem:[%s1 + $0xc08] sm:$0xff]
    %v414 = vld [vmem:[%s1 + $0xc10] sm:$0xff]
    %v415 = vld [vmem:[%s1 + $0xc18] sm:$0xff]
    %v416 = vld [vmem:[%s1 + $0xc20] sm:$0xff]
    %v417 = vld [vmem:[%s1 + $0xc28] sm:$0xff]
    %v418 = vld [vmem:[%s1 + $0xc30] sm:$0xff]
    %v419 = vld [vmem:[%s1 + $0xc38] sm:$0xff]
    %v420 = vld [vmem:[%s1 + $0xc40] sm:$0xff]
    %v421 = vld [vmem:[%s1 + $0xc48] sm:$0xff]
    %v422 = vld [vmem:[%s1 + $0xc50] sm:$0xff]
    %v423 = vld [vmem:[%s1 + $0xc58] sm:$0xff]
    %v424 = vld [vmem:[%s1 + $0xc60] sm:$0xff]
    %v425 = vld [vmem:[%s1 + $0xc68] sm:$0xff]
    %v426 = vld [vmem:[%s1 + $0xc70] sm:$0xff]
    %v427 = vld [vmem:[%s1 + $0xc78] sm:$0xff]
    %v428 = vld [vmem:[%s1 + $0xc80] sm:$0xff]
    %v429 = vld [vmem:[%s1 + $0xc88] sm:$0xff]
    %v430 = vld [vmem:[%s1 + $0xc90] sm:$0xff]
    %v431 = vld [vmem:[%s1 + $0xc98] sm:$0xff]
    %v432 = vld [vmem:[%s1 + $0xca0] sm:$0xff]
    %v433 = vld [vmem:[%s1 + $0xca8] sm:$0xff]
    %v434 = vld [vmem:[%s1 + $0xcb0] sm:$0xff]
    %v435 = vld [vmem:[%s1 + $0xcb8] sm:$0xff]
    %v436 = vld [vmem:[%s1 + $0xcc0] sm:$0xff]
    %v437 = vld [vmem:[%s1 + $0xcc8] sm:$0xff]
    %v438 = vld [vmem:[%s1 + $0xcd0] sm:$0xff]
    %v439 = vld [vmem:[%s1 + $0xcd8] sm:$0xff]
    %v440 = vld [vmem:[%s1 + $0xce0] sm:$0xff]
    %v441 = vld [vmem:[%s1 + $0xce8] sm:$0xff]
    %v442 = vld [vmem:[%s1 + $0xcf0] sm:$0xff]
    %v443 = vld [vmem:[%s1 + $0xcf8] sm:$0xff]
    %v444 = vld [vmem:[%s1 + $0xd00] sm:$0xff]
    %v445 = vld [vmem:[%s1 + $0xd08] sm:$0xff]
    %v446 = vld [vmem:[%s1 + $0xd10] sm:$0xff]
    %v447 = vld [vmem:[%s1 + $0xd18] sm:$0xff]
    %v448 = vld [vmem:[%s1 + $0xd20] sm:$0xff]
    %v449 = vld [vmem:[%s1 + $0xd28] sm:$0xff]
    %v450 = vld [vmem:[%s1 + $0xd30] sm:$0xff]
    %v451 = vld [vmem:[%s1 + $0xd38] sm:$0xff]
    %v452 = vld [vmem:[%s1 + $0xd40] sm:$0xff]
    %v453 = vld [vmem:[%s1 + $0xd48] sm:$0xff]
    %v454 = vld [vmem:[%s1 + $0xd50] sm:$0xff]
    %v455 = vld [vmem:[%s1 + $0xd58] sm:$0xff]
    %v456 = vld [vmem:[%s1 + $0xd60] sm:$0xff]
    %v457 = vld [vmem:[%s1 + $0xd68] sm:$0xff]
    %v458 = vld [vmem:[%s1 + $0xd70] sm:$0xff]
    %v459 = vld [vmem:[%s1 + $0xd78] sm:$0xff]
    %v460 = vld [vmem:[%s1 + $0xd80] sm:$0xff]
    %v461 = vld [vmem:[%s1 + $0xd88] sm:$0xff]
    %v462 = vld [vmem:[%s1 + $0xd90] sm:$0xff]
    %v463 = vld [vmem:[%s1 + $0xd98] sm:$0xff]
    %v464 = vld [vmem:[%s1 + $0xda0] sm:$0xff]
    %v465 = vld [vmem:[%s1 + $0xda8] sm:$0xff]
    %v466 = vld [vmem:[%s1 + $0xdb0] sm:$0xff]
    %v467 = vld [vmem:[%s1 + $0xdb8] sm:$0xff]
    %v468 = vld [vmem:[%s1 + $0xdc0] sm:$0xff]
    %v469 = vld [vmem:[%s1 + $0xdc8] sm:$0xff]
    %v470 = vld [vmem:[%s1 + $0xdd0] sm:$0xff]
    %v471 = vld [vmem:[%s1 + $0xdd8] sm:$0xff]
    %v472 = vld [vmem:[%s1 + $0xde0] sm:$0xff]
    %v473 = vld [vmem:[%s1 + $0xde8] sm:$0xff]
    %v474 = vld [vmem:[%s1 + $0xdf0] sm:$0xff]
    %v475 = vld [vmem:[%s1 + $0xdf8] sm:$0xff]
    %v476 = vld [vmem:[%s1 + $0xe00] sm:$0xff]
    %v477 = vld [vmem:[%s1 + $0xe08] sm:$0xff]
    %v478 = vld [vmem:[%s1 + $0xe10] sm:$0xff]
    %v479 = vld [vmem:[%s1 + $0xe18] sm:$0xff]
    %v480 = vld [vmem:[%s1 + $0xe20] sm:$0xff]
    %v481 = vld [vmem:[%s1 + $0xe28] sm:$0xff]
    %v482 = vld [vmem:[%s1 + $0xe30] sm:$0xff]
    %v483 = vld [vmem:[%s1 + $0xe38] sm:$0xff]
    %v484 = vld [vmem:[%s1 + $0xe40] sm:$0xff]
    %v485 = vld [vmem:[%s1 + $0xe48] sm:$0xff]
    %v486 = vld [vmem:[%s1 + $0xe50] sm:$0xff]
    %v487 = vld [vmem:[%s1 + $0xe58] sm:$0xff]
    %v488 = vld [vmem:[%s1 + $0xe60] sm:$0xff]
    %v489 = vld [vmem:[%s1 + $0xe68] sm:$0xff]
    %v490 = vld [vmem:[%s1 + $0xe70] sm:$0xff]
    %v491 = vld [vmem:[%s1 + $0xe78] sm:$0xff]
    %v492 = vld [vmem:[%s1 + $0xe80] sm:$0xff]
    %v493 = vld [vmem:[%s1 + $0xe88] sm:$0xff]
    %v494 = vld [vmem:[%s1 + $0xe90] sm:$0xff]
    %v495 = vld [vmem:[%s1 + $0xe98] sm:$0xff]
    %v496 = vld [vmem:[%s1 + $0xea0] sm:$0xff]
    %v497 = vld [vmem:[%s1 + $0xea8] sm:$0xff]
    %v498 = vld [vmem:[%s1 + $0xeb0] sm:$0xff]
    %v499 = vld [vmem:[%s1 + $0xeb8] sm:$0xff]
    %v500 = vld [vmem:[%s1 + $0xec0] sm:$0xff]
    %v501 = vld [vmem:[%s1 + $0xec8] sm:$0xff]
    %v502 = vld [vmem:[%s1 + $0xed0] sm:$0xff]
    %v503 = vld [vmem:[%s1 + $0xed8] sm:$0xff]
    %v504 = vld [vmem:[%s1 + $0xee0] sm:$0xff]
    %v505 = vld [vmem:[%s1 + $0xee8] sm:$0xff]
    %v506 = vld [vmem:[%s1 + $0xef0] sm:$0xff]
    %v507 = vld [vmem:[%s1 + $0xef8] sm:$0xff]
    %v508 = vld [vmem:[%s1 + $0xf00] sm:$0xff]
    %v509 = vld [vmem:[%s1 + $0xf08] sm:$0xff]
    %v510 = vld [vmem:[%s1 + $0xf10] sm:$0xff]
    %v511 = vld [vmem:[%s1 + $0xf18] sm:$0xff]
    %v512 = vld [vmem:[%s1 + $0xf20] sm:$0xff]
    %v513 = vld [vmem:[%s1 + $0xf28] sm:$0xff]
    %v514 = vld [vmem:[%s1 + $0xf30] sm:$0xff]
    %v515 = vld [vmem:[%s1 + $0xf38] sm:$0xff]
    %v516 = vld [vmem:[%s1 + $0xf40] sm:$0xff]
    %v517 = vld [vmem:[%s1 + $0xf48] sm:$0xff]
    %v518 = vld [vmem:[%s1 + $0xf50] sm:$0xff]
    %v519 = vld [vmem:[%s1 + $0xf58] sm:$0xff]
    %v520 = vld [vmem:[%s1 + $0xf60] sm:$0xff]
    %v521 = vld [vmem:[%s1 + $0xf68] sm:$0xff]
    %v522 = vld [vmem:[%s1 + $0xf70] sm:$0xff]
    %v523 = vld [vmem:[%s1 + $0xf78] sm:$0xff]
    %v524 = vld [vmem:[%s1 + $0xf80] sm:$0xff]
    %v525 = vld [vmem:[%s1 + $0xf88] sm:$0xff]
    %v526 = vld [vmem:[%s1 + $0xf90] sm:$0xff]
    %v527 = vld [vmem:[%s1 + $0xf98] sm:$0xff]
    %v528 = vld [vmem:[%s1 + $0xfa0] sm:$0xff]
    %v529 = vld [vmem:[%s1 + $0xfa8] sm:$0xff]
    %v530 = vld [vmem:[%s1 + $0xfb0] sm:$0xff]
    %v531 = vld [vmem:[%s1 + $0xfb8] sm:$0xff]
    %v532 = vld [vmem:[%s1 + $0xfc0] sm:$0xff]
    %v533 = vld [vmem:[%s1 + $0xfc8] sm:$0xff]
    %v534 = vld [vmem:[%s1 + $0xfd0] sm:$0xff]
    %v535 = vld [vmem:[%s1 + $0xfd8] sm:$0xff]
    %v536 = vld [vmem:[%s1 + $0xfe0] sm:$0xff]
    %v537 = vld [vmem:[%s1 + $0xfe8] sm:$0xff]
    %v538 = vld [vmem:[%s1 + $0xff0] sm:$0xff]
    %v539 = vld [vmem:[%s1 + $0xff8] sm:$0xff]
    %v540 = vld [vmem:[%s1 + $0x1000] sm:$0xff]
    %v541 = vld [vmem:[%s1 + $0x1008] sm:$0xff]
    %v542 = vld [vmem:[%s1 + $0x1010] sm:$0xff]
    %v543 = vld [vmem:[%s1 + $0x1018] sm:$0xff]
    %v544 = vld [vmem:[%s1 + $0x1020] sm:$0xff]
    %v545 = vld [vmem:[%s1 + $0x1028] sm:$0xff]
    %v546 = vld [vmem:[%s1 + $0x1030] sm:$0xff]
    %v547 = vld [vmem:[%s1 + $0x1038] sm:$0xff]
    %v548 = vld [vmem:[%s1 + $0x1040] sm:$0xff]
    %v549 = vld [vmem:[%s1 + $0x1048] sm:$0xff]
    %v550 = vld [vmem:[%s1 + $0x1050] sm:$0xff]
    %v551 = vld [vmem:[%s1 + $0x1058] sm:$0xff]
    %v552 = vld [vmem:[%s1 + $0x1060] sm:$0xff]
    %v553 = vld [vmem:[%s1 + $0x1068] sm:$0xff]
    %v554 = vld [vmem:[%s1 + $0x1070] sm:$0xff]
    %v555 = vld [vmem:[%s1 + $0x1078] sm:$0xff]
    %v556 = vld [vmem:[%s1 + $0x1080] sm:$0xff]
    %v557 = vld [vmem:[%s1 + $0x1088] sm:$0xff]
    %v558 = vld [vmem:[%s1 + $0x1090] sm:$0xff]
    %v559 = vld [vmem:[%s1 + $0x1098] sm:$0xff]
    %v560 = vld [vmem:[%s1 + $0x10a0] sm:$0xff]
    %v561 = vld [vmem:[%s1 + $0x10a8] sm:$0xff]
    %v562 = vld [vmem:[%s1 + $0x10b0] sm:$0xff]
    %v563 = vld [vmem:[%s1 + $0x10b8] sm:$0xff]
    %v564 = vld [vmem:[%s1 + $0x10c0] sm:$0xff]
    %v565 = vld [vmem:[%s1 + $0x10c8] sm:$0xff]
    %v566 = vld [vmem:[%s1 + $0x10d0] sm:$0xff]
    %v567 = vld [vmem:[%s1 + $0x10d8] sm:$0xff]
    %v568 = vld [vmem:[%s1 + $0x10e0] sm:$0xff]
    %v569 = vld [vmem:[%s1 + $0x10e8] sm:$0xff]
    %v570 = vld [vmem:[%s1 + $0x10f0] sm:$0xff]
    %v571 = vld [vmem:[%s1 + $0x10f8] sm:$0xff]
    %v572 = vld [vmem:[%s1 + $0x1100] sm:$0xff]
    %v573 = vld [vmem:[%s1 + $0x1108] sm:$0xff]
    %v574 = vld [vmem:[%s1 + $0x1110] sm:$0xff]
    %v575 = vld [vmem:[%s1 + $0x1118] sm:$0xff]
    %v576 = vld [vmem:[%s1 + $0x1120] sm:$0xff]
    %v577 = vld [vmem:[%s1 + $0x1128] sm:$0xff]
    %v578 = vld [vmem:[%s1 + $0x1130] sm:$0xff]
    %v579 = vld [vmem:[%s1 + $0x1138] sm:$0xff]
    %v580 = vld [vmem:[%s1 + $0x1140] sm:$0xff]
    %v581 = vld [vmem:[%s1 + $0x1148] sm:$0xff]
    %v582 = vld [vmem:[%s1 + $0x1150] sm:$0xff]
    %v583 = vld [vmem:[%s1 + $0x1158] sm:$0xff]
    %v584 = vld [vmem:[%s1 + $0x1160] sm:$0xff]
    %v585 = vld [vmem:[%s1 + $0x1168] sm:$0xff]
    %v586 = vld [vmem:[%s1 + $0x1170] sm:$0xff]
    %v587 = vld [vmem:[%s1 + $0x1178] sm:$0xff]
    %v588 = vld [vmem:[%s1 + $0x1180] sm:$0xff]
    %v589 = vld [vmem:[%s1 + $0x1188] sm:$0xff]
    %v590 = vld [vmem:[%s1 + $0x1190] sm:$0xff]
    %v591 = vld [vmem:[%s1 + $0x1198] sm:$0xff]
    %v592 = vld [vmem:[%s1 + $0x11a0] sm:$0xff]
    %v593 = vld [vmem:[%s1 + $0x11a8] sm:$0xff]
    %v594 = vld [vmem:[%s1 + $0x11b0] sm:$0xff]
    %v595 = vld [vmem:[%s1 + $0x11b8] sm:$0xff]
    %v596 = vld [vmem:[%s1 + $0x11c0] sm:$0xff]
    %v597 = vld [vmem:[%s1 + $0x11c8] sm:$0xff]
    %v598 = vld [vmem:[%s1 + $0x11d0] sm:$0xff]
    %v599 = vld [vmem:[%s1 + $0x11d8] sm:$0xff]
    %v600 = vld [vmem:[%s1 + $0x11e0] sm:$0xff]
    %v601 = vld [vmem:[%s1 + $0x11e8] sm:$0xff]
    %v602 = vld [vmem:[%s1 + $0x11f0] sm:$0xff]
    %v603 = vld [vmem:[%s1 + $0x11f8] sm:$0xff]
    %v604 = vld [vmem:[%s1 + $0x1200] sm:$0xff]
    %v605 = vld [vmem:[%s1 + $0x1208] sm:$0xff]
    %v606 = vld [vmem:[%s1 + $0x1210] sm:$0xff]
    %v607 = vld [vmem:[%s1 + $0x1218] sm:$0xff]
    %v608 = vld [vmem:[%s1 + $0x1220] sm:$0xff]
    %v609 = vld [vmem:[%s1 + $0x1228] sm:$0xff]
    %v610 = vld [vmem:[%s1 + $0x1230] sm:$0xff]
    %v611 = vld [vmem:[%s1 + $0x1238] sm:$0xff]
    %v612 = vld [vmem:[%s1 + $0x1240] sm:$0xff]
    %v613 = vld [vmem:[%s1 + $0x1248] sm:$0xff]
    %v614 = vld [vmem:[%s1 + $0x1250] sm:$0xff]
    %v615 = vld [vmem:[%s1 + $0x1258] sm:$0xff]
    %v616 = vld [vmem:[%s1 + $0x1260] sm:$0xff]
    %v617 = vld [vmem:[%s1 + $0x1268] sm:$0xff]
    %v618 = vld [vmem:[%s1 + $0x1270] sm:$0xff]
    %v619 = vld [vmem:[%s1 + $0x1278] sm:$0xff]
    %v620 = vld [vmem:[%s1 + $0x1280] sm:$0xff]
    %v621 = vld [vmem:[%s1 + $0x1288] sm:$0xff]
    %v622 = vld [vmem:[%s1 + $0x1290] sm:$0xff]
    %v623 = vld [vmem:[%s1 + $0x1298] sm:$0xff]
    %v624 = vld [vmem:[%s1 + $0x12a0] sm:$0xff]
    %v625 = vld [vmem:[%s1 + $0x12a8] sm:$0xff]
    %v626 = vld [vmem:[%s1 + $0x12b0] sm:$0xff]
    %v627 = vld [vmem:[%s1 + $0x12b8] sm:$0xff]
    %v628 = vld [vmem:[%s1 + $0x12c0] sm:$0xff]
    %v629 = vld [vmem:[%s1 + $0x12c8] sm:$0xff]
    %v630 = vld [vmem:[%s1 + $0x12d0] sm:$0xff]
    %v631 = vld [vmem:[%s1 + $0x12d8] sm:$0xff]
    %v632 = vld [vmem:[%s1 + $0x12e0] sm:$0xff]
    %v633 = vld [vmem:[%s1 + $0x12e8] sm:$0xff]
    %v634 = vld [vmem:[%s1 + $0x12f0] sm:$0xff]
    %v635 = vld [vmem:[%s1 + $0x12f8] sm:$0xff]
    %v636 = vld [vmem:[%s1 + $0x1300] sm:$0xff]
    %v637 = vld [vmem:[%s1 + $0x1308] sm:$0xff]
    %v638 = vld [vmem:[%s1 + $0x1310] sm:$0xff]
    %v639 = vld [vmem:[%s1 + $0x1318] sm:$0xff]
    %v640 = vld [vmem:[%s1 + $0x1320] sm:$0xff]
    %v641 = vld [vmem:[%s1 + $0x1328] sm:$0xff]
    %v642 = vld [vmem:[%s1 + $0x1330] sm:$0xff]
    %v643 = vld [vmem:[%s1 + $0x1338] sm:$0xff]
    %v644 = vld [vmem:[%s1 + $0x1340] sm:$0xff]
    %v645 = vld [vmem:[%s1 + $0x1348] sm:$0xff]
    %v646 = vld [vmem:[%s1 + $0x1350] sm:$0xff]
    %v647 = vld [vmem:[%s1 + $0x1358] sm:$0xff]
    %v648 = vld [vmem:[%s1 + $0x1360] sm:$0xff]
    %v649 = vld [vmem:[%s1 + $0x1368] sm:$0xff]
    %v650 = vld [vmem:[%s1 + $0x1370] sm:$0xff]
    %v651 = vld [vmem:[%s1 + $0x1378] sm:$0xff]
    %v652 = vld [vmem:[%s1 + $0x1380] sm:$0xff]
    %v653 = vld [vmem:[%s1 + $0x1388] sm:$0xff]
    %v654 = vld [vmem:[%s1 + $0x1390] sm:$0xff]
    %v655 = vld [vmem:[%s1 + $0x1398] sm:$0xff]
    %v656 = vld [vmem:[%s1 + $0x13a0] sm:$0xff]
    %v657 = vld [vmem:[%s1 + $0x13a8] sm:$0xff]
    %v658 = vld [vmem:[%s1 + $0x13b0] sm:$0xff]
    %v659 = vld [vmem:[%s1 + $0x13b8] sm:$0xff]
    %v660 = vld [vmem:[%s1 + $0x13c0] sm:$0xff]
    %v661 = vld [vmem:[%s1 + $0x13c8] sm:$0xff]
    %v662 = vld [vmem:[%s1 + $0x13d0] sm:$0xff]
    %v663 = vld [vmem:[%s1 + $0x13d8] sm:$0xff]
    %v664 = vld [vmem:[%s1 + $0x13e0] sm:$0xff]
    %v665 = vld [vmem:[%s1 + $0x13e8] sm:$0xff]
    %v666 = vld [vmem:[%s1 + $0x13f0] sm:$0xff]
    %v667 = vld [vmem:[%s1 + $0x13f8] sm:$0xff]
    %v668 = vld [vmem:[%s1 + $0x1400] sm:$0xff]
    %v669 = vld [vmem:[%s1 + $0x1408] sm:$0xff]
    %v670 = vld [vmem:[%s1 + $0x1410] sm:$0xff]
    %v671 = vld [vmem:[%s1 + $0x1418] sm:$0xff]
    %v672 = vld [vmem:[%s1 + $0x1420] sm:$0xff]
    %v673 = vld [vmem:[%s1 + $0x1428] sm:$0xff]
    %v674 = vld [vmem:[%s1 + $0x1430] sm:$0xff]
    %v675 = vld [vmem:[%s1 + $0x1438] sm:$0xff]
    %v676 = vld [vmem:[%s1 + $0x1440] sm:$0xff]
    %v677 = vld [vmem:[%s1 + $0x1448] sm:$0xff]
    %v678 = vld [vmem:[%s1 + $0x1450] sm:$0xff]
    %v679 = vld [vmem:[%s1 + $0x1458] sm:$0xff]
    %v680 = vld [vmem:[%s1 + $0x1460] sm:$0xff]
    %v681 = vld [vmem:[%s1 + $0x1468] sm:$0xff]
    %v682 = vld [vmem:[%s1 + $0x1470] sm:$0xff]
    %v683 = vld [vmem:[%s1 + $0x1478] sm:$0xff]
    %v684 = vld [vmem:[%s1 + $0x1480] sm:$0xff]
    %v685 = vld [vmem:[%s1 + $0x1488] sm:$0xff]
    %v686 = vld [vmem:[%s1 + $0x1490] sm:$0xff]
    %v687 = vld [vmem:[%s1 + $0x1498] sm:$0xff]
    %v688 = vld [vmem:[%s1 + $0x14a0] sm:$0xff]
    %v689 = vld [vmem:[%s1 + $0x14a8] sm:$0xff]
    %v690 = vld [vmem:[%s1 + $0x14b0] sm:$0xff]
    %v691 = vld [vmem:[%s1 + $0x14b8] sm:$0xff]
    %v692 = vld [vmem:[%s1 + $0x14c0] sm:$0xff]
    %v693 = vld [vmem:[%s1 + $0x14c8] sm:$0xff]
    %v694 = vld [vmem:[%s1 + $0x14d0] sm:$0xff]
    %v695 = vld [vmem:[%s1 + $0x14d8] sm:$0xff]
    %v696 = vld [vmem:[%s1 + $0x14e0] sm:$0xff]
    %v697 = vld [vmem:[%s1 + $0x14e8] sm:$0xff]
    %v698 = vld [vmem:[%s1 + $0x14f0] sm:$0xff]
    %v699 = vld [vmem:[%s1 + $0x14f8] sm:$0xff]
    %v700 = vld [vmem:[%s1 + $0x1500] sm:$0xff]
    %v701 = vld [vmem:[%s1 + $0x1508] sm:$0xff]
    %v702 = vld [vmem:[%s1 + $0x1510] sm:$0xff]
    %v703 = vld [vmem:[%s1 + $0x1518] sm:$0xff]
    %v704 = vld [vmem:[%s1 + $0x1520] sm:$0xff]
    %v705 = vld [vmem:[%s1 + $0x1528] sm:$0xff]
    %v706 = vld [vmem:[%s1 + $0x1530] sm:$0xff]
    %v707 = vld [vmem:[%s1 + $0x1538] sm:$0xff]
    %v708 = vld [vmem:[%s1 + $0x1540] sm:$0xff]
    %v709 = vld [vmem:[%s1 + $0x1548] sm:$0xff]
    %v710 = vld [vmem:[%s1 + $0x1550] sm:$0xff]
    %v711 = vld [vmem:[%s1 + $0x1558] sm:$0xff]
    %v712 = vld [vmem:[%s1 + $0x1560] sm:$0xff]
    %v713 = vld [vmem:[%s1 + $0x1568] sm:$0xff]
    %v714 = vld [vmem:[%s1 + $0x1570] sm:$0xff]
    %v715 = vld [vmem:[%s1 + $0x1578] sm:$0xff]
    %v716 = vld [vmem:[%s1 + $0x1580] sm:$0xff]
    %v717 = vld [vmem:[%s1 + $0x1588] sm:$0xff]
    %v718 = vld [vmem:[%s1 + $0x1590] sm:$0xff]
    %v719 = vld [vmem:[%s1 + $0x1598] sm:$0xff]
    %v720 = vld [vmem:[%s1 + $0x15a0] sm:$0xff]
    %v721 = vld [vmem:[%s1 + $0x15a8] sm:$0xff]
    %v722 = vld [vmem:[%s1 + $0x15b0] sm:$0xff]
    %v723 = vld [vmem:[%s1 + $0x15b8] sm:$0xff]
    %v724 = vld [vmem:[%s1 + $0x15c0] sm:$0xff]
    %v725 = vld [vmem:[%s1 + $0x15c8] sm:$0xff]
    %v726 = vld [vmem:[%s1 + $0x15d0] sm:$0xff]
    %v727 = vld [vmem:[%s1 + $0x15d8] sm:$0xff]
    %v728 = vld [vmem:[%s1 + $0x15e0] sm:$0xff]
    %v729 = vld [vmem:[%s1 + $0x15e8] sm:$0xff]
    %v730 = vld [vmem:[%s1 + $0x15f0] sm:$0xff]
    %v731 = vld [vmem:[%s1 + $0x15f8] sm:$0xff]
    %v732 = vld [vmem:[%s1 + $0x1600] sm:$0xff]
    %v733 = vld [vmem:[%s1 + $0x1608] sm:$0xff]
    %v734 = vld [vmem:[%s1 + $0x1610] sm:$0xff]
    %v735 = vld [vmem:[%s1 + $0x1618] sm:$0xff]
    %v736 = vld [vmem:[%s1 + $0x1620] sm:$0xff]
    %v737 = vld [vmem:[%s1 + $0x1628] sm:$0xff]
    %v738 = vld [vmem:[%s1 + $0x1630] sm:$0xff]
    %v739 = vld [vmem:[%s1 + $0x1638] sm:$0xff]
    %v740 = vld [vmem:[%s1 + $0x1640] sm:$0xff]
    %v741 = vld [vmem:[%s1 + $0x1648] sm:$0xff]
    %v742 = vld [vmem:[%s1 + $0x1650] sm:$0xff]
    %v743 = vld [vmem:[%s1 + $0x1658] sm:$0xff]
    %v744 = vld [vmem:[%s1 + $0x1660] sm:$0xff]
    %v745 = vld [vmem:[%s1 + $0x1668] sm:$0xff]
    %v746 = vld [vmem:[%s1 + $0x1670] sm:$0xff]
    %v747 = vld [vmem:[%s1 + $0x1678] sm:$0xff]
    %v748 = vld [vmem:[%s1 + $0x1680] sm:$0xff]
    %v749 = vld [vmem:[%s1 + $0x1688] sm:$0xff]
    %v750 = vld [vmem:[%s1 + $0x1690] sm:$0xff]
    %v751 = vld [vmem:[%s1 + $0x1698] sm:$0xff]
    %v752 = vld [vmem:[%s1 + $0x16a0] sm:$0xff]
    %v753 = vld [vmem:[%s1 + $0x16a8] sm:$0xff]
    %v754 = vld [vmem:[%s1 + $0x16b0] sm:$0xff]
    %v755 = vld [vmem:[%s1 + $0x16b8] sm:$0xff]
    %v756 = vld [vmem:[%s1 + $0x16c0] sm:$0xff]
    %v757 = vld [vmem:[%s1 + $0x16c8] sm:$0xff]
    %v758 = vld [vmem:[%s1 + $0x16d0] sm:$0xff]
    %v759 = vld [vmem:[%s1 + $0x16d8] sm:$0xff]
    %v760 = vld [vmem:[%s1 + $0x16e0] sm:$0xff]
    %v761 = vld [vmem:[%s1 + $0x16e8] sm:$0xff]
    %v762 = vld [vmem:[%s1 + $0x16f0] sm:$0xff]
    %v763 = vld [vmem:[%s1 + $0x16f8] sm:$0xff]
    %v764 = vld [vmem:[%s1 + $0x1700] sm:$0xff]
    %v765 = vld [vmem:[%s1 + $0x1708] sm:$0xff]
    %v766 = vld [vmem:[%s1 + $0x1710] sm:$0xff]
    %v767 = vld [vmem:[%s1 + $0x1718] sm:$0xff]
    %v768 = vld [vmem:[%s1 + $0x1720] sm:$0xff]
    %v769 = vld [vmem:[%s1 + $0x1728] sm:$0xff]
    %v770 = vld [vmem:[%s1 + $0x1730] sm:$0xff]
    %v771 = vld [vmem:[%s1 + $0x1738] sm:$0xff]
    %v772 = vld [vmem:[%s1 + $0x1740] sm:$0xff]
    %v773 = vld [vmem:[%s1 + $0x1748] sm:$0xff]
    %v774 = vld [vmem:[%s1 + $0x1750] sm:$0xff]
    %v775 = vld [vmem:[%s1 + $0x1758] sm:$0xff]
    %v776 = vld [vmem:[%s1 + $0x1760] sm:$0xff]
    %v777 = vld [vmem:[%s1 + $0x1768] sm:$0xff]
    %v778 = vld [vmem:[%s1 + $0x1770] sm:$0xff]
    %v779 = vld [vmem:[%s1 + $0x1778] sm:$0xff]
    %v780 = vld [vmem:[%s1 + $0x1780] sm:$0xff]
    %v781 = vld [vmem:[%s1 + $0x1788] sm:$0xff]
    %v782 = vld [vmem:[%s1 + $0x1790] sm:$0xff]
    %v783 = vld [vmem:[%s1 + $0x1798] sm:$0xff]
    %v784 = vld [vmem:[%s1 + $0x17a0] sm:$0xff]
    %v785 = vld [vmem:[%s1 + $0x17a8] sm:$0xff]
    %v786 = vld [vmem:[%s1 + $0x17b0] sm:$0xff]
    %v787 = vld [vmem:[%s1 + $0x17b8] sm:$0xff]
    %v788 = vld [vmem:[%s1 + $0x17c0] sm:$0xff]
    %v789 = vld [vmem:[%s1 + $0x17c8] sm:$0xff]
    %v790 = vld [vmem:[%s1 + $0x17d0] sm:$0xff]
    %v791 = vld [vmem:[%s1 + $0x17d8] sm:$0xff]
    %v792 = vld [vmem:[%s1 + $0x17e0] sm:$0xff]
    %v793 = vld [vmem:[%s1 + $0x17e8] sm:$0xff]
    %v794 = vld [vmem:[%s1 + $0x17f0] sm:$0xff]
    %v795 = vld [vmem:[%s1 + $0x17f8] sm:$0xff]
    %v796 = vld [vmem:[%s1 + $0x1800] sm:$0xff]
    %v797 = vld [vmem:[%s1 + $0x1808] sm:$0xff]
    %v798 = vld [vmem:[%s1 + $0x1810] sm:$0xff]
    %v799 = vld [vmem:[%s1 + $0x1818] sm:$0xff]
    %v800 = vld [vmem:[%s1 + $0x1820] sm:$0xff]
    %v801 = vld [vmem:[%s1 + $0x1828] sm:$0xff]
    %v802 = vld [vmem:[%s1 + $0x1830] sm:$0xff]
    %v803 = vld [vmem:[%s1 + $0x1838] sm:$0xff]
    %v804 = vld [vmem:[%s1 + $0x1840] sm:$0xff]
    %v805 = vld [vmem:[%s1 + $0x1848] sm:$0xff]
    %v806 = vld [vmem:[%s1 + $0x1850] sm:$0xff]
    %v807 = vld [vmem:[%s1 + $0x1858] sm:$0xff]
    %v808 = vld [vmem:[%s1 + $0x1860] sm:$0xff]
    %v809 = vld [vmem:[%s1 + $0x1868] sm:$0xff]
    %v810 = vld [vmem:[%s1 + $0x1870] sm:$0xff]
    %v811 = vld [vmem:[%s1 + $0x1878] sm:$0xff]
    %v812 = vld [vmem:[%s1 + $0x1880] sm:$0xff]
    %v813 = vld [vmem:[%s1 + $0x1888] sm:$0xff]
    %v814 = vld [vmem:[%s1 + $0x1890] sm:$0xff]
    %v815 = vld [vmem:[%s1 + $0x1898] sm:$0xff]
    %v816 = vld [vmem:[%s1 + $0x18a0] sm:$0xff]
    %v817 = vld [vmem:[%s1 + $0x18a8] sm:$0xff]
    %v818 = vld [vmem:[%s1 + $0x18b0] sm:$0xff]
    %v819 = vld [vmem:[%s1 + $0x18b8] sm:$0xff]
    %v820 = vld [vmem:[%s1 + $0x18c0] sm:$0xff]
    %v821 = vld [vmem:[%s1 + $0x18c8] sm:$0xff]
    %v822 = vld [vmem:[%s1 + $0x18d0] sm:$0xff]
    %v823 = vld [vmem:[%s1 + $0x18d8] sm:$0xff]
    %v824 = vld [vmem:[%s1 + $0x18e0] sm:$0xff]
    %v825 = vld [vmem:[%s1 + $0x18e8] sm:$0xff]
    %v826 = vld [vmem:[%s1 + $0x18f0] sm:$0xff]
    %v827 = vld [vmem:[%s1 + $0x18f8] sm:$0xff]
    %v828 = vld [vmem:[%s1 + $0x1900] sm:$0xff]
    %v829 = vld [vmem:[%s1 + $0x1908] sm:$0xff]
    %v830 = vld [vmem:[%s1 + $0x1910] sm:$0xff]
    %v831 = vld [vmem:[%s1 + $0x1918] sm:$0xff]
    %v832 = vld [vmem:[%s1 + $0x1920] sm:$0xff]
    %v833 = vld [vmem:[%s1 + $0x1928] sm:$0xff]
    %v834 = vld [vmem:[%s1 + $0x1930] sm:$0xff]
    %v835 = vld [vmem:[%s1 + $0x1938] sm:$0xff]
    %v836 = vld [vmem:[%s1 + $0x1940] sm:$0xff]
    %v837 = vld [vmem:[%s1 + $0x1948] sm:$0xff]
    %v838 = vld [vmem:[%s1 + $0x1950] sm:$0xff]
    %v839 = vld [vmem:[%s1 + $0x1958] sm:$0xff]
    %v840 = vld [vmem:[%s1 + $0x1960] sm:$0xff]
    %v841 = vld [vmem:[%s1 + $0x1968] sm:$0xff]
    %v842 = vld [vmem:[%s1 + $0x1970] sm:$0xff]
    %v843 = vld [vmem:[%s1 + $0x1978] sm:$0xff]
    %v844 = vld [vmem:[%s1 + $0x1980] sm:$0xff]
    %v845 = vld [vmem:[%s1 + $0x1988] sm:$0xff]
    %v846 = vld [vmem:[%s1 + $0x1990] sm:$0xff]
    %v847 = vld [vmem:[%s1 + $0x1998] sm:$0xff]
    %v848 = vld [vmem:[%s1 + $0x19a0] sm:$0xff]
    %v849 = vld [vmem:[%s1 + $0x19a8] sm:$0xff]
    %v850 = vld [vmem:[%s1 + $0x19b0] sm:$0xff]
    %v851 = vld [vmem:[%s1 + $0x19b8] sm:$0xff]
    %v852 = vld [vmem:[%s1 + $0x19c0] sm:$0xff]
    %v853 = vld [vmem:[%s1 + $0x19c8] sm:$0xff]
    %v854 = vld [vmem:[%s1 + $0x19d0] sm:$0xff]
    %v855 = vld [vmem:[%s1 + $0x19d8] sm:$0xff]
    %v856 = vld [vmem:[%s1 + $0x19e0] sm:$0xff]
    %v857 = vld [vmem:[%s1 + $0x19e8] sm:$0xff]
    %v858 = vld [vmem:[%s1 + $0x19f0] sm:$0xff]
    %v859 = vld [vmem:[%s1 + $0x19f8] sm:$0xff]
    %v860 = vld [vmem:[%s1 + $0x1a00] sm:$0xff]
    %v861 = vld [vmem:[%s1 + $0x1a08] sm:$0xff]
    %v862 = vld [vmem:[%s1 + $0x1a10] sm:$0xff]
    %v863 = vld [vmem:[%s1 + $0x1a18] sm:$0xff]
    %v864 = vld [vmem:[%s1 + $0x1a20] sm:$0xff]
    %v865 = vld [vmem:[%s1 + $0x1a28] sm:$0xff]
    %v866 = vld [vmem:[%s1 + $0x1a30] sm:$0xff]
    %v867 = vld [vmem:[%s1 + $0x1a38] sm:$0xff]
    %v868 = vld [vmem:[%s1 + $0x1a40] sm:$0xff]
    %v869 = vld [vmem:[%s1 + $0x1a48] sm:$0xff]
    %v870 = vld [vmem:[%s1 + $0x1a50] sm:$0xff]
    %v871 = vld [vmem:[%s1 + $0x1a58] sm:$0xff]
    %v872 = vld [vmem:[%s1 + $0x1a60] sm:$0xff]
    %v873 = vld [vmem:[%s1 + $0x1a68] sm:$0xff]
    %v874 = vld [vmem:[%s1 + $0x1a70] sm:$0xff]
    %v875 = vld [vmem:[%s1 + $0x1a78] sm:$0xff]
    %v876 = vld [vmem:[%s1 + $0x1a80] sm:$0xff]
    %v877 = vld [vmem:[%s1 + $0x1a88] sm:$0xff]
    %v878 = vld [vmem:[%s1 + $0x1a90] sm:$0xff]
    %v879 = vld [vmem:[%s1 + $0x1a98] sm:$0xff]
    %v880 = vld [vmem:[%s1 + $0x1aa0] sm:$0xff]
    %v881 = vld [vmem:[%s1 + $0x1aa8] sm:$0xff]
    %v882 = vld [vmem:[%s1 + $0x1ab0] sm:$0xff]
    %v883 = vld [vmem:[%s1 + $0x1ab8] sm:$0xff]
    %v884 = vld [vmem:[%s1 + $0x1ac0] sm:$0xff]
    %v885 = vld [vmem:[%s1 + $0x1ac8] sm:$0xff]
    %v886 = vld [vmem:[%s1 + $0x1ad0] sm:$0xff]
    %v887 = vld [vmem:[%s1 + $0x1ad8] sm:$0xff]
    %v888 = vld [vmem:[%s1 + $0x1ae0] sm:$0xff]
    %v889 = vld [vmem:[%s1 + $0x1ae8] sm:$0xff]
    %v890 = vld [vmem:[%s1 + $0x1af0] sm:$0xff]
    %v891 = vld [vmem:[%s1 + $0x1af8] sm:$0xff]
    %v892 = vld [vmem:[%s1 + $0x1b00] sm:$0xff]
    %v893 = vld [vmem:[%s1 + $0x1b08] sm:$0xff]
    %v894 = vld [vmem:[%s1 + $0x1b10] sm:$0xff]
    %v895 = vld [vmem:[%s1 + $0x1b18] sm:$0xff]
    %v896 = vld [vmem:[%s1 + $0x1b20] sm:$0xff]
    %v897 = vld [vmem:[%s1 + $0x1b28] sm:$0xff]
    %v898 = vld [vmem:[%s1 + $0x1b30] sm:$0xff]
    %v899 = vld [vmem:[%s1 + $0x1b38] sm:$0xff]
    %v900 = vld [vmem:[%s1 + $0x1b40] sm:$0xff]
    %v901 = vld [vmem:[%s1 + $0x1b48] sm:$0xff]
    %v902 = vld [vmem:[%s1 + $0x1b50] sm:$0xff]
    %v903 = vld [vmem:[%s1 + $0x1b58] sm:$0xff]
    %v904 = vld [vmem:[%s1 + $0x1b60] sm:$0xff]
    %v905 = vld [vmem:[%s1 + $0x1b68] sm:$0xff]
    %v906 = vld [vmem:[%s1 + $0x1b70] sm:$0xff]
    %v907 = vld [vmem:[%s1 + $0x1b78] sm:$0xff]
    %v908 = vld [vmem:[%s1 + $0x1b80] sm:$0xff]
    %v909 = vld [vmem:[%s1 + $0x1b88] sm:$0xff]
    %v910 = vld [vmem:[%s1 + $0x1b90] sm:$0xff]
    %v911 = vld [vmem:[%s1 + $0x1b98] sm:$0xff]
    %v912 = vld [vmem:[%s1 + $0x1ba0] sm:$0xff]
    %v913 = vld [vmem:[%s1 + $0x1ba8] sm:$0xff]
    %v914 = vld [vmem:[%s1 + $0x1bb0] sm:$0xff]
    %v915 = vld [vmem:[%s1 + $0x1bb8] sm:$0xff]
    %v916 = vld [vmem:[%s1 + $0x1bc0] sm:$0xff]
    %v917 = vld [vmem:[%s1 + $0x1bc8] sm:$0xff]
    %v918 = vld [vmem:[%s1 + $0x1bd0] sm:$0xff]
    %v919 = vld [vmem:[%s1 + $0x1bd8] sm:$0xff]
    %v920 = vld [vmem:[%s1 + $0x1be0] sm:$0xff]
    %v921 = vld [vmem:[%s1 + $0x1be8] sm:$0xff]
    %v922 = vld [vmem:[%s1 + $0x1bf0] sm:$0xff]
    %v923 = vld [vmem:[%s1 + $0x1bf8] sm:$0xff]
    %v924 = vld [vmem:[%s1 + $0x1c00] sm:$0xff]
    %v925 = vld [vmem:[%s1 + $0x1c08] sm:$0xff]
    %v926 = vld [vmem:[%s1 + $0x1c10] sm:$0xff]
    %v927 = vld [vmem:[%s1 + $0x1c18] sm:$0xff]
    %v928 = vld [vmem:[%s1 + $0x1c20] sm:$0xff]
    %v929 = vld [vmem:[%s1 + $0x1c28] sm:$0xff]
    %v930 = vld [vmem:[%s1 + $0x1c30] sm:$0xff]
    %v931 = vld [vmem:[%s1 + $0x1c38] sm:$0xff]
    %v932 = vld [vmem:[%s1 + $0x1c40] sm:$0xff]
    %v933 = vld [vmem:[%s1 + $0x1c48] sm:$0xff]
    %v934 = vld [vmem:[%s1 + $0x1c50] sm:$0xff]
    %v935 = vld [vmem:[%s1 + $0x1c58] sm:$0xff]
    %v936 = vld [vmem:[%s1 + $0x1c60] sm:$0xff]
    %v937 = vld [vmem:[%s1 + $0x1c68] sm:$0xff]
    %v938 = vld [vmem:[%s1 + $0x1c70] sm:$0xff]
    %v939 = vld [vmem:[%s1 + $0x1c78] sm:$0xff]
    %v940 = vld [vmem:[%s1 + $0x1c80] sm:$0xff]
    %v941 = vld [vmem:[%s1 + $0x1c88] sm:$0xff]
    %v942 = vld [vmem:[%s1 + $0x1c90] sm:$0xff]
    %v943 = vld [vmem:[%s1 + $0x1c98] sm:$0xff]
    %v944 = vld [vmem:[%s1 + $0x1ca0] sm:$0xff]
    %v945 = vld [vmem:[%s1 + $0x1ca8] sm:$0xff]
    %v946 = vld [vmem:[%s1 + $0x1cb0] sm:$0xff]
    %v947 = vld [vmem:[%s1 + $0x1cb8] sm:$0xff]
    %v948 = vld [vmem:[%s1 + $0x1cc0] sm:$0xff]
    %v949 = vld [vmem:[%s1 + $0x1cc8] sm:$0xff]
    %v950 = vld [vmem:[%s1 + $0x1cd0] sm:$0xff]
    %v951 = vld [vmem:[%s1 + $0x1cd8] sm:$0xff]
    %v952 = vld [vmem:[%s1 + $0x1ce0] sm:$0xff]
    %v953 = vld [vmem:[%s1 + $0x1ce8] sm:$0xff]
    %v954 = vld [vmem:[%s1 + $0x1cf0] sm:$0xff]
    %v955 = vld [vmem:[%s1 + $0x1cf8] sm:$0xff]
    %v956 = vld [vmem:[%s1 + $0x1d00] sm:$0xff]
    %v957 = vld [vmem:[%s1 + $0x1d08] sm:$0xff]
    %v958 = vld [vmem:[%s1 + $0x1d10] sm:$0xff]
    %v959 = vld [vmem:[%s1 + $0x1d18] sm:$0xff]
    %v960 = vld [vmem:[%s1 + $0x1d20] sm:$0xff]
    %v961 = vld [vmem:[%s1 + $0x1d28] sm:$0xff]
    %v962 = vld [vmem:[%s1 + $0x1d30] sm:$0xff]
    %v963 = vld [vmem:[%s1 + $0x1d38] sm:$0xff]
    %v964 = vld [vmem:[%s1 + $0x1d40] sm:$0xff]
    %v965 = vld [vmem:[%s1 + $0x1d48] sm:$0xff]
    %v966 = vld [vmem:[%s1 + $0x1d50] sm:$0xff]
    %v967 = vld [vmem:[%s1 + $0x1d58] sm:$0xff]
    %v968 = vld [vmem:[%s1 + $0x1d60] sm:$0xff]
    %v969 = vld [vmem:[%s1 + $0x1d68] sm:$0xff]
    %v970 = vld [vmem:[%s1 + $0x1d70] sm:$0xff]
    %v971 = vld [vmem:[%s1 + $0x1d78] sm:$0xff]
    %v972 = vld [vmem:[%s1 + $0x1d80] sm:$0xff]
    %v973 = vld [vmem:[%s1 + $0x1d88] sm:$0xff]
    %v974 = vld [vmem:[%s1 + $0x1d90] sm:$0xff]
    %v975 = vld [vmem:[%s1 + $0x1d98] sm:$0xff]
    %v976 = vld [vmem:[%s1 + $0x1da0] sm:$0xff]
    %v977 = vld [vmem:[%s1 + $0x1da8] sm:$0xff]
    %v978 = vld [vmem:[%s1 + $0x1db0] sm:$0xff]
    %v979 = vld [vmem:[%s1 + $0x1db8] sm:$0xff]
    %v980 = vld [vmem:[%s1 + $0x1dc0] sm:$0xff]
    %v981 = vld [vmem:[%s1 + $0x1dc8] sm:$0xff]
    %v982 = vld [vmem:[%s1 + $0x1dd0] sm:$0xff]
    %v983 = vld [vmem:[%s1 + $0x1dd8] sm:$0xff]
    %v984 = vld [vmem:[%s1 + $0x1de0] sm:$0xff]
    %v985 = vld [vmem:[%s1 + $0x1de8] sm:$0xff]
    %v986 = vld [vmem:[%s1 + $0x1df0] sm:$0xff]
    %v987 = vld [vmem:[%s1 + $0x1df8] sm:$0xff]
    %v988 = vld [vmem:[%s1 + $0x1e00] sm:$0xff]
    %v989 = vld [vmem:[%s1 + $0x1e08] sm:$0xff]
    %v990 = vld [vmem:[%s1 + $0x1e10] sm:$0xff]
    %v991 = vld [vmem:[%s1 + $0x1e18] sm:$0xff]
    %v992 = vld [vmem:[%s1 + $0x1e20] sm:$0xff]
    %v993 = vld [vmem:[%s1 + $0x1e28] sm:$0xff]
    %v994 = vld [vmem:[%s1 + $0x1e30] sm:$0xff]
    %v995 = vld [vmem:[%s1 + $0x1e38] sm:$0xff]
    %v996 = vld [vmem:[%s1 + $0x1e40] sm:$0xff]
    %v997 = vld [vmem:[%s1 + $0x1e48] sm:$0xff]
    %v998 = vld [vmem:[%s1 + $0x1e50] sm:$0xff]
    %v999 = vld [vmem:[%s1 + $0x1e58] sm:$0xff]
    %v1000 = vld [vmem:[%s1 + $0x1e60] sm:$0xff]
    %v1001 = vld [vmem:[%s1 + $0x1e68] sm:$0xff]
    %v1002 = vld [vmem:[%s1 + $0x1e70] sm:$0xff]
    %v1003 = vld [vmem:[%s1 + $0x1e78] sm:$0xff]
    %v1004 = vld [vmem:[%s1 + $0x1e80] sm:$0xff]
    %v1005 = vld [vmem:[%s1 + $0x1e88] sm:$0xff]
    %v1006 = vld [vmem:[%s1 + $0x1e90] sm:$0xff]
    %v1007 = vld [vmem:[%s1 + $0x1e98] sm:$0xff]
    %v1008 = vld [vmem:[%s1 + $0x1ea0] sm:$0xff]
    %v1009 = vld [vmem:[%s1 + $0x1ea8] sm:$0xff]
    %v1010 = vld [vmem:[%s1 + $0x1eb0] sm:$0xff]
    %v1011 = vld [vmem:[%s1 + $0x1eb8] sm:$0xff]
    %v1012 = vld [vmem:[%s1 + $0x1ec0] sm:$0xff]
    %v1013 = vld [vmem:[%s1 + $0x1ec8] sm:$0xff]
    %v1014 = vld [vmem:[%s1 + $0x1ed0] sm:$0xff]
    %v1015 = vld [vmem:[%s1 + $0x1ed8] sm:$0xff]
    %v1016 = vld [vmem:[%s1 + $0x1ee0] sm:$0xff]
    %v1017 = vld [vmem:[%s1 + $0x1ee8] sm:$0xff]
    %v1018 = vld [vmem:[%s1 + $0x1ef0] sm:$0xff]
    %v1019 = vld [vmem:[%s1 + $0x1ef8] sm:$0xff]
    %v1020 = vld [vmem:[%s1 + $0x1f00] sm:$0xff]
    %v1021 = vld [vmem:[%s1 + $0x1f08] sm:$0xff]
    %v1022 = vld [vmem:[%s1 + $0x1f10] sm:$0xff]
    %v1023 = vld [vmem:[%s1 + $0x1f18] sm:$0xff]
    %v1024 = vld [vmem:[%s1 + $0x1f20] sm:$0xff]
    %v1025 = vld [vmem:[%s1 + $0x1f28] sm:$0xff]
    %v1026 = vld [vmem:[%s1 + $0x1f30] sm:$0xff]
    %v1027 = vld [vmem:[%s1 + $0x1f38] sm:$0xff]
    %v1028 = vld [vmem:[%s1 + $0x1f40] sm:$0xff]
    %v1029 = vld [vmem:[%s1 + $0x1f48] sm:$0xff]
    %v1030 = vld [vmem:[%s1 + $0x1f50] sm:$0xff]
    %v1031 = vld [vmem:[%s1 + $0x1f58] sm:$0xff]
    %v1032 = vld [vmem:[%s1 + $0x1f60] sm:$0xff]
    %v1033 = vld [vmem:[%s1 + $0x1f68] sm:$0xff]
    %v1034 = vld [vmem:[%s1 + $0x1f70] sm:$0xff]
    %v1035 = vld [vmem:[%s1 + $0x1f78] sm:$0xff]
    %v1036 = vld [vmem:[%s1 + $0x1f80] sm:$0xff]
    %v1037 = vld [vmem:[%s1 + $0x1f88] sm:$0xff]
    %v1038 = vld [vmem:[%s1 + $0x1f90] sm:$0xff]
    %v1039 = vld [vmem:[%s1 + $0x1f98] sm:$0xff]
    %v1040 = vld [vmem:[%s1 + $0x1fa0] sm:$0xff]
    %v1041 = vld [vmem:[%s1 + $0x1fa8] sm:$0xff]
    %v1042 = vld [vmem:[%s1 + $0x1fb0] sm:$0xff]
    %v1043 = vld [vmem:[%s1 + $0x1fb8] sm:$0xff]
    %v1044 = vld [vmem:[%s1 + $0x1fc0] sm:$0xff]
    %v1045 = vld [vmem:[%s1 + $0x1fc8] sm:$0xff]
    %v1046 = vld [vmem:[%s1 + $0x1fd0] sm:$0xff]
    %v1047 = vld [vmem:[%s1 + $0x1fd8] sm:$0xff]
    %v1048 = vld [vmem:[%s1 + $0x1fe0] sm:$0xff]
    %v1049 = vld [vmem:[%s1 + $0x1fe8] sm:$0xff]
    %v1050 = vld [vmem:[%s1 + $0x1ff0] sm:$0xff]
    %v1051 = vld [vmem:[%s1 + $0x1ff8] sm:$0xff]
    %v1052 = vld [vmem:[%s2] sm:$0xf]
    %v1054 = vlaneseq
    %v1055 = vshrl.u32 %v1054, 7
    %v1056 = vsub.s32 0, %v1055
    %v1057 = vrot.slane %v1052, %v1056
    %v1058 = vlaneseq
    %v1059 = vshrl.u32 %v1058, 7
    %v1060 = vsub.s32 1, %v1059
    %v1061 = vrot.slane %v1052, %v1060
    %v1062 = vlaneseq
    %v1063 = vshrl.u32 %v1062, 7
    %v1064 = vsub.s32 2, %v1063
    %v1065 = vrot.slane %v1052, %v1064
    %v1066 = vlaneseq
    %v1067 = vshrl.u32 %v1066, 7
    %v1068 = vsub.s32 3, %v1067
    %v1069 = vrot.slane %v1052, %v1068
    %v1078 = vcombine.high %v24, %v24
    %v1080 = vunpack.c.l.s4 1983009808
    %v1081 = vunpack.c.0.s8 %v1080
    %v1082 = vlaneseq
    %v1083 = vshrl.u32 %v1082, 7
    %v1084 = vsub.s32 %v1081, %v1083
    %v1085 = vrot.slane %v24, %v1084
    %v1087 = vunpack.c.l.s4 1983009808
    %v1088 = vunpack.c.0.s8 %v1087
    %v1089 = vlaneseq
    %v1090 = vshrl.u32 %v1089, 7
    %v1091 = vsub.s32 %v1088, %v1090
    %v1092 = vrot.slane %v1078, %v1091
    %v1093 = vcombine.high %v1085, %v1085
    %v1094 = vcombine.high %v1092, %v1092
    %v1095 = vcombine.high %v25, %v25
    %v1097 = vunpack.c.l.s4 1983009808
    %v1098 = vunpack.c.0.s8 %v1097
    %v1099 = vlaneseq
    %v1100 = vshrl.u32 %v1099, 7
    %v1101 = vsub.s32 %v1098, %v1100
    %v1102 = vrot.slane %v25, %v1101
    %v1104 = vunpack.c.l.s4 1983009808
    %v1105 = vunpack.c.0.s8 %v1104
    %v1106 = vlaneseq
    %v1107 = vshrl.u32 %v1106, 7
    %v1108 = vsub.s32 %v1105, %v1107
    %v1109 = vrot.slane %v1095, %v1108
    %v1110 = vcombine.high %v1102, %v1102
    %v1111 = vcombine.high %v1109, %v1109
    %v1112 = vcombine.high %v26, %v26
    %v1114 = vunpack.c.l.s4 1983009808
    %v1115 = vunpack.c.0.s8 %v1114
    %v1116 = vlaneseq
    %v1117 = vshrl.u32 %v1116, 7
    %v1118 = vsub.s32 %v1115, %v1117
    %v1119 = vrot.slane %v26, %v1118
    %v1121 = vunpack.c.l.s4 1983009808
    %v1122 = vunpack.c.0.s8 %v1121
    %v1123 = vlaneseq
    %v1124 = vshrl.u32 %v1123, 7
    %v1125 = vsub.s32 %v1122, %v1124
    %v1126 = vrot.slane %v1112, %v1125
    %v1127 = vcombine.high %v1119, %v1119
    %v1128 = vcombine.high %v1126, %v1126
    %v1129 = vcombine.high %v27, %v27
    %v1131 = vunpack.c.l.s4 1983009808
    %v1132 = vunpack.c.0.s8 %v1131
    %v1133 = vlaneseq
    %v1134 = vshrl.u32 %v1133, 7
    %v1135 = vsub.s32 %v1132, %v1134
    %v1136 = vrot.slane %v27, %v1135
    %v1138 = vunpack.c.l.s4 1983009808
    %v1139 = vunpack.c.0.s8 %v1138
    %v1140 = vlaneseq
    %v1141 = vshrl.u32 %v1140, 7
    %v1142 = vsub.s32 %v1139, %v1141
    %v1143 = vrot.slane %v1129, %v1142
    %v1144 = vcombine.high %v1136, %v1136
    %v1145 = vcombine.high %v1143, %v1143
    %1162 = vmatprep.subr.mxu0 %v29
    %1163 = vmatpush1.msra.mxu0 %v28
    %1164 = vmatprep.subr.mxu0 %v33
    %1165 = vmatpush1.msra.mxu0 %v32
    %1166 = vmatprep.subr.mxu0 %v37
    %1167 = vmatpush1.msra.mxu0 %v36
    %1168 = vmatprep.subr.mxu0 %v41
    %1169 = vmatpush1.msra.mxu0 %v40
    %1170 = vmatprep.subr.mxu0 %v45
    %1171 = vmatpush1.msra.mxu0 %v44
    %1172 = vmatprep.subr.mxu0 %v49
    %1173 = vmatpush1.msra.mxu0 %v48
    %1174 = vmatprep.subr.mxu0 %v53
    %1175 = vmatpush1.msra.mxu0 %v52
    %1176 = vmatprep.subr.mxu0 %v57
    %1177 = vmatpush1.msra.mxu0 %v56
    %1178 = vmatprep.subr.mxu0 %v61
    %1179 = vmatpush1.msra.mxu0 %v60
    %1180 = vmatprep.subr.mxu0 %v65
    %1181 = vmatpush1.msra.mxu0 %v64
    %1182 = vmatprep.subr.mxu0 %v69
    %1183 = vmatpush1.msra.mxu0 %v68
    %1184 = vmatprep.subr.mxu0 %v73
    %1185 = vmatpush1.msra.mxu0 %v72
    %1186 = vmatprep.subr.mxu0 %v77
    %1187 = vmatpush1.msra.mxu0 %v76
    %1188 = vmatprep.subr.mxu0 %v81
    %1189 = vmatpush1.msra.mxu0 %v80
    %1190 = vmatprep.subr.mxu0 %v85
    %1191 = vmatpush1.msra.mxu0 %v84
    %1192 = vmatprep.subr.mxu0 %v89
    %1193 = vmatpush1.msra.mxu0 %v88
    %1194 = vmatprep.subr.mxu0 %v93
    %1195 = vmatpush1.msra.mxu0 %v92
    %1196 = vmatprep.subr.mxu0 %v97
    %1197 = vmatpush1.msra.mxu0 %v96
    %1198 = vmatprep.subr.mxu0 %v101
    %1199 = vmatpush1.msra.mxu0 %v100
    %1200 = vmatprep.subr.mxu0 %v105
    %1201 = vmatpush1.msra.mxu0 %v104
    %1202 = vmatprep.subr.mxu0 %v109
    %1203 = vmatpush1.msra.mxu0 %v108
    %1204 = vmatprep.subr.mxu0 %v113
    %1205 = vmatpush1.msra.mxu0 %v112
    %1206 = vmatprep.subr.mxu0 %v117
    %1207 = vmatpush1.msra.mxu0 %v116
    %1208 = vmatprep.subr.mxu0 %v121
    %1209 = vmatpush1.msra.mxu0 %v120
    %1210 = vmatprep.subr.mxu0 %v125
    %1211 = vmatpush1.msra.mxu0 %v124
    %1212 = vmatprep.subr.mxu0 %v129
    %1213 = vmatpush1.msra.mxu0 %v128
    %1214 = vmatprep.subr.mxu0 %v133
    %1215 = vmatpush1.msra.mxu0 %v132
    %1216 = vmatprep.subr.mxu0 %v137
    %1217 = vmatpush1.msra.mxu0 %v136
    %1218 = vmatprep.subr.mxu0 %v141
    %1219 = vmatpush1.msra.mxu0 %v140
    %1220 = vmatprep.subr.mxu0 %v145
    %1221 = vmatpush1.msra.mxu0 %v144
    %1222 = vmatprep.subr.mxu0 %v149
    %1223 = vmatpush1.msra.mxu0 %v148
    %1224 = vmatprep.subr.mxu0 %v153
    %1225 = vmatpush1.msra.mxu0 %v152
    %1226 = vmatprep.mubr.f32.mxu0 %v1093
    %1227 = vmatmul.mubr.f32.gmra.mrb[0].mxu0 %v1085
    %v1228 = vpop.f32.mrb[0].mxu0
    %v1229 = vadd.f32 %v1057, %v1228
    %v1230 = vpop.f32.mrb[0].mxu0
    %v1231 = vadd.f32 %v1061, %v1230
    %1232 = vdwg.mxu0
    %1233 = vmatprep.subr.mxu0 %v157
    %1234 = vmatpush1.msra.mxu0 %v156
    %1235 = vmatprep.subr.mxu0 %v161
    %1236 = vmatpush1.msra.mxu0 %v160
    %1237 = vmatprep.subr.mxu0 %v165
    %1238 = vmatpush1.msra.mxu0 %v164
    %1239 = vmatprep.subr.mxu0 %v169
    %1240 = vmatpush1.msra.mxu0 %v168
    %1241 = vmatprep.subr.mxu0 %v173
    %1242 = vmatpush1.msra.mxu0 %v172
    %1243 = vmatprep.subr.mxu0 %v177
    %1244 = vmatpush1.msra.mxu0 %v176
    %1245 = vmatprep.subr.mxu0 %v181
    %1246 = vmatpush1.msra.mxu0 %v180
    %1247 = vmatprep.subr.mxu0 %v185
    %1248 = vmatpush1.msra.mxu0 %v184
    %1249 = vmatprep.subr.mxu0 %v189
    %1250 = vmatpush1.msra.mxu0 %v188
    %1251 = vmatprep.subr.mxu0 %v193
    %1252 = vmatpush1.msra.mxu0 %v192
    %1253 = vmatprep.subr.mxu0 %v197
    %1254 = vmatpush1.msra.mxu0 %v196
    %1255 = vmatprep.subr.mxu0 %v201
    %1256 = vmatpush1.msra.mxu0 %v200
    %1257 = vmatprep.subr.mxu0 %v205
    %1258 = vmatpush1.msra.mxu0 %v204
    %1259 = vmatprep.subr.mxu0 %v209
    %1260 = vmatpush1.msra.mxu0 %v208
    %1261 = vmatprep.subr.mxu0 %v213
    %1262 = vmatpush1.msra.mxu0 %v212
    %1263 = vmatprep.subr.mxu0 %v217
    %1264 = vmatpush1.msra.mxu0 %v216
    %1265 = vmatprep.subr.mxu0 %v221
    %1266 = vmatpush1.msra.mxu0 %v220
    %1267 = vmatprep.subr.mxu0 %v225
    %1268 = vmatpush1.msra.mxu0 %v224
    %1269 = vmatprep.subr.mxu0 %v229
    %1270 = vmatpush1.msra.mxu0 %v228
    %1271 = vmatprep.subr.mxu0 %v233
    %1272 = vmatpush1.msra.mxu0 %v232
    %1273 = vmatprep.subr.mxu0 %v237
    %1274 = vmatpush1.msra.mxu0 %v236
    %1275 = vmatprep.subr.mxu0 %v241
    %1276 = vmatpush1.msra.mxu0 %v240
    %1277 = vmatprep.subr.mxu0 %v245
    %1278 = vmatpush1.msra.mxu0 %v244
    %1279 = vmatprep.subr.mxu0 %v249
    %1280 = vmatpush1.msra.mxu0 %v248
    %1281 = vmatprep.subr.mxu0 %v253
    %1282 = vmatpush1.msra.mxu0 %v252
    %1283 = vmatprep.subr.mxu0 %v257
    %1284 = vmatpush1.msra.mxu0 %v256
    %1285 = vmatprep.subr.mxu0 %v261
    %1286 = vmatpush1.msra.mxu0 %v260
    %1287 = vmatprep.subr.mxu0 %v265
    %1288 = vmatpush1.msra.mxu0 %v264
    %1289 = vmatprep.subr.mxu0 %v269
    %1290 = vmatpush1.msra.mxu0 %v268
    %1291 = vmatprep.subr.mxu0 %v273
    %1292 = vmatpush1.msra.mxu0 %v272
    %1293 = vmatprep.subr.mxu0 %v277
    %1294 = vmatpush1.msra.mxu0 %v276
    %1295 = vmatprep.subr.mxu0 %v281
    %1296 = vmatpush1.msra.mxu0 %v280
    %1297 = vmatprep.mubr.f32.mxu0 %v1094
    %1298 = vmatmul.mubr.f32.gmra.mrb[0].mxu0 %v1092
    %v1299 = vpop.f32.mrb[0].mxu0
    %v1300 = vadd.f32 %v1229, %v1299
    %v1301 = vpop.f32.mrb[0].mxu0
    %v1302 = vadd.f32 %v1231, %v1301
    %1303 = vdwg.mxu0
    %1304 = vmatprep.subr.mxu0 %v285
    %1305 = vmatpush1.msra.mxu0 %v284
    %1306 = vmatprep.subr.mxu0 %v289
    %1307 = vmatpush1.msra.mxu0 %v288
    %1308 = vmatprep.subr.mxu0 %v293
    %1309 = vmatpush1.msra.mxu0 %v292
    %1310 = vmatprep.subr.mxu0 %v297
    %1311 = vmatpush1.msra.mxu0 %v296
    %1312 = vmatprep.subr.mxu0 %v301
    %1313 = vmatpush1.msra.mxu0 %v300
    %1314 = vmatprep.subr.mxu0 %v305
    %1315 = vmatpush1.msra.mxu0 %v304
    %1316 = vmatprep.subr.mxu0 %v309
    %1317 = vmatpush1.msra.mxu0 %v308
    %1318 = vmatprep.subr.mxu0 %v313
    %1319 = vmatpush1.msra.mxu0 %v312
    %1320 = vmatprep.subr.mxu0 %v317
    %1321 = vmatpush1.msra.mxu0 %v316
    %1322 = vmatprep.subr.mxu0 %v321
    %1323 = vmatpush1.msra.mxu0 %v320
    %1324 = vmatprep.subr.mxu0 %v325
    %1325 = vmatpush1.msra.mxu0 %v324
    %1326 = vmatprep.subr.mxu0 %v329
    %1327 = vmatpush1.msra.mxu0 %v328
    %1328 = vmatprep.subr.mxu0 %v333
    %1329 = vmatpush1.msra.mxu0 %v332
    %1330 = vmatprep.subr.mxu0 %v337
    %1331 = vmatpush1.msra.mxu0 %v336
    %1332 = vmatprep.subr.mxu0 %v341
    %1333 = vmatpush1.msra.mxu0 %v340
    %1334 = vmatprep.subr.mxu0 %v345
    %1335 = vmatpush1.msra.mxu0 %v344
    %1336 = vmatprep.subr.mxu0 %v349
    %1337 = vmatpush1.msra.mxu0 %v348
    %1338 = vmatprep.subr.mxu0 %v353
    %1339 = vmatpush1.msra.mxu0 %v352
    %1340 = vmatprep.subr.mxu0 %v357
    %1341 = vmatpush1.msra.mxu0 %v356
    %1342 = vmatprep.subr.mxu0 %v361
    %1343 = vmatpush1.msra.mxu0 %v360
    %1344 = vmatprep.subr.mxu0 %v365
    %1345 = vmatpush1.msra.mxu0 %v364
    %1346 = vmatprep.subr.mxu0 %v369
    %1347 = vmatpush1.msra.mxu0 %v368
    %1348 = vmatprep.subr.mxu0 %v373
    %1349 = vmatpush1.msra.mxu0 %v372
    %1350 = vmatprep.subr.mxu0 %v377
    %1351 = vmatpush1.msra.mxu0 %v376
    %1352 = vmatprep.subr.mxu0 %v381
    %1353 = vmatpush1.msra.mxu0 %v380
    %1354 = vmatprep.subr.mxu0 %v385
    %1355 = vmatpush1.msra.mxu0 %v384
    %1356 = vmatprep.subr.mxu0 %v389
    %1357 = vmatpush1.msra.mxu0 %v388
    %1358 = vmatprep.subr.mxu0 %v393
    %1359 = vmatpush1.msra.mxu0 %v392
    %1360 = vmatprep.subr.mxu0 %v397
    %1361 = vmatpush1.msra.mxu0 %v396
    %1362 = vmatprep.subr.mxu0 %v401
    %1363 = vmatpush1.msra.mxu0 %v400
    %1364 = vmatprep.subr.mxu0 %v405
    %1365 = vmatpush1.msra.mxu0 %v404
    %1366 = vmatprep.subr.mxu0 %v409
    %1367 = vmatpush1.msra.mxu0 %v408
    %1368 = vmatprep.mubr.f32.mxu0 %v1110
    %1369 = vmatmul.mubr.f32.gmra.mrb[0].mxu0 %v1102
    %v1370 = vpop.f32.mrb[0].mxu0
    %v1371 = vadd.f32 %v1300, %v1370
    %v1372 = vpop.f32.mrb[0].mxu0
    %v1373 = vadd.f32 %v1302, %v1372
    %1374 = vdwg.mxu0
    %1375 = vmatprep.subr.mxu0 %v413
    %1376 = vmatpush1.msra.mxu0 %v412
    %1377 = vmatprep.subr.mxu0 %v417
    %1378 = vmatpush1.msra.mxu0 %v416
    %1379 = vmatprep.subr.mxu0 %v421
    %1380 = vmatpush1.msra.mxu0 %v420
    %1381 = vmatprep.subr.mxu0 %v425
    %1382 = vmatpush1.msra.mxu0 %v424
    %1383 = vmatprep.subr.mxu0 %v429
    %1384 = vmatpush1.msra.mxu0 %v428
    %1385 = vmatprep.subr.mxu0 %v433
    %1386 = vmatpush1.msra.mxu0 %v432
    %1387 = vmatprep.subr.mxu0 %v437
    %1388 = vmatpush1.msra.mxu0 %v436
    %1389 = vmatprep.subr.mxu0 %v441
    %1390 = vmatpush1.msra.mxu0 %v440
    %1391 = vmatprep.subr.mxu0 %v445
    %1392 = vmatpush1.msra.mxu0 %v444
    %1393 = vmatprep.subr.mxu0 %v449
    %1394 = vmatpush1.msra.mxu0 %v448
    %1395 = vmatprep.subr.mxu0 %v453
    %1396 = vmatpush1.msra.mxu0 %v452
    %1397 = vmatprep.subr.mxu0 %v457
    %1398 = vmatpush1.msra.mxu0 %v456
    %1399 = vmatprep.subr.mxu0 %v461
    %1400 = vmatpush1.msra.mxu0 %v460
    %1401 = vmatprep.subr.mxu0 %v465
    %1402 = vmatpush1.msra.mxu0 %v464
    %1403 = vmatprep.subr.mxu0 %v469
    %1404 = vmatpush1.msra.mxu0 %v468
    %1405 = vmatprep.subr.mxu0 %v473
    %1406 = vmatpush1.msra.mxu0 %v472
    %1407 = vmatprep.subr.mxu0 %v477
    %1408 = vmatpush1.msra.mxu0 %v476
    %1409 = vmatprep.subr.mxu0 %v481
    %1410 = vmatpush1.msra.mxu0 %v480
    %1411 = vmatprep.subr.mxu0 %v485
    %1412 = vmatpush1.msra.mxu0 %v484
    %1413 = vmatprep.subr.mxu0 %v489
    %1414 = vmatpush1.msra.mxu0 %v488
    %1415 = vmatprep.subr.mxu0 %v493
    %1416 = vmatpush1.msra.mxu0 %v492
    %1417 = vmatprep.subr.mxu0 %v497
    %1418 = vmatpush1.msra.mxu0 %v496
    %1419 = vmatprep.subr.mxu0 %v501
    %1420 = vmatpush1.msra.mxu0 %v500
    %1421 = vmatprep.subr.mxu0 %v505
    %1422 = vmatpush1.msra.mxu0 %v504
    %1423 = vmatprep.subr.mxu0 %v509
    %1424 = vmatpush1.msra.mxu0 %v508
    %1425 = vmatprep.subr.mxu0 %v513
    %1426 = vmatpush1.msra.mxu0 %v512
    %1427 = vmatprep.subr.mxu0 %v517
    %1428 = vmatpush1.msra.mxu0 %v516
    %1429 = vmatprep.subr.mxu0 %v521
    %1430 = vmatpush1.msra.mxu0 %v520
    %1431 = vmatprep.subr.mxu0 %v525
    %1432 = vmatpush1.msra.mxu0 %v524
    %1433 = vmatprep.subr.mxu0 %v529
    %1434 = vmatpush1.msra.mxu0 %v528
    %1435 = vmatprep.subr.mxu0 %v533
    %1436 = vmatpush1.msra.mxu0 %v532
    %1437 = vmatprep.subr.mxu0 %v537
    %1438 = vmatpush1.msra.mxu0 %v536
    %1439 = vmatprep.mubr.f32.mxu0 %v1111
    %1440 = vmatmul.mubr.f32.gmra.mrb[0].mxu0 %v1109
    %v1441 = vpop.f32.mrb[0].mxu0
    %v1442 = vadd.f32 %v1371, %v1441
    %v1443 = vpop.f32.mrb[0].mxu0
    %v1444 = vadd.f32 %v1373, %v1443
    %1445 = vdwg.mxu0
    %1446 = vmatprep.subr.mxu0 %v541
    %1447 = vmatpush1.msra.mxu0 %v540
    %1448 = vmatprep.subr.mxu0 %v545
    %1449 = vmatpush1.msra.mxu0 %v544
    %1450 = vmatprep.subr.mxu0 %v549
    %1451 = vmatpush1.msra.mxu0 %v548
    %1452 = vmatprep.subr.mxu0 %v553
    %1453 = vmatpush1.msra.mxu0 %v552
    %1454 = vmatprep.subr.mxu0 %v557
    %1455 = vmatpush1.msra.mxu0 %v556
    %1456 = vmatprep.subr.mxu0 %v561
    %1457 = vmatpush1.msra.mxu0 %v560
    %1458 = vmatprep.subr.mxu0 %v565
    %1459 = vmatpush1.msra.mxu0 %v564
    %1460 = vmatprep.subr.mxu0 %v569
    %1461 = vmatpush1.msra.mxu0 %v568
    %1462 = vmatprep.subr.mxu0 %v573
    %1463 = vmatpush1.msra.mxu0 %v572
    %1464 = vmatprep.subr.mxu0 %v577
    %1465 = vmatpush1.msra.mxu0 %v576
    %1466 = vmatprep.subr.mxu0 %v581
    %1467 = vmatpush1.msra.mxu0 %v580
    %1468 = vmatprep.subr.mxu0 %v585
    %1469 = vmatpush1.msra.mxu0 %v584
    %1470 = vmatprep.subr.mxu0 %v589
    %1471 = vmatpush1.msra.mxu0 %v588
    %1472 = vmatprep.subr.mxu0 %v593
    %1473 = vmatpush1.msra.mxu0 %v592
    %1474 = vmatprep.subr.mxu0 %v597
    %1475 = vmatpush1.msra.mxu0 %v596
    %1476 = vmatprep.subr.mxu0 %v601
    %1477 = vmatpush1.msra.mxu0 %v600
    %1478 = vmatprep.subr.mxu0 %v605
    %1479 = vmatpush1.msra.mxu0 %v604
    %1480 = vmatprep.subr.mxu0 %v609
    %1481 = vmatpush1.msra.mxu0 %v608
    %1482 = vmatprep.subr.mxu0 %v613
    %1483 = vmatpush1.msra.mxu0 %v612
    %1484 = vmatprep.subr.mxu0 %v617
    %1485 = vmatpush1.msra.mxu0 %v616
    %1486 = vmatprep.subr.mxu0 %v621
    %1487 = vmatpush1.msra.mxu0 %v620
    %1488 = vmatprep.subr.mxu0 %v625
    %1489 = vmatpush1.msra.mxu0 %v624
    %1490 = vmatprep.subr.mxu0 %v629
    %1491 = vmatpush1.msra.mxu0 %v628
    %1492 = vmatprep.subr.mxu0 %v633
    %1493 = vmatpush1.msra.mxu0 %v632
    %1494 = vmatprep.subr.mxu0 %v637
    %1495 = vmatpush1.msra.mxu0 %v636
    %1496 = vmatprep.subr.mxu0 %v641
    %1497 = vmatpush1.msra.mxu0 %v640
    %1498 = vmatprep.subr.mxu0 %v645
    %1499 = vmatpush1.msra.mxu0 %v644
    %1500 = vmatprep.subr.mxu0 %v649
    %1501 = vmatpush1.msra.mxu0 %v648
    %1502 = vmatprep.subr.mxu0 %v653
    %1503 = vmatpush1.msra.mxu0 %v652
    %1504 = vmatprep.subr.mxu0 %v657
    %1505 = vmatpush1.msra.mxu0 %v656
    %1506 = vmatprep.subr.mxu0 %v661
    %1507 = vmatpush1.msra.mxu0 %v660
    %1508 = vmatprep.subr.mxu0 %v665
    %1509 = vmatpush1.msra.mxu0 %v664
    %1510 = vmatprep.mubr.f32.mxu0 %v1127
    %1511 = vmatmul.mubr.f32.gmra.mrb[0].mxu0 %v1119
    %v1512 = vpop.f32.mrb[0].mxu0
    %v1513 = vadd.f32 %v1442, %v1512
    %v1514 = vpop.f32.mrb[0].mxu0
    %v1515 = vadd.f32 %v1444, %v1514
    %1516 = vdwg.mxu0
    %1517 = vmatprep.subr.mxu0 %v669
    %1518 = vmatpush1.msra.mxu0 %v668
    %1519 = vmatprep.subr.mxu0 %v673
    %1520 = vmatpush1.msra.mxu0 %v672
    %1521 = vmatprep.subr.mxu0 %v677
    %1522 = vmatpush1.msra.mxu0 %v676
    %1523 = vmatprep.subr.mxu0 %v681
    %1524 = vmatpush1.msra.mxu0 %v680
    %1525 = vmatprep.subr.mxu0 %v685
    %1526 = vmatpush1.msra.mxu0 %v684
    %1527 = vmatprep.subr.mxu0 %v689
    %1528 = vmatpush1.msra.mxu0 %v688
    %1529 = vmatprep.subr.mxu0 %v693
    %1530 = vmatpush1.msra.mxu0 %v692
    %1531 = vmatprep.subr.mxu0 %v697
    %1532 = vmatpush1.msra.mxu0 %v696
    %1533 = vmatprep.subr.mxu0 %v701
    %1534 = vmatpush1.msra.mxu0 %v700
    %1535 = vmatprep.subr.mxu0 %v705
    %1536 = vmatpush1.msra.mxu0 %v704
    %1537 = vmatprep.subr.mxu0 %v709
    %1538 = vmatpush1.msra.mxu0 %v708
    %1539 = vmatprep.subr.mxu0 %v713
    %1540 = vmatpush1.msra.mxu0 %v712
    %1541 = vmatprep.subr.mxu0 %v717
    %1542 = vmatpush1.msra.mxu0 %v716
    %1543 = vmatprep.subr.mxu0 %v721
    %1544 = vmatpush1.msra.mxu0 %v720
    %1545 = vmatprep.subr.mxu0 %v725
    %1546 = vmatpush1.msra.mxu0 %v724
    %1547 = vmatprep.subr.mxu0 %v729
    %1548 = vmatpush1.msra.mxu0 %v728
    %1549 = vmatprep.subr.mxu0 %v733
    %1550 = vmatpush1.msra.mxu0 %v732
    %1551 = vmatprep.subr.mxu0 %v737
    %1552 = vmatpush1.msra.mxu0 %v736
    %1553 = vmatprep.subr.mxu0 %v741
    %1554 = vmatpush1.msra.mxu0 %v740
    %1555 = vmatprep.subr.mxu0 %v745
    %1556 = vmatpush1.msra.mxu0 %v744
    %1557 = vmatprep.subr.mxu0 %v749
    %1558 = vmatpush1.msra.mxu0 %v748
    %1559 = vmatprep.subr.mxu0 %v753
    %1560 = vmatpush1.msra.mxu0 %v752
    %1561 = vmatprep.subr.mxu0 %v757
    %1562 = vmatpush1.msra.mxu0 %v756
    %1563 = vmatprep.subr.mxu0 %v761
    %1564 = vmatpush1.msra.mxu0 %v760
    %1565 = vmatprep.subr.mxu0 %v765
    %1566 = vmatpush1.msra.mxu0 %v764
    %1567 = vmatprep.subr.mxu0 %v769
    %1568 = vmatpush1.msra.mxu0 %v768
    %1569 = vmatprep.subr.mxu0 %v773
    %1570 = vmatpush1.msra.mxu0 %v772
    %1571 = vmatprep.subr.mxu0 %v777
    %1572 = vmatpush1.msra.mxu0 %v776
    %1573 = vmatprep.subr.mxu0 %v781
    %1574 = vmatpush1.msra.mxu0 %v780
    %1575 = vmatprep.subr.mxu0 %v785
    %1576 = vmatpush1.msra.mxu0 %v784
    %1577 = vmatprep.subr.mxu0 %v789
    %1578 = vmatpush1.msra.mxu0 %v788
    %1579 = vmatprep.subr.mxu0 %v793
    %1580 = vmatpush1.msra.mxu0 %v792
    %1581 = vmatprep.mubr.f32.mxu0 %v1128
    %1582 = vmatmul.mubr.f32.gmra.mrb[0].mxu0 %v1126
    %v1583 = vpop.f32.mrb[0].mxu0
    %v1584 = vadd.f32 %v1513, %v1583
    %v1585 = vpop.f32.mrb[0].mxu0
    %v1586 = vadd.f32 %v1515, %v1585
    %1587 = vdwg.mxu0
    %1588 = vmatprep.subr.mxu0 %v797
    %1589 = vmatpush1.msra.mxu0 %v796
    %1590 = vmatprep.subr.mxu0 %v801
    %1591 = vmatpush1.msra.mxu0 %v800
    %1592 = vmatprep.subr.mxu0 %v805
    %1593 = vmatpush1.msra.mxu0 %v804
    %1594 = vmatprep.subr.mxu0 %v809
    %1595 = vmatpush1.msra.mxu0 %v808
    %1596 = vmatprep.subr.mxu0 %v813
    %1597 = vmatpush1.msra.mxu0 %v812
    %1598 = vmatprep.subr.mxu0 %v817
    %1599 = vmatpush1.msra.mxu0 %v816
    %1600 = vmatprep.subr.mxu0 %v821
    %1601 = vmatpush1.msra.mxu0 %v820
    %1602 = vmatprep.subr.mxu0 %v825
    %1603 = vmatpush1.msra.mxu0 %v824
    %1604 = vmatprep.subr.mxu0 %v829
    %1605 = vmatpush1.msra.mxu0 %v828
    %1606 = vmatprep.subr.mxu0 %v833
    %1607 = vmatpush1.msra.mxu0 %v832
    %1608 = vmatprep.subr.mxu0 %v837
    %1609 = vmatpush1.msra.mxu0 %v836
    %1610 = vmatprep.subr.mxu0 %v841
    %1611 = vmatpush1.msra.mxu0 %v840
    %1612 = vmatprep.subr.mxu0 %v845
    %1613 = vmatpush1.msra.mxu0 %v844
    %1614 = vmatprep.subr.mxu0 %v849
    %1615 = vmatpush1.msra.mxu0 %v848
    %1616 = vmatprep.subr.mxu0 %v853
    %1617 = vmatpush1.msra.mxu0 %v852
    %1618 = vmatprep.subr.mxu0 %v857
    %1619 = vmatpush1.msra.mxu0 %v856
    %1620 = vmatprep.subr.mxu0 %v861
    %1621 = vmatpush1.msra.mxu0 %v860
    %1622 = vmatprep.subr.mxu0 %v865
    %1623 = vmatpush1.msra.mxu0 %v864
    %1624 = vmatprep.subr.mxu0 %v869
    %1625 = vmatpush1.msra.mxu0 %v868
    %1626 = vmatprep.subr.mxu0 %v873
    %1627 = vmatpush1.msra.mxu0 %v872
    %1628 = vmatprep.subr.mxu0 %v877
    %1629 = vmatpush1.msra.mxu0 %v876
    %1630 = vmatprep.subr.mxu0 %v881
    %1631 = vmatpush1.msra.mxu0 %v880
    %1632 = vmatprep.subr.mxu0 %v885
    %1633 = vmatpush1.msra.mxu0 %v884
    %1634 = vmatprep.subr.mxu0 %v889
    %1635 = vmatpush1.msra.mxu0 %v888
    %1636 = vmatprep.subr.mxu0 %v893
    %1637 = vmatpush1.msra.mxu0 %v892
    %1638 = vmatprep.subr.mxu0 %v897
    %1639 = vmatpush1.msra.mxu0 %v896
    %1640 = vmatprep.subr.mxu0 %v901
    %1641 = vmatpush1.msra.mxu0 %v900
    %1642 = vmatprep.subr.mxu0 %v905
    %1643 = vmatpush1.msra.mxu0 %v904
    %1644 = vmatprep.subr.mxu0 %v909
    %1645 = vmatpush1.msra.mxu0 %v908
    %1646 = vmatprep.subr.mxu0 %v913
    %1647 = vmatpush1.msra.mxu0 %v912
    %1648 = vmatprep.subr.mxu0 %v917
    %1649 = vmatpush1.msra.mxu0 %v916
    %1650 = vmatprep.subr.mxu0 %v921
    %1651 = vmatpush1.msra.mxu0 %v920
    %1652 = vmatprep.mubr.f32.mxu0 %v1144
    %1653 = vmatmul.mubr.f32.gmra.mrb[0].mxu0 %v1136
    %v1654 = vpop.f32.mrb[0].mxu0
    %v1655 = vadd.f32 %v1584, %v1654
    %v1656 = vpop.f32.mrb[0].mxu0
    %v1657 = vadd.f32 %v1586, %v1656
    %1658 = vdwg.mxu0
    %1659 = vmatprep.subr.mxu0 %v925
    %1660 = vmatpush1.msra.mxu0 %v924
    %1661 = vmatprep.subr.mxu0 %v929
    %1662 = vmatpush1.msra.mxu0 %v928
    %1663 = vmatprep.subr.mxu0 %v933
    %1664 = vmatpush1.msra.mxu0 %v932
    %1665 = vmatprep.subr.mxu0 %v937
    %1666 = vmatpush1.msra.mxu0 %v936
    %1667 = vmatprep.subr.mxu0 %v941
    %1668 = vmatpush1.msra.mxu0 %v940
    %1669 = vmatprep.subr.mxu0 %v945
    %1670 = vmatpush1.msra.mxu0 %v944
    %1671 = vmatprep.subr.mxu0 %v949
    %1672 = vmatpush1.msra.mxu0 %v948
    %1673 = vmatprep.subr.mxu0 %v953
    %1674 = vmatpush1.msra.mxu0 %v952
    %1675 = vmatprep.subr.mxu0 %v957
    %1676 = vmatpush1.msra.mxu0 %v956
    %1677 = vmatprep.subr.mxu0 %v961
    %1678 = vmatpush1.msra.mxu0 %v960
    %1679 = vmatprep.subr.mxu0 %v965
    %1680 = vmatpush1.msra.mxu0 %v964
    %1681 = vmatprep.subr.mxu0 %v969
    %1682 = vmatpush1.msra.mxu0 %v968
    %1683 = vmatprep.subr.mxu0 %v973
    %1684 = vmatpush1.msra.mxu0 %v972
    %1685 = vmatprep.subr.mxu0 %v977
    %1686 = vmatpush1.msra.mxu0 %v976
    %1687 = vmatprep.subr.mxu0 %v981
    %1688 = vmatpush1.msra.mxu0 %v980
    %1689 = vmatprep.subr.mxu0 %v985
    %1690 = vmatpush1.msra.mxu0 %v984
    %1691 = vmatprep.subr.mxu0 %v989
    %1692 = vmatpush1.msra.mxu0 %v988
    %1693 = vmatprep.subr.mxu0 %v993
    %1694 = vmatpush1.msra.mxu0 %v992
    %1695 = vmatprep.subr.mxu0 %v997
    %1696 = vmatpush1.msra.mxu0 %v996
    %1697 = vmatprep.subr.mxu0 %v1001
    %1698 = vmatpush1.msra.mxu0 %v1000
    %1699 = vmatprep.subr.mxu0 %v1005
    %1700 = vmatpush1.msra.mxu0 %v1004
    %1701 = vmatprep.subr.mxu0 %v1009
    %1702 = vmatpush1.msra.mxu0 %v1008
    %1703 = vmatprep.subr.mxu0 %v1013
    %1704 = vmatpush1.msra.mxu0 %v1012
    %1705 = vmatprep.subr.mxu0 %v1017
    %1706 = vmatpush1.msra.mxu0 %v1016
    %1707 = vmatprep.subr.mxu0 %v1021
    %1708 = vmatpush1.msra.mxu0 %v1020
    %1709 = vmatprep.subr.mxu0 %v1025
    %1710 = vmatpush1.msra.mxu0 %v1024
    %1711 = vmatprep.subr.mxu0 %v1029
    %1712 = vmatpush1.msra.mxu0 %v1028
    %1713 = vmatprep.subr.mxu0 %v1033
    %1714 = vmatpush1.msra.mxu0 %v1032
    %1715 = vmatprep.subr.mxu0 %v1037
    %1716 = vmatpush1.msra.mxu0 %v1036
    %1717 = vmatprep.subr.mxu0 %v1041
    %1718 = vmatpush1.msra.mxu0 %v1040
    %1719 = vmatprep.subr.mxu0 %v1045
    %1720 = vmatpush1.msra.mxu0 %v1044
    %1721 = vmatprep.subr.mxu0 %v1049
    %1722 = vmatpush1.msra.mxu0 %v1048
    %1723 = vmatprep.mubr.f32.mxu0 %v1145
    %1724 = vmatmul.mubr.f32.gmra.mrb[0].mxu0 %v1143
    %v1725 = vpop.f32.mrb[0].mxu0
    %v1726 = vadd.f32 %v1655, %v1725
    %v1727 = vpop.f32.mrb[0].mxu0
    %v1728 = vadd.f32 %v1657, %v1727
    %1729 = vdwg.mxu0
    %1730 = vmatprep.subr.mxu0 %v31
    %1731 = vmatpush1.msra.mxu0 %v30
    %1732 = vmatprep.subr.mxu0 %v35
    %1733 = vmatpush1.msra.mxu0 %v34
    %1734 = vmatprep.subr.mxu0 %v39
    %1735 = vmatpush1.msra.mxu0 %v38
    %1736 = vmatprep.subr.mxu0 %v43
    %1737 = vmatpush1.msra.mxu0 %v42
    %1738 = vmatprep.subr.mxu0 %v47
    %1739 = vmatpush1.msra.mxu0 %v46
    %1740 = vmatprep.subr.mxu0 %v51
    %1741 = vmatpush1.msra.mxu0 %v50
    %1742 = vmatprep.subr.mxu0 %v55
    %1743 = vmatpush1.msra.mxu0 %v54
    %1744 = vmatprep.subr.mxu0 %v59
    %1745 = vmatpush1.msra.mxu0 %v58
    %1746 = vmatprep.subr.mxu0 %v63
    %1747 = vmatpush1.msra.mxu0 %v62
    %1748 = vmatprep.subr.mxu0 %v67
    %1749 = vmatpush1.msra.mxu0 %v66
    %1750 = vmatprep.subr.mxu0 %v71
    %1751 = vmatpush1.msra.mxu0 %v70
    %1752 = vmatprep.subr.mxu0 %v75
    %1753 = vmatpush1.msra.mxu0 %v74
    %1754 = vmatprep.subr.mxu0 %v79
    %1755 = vmatpush1.msra.mxu0 %v78
    %1756 = vmatprep.subr.mxu0 %v83
    %1757 = vmatpush1.msra.mxu0 %v82
    %1758 = vmatprep.subr.mxu0 %v87
    %1759 = vmatpush1.msra.mxu0 %v86
    %1760 = vmatprep.subr.mxu0 %v91
    %1761 = vmatpush1.msra.mxu0 %v90
    %1762 = vmatprep.subr.mxu0 %v95
    %1763 = vmatpush1.msra.mxu0 %v94
    %1764 = vmatprep.subr.mxu0 %v99
    %1765 = vmatpush1.msra.mxu0 %v98
    %1766 = vmatprep.subr.mxu0 %v103
    %1767 = vmatpush1.msra.mxu0 %v102
    %1768 = vmatprep.subr.mxu0 %v107
    %1769 = vmatpush1.msra.mxu0 %v106
    %1770 = vmatprep.subr.mxu0 %v111
    %1771 = vmatpush1.msra.mxu0 %v110
    %1772 = vmatprep.subr.mxu0 %v115
    %1773 = vmatpush1.msra.mxu0 %v114
    %1774 = vmatprep.subr.mxu0 %v119
    %1775 = vmatpush1.msra.mxu0 %v118
    %1776 = vmatprep.subr.mxu0 %v123
    %1777 = vmatpush1.msra.mxu0 %v122
    %1778 = vmatprep.subr.mxu0 %v127
    %1779 = vmatpush1.msra.mxu0 %v126
    %1780 = vmatprep.subr.mxu0 %v131
    %1781 = vmatpush1.msra.mxu0 %v130
    %1782 = vmatprep.subr.mxu0 %v135
    %1783 = vmatpush1.msra.mxu0 %v134
    %1784 = vmatprep.subr.mxu0 %v139
    %1785 = vmatpush1.msra.mxu0 %v138
    %1786 = vmatprep.subr.mxu0 %v143
    %1787 = vmatpush1.msra.mxu0 %v142
    %1788 = vmatprep.subr.mxu0 %v147
    %1789 = vmatpush1.msra.mxu0 %v146
    %1790 = vmatprep.subr.mxu0 %v151
    %1791 = vmatpush1.msra.mxu0 %v150
    %1792 = vmatprep.subr.mxu0 %v155
    %1793 = vmatpush1.msra.mxu0 %v154
    %1794 = vmatprep.mubr.f32.mxu0 %v1093
    %1795 = vmatmul.mubr.f32.gmra.mrb[0].mxu0 %v1085
    %v1796 = vpop.f32.mrb[0].mxu0
    %v1797 = vadd.f32 %v1065, %v1796
    %v1798 = vpop.f32.mrb[0].mxu0
    %v1799 = vadd.f32 %v1069, %v1798
    %1800 = vdwg.mxu0
    %1801 = vmatprep.subr.mxu0 %v159
    %1802 = vmatpush1.msra.mxu0 %v158
    %1803 = vmatprep.subr.mxu0 %v163
    %1804 = vmatpush1.msra.mxu0 %v162
    %1805 = vmatprep.subr.mxu0 %v167
    %1806 = vmatpush1.msra.mxu0 %v166
    %1807 = vmatprep.subr.mxu0 %v171
    %1808 = vmatpush1.msra.mxu0 %v170
    %1809 = vmatprep.subr.mxu0 %v175
    %1810 = vmatpush1.msra.mxu0 %v174
    %1811 = vmatprep.subr.mxu0 %v179
    %1812 = vmatpush1.msra.mxu0 %v178
    %1813 = vmatprep.subr.mxu0 %v183
    %1814 = vmatpush1.msra.mxu0 %v182
    %1815 = vmatprep.subr.mxu0 %v187
    %1816 = vmatpush1.msra.mxu0 %v186
    %1817 = vmatprep.subr.mxu0 %v191
    %1818 = vmatpush1.msra.mxu0 %v190
    %1819 = vmatprep.subr.mxu0 %v195
    %1820 = vmatpush1.msra.mxu0 %v194
    %1821 = vmatprep.subr.mxu0 %v199
    %1822 = vmatpush1.msra.mxu0 %v198
    %1823 = vmatprep.subr.mxu0 %v203
    %1824 = vmatpush1.msra.mxu0 %v202
    %1825 = vmatprep.subr.mxu0 %v207
    %1826 = vmatpush1.msra.mxu0 %v206
    %1827 = vmatprep.subr.mxu0 %v211
    %1828 = vmatpush1.msra.mxu0 %v210
    %1829 = vmatprep.subr.mxu0 %v215
    %1830 = vmatpush1.msra.mxu0 %v214
    %1831 = vmatprep.subr.mxu0 %v219
    %1832 = vmatpush1.msra.mxu0 %v218
    %1833 = vmatprep.subr.mxu0 %v223
    %1834 = vmatpush1.msra.mxu0 %v222
    %1835 = vmatprep.subr.mxu0 %v227
    %1836 = vmatpush1.msra.mxu0 %v226
    %1837 = vmatprep.subr.mxu0 %v231
    %1838 = vmatpush1.msra.mxu0 %v230
    %1839 = vmatprep.subr.mxu0 %v235
    %1840 = vmatpush1.msra.mxu0 %v234
    %1841 = vmatprep.subr.mxu0 %v239
    %1842 = vmatpush1.msra.mxu0 %v238
    %1843 = vmatprep.subr.mxu0 %v243
    %1844 = vmatpush1.msra.mxu0 %v242
    %1845 = vmatprep.subr.mxu0 %v247
    %1846 = vmatpush1.msra.mxu0 %v246
    %1847 = vmatprep.subr.mxu0 %v251
    %1848 = vmatpush1.msra.mxu0 %v250
    %1849 = vmatprep.subr.mxu0 %v255
    %1850 = vmatpush1.msra.mxu0 %v254
    %1851 = vmatprep.subr.mxu0 %v259
    %1852 = vmatpush1.msra.mxu0 %v258
    %1853 = vmatprep.subr.mxu0 %v263
    %1854 = vmatpush1.msra.mxu0 %v262
    %1855 = vmatprep.subr.mxu0 %v267
    %1856 = vmatpush1.msra.mxu0 %v266
    %1857 = vmatprep.subr.mxu0 %v271
    %1858 = vmatpush1.msra.mxu0 %v270
    %1859 = vmatprep.subr.mxu0 %v275
    %1860 = vmatpush1.msra.mxu0 %v274
    %1861 = vmatprep.subr.mxu0 %v279
    %1862 = vmatpush1.msra.mxu0 %v278
    %1863 = vmatprep.subr.mxu0 %v283
    %1864 = vmatpush1.msra.mxu0 %v282
    %1865 = vmatprep.mubr.f32.mxu0 %v1094
    %1866 = vmatmul.mubr.f32.gmra.mrb[0].mxu0 %v1092
    %v1867 = vpop.f32.mrb[0].mxu0
    %v1868 = vadd.f32 %v1797, %v1867
    %v1869 = vpop.f32.mrb[0].mxu0
    %v1870 = vadd.f32 %v1799, %v1869
    %1871 = vdwg.mxu0
    %1872 = vmatprep.subr.mxu0 %v287
    %1873 = vmatpush1.msra.mxu0 %v286
    %1874 = vmatprep.subr.mxu0 %v291
    %1875 = vmatpush1.msra.mxu0 %v290
    %1876 = vmatprep.subr.mxu0 %v295
    %1877 = vmatpush1.msra.mxu0 %v294
    %1878 = vmatprep.subr.mxu0 %v299
    %1879 = vmatpush1.msra.mxu0 %v298
    %1880 = vmatprep.subr.mxu0 %v303
    %1881 = vmatpush1.msra.mxu0 %v302
    %1882 = vmatprep.subr.mxu0 %v307
    %1883 = vmatpush1.msra.mxu0 %v306
    %1884 = vmatprep.subr.mxu0 %v311
    %1885 = vmatpush1.msra.mxu0 %v310
    %1886 = vmatprep.subr.mxu0 %v315
    %1887 = vmatpush1.msra.mxu0 %v314
    %1888 = vmatprep.subr.mxu0 %v319
    %1889 = vmatpush1.msra.mxu0 %v318
    %1890 = vmatprep.subr.mxu0 %v323
    %1891 = vmatpush1.msra.mxu0 %v322
    %1892 = vmatprep.subr.mxu0 %v327
    %1893 = vmatpush1.msra.mxu0 %v326
    %1894 = vmatprep.subr.mxu0 %v331
    %1895 = vmatpush1.msra.mxu0 %v330
    %1896 = vmatprep.subr.mxu0 %v335
    %1897 = vmatpush1.msra.mxu0 %v334
    %1898 = vmatprep.subr.mxu0 %v339
    %1899 = vmatpush1.msra.mxu0 %v338
    %1900 = vmatprep.subr.mxu0 %v343
    %1901 = vmatpush1.msra.mxu0 %v342
    %1902 = vmatprep.subr.mxu0 %v347
    %1903 = vmatpush1.msra.mxu0 %v346
    %1904 = vmatprep.subr.mxu0 %v351
    %1905 = vmatpush1.msra.mxu0 %v350
    %1906 = vmatprep.subr.mxu0 %v355
    %1907 = vmatpush1.msra.mxu0 %v354
    %1908 = vmatprep.subr.mxu0 %v359
    %1909 = vmatpush1.msra.mxu0 %v358
    %1910 = vmatprep.subr.mxu0 %v363
    %1911 = vmatpush1.msra.mxu0 %v362
    %1912 = vmatprep.subr.mxu0 %v367
    %1913 = vmatpush1.msra.mxu0 %v366
    %1914 = vmatprep.subr.mxu0 %v371
    %1915 = vmatpush1.msra.mxu0 %v370
    %1916 = vmatprep.subr.mxu0 %v375
    %1917 = vmatpush1.msra.mxu0 %v374
    %1918 = vmatprep.subr.mxu0 %v379
    %1919 = vmatpush1.msra.mxu0 %v378
    %1920 = vmatprep.subr.mxu0 %v383
    %1921 = vmatpush1.msra.mxu0 %v382
    %1922 = vmatprep.subr.mxu0 %v387
    %1923 = vmatpush1.msra.mxu0 %v386
    %1924 = vmatprep.subr.mxu0 %v391
    %1925 = vmatpush1.msra.mxu0 %v390
    %1926 = vmatprep.subr.mxu0 %v395
    %1927 = vmatpush1.msra.mxu0 %v394
    %1928 = vmatprep.subr.mxu0 %v399
    %1929 = vmatpush1.msra.mxu0 %v398
    %1930 = vmatprep.subr.mxu0 %v403
    %1931 = vmatpush1.msra.mxu0 %v402
    %1932 = vmatprep.subr.mxu0 %v407
    %1933 = vmatpush1.msra.mxu0 %v406
    %1934 = vmatprep.subr.mxu0 %v411
    %1935 = vmatpush1.msra.mxu0 %v410
    %1936 = vmatprep.mubr.f32.mxu0 %v1110
    %1937 = vmatmul.mubr.f32.gmra.mrb[0].mxu0 %v1102
    %v1938 = vpop.f32.mrb[0].mxu0
    %v1939 = vadd.f32 %v1868, %v1938
    %v1940 = vpop.f32.mrb[0].mxu0
    %v1941 = vadd.f32 %v1870, %v1940
    %1942 = vdwg.mxu0
    %1943 = vmatprep.subr.mxu0 %v415
    %1944 = vmatpush1.msra.mxu0 %v414
    %1945 = vmatprep.subr.mxu0 %v419
    %1946 = vmatpush1.msra.mxu0 %v418
    %1947 = vmatprep.subr.mxu0 %v423
    %1948 = vmatpush1.msra.mxu0 %v422
    %1949 = vmatprep.subr.mxu0 %v427
    %1950 = vmatpush1.msra.mxu0 %v426
    %1951 = vmatprep.subr.mxu0 %v431
    %1952 = vmatpush1.msra.mxu0 %v430
    %1953 = vmatprep.subr.mxu0 %v435
    %1954 = vmatpush1.msra.mxu0 %v434
    %1955 = vmatprep.subr.mxu0 %v439
    %1956 = vmatpush1.msra.mxu0 %v438
    %1957 = vmatprep.subr.mxu0 %v443
    %1958 = vmatpush1.msra.mxu0 %v442
    %1959 = vmatprep.subr.mxu0 %v447
    %1960 = vmatpush1.msra.mxu0 %v446
    %1961 = vmatprep.subr.mxu0 %v451
    %1962 = vmatpush1.msra.mxu0 %v450
    %1963 = vmatprep.subr.mxu0 %v455
    %1964 = vmatpush1.msra.mxu0 %v454
    %1965 = vmatprep.subr.mxu0 %v459
    %1966 = vmatpush1.msra.mxu0 %v458
    %1967 = vmatprep.subr.mxu0 %v463
    %1968 = vmatpush1.msra.mxu0 %v462
    %1969 = vmatprep.subr.mxu0 %v467
    %1970 = vmatpush1.msra.mxu0 %v466
    %1971 = vmatprep.subr.mxu0 %v471
    %1972 = vmatpush1.msra.mxu0 %v470
    %1973 = vmatprep.subr.mxu0 %v475
    %1974 = vmatpush1.msra.mxu0 %v474
    %1975 = vmatprep.subr.mxu0 %v479
    %1976 = vmatpush1.msra.mxu0 %v478
    %1977 = vmatprep.subr.mxu0 %v483
    %1978 = vmatpush1.msra.mxu0 %v482
    %1979 = vmatprep.subr.mxu0 %v487
    %1980 = vmatpush1.msra.mxu0 %v486
    %1981 = vmatprep.subr.mxu0 %v491
    %1982 = vmatpush1.msra.mxu0 %v490
    %1983 = vmatprep.subr.mxu0 %v495
    %1984 = vmatpush1.msra.mxu0 %v494
    %1985 = vmatprep.subr.mxu0 %v499
    %1986 = vmatpush1.msra.mxu0 %v498
    %1987 = vmatprep.subr.mxu0 %v503
    %1988 = vmatpush1.msra.mxu0 %v502
    %1989 = vmatprep.subr.mxu0 %v507
    %1990 = vmatpush1.msra.mxu0 %v506
    %1991 = vmatprep.subr.mxu0 %v511
    %1992 = vmatpush1.msra.mxu0 %v510
    %1993 = vmatprep.subr.mxu0 %v515
    %1994 = vmatpush1.msra.mxu0 %v514
    %1995 = vmatprep.subr.mxu0 %v519
    %1996 = vmatpush1.msra.mxu0 %v518
    %1997 = vmatprep.subr.mxu0 %v523
    %1998 = vmatpush1.msra.mxu0 %v522
    %1999 = vmatprep.subr.mxu0 %v527
    %2000 = vmatpush1.msra.mxu0 %v526
    %2001 = vmatprep.subr.mxu0 %v531
    %2002 = vmatpush1.msra.mxu0 %v530
    %2003 = vmatprep.subr.mxu0 %v535
    %2004 = vmatpush1.msra.mxu0 %v534
    %2005 = vmatprep.subr.mxu0 %v539
    %2006 = vmatpush1.msra.mxu0 %v538
    %2007 = vmatprep.mubr.f32.mxu0 %v1111
    %2008 = vmatmul.mubr.f32.gmra.mrb[0].mxu0 %v1109
    %v2009 = vpop.f32.mrb[0].mxu0
    %v2010 = vadd.f32 %v1939, %v2009
    %v2011 = vpop.f32.mrb[0].mxu0
    %v2012 = vadd.f32 %v1941, %v2011
    %2013 = vdwg.mxu0
    %2014 = vmatprep.subr.mxu0 %v543
    %2015 = vmatpush1.msra.mxu0 %v542
    %2016 = vmatprep.subr.mxu0 %v547
    %2017 = vmatpush1.msra.mxu0 %v546
    %2018 = vmatprep.subr.mxu0 %v551
    %2019 = vmatpush1.msra.mxu0 %v550
    %2020 = vmatprep.subr.mxu0 %v555
    %2021 = vmatpush1.msra.mxu0 %v554
    %2022 = vmatprep.subr.mxu0 %v559
    %2023 = vmatpush1.msra.mxu0 %v558
    %2024 = vmatprep.subr.mxu0 %v563
    %2025 = vmatpush1.msra.mxu0 %v562
    %2026 = vmatprep.subr.mxu0 %v567
    %2027 = vmatpush1.msra.mxu0 %v566
    %2028 = vmatprep.subr.mxu0 %v571
    %2029 = vmatpush1.msra.mxu0 %v570
    %2030 = vmatprep.subr.mxu0 %v575
    %2031 = vmatpush1.msra.mxu0 %v574
    %2032 = vmatprep.subr.mxu0 %v579
    %2033 = vmatpush1.msra.mxu0 %v578
    %2034 = vmatprep.subr.mxu0 %v583
    %2035 = vmatpush1.msra.mxu0 %v582
    %2036 = vmatprep.subr.mxu0 %v587
    %2037 = vmatpush1.msra.mxu0 %v586
    %2038 = vmatprep.subr.mxu0 %v591
    %2039 = vmatpush1.msra.mxu0 %v590
    %2040 = vmatprep.subr.mxu0 %v595
    %2041 = vmatpush1.msra.mxu0 %v594
    %2042 = vmatprep.subr.mxu0 %v599
    %2043 = vmatpush1.msra.mxu0 %v598
    %2044 = vmatprep.subr.mxu0 %v603
    %2045 = vmatpush1.msra.mxu0 %v602
    %2046 = vmatprep.subr.mxu0 %v607
    %2047 = vmatpush1.msra.mxu0 %v606
    %2048 = vmatprep.subr.mxu0 %v611
    %2049 = vmatpush1.msra.mxu0 %v610
    %2050 = vmatprep.subr.mxu0 %v615
    %2051 = vmatpush1.msra.mxu0 %v614
    %2052 = vmatprep.subr.mxu0 %v619
    %2053 = vmatpush1.msra.mxu0 %v618
    %2054 = vmatprep.subr.mxu0 %v623
    %2055 = vmatpush1.msra.mxu0 %v622
    %2056 = vmatprep.subr.mxu0 %v627
    %2057 = vmatpush1.msra.mxu0 %v626
    %2058 = vmatprep.subr.mxu0 %v631
    %2059 = vmatpush1.msra.mxu0 %v630
    %2060 = vmatprep.subr.mxu0 %v635
    %2061 = vmatpush1.msra.mxu0 %v634
    %2062 = vmatprep.subr.mxu0 %v639
    %2063 = vmatpush1.msra.mxu0 %v638
    %2064 = vmatprep.subr.mxu0 %v643
    %2065 = vmatpush1.msra.mxu0 %v642
    %2066 = vmatprep.subr.mxu0 %v647
    %2067 = vmatpush1.msra.mxu0 %v646
    %2068 = vmatprep.subr.mxu0 %v651
    %2069 = vmatpush1.msra.mxu0 %v650
    %2070 = vmatprep.subr.mxu0 %v655
    %2071 = vmatpush1.msra.mxu0 %v654
    %2072 = vmatprep.subr.mxu0 %v659
    %2073 = vmatpush1.msra.mxu0 %v658
    %2074 = vmatprep.subr.mxu0 %v663
    %2075 = vmatpush1.msra.mxu0 %v662
    %2076 = vmatprep.subr.mxu0 %v667
    %2077 = vmatpush1.msra.mxu0 %v666
    %2078 = vmatprep.mubr.f32.mxu0 %v1127
    %2079 = vmatmul.mubr.f32.gmra.mrb[0].mxu0 %v1119
    %v2080 = vpop.f32.mrb[0].mxu0
    %v2081 = vadd.f32 %v2010, %v2080
    %v2082 = vpop.f32.mrb[0].mxu0
    %v2083 = vadd.f32 %v2012, %v2082
    %2084 = vdwg.mxu0
    %2085 = vmatprep.subr.mxu0 %v671
    %2086 = vmatpush1.msra.mxu0 %v670
    %2087 = vmatprep.subr.mxu0 %v675
    %2088 = vmatpush1.msra.mxu0 %v674
    %2089 = vmatprep.subr.mxu0 %v679
    %2090 = vmatpush1.msra.mxu0 %v678
    %2091 = vmatprep.subr.mxu0 %v683
    %2092 = vmatpush1.msra.mxu0 %v682
    %2093 = vmatprep.subr.mxu0 %v687
    %2094 = vmatpush1.msra.mxu0 %v686
    %2095 = vmatprep.subr.mxu0 %v691
    %2096 = vmatpush1.msra.mxu0 %v690
    %2097 = vmatprep.subr.mxu0 %v695
    %2098 = vmatpush1.msra.mxu0 %v694
    %2099 = vmatprep.subr.mxu0 %v699
    %2100 = vmatpush1.msra.mxu0 %v698
    %2101 = vmatprep.subr.mxu0 %v703
    %2102 = vmatpush1.msra.mxu0 %v702
    %2103 = vmatprep.subr.mxu0 %v707
    %2104 = vmatpush1.msra.mxu0 %v706
    %2105 = vmatprep.subr.mxu0 %v711
    %2106 = vmatpush1.msra.mxu0 %v710
    %2107 = vmatprep.subr.mxu0 %v715
    %2108 = vmatpush1.msra.mxu0 %v714
    %2109 = vmatprep.subr.mxu0 %v719
    %2110 = vmatpush1.msra.mxu0 %v718
    %2111 = vmatprep.subr.mxu0 %v723
    %2112 = vmatpush1.msra.mxu0 %v722
    %2113 = vmatprep.subr.mxu0 %v727
    %2114 = vmatpush1.msra.mxu0 %v726
    %2115 = vmatprep.subr.mxu0 %v731
    %2116 = vmatpush1.msra.mxu0 %v730
    %2117 = vmatprep.subr.mxu0 %v735
    %2118 = vmatpush1.msra.mxu0 %v734
    %2119 = vmatprep.subr.mxu0 %v739
    %2120 = vmatpush1.msra.mxu0 %v738
    %2121 = vmatprep.subr.mxu0 %v743
    %2122 = vmatpush1.msra.mxu0 %v742
    %2123 = vmatprep.subr.mxu0 %v747
    %2124 = vmatpush1.msra.mxu0 %v746
    %2125 = vmatprep.subr.mxu0 %v751
    %2126 = vmatpush1.msra.mxu0 %v750
    %2127 = vmatprep.subr.mxu0 %v755
    %2128 = vmatpush1.msra.mxu0 %v754
    %2129 = vmatprep.subr.mxu0 %v759
    %2130 = vmatpush1.msra.mxu0 %v758
    %2131 = vmatprep.subr.mxu0 %v763
    %2132 = vmatpush1.msra.mxu0 %v762
    %2133 = vmatprep.subr.mxu0 %v767
    %2134 = vmatpush1.msra.mxu0 %v766
    %2135 = vmatprep.subr.mxu0 %v771
    %2136 = vmatpush1.msra.mxu0 %v770
    %2137 = vmatprep.subr.mxu0 %v775
    %2138 = vmatpush1.msra.mxu0 %v774
    %2139 = vmatprep.subr.mxu0 %v779
    %2140 = vmatpush1.msra.mxu0 %v778
    %2141 = vmatprep.subr.mxu0 %v783
    %2142 = vmatpush1.msra.mxu0 %v782
    %2143 = vmatprep.subr.mxu0 %v787
    %2144 = vmatpush1.msra.mxu0 %v786
    %2145 = vmatprep.subr.mxu0 %v791
    %2146 = vmatpush1.msra.mxu0 %v790
    %2147 = vmatprep.subr.mxu0 %v795
    %2148 = vmatpush1.msra.mxu0 %v794
    %2149 = vmatprep.mubr.f32.mxu0 %v1128
    %2150 = vmatmul.mubr.f32.gmra.mrb[0].mxu0 %v1126
    %v2151 = vpop.f32.mrb[0].mxu0
    %v2152 = vadd.f32 %v2081, %v2151
    %v2153 = vpop.f32.mrb[0].mxu0
    %v2154 = vadd.f32 %v2083, %v2153
    %2155 = vdwg.mxu0
    %2156 = vmatprep.subr.mxu0 %v799
    %2157 = vmatpush1.msra.mxu0 %v798
    %2158 = vmatprep.subr.mxu0 %v803
    %2159 = vmatpush1.msra.mxu0 %v802
    %2160 = vmatprep.subr.mxu0 %v807
    %2161 = vmatpush1.msra.mxu0 %v806
    %2162 = vmatprep.subr.mxu0 %v811
    %2163 = vmatpush1.msra.mxu0 %v810
    %2164 = vmatprep.subr.mxu0 %v815
    %2165 = vmatpush1.msra.mxu0 %v814
    %2166 = vmatprep.subr.mxu0 %v819
    %2167 = vmatpush1.msra.mxu0 %v818
    %2168 = vmatprep.subr.mxu0 %v823
    %2169 = vmatpush1.msra.mxu0 %v822
    %2170 = vmatprep.subr.mxu0 %v827
    %2171 = vmatpush1.msra.mxu0 %v826
    %2172 = vmatprep.subr.mxu0 %v831
    %2173 = vmatpush1.msra.mxu0 %v830
    %2174 = vmatprep.subr.mxu0 %v835
    %2175 = vmatpush1.msra.mxu0 %v834
    %2176 = vmatprep.subr.mxu0 %v839
    %2177 = vmatpush1.msra.mxu0 %v838
    %2178 = vmatprep.subr.mxu0 %v843
    %2179 = vmatpush1.msra.mxu0 %v842
    %2180 = vmatprep.subr.mxu0 %v847
    %2181 = vmatpush1.msra.mxu0 %v846
    %2182 = vmatprep.subr.mxu0 %v851
    %2183 = vmatpush1.msra.mxu0 %v850
    %2184 = vmatprep.subr.mxu0 %v855
    %2185 = vmatpush1.msra.mxu0 %v854
    %2186 = vmatprep.subr.mxu0 %v859
    %2187 = vmatpush1.msra.mxu0 %v858
    %2188 = vmatprep.subr.mxu0 %v863
    %2189 = vmatpush1.msra.mxu0 %v862
    %2190 = vmatprep.subr.mxu0 %v867
    %2191 = vmatpush1.msra.mxu0 %v866
    %2192 = vmatprep.subr.mxu0 %v871
    %2193 = vmatpush1.msra.mxu0 %v870
    %2194 = vmatprep.subr.mxu0 %v875
    %2195 = vmatpush1.msra.mxu0 %v874
    %2196 = vmatprep.subr.mxu0 %v879
    %2197 = vmatpush1.msra.mxu0 %v878
    %2198 = vmatprep.subr.mxu0 %v883
    %2199 = vmatpush1.msra.mxu0 %v882
    %2200 = vmatprep.subr.mxu0 %v887
    %2201 = vmatpush1.msra.mxu0 %v886
    %2202 = vmatprep.subr.mxu0 %v891
    %2203 = vmatpush1.msra.mxu0 %v890
    %2204 = vmatprep.subr.mxu0 %v895
    %2205 = vmatpush1.msra.mxu0 %v894
    %2206 = vmatprep.subr.mxu0 %v899
    %2207 = vmatpush1.msra.mxu0 %v898
    %2208 = vmatprep.subr.mxu0 %v903
    %2209 = vmatpush1.msra.mxu0 %v902
    %2210 = vmatprep.subr.mxu0 %v907
    %2211 = vmatpush1.msra.mxu0 %v906
    %2212 = vmatprep.subr.mxu0 %v911
    %2213 = vmatpush1.msra.mxu0 %v910
    %2214 = vmatprep.subr.mxu0 %v915
    %2215 = vmatpush1.msra.mxu0 %v914
    %2216 = vmatprep.subr.mxu0 %v919
    %2217 = vmatpush1.msra.mxu0 %v918
    %2218 = vmatprep.subr.mxu0 %v923
    %2219 = vmatpush1.msra.mxu0 %v922
    %2220 = vmatprep.mubr.f32.mxu0 %v1144
    %2221 = vmatmul.mubr.f32.gmra.mrb[0].mxu0 %v1136
    %v2222 = vpop.f32.mrb[0].mxu0
    %v2223 = vadd.f32 %v2152, %v2222
    %v2224 = vpop.f32.mrb[0].mxu0
    %v2225 = vadd.f32 %v2154, %v2224
    %2226 = vdwg.mxu0
    %2227 = vmatprep.subr.mxu0 %v927
    %2228 = vmatpush1.msra.mxu0 %v926
    %2229 = vmatprep.subr.mxu0 %v931
    %2230 = vmatpush1.msra.mxu0 %v930
    %2231 = vmatprep.subr.mxu0 %v935
    %2232 = vmatpush1.msra.mxu0 %v934
    %2233 = vmatprep.subr.mxu0 %v939
    %2234 = vmatpush1.msra.mxu0 %v938
    %2235 = vmatprep.subr.mxu0 %v943
    %2236 = vmatpush1.msra.mxu0 %v942
    %2237 = vmatprep.subr.mxu0 %v947
    %2238 = vmatpush1.msra.mxu0 %v946
    %2239 = vmatprep.subr.mxu0 %v951
    %2240 = vmatpush1.msra.mxu0 %v950
    %2241 = vmatprep.subr.mxu0 %v955
    %2242 = vmatpush1.msra.mxu0 %v954
    %2243 = vmatprep.subr.mxu0 %v959
    %2244 = vmatpush1.msra.mxu0 %v958
    %2245 = vmatprep.subr.mxu0 %v963
    %2246 = vmatpush1.msra.mxu0 %v962
    %2247 = vmatprep.subr.mxu0 %v967
    %2248 = vmatpush1.msra.mxu0 %v966
    %2249 = vmatprep.subr.mxu0 %v971
    %2250 = vmatpush1.msra.mxu0 %v970
    %2251 = vmatprep.subr.mxu0 %v975
    %2252 = vmatpush1.msra.mxu0 %v974
    %2253 = vmatprep.subr.mxu0 %v979
    %2254 = vmatpush1.msra.mxu0 %v978
    %2255 = vmatprep.subr.mxu0 %v983
    %2256 = vmatpush1.msra.mxu0 %v982
    %2257 = vmatprep.subr.mxu0 %v987
    %2258 = vmatpush1.msra.mxu0 %v986
    %2259 = vmatprep.subr.mxu0 %v991
    %2260 = vmatpush1.msra.mxu0 %v990
    %2261 = vmatprep.subr.mxu0 %v995
    %2262 = vmatpush1.msra.mxu0 %v994
    %2263 = vmatprep.subr.mxu0 %v999
    %2264 = vmatpush1.msra.mxu0 %v998
    %2265 = vmatprep.subr.mxu0 %v1003
    %2266 = vmatpush1.msra.mxu0 %v1002
    %2267 = vmatprep.subr.mxu0 %v1007
    %2268 = vmatpush1.msra.mxu0 %v1006
    %2269 = vmatprep.subr.mxu0 %v1011
    %2270 = vmatpush1.msra.mxu0 %v1010
    %2271 = vmatprep.subr.mxu0 %v1015
    %2272 = vmatpush1.msra.mxu0 %v1014
    %2273 = vmatprep.subr.mxu0 %v1019
    %2274 = vmatpush1.msra.mxu0 %v1018
    %2275 = vmatprep.subr.mxu0 %v1023
    %2276 = vmatpush1.msra.mxu0 %v1022
    %2277 = vmatprep.subr.mxu0 %v1027
    %2278 = vmatpush1.msra.mxu0 %v1026
    %2279 = vmatprep.subr.mxu0 %v1031
    %2280 = vmatpush1.msra.mxu0 %v1030
    %2281 = vmatprep.subr.mxu0 %v1035
    %2282 = vmatpush1.msra.mxu0 %v1034
    %2283 = vmatprep.subr.mxu0 %v1039
    %2284 = vmatpush1.msra.mxu0 %v1038
    %2285 = vmatprep.subr.mxu0 %v1043
    %2286 = vmatpush1.msra.mxu0 %v1042
    %2287 = vmatprep.subr.mxu0 %v1047
    %2288 = vmatpush1.msra.mxu0 %v1046
    %2289 = vmatprep.subr.mxu0 %v1051
    %2290 = vmatpush1.msra.mxu0 %v1050
    %2291 = vmatprep.mubr.f32.mxu0 %v1145
    %2292 = vmatmul.mubr.f32.gmra.mrb[0].mxu0 %v1143
    %v2293 = vpop.f32.mrb[0].mxu0
    %v2294 = vadd.f32 %v2223, %v2293
    %v2295 = vpop.f32.mrb[0].mxu0
    %v2296 = vadd.f32 %v2225, %v2295
    %2297 = vdwg.mxu0
    %vm2298 = vcmp.gt.f32.partialorder %v1726, 0.0
    %vm2299 = vcmp.gt.f32.partialorder %v1728, 0.0
    %vm2300 = vcmp.gt.f32.partialorder %v2294, 0.0
    %vm2301 = vcmp.gt.f32.partialorder %v2296, 0.0
    %v2302 = vmul.f32 %v1726, 0.01
    %v2303 = vmul.f32 %v1728, 0.01
    %v2304 = vmul.f32 %v2294, 0.01
    %v2305 = vmul.f32 %v2296, 0.01
    %v2306 = vsel %vm2298, %v1726, %v2302
    %v2307 = vsel %vm2299, %v1728, %v2303
    %v2308 = vsel %vm2300, %v2294, %v2304
    %v2309 = vsel %vm2301, %v2296, %v2305
    %v2314 = vcombine.low %v2306, %v2307
    %v2315 = vcombine.low %v2308, %v2309
    %v2317 = vunpack.c.l.s4 1983009808
    %v2318 = vunpack.c.0.s8 %v2317
    %v2319 = vlaneseq
    %v2320 = vshrl.u32 %v2319, 7
    %v2321 = vsub.s32 %v2318, %v2320
    %v2322 = vrot.slane %v2314, %v2321
    %v2324 = vunpack.c.l.s4 1983009808
    %v2325 = vunpack.c.0.s8 %v2324
    %v2326 = vlaneseq
    %v2327 = vshrl.u32 %v2326, 7
    %v2328 = vsub.s32 %v2325, %v2327
    %v2329 = vrot.slane %v2315, %v2328
    %v2330 = vcombine.low %v2322, %v2329
    %2332 = vst [vmem:[#allocation4] sm:$0xff] %v2330
    %v2333 = vld [vmem:[%s3] sm:$0xff]
    %v2334 = vld [vmem:[%s3 + $0x8] sm:$0xff]
    %v2335 = vld [vmem:[%s3 + $0x10] sm:$0xff]
    %v2336 = vld [vmem:[%s3 + $0x18] sm:$0xff]
    %v2337 = vld [vmem:[%s3 + $0x20] sm:$0xff]
    %v2338 = vld [vmem:[%s3 + $0x28] sm:$0xff]
    %v2339 = vld [vmem:[%s3 + $0x30] sm:$0xff]
    %v2340 = vld [vmem:[%s3 + $0x38] sm:$0xff]
    %v2341 = vld [vmem:[%s3 + $0x40] sm:$0xff]
    %v2342 = vld [vmem:[%s3 + $0x48] sm:$0xff]
    %v2343 = vld [vmem:[%s3 + $0x50] sm:$0xff]
    %v2344 = vld [vmem:[%s3 + $0x58] sm:$0xff]
    %v2345 = vld [vmem:[%s3 + $0x60] sm:$0xff]
    %v2346 = vld [vmem:[%s3 + $0x68] sm:$0xff]
    %v2347 = vld [vmem:[%s3 + $0x70] sm:$0xff]
    %v2348 = vld [vmem:[%s3 + $0x78] sm:$0xff]
    %v2349 = vld [vmem:[%s3 + $0x80] sm:$0xff]
    %v2350 = vld [vmem:[%s3 + $0x88] sm:$0xff]
    %v2351 = vld [vmem:[%s3 + $0x90] sm:$0xff]
    %v2352 = vld [vmem:[%s3 + $0x98] sm:$0xff]
    %v2353 = vld [vmem:[%s3 + $0xa0] sm:$0xff]
    %v2354 = vld [vmem:[%s3 + $0xa8] sm:$0xff]
    %v2355 = vld [vmem:[%s3 + $0xb0] sm:$0xff]
    %v2356 = vld [vmem:[%s3 + $0xb8] sm:$0xff]
    %v2357 = vld [vmem:[%s3 + $0xc0] sm:$0xff]
    %v2358 = vld [vmem:[%s3 + $0xc8] sm:$0xff]
    %v2359 = vld [vmem:[%s3 + $0xd0] sm:$0xff]
    %v2360 = vld [vmem:[%s3 + $0xd8] sm:$0xff]
    %v2361 = vld [vmem:[%s3 + $0xe0] sm:$0xff]
    %v2362 = vld [vmem:[%s3 + $0xe8] sm:$0xff]
    %v2363 = vld [vmem:[%s3 + $0xf0] sm:$0xff]
    %v2364 = vld [vmem:[%s3 + $0xf8] sm:$0xff]
    %v2365 = vld [vmem:[%s3 + $0x100] sm:$0xff]
    %v2366 = vld [vmem:[%s3 + $0x108] sm:$0xff]
    %v2367 = vld [vmem:[%s3 + $0x110] sm:$0xff]
    %v2368 = vld [vmem:[%s3 + $0x118] sm:$0xff]
    %v2369 = vld [vmem:[%s3 + $0x120] sm:$0xff]
    %v2370 = vld [vmem:[%s3 + $0x128] sm:$0xff]
    %v2371 = vld [vmem:[%s3 + $0x130] sm:$0xff]
    %v2372 = vld [vmem:[%s3 + $0x138] sm:$0xff]
    %v2373 = vld [vmem:[%s3 + $0x140] sm:$0xff]
    %v2374 = vld [vmem:[%s3 + $0x148] sm:$0xff]
    %v2375 = vld [vmem:[%s3 + $0x150] sm:$0xff]
    %v2376 = vld [vmem:[%s3 + $0x158] sm:$0xff]
    %v2377 = vld [vmem:[%s3 + $0x160] sm:$0xff]
    %v2378 = vld [vmem:[%s3 + $0x168] sm:$0xff]
    %v2379 = vld [vmem:[%s3 + $0x170] sm:$0xff]
    %v2380 = vld [vmem:[%s3 + $0x178] sm:$0xff]
    %v2381 = vld [vmem:[%s3 + $0x180] sm:$0xff]
    %v2382 = vld [vmem:[%s3 + $0x188] sm:$0xff]
    %v2383 = vld [vmem:[%s3 + $0x190] sm:$0xff]
    %v2384 = vld [vmem:[%s3 + $0x198] sm:$0xff]
    %v2385 = vld [vmem:[%s3 + $0x1a0] sm:$0xff]
    %v2386 = vld [vmem:[%s3 + $0x1a8] sm:$0xff]
    %v2387 = vld [vmem:[%s3 + $0x1b0] sm:$0xff]
    %v2388 = vld [vmem:[%s3 + $0x1b8] sm:$0xff]
    %v2389 = vld [vmem:[%s3 + $0x1c0] sm:$0xff]
    %v2390 = vld [vmem:[%s3 + $0x1c8] sm:$0xff]
    %v2391 = vld [vmem:[%s3 + $0x1d0] sm:$0xff]
    %v2392 = vld [vmem:[%s3 + $0x1d8] sm:$0xff]
    %v2393 = vld [vmem:[%s3 + $0x1e0] sm:$0xff]
    %v2394 = vld [vmem:[%s3 + $0x1e8] sm:$0xff]
    %v2395 = vld [vmem:[%s3 + $0x1f0] sm:$0xff]
    %v2396 = vld [vmem:[%s3 + $0x1f8] sm:$0xff]
    %v2397 = vld [vmem:[%s4] sm:$0x1]
    %v2399 = vlaneseq
    %v2400 = vshrl.u32 %v2399, 7
    %v2401 = vsub.s32 0, %v2400
    %v2402 = vrot.slane %v2397, %v2401
    %2404 = vmatprep.subr.mxu0 0.0
    %2405 = vmatpush1.msra.mxu0 %v2333
    %2406 = vmatprep.subr.mxu0 0.0
    %2407 = vmatpush1.msra.mxu0 %v2334
    %2408 = vmatprep.subr.mxu0 0.0
    %2409 = vmatpush1.msra.mxu0 %v2335
    %2410 = vmatprep.subr.mxu0 0.0
    %2411 = vmatpush1.msra.mxu0 %v2336
    %2412 = vmatprep.subr.mxu0 0.0
    %2413 = vmatpush1.msra.mxu0 %v2337
    %2414 = vmatprep.subr.mxu0 0.0
    %2415 = vmatpush1.msra.mxu0 %v2338
    %2416 = vmatprep.subr.mxu0 0.0
    %2417 = vmatpush1.msra.mxu0 %v2339
    %2418 = vmatprep.subr.mxu0 0.0
    %2419 = vmatpush1.msra.mxu0 %v2340
    %2420 = vmatprep.subr.mxu0 0.0
    %2421 = vmatpush1.msra.mxu0 %v2341
    %2422 = vmatprep.subr.mxu0 0.0
    %2423 = vmatpush1.msra.mxu0 %v2342
    %2424 = vmatprep.subr.mxu0 0.0
    %2425 = vmatpush1.msra.mxu0 %v2343
    %2426 = vmatprep.subr.mxu0 0.0
    %2427 = vmatpush1.msra.mxu0 %v2344
    %2428 = vmatprep.subr.mxu0 0.0
    %2429 = vmatpush1.msra.mxu0 %v2345
    %2430 = vmatprep.subr.mxu0 0.0
    %2431 = vmatpush1.msra.mxu0 %v2346
    %2432 = vmatprep.subr.mxu0 0.0
    %2433 = vmatpush1.msra.mxu0 %v2347
    %2434 = vmatprep.subr.mxu0 0.0
    %2435 = vmatpush1.msra.mxu0 %v2348
    %2436 = vmatprep.subr.mxu0 0.0
    %2437 = vmatpush1.msra.mxu0 %v2349
    %2438 = vmatprep.subr.mxu0 0.0
    %2439 = vmatpush1.msra.mxu0 %v2350
    %2440 = vmatprep.subr.mxu0 0.0
    %2441 = vmatpush1.msra.mxu0 %v2351
    %2442 = vmatprep.subr.mxu0 0.0
    %2443 = vmatpush1.msra.mxu0 %v2352
    %2444 = vmatprep.subr.mxu0 0.0
    %2445 = vmatpush1.msra.mxu0 %v2353
    %2446 = vmatprep.subr.mxu0 0.0
    %2447 = vmatpush1.msra.mxu0 %v2354
    %2448 = vmatprep.subr.mxu0 0.0
    %2449 = vmatpush1.msra.mxu0 %v2355
    %2450 = vmatprep.subr.mxu0 0.0
    %2451 = vmatpush1.msra.mxu0 %v2356
    %2452 = vmatprep.subr.mxu0 0.0
    %2453 = vmatpush1.msra.mxu0 %v2357
    %2454 = vmatprep.subr.mxu0 0.0
    %2455 = vmatpush1.msra.mxu0 %v2358
    %2456 = vmatprep.subr.mxu0 0.0
    %2457 = vmatpush1.msra.mxu0 %v2359
    %2458 = vmatprep.subr.mxu0 0.0
    %2459 = vmatpush1.msra.mxu0 %v2360
    %2460 = vmatprep.subr.mxu0 0.0
    %2461 = vmatpush1.msra.mxu0 %v2361
    %2462 = vmatprep.subr.mxu0 0.0
    %2463 = vmatpush1.msra.mxu0 %v2362
    %2464 = vmatprep.subr.mxu0 0.0
    %2465 = vmatpush1.msra.mxu0 %v2363
    %2466 = vmatprep.subr.mxu0 0.0
    %2467 = vmatpush1.msra.mxu0 %v2364
    %2468 = vmatprep.mubr.f32.mxu0 %v2307
    %2469 = vmatmul.mubr.f32.gmra.mrb[0].mxu0 %v2306
    %v2470 = vpop.f32.mrb[0].mxu0
    %v2471 = vadd.f32 %v2402, %v2470
    %v2472 = vpop.f32.mrb[0].mxu0
    %2473 = vdwg.mxu0
    %2474 = vmatprep.subr.mxu0 0.0
    %2475 = vmatpush1.msra.mxu0 %v2365
    %2476 = vmatprep.subr.mxu0 0.0
    %2477 = vmatpush1.msra.mxu0 %v2366
    %2478 = vmatprep.subr.mxu0 0.0
    %2479 = vmatpush1.msra.mxu0 %v2367
    %2480 = vmatprep.subr.mxu0 0.0
    %2481 = vmatpush1.msra.mxu0 %v2368
    %2482 = vmatprep.subr.mxu0 0.0
    %2483 = vmatpush1.msra.mxu0 %v2369
    %2484 = vmatprep.subr.mxu0 0.0
    %2485 = vmatpush1.msra.mxu0 %v2370
    %2486 = vmatprep.subr.mxu0 0.0
    %2487 = vmatpush1.msra.mxu0 %v2371
    %2488 = vmatprep.subr.mxu0 0.0
    %2489 = vmatpush1.msra.mxu0 %v2372
    %2490 = vmatprep.subr.mxu0 0.0
    %2491 = vmatpush1.msra.mxu0 %v2373
    %2492 = vmatprep.subr.mxu0 0.0
    %2493 = vmatpush1.msra.mxu0 %v2374
    %2494 = vmatprep.subr.mxu0 0.0
    %2495 = vmatpush1.msra.mxu0 %v2375
    %2496 = vmatprep.subr.mxu0 0.0
    %2497 = vmatpush1.msra.mxu0 %v2376
    %2498 = vmatprep.subr.mxu0 0.0
    %2499 = vmatpush1.msra.mxu0 %v2377
    %2500 = vmatprep.subr.mxu0 0.0
    %2501 = vmatpush1.msra.mxu0 %v2378
    %2502 = vmatprep.subr.mxu0 0.0
    %2503 = vmatpush1.msra.mxu0 %v2379
    %2504 = vmatprep.subr.mxu0 0.0
    %2505 = vmatpush1.msra.mxu0 %v2380
    %2506 = vmatprep.subr.mxu0 0.0
    %2507 = vmatpush1.msra.mxu0 %v2381
    %2508 = vmatprep.subr.mxu0 0.0
    %2509 = vmatpush1.msra.mxu0 %v2382
    %2510 = vmatprep.subr.mxu0 0.0
    %2511 = vmatpush1.msra.mxu0 %v2383
    %2512 = vmatprep.subr.mxu0 0.0
    %2513 = vmatpush1.msra.mxu0 %v2384
    %2514 = vmatprep.subr.mxu0 0.0
    %2515 = vmatpush1.msra.mxu0 %v2385
    %2516 = vmatprep.subr.mxu0 0.0
    %2517 = vmatpush1.msra.mxu0 %v2386
    %2518 = vmatprep.subr.mxu0 0.0
    %2519 = vmatpush1.msra.mxu0 %v2387
    %2520 = vmatprep.subr.mxu0 0.0
    %2521 = vmatpush1.msra.mxu0 %v2388
    %2522 = vmatprep.subr.mxu0 0.0
    %2523 = vmatpush1.msra.mxu0 %v2389
    %2524 = vmatprep.subr.mxu0 0.0
    %2525 = vmatpush1.msra.mxu0 %v2390
    %2526 = vmatprep.subr.mxu0 0.0
    %2527 = vmatpush1.msra.mxu0 %v2391
    %2528 = vmatprep.subr.mxu0 0.0
    %2529 = vmatpush1.msra.mxu0 %v2392
    %2530 = vmatprep.subr.mxu0 0.0
    %2531 = vmatpush1.msra.mxu0 %v2393
    %2532 = vmatprep.subr.mxu0 0.0
    %2533 = vmatpush1.msra.mxu0 %v2394
    %2534 = vmatprep.subr.mxu0 0.0
    %2535 = vmatpush1.msra.mxu0 %v2395
    %2536 = vmatprep.subr.mxu0 0.0
    %2537 = vmatpush1.msra.mxu0 %v2396
    %2538 = vmatprep.mubr.f32.mxu0 %v2309
    %2539 = vmatmul.mubr.f32.gmra.mrb[0].mxu0 %v2308
    %v2540 = vpop.f32.mrb[0].mxu0
    %v2541 = vadd.f32 %v2471, %v2540
    %v2542 = vpop.f32.mrb[0].mxu0
    %2543 = vdwg.mxu0
    %2544 = vst [vmem:[#allocation2] sm:$0x3] %v2541
    // Predicated region
    $region22: #{rgb_action_forward.3} parent=1 // pred_check
      _
    $region23: #{rgb_action_forward.3} parent=1 // pred_check_branch
      %2546 = sbr.rel (0) target = $region25
    $region24: #{rgb_action_forward.3} parent=1 // pred_region
      %s2548 = ssub.s32 32, 32
      %2549 = vsyncadd [#allocation3], %s2548
      %s2551 = sshll.u32 [#allocation2], 4
      %s2552 = int_to_ptr.vmem [resolvable:$true] %s2551
      %2554 = dma.vmem_to_hbm [thread:$0]  %s2552, 32, %s5, [#allocation3]
    $region25: #{rgb_action_forward.3} parent=1 // pred_fallthru
      _
    // Predicated region
    $region26: #{rgb_action_forward.3} parent=1 // pred_check
      _
    $region27: #{rgb_action_forward.3} parent=1 // pred_check_branch
      %2556 = sbr.rel (0) target = $region29
    $region28: #{rgb_action_forward.3} parent=1 // pred_region
      %s2558 = ssub.s32 128, 128
      %2559 = vsyncadd [#allocation5], %s2558
      %s2561 = sshll.u32 [#allocation4], 4
      %s2562 = int_to_ptr.vmem [resolvable:$true] %s2561
      %2564 = dma.vmem_to_hbm [thread:$0]  %s2562, 128, %s6, [#allocation5]
    $region29: #{rgb_action_forward.3} parent=1 // pred_fallthru
      _
    // Predicated region
    $region30: #{rgb_action_forward.3} parent=1 // pred_check
      _
    $region31: #{rgb_action_forward.3} parent=1 // pred_check_branch
      %2566 = sbr.rel (0) target = $region33
    $region32: #{rgb_action_forward.3} parent=1 // pred_region
      %2567 = dma.done [#allocation3], 32
    $region33: #{rgb_action_forward.3} parent=1 // pred_fallthru
      _
    // Predicated region
    $region34: #{rgb_action_forward.3} parent=1 // pred_check
      _
    $region35: #{rgb_action_forward.3} parent=1 // pred_check_branch
      %2569 = sbr.rel (0) target = $region37
    $region36: #{rgb_action_forward.3} parent=1 // pred_region
      %2570 = dma.done [#allocation5], 128
    $region37: #{rgb_action_forward.3} parent=1 // pred_fallthru
      _
    %2571 = vsyncpa [#allocation3], 1
    %2572 = vsyncpa [#allocation5], 1

// kernel: rgb_action_forward.2
$region0: #{rgb_action_forward.2}
  #allocation0 [shape = 'u32[]', space=smem, size = 0x4, offset = 0x4, fixed_abs, tag = 'smem constant byte address 0x4 - core index']
  #allocation1 [shape = 'u32[144,128]{1,0:T(1,128)}', space=vmem, size = 0x12000, scoped, tag = 'internal scratch']
  %s0 = inlined_call_operand.vmem [shape: f32[16,1664], index: 0, kind: input, shape index: {}]
  %s1 = inlined_call_operand.vmem [shape: f32[1664,832], index: 1, kind: input, shape index: {}]
  %s2 = inlined_call_operand.vmem [shape: f32[1,832], index: 2, kind: input, shape index: {}]
  %s3 = inlined_call_operand.vmem [shape: f32[832,1024], index: 3, kind: input, shape index: {}]
  %s4 = inlined_call_operand.vmem [shape: f32[1,1024], index: 4, kind: input, shape index: {}]
  %s5 = inlined_call_operand.vmem [shape: f32[1024,256], index: 5, kind: input, shape index: {}]
  %s6 = inlined_call_operand.vmem [shape: f32[1,256], index: 6, kind: input, shape index: {}]
  %s7 = inlined_call_operand.vmem [shape: f32[16,256], index: 7, kind: output, shape index: {}]
  %s8 = sld [smem:[#allocation0]]
  $region38: #{rgb_action_forward.2} parent=0
    _
  %s10 = ssub.s32 1, %s8
  %s11 = scalar_select 0, %s10, %s8
  // Predicated region
  $region2: #{rgb_action_forward.2} parent=0 // pred_check
    _
  $region3: #{rgb_action_forward.2} parent=0 // pred_check_branch
    %13 = sbr.rel (0) target = $region5
  $region4: #{rgb_action_forward.2} parent=0 // pred_region
    _
  $region5: #{rgb_action_forward.2} parent=0 // pred_fallthru
    _
  // Predicated region
  $region6: #{rgb_action_forward.2} parent=0 // pred_check
    _
  $region7: #{rgb_action_forward.2} parent=0 // pred_check_branch
    %15 = sbr.rel (0) target = $region9
  $region8: #{rgb_action_forward.2} parent=0 // pred_region
    _
  $region9: #{rgb_action_forward.2} parent=0 // pred_fallthru
    _
  // Predicated region
  $region10: #{rgb_action_forward.2} parent=0 // pred_check
    _
  $region11: #{rgb_action_forward.2} parent=0 // pred_check_branch
    %17 = sbr.rel (0) target = $region13
  $region12: #{rgb_action_forward.2} parent=0 // pred_region
    _
  $region13: #{rgb_action_forward.2} parent=0 // pred_fallthru
    _
  // Predicated region
  $region14: #{rgb_action_forward.2} parent=0 // pred_check
    _
  $region15: #{rgb_action_forward.2} parent=0 // pred_check_branch
    %19 = sbr.rel (0) target = $region17
  $region16: #{rgb_action_forward.2} parent=0 // pred_region
    _
  $region17: #{rgb_action_forward.2} parent=0 // pred_fallthru
    _
  // Predicated region
  $region18: #{rgb_action_forward.2} parent=0 // pred_check
    _
  $region19: #{rgb_action_forward.2} parent=0 // pred_check_branch
    %21 = sbr.rel (0) target = $region21
  $region20: #{rgb_action_forward.2} parent=0 // pred_region
    _
  $region21: #{rgb_action_forward.2} parent=0 // pred_fallthru
    _
  // Predicated region
  $region22: #{rgb_action_forward.2} parent=0 // pred_check
    _
  $region23: #{rgb_action_forward.2} parent=0 // pred_check_branch
    %23 = sbr.rel (0) target = $region25
  $region24: #{rgb_action_forward.2} parent=0 // pred_region
    _
  $region25: #{rgb_action_forward.2} parent=0 // pred_fallthru
    _
  // Predicated region
  $region26: #{rgb_action_forward.2} parent=0 // pred_check
    _
  $region27: #{rgb_action_forward.2} parent=0 // pred_check_branch
    %25 = sbr.rel (0) target = $region29
  $region28: #{rgb_action_forward.2} parent=0 // pred_region
    _
  $region29: #{rgb_action_forward.2} parent=0 // pred_fallthru
    _
  %v26 = vld [vmem:[%s0] sm:$0xff]
  %v27 = vld [vmem:[%s0 + $0x8] sm:$0xff]
  %v28 = vld [vmem:[%s0 + $0x10] sm:$0xff]
  %v29 = vld [vmem:[%s0 + $0x18] sm:$0xff]
  %v30 = vld [vmem:[%s0 + $0x20] sm:$0xff]
  %v31 = vld [vmem:[%s0 + $0x28] sm:$0xff]
  %v32 = vld [vmem:[%s0 + $0x30] sm:$0xff]
  %v33 = vld [vmem:[%s0 + $0x38] sm:$0xff]
  %v34 = vld [vmem:[%s0 + $0x40] sm:$0xff]
  %v35 = vld [vmem:[%s0 + $0x48] sm:$0xff]
  %v36 = vld [vmem:[%s0 + $0x50] sm:$0xff]
  %v37 = vld [vmem:[%s0 + $0x58] sm:$0xff]
  %v38 = vld [vmem:[%s0 + $0x60] sm:$0xff]
  %v39 = vld [vmem:[%s0 + $0x68] sm:$0xff]
  %v40 = vld [vmem:[%s0 + $0x70] sm:$0xff]
  %v41 = vld [vmem:[%s0 + $0x78] sm:$0xff]
  %v42 = vld [vmem:[%s0 + $0x80] sm:$0xff]
  %v43 = vld [vmem:[%s0 + $0x88] sm:$0xff]
  %v44 = vld [vmem:[%s0 + $0x90] sm:$0xff]
  %v45 = vld [vmem:[%s0 + $0x98] sm:$0xff]
  %v46 = vld [vmem:[%s0 + $0xa0] sm:$0xff]
  %v47 = vld [vmem:[%s0 + $0xa8] sm:$0xff]
  %v48 = vld [vmem:[%s0 + $0xb0] sm:$0xff]
  %v49 = vld [vmem:[%s0 + $0xb8] sm:$0xff]
  %v50 = vld [vmem:[%s0 + $0xc0] sm:$0xff]
  %v51 = vld [vmem:[%s0 + $0xc8] sm:$0xff]
  %v52 = vld [vmem:[%s1] sm:$0xff]
  %v53 = vld [vmem:[%s1 + $0x8] sm:$0xff]
  %v54 = vld [vmem:[%s1 + $0x10] sm:$0xff]
  %v55 = vld [vmem:[%s1 + $0x18] sm:$0xff]
  %v56 = vld [vmem:[%s1 + $0x20] sm:$0xff]
  %v57 = vld [vmem:[%s1 + $0x28] sm:$0xff]
  %v58 = vld [vmem:[%s1 + $0x30] sm:$0xff]
  %v59 = vld [vmem:[%s1 + $0x38] sm:$0xff]
  %v60 = vld [vmem:[%s1 + $0x40] sm:$0xff]
  %v61 = vld [vmem:[%s1 + $0x48] sm:$0xff]
  %v62 = vld [vmem:[%s1 + $0x50] sm:$0xff]
  %v63 = vld [vmem:[%s1 + $0x58] sm:$0xff]
  %v64 = vld [vmem:[%s1 + $0x60] sm:$0xff]
  %v65 = vld [vmem:[%s1 + $0x68] sm:$0xff]
  %v66 = vld [vmem:[%s1 + $0x70] sm:$0xff]
  %v67 = vld [vmem:[%s1 + $0x78] sm:$0xff]
  %v68 = vld [vmem:[%s1 + $0x80] sm:$0xff]
  %v69 = vld [vmem:[%s1 + $0x88] sm:$0xff]
  %v70 = vld [vmem:[%s1 + $0x90] sm:$0xff]
  %v71 = vld [vmem:[%s1 + $0x98] sm:$0xff]
  %v72 = vld [vmem:[%s1 + $0xa0] sm:$0xff]
  %v73 = vld [vmem:[%s1 + $0xa8] sm:$0xff]
  %v74 = vld [vmem:[%s1 + $0xb0] sm:$0xff]
  %v75 = vld [vmem:[%s1 + $0xb8] sm:$0xff]
  %v76 = vld [vmem:[%s1 + $0xc0] sm:$0xff]
  %v77 = vld [vmem:[%s1 + $0xc8] sm:$0xff]
  %v78 = vld [vmem:[%s1 + $0xd0] sm:$0xff]
  %v79 = vld [vmem:[%s1 + $0xd8] sm:$0xff]
  %v80 = vld [vmem:[%s1 + $0xe0] sm:$0xff]
  %v81 = vld [vmem:[%s1 + $0xe8] sm:$0xff]
  %v82 = vld [vmem:[%s1 + $0xf0] sm:$0xff]
  %v83 = vld [vmem:[%s1 + $0xf8] sm:$0xff]
  %v84 = vld [vmem:[%s1 + $0x100] sm:$0xff]
  %v85 = vld [vmem:[%s1 + $0x108] sm:$0xff]
  %v86 = vld [vmem:[%s1 + $0x110] sm:$0xff]
  %v87 = vld [vmem:[%s1 + $0x118] sm:$0xff]
  %v88 = vld [vmem:[%s1 + $0x120] sm:$0xff]
  %v89 = vld [vmem:[%s1 + $0x128] sm:$0xff]
  %v90 = vld [vmem:[%s1 + $0x130] sm:$0xff]
  %v91 = vld [vmem:[%s1 + $0x138] sm:$0xff]
  %v92 = vld [vmem:[%s1 + $0x140] sm:$0xff]
  %v93 = vld [vmem:[%s1 + $0x148] sm:$0xff]
  %v94 = vld [vmem:[%s1 + $0x150] sm:$0xff]
  %v95 = vld [vmem:[%s1 + $0x158] sm:$0xff]
  %v96 = vld [vmem:[%s1 + $0x160] sm:$0xff]
  %v97 = vld [vmem:[%s1 + $0x168] sm:$0xff]
  %v98 = vld [vmem:[%s1 + $0x170] sm:$0xff]
  %v99 = vld [vmem:[%s1 + $0x178] sm:$0xff]
  %v100 = vld [vmem:[%s1 + $0x180] sm:$0xff]
  %v101 = vld [vmem:[%s1 + $0x188] sm:$0xff]
  %v102 = vld [vmem:[%s1 + $0x190] sm:$0xff]
  %v103 = vld [vmem:[%s1 + $0x198] sm:$0xff]
  %v104 = vld [vmem:[%s1 + $0x1a0] sm:$0xff]
  %v105 = vld [vmem:[%s1 + $0x1a8] sm:$0xff]
  %v106 = vld [vmem:[%s1 + $0x1b0] sm:$0xff]
  %v107 = vld [vmem:[%s1 + $0x1b8] sm:$0xff]
  %v108 = vld [vmem:[%s1 + $0x1c0] sm:$0xff]
  %v109 = vld [vmem:[%s1 + $0x1c8] sm:$0xff]
  %v110 = vld [vmem:[%s1 + $0x1d0] sm:$0xff]
  %v111 = vld [vmem:[%s1 + $0x1d8] sm:$0xff]
  %v112 = vld [vmem:[%s1 + $0x1e0] sm:$0xff]
  %v113 = vld [vmem:[%s1 + $0x1e8] sm:$0xff]
  %v114 = vld [vmem:[%s1 + $0x1f0] sm:$0xff]
  %v115 = vld [vmem:[%s1 + $0x1f8] sm:$0xff]
  %v116 = vld [vmem:[%s1 + $0x200] sm:$0xff]
  %v117 = vld [vmem:[%s1 + $0x208] sm:$0xff]
  %v118 = vld [vmem:[%s1 + $0x210] sm:$0xff]
  %v119 = vld [vmem:[%s1 + $0x218] sm:$0xff]
  %v120 = vld [vmem:[%s1 + $0x220] sm:$0xff]
  %v121 = vld [vmem:[%s1 + $0x228] sm:$0xff]
  %v122 = vld [vmem:[%s1 + $0x230] sm:$0xff]
  %v123 = vld [vmem:[%s1 + $0x238] sm:$0xff]
  %v124 = vld [vmem:[%s1 + $0x240] sm:$0xff]
  %v125 = vld [vmem:[%s1 + $0x248] sm:$0xff]
  %v126 = vld [vmem:[%s1 + $0x250] sm:$0xff]
  %v127 = vld [vmem:[%s1 + $0x258] sm:$0xff]
  %v128 = vld [vmem:[%s1 + $0x260] sm:$0xff]
  %v129 = vld [vmem:[%s1 + $0x268] sm:$0xff]
  %v130 = vld [vmem:[%s1 + $0x270] sm:$0xff]
  %v131 = vld [vmem:[%s1 + $0x278] sm:$0xff]
  %v132 = vld [vmem:[%s1 + $0x280] sm:$0xff]
  %v133 = vld [vmem:[%s1 + $0x288] sm:$0xff]
  %v134 = vld [vmem:[%s1 + $0x290] sm:$0xff]
  %v135 = vld [vmem:[%s1 + $0x298] sm:$0xff]
  %v136 = vld [vmem:[%s1 + $0x2a0] sm:$0xff]
  %v137 = vld [vmem:[%s1 + $0x2a8] sm:$0xff]
  %v138 = vld [vmem:[%s1 + $0x2b0] sm:$0xff]
  %v139 = vld [vmem:[%s1 + $0x2b8] sm:$0xff]
  %v140 = vld [vmem:[%s1 + $0x2c0] sm:$0xff]
  %v141 = vld [vmem:[%s1 + $0x2c8] sm:$0xff]
  %v142 = vld [vmem:[%s1 + $0x2d0] sm:$0xff]
  %v143 = vld [vmem:[%s1 + $0x2d8] sm:$0xff]
  %v144 = vld [vmem:[%s1 + $0x2e0] sm:$0xff]
  %v145 = vld [vmem:[%s1 + $0x2e8] sm:$0xff]
  %v146 = vld [vmem:[%s1 + $0x2f0] sm:$0xff]
  %v147 = vld [vmem:[%s1 + $0x2f8] sm:$0xff]
  %v148 = vld [vmem:[%s1 + $0x300] sm:$0xff]
  %v149 = vld [vmem:[%s1 + $0x308] sm:$0xff]
  %v150 = vld [vmem:[%s1 + $0x310] sm:$0xff]
  %v151 = vld [vmem:[%s1 + $0x318] sm:$0xff]
  %v152 = vld [vmem:[%s1 + $0x320] sm:$0xff]
  %v153 = vld [vmem:[%s1 + $0x328] sm:$0xff]
  %v154 = vld [vmem:[%s1 + $0x330] sm:$0xff]
  %v155 = vld [vmem:[%s1 + $0x338] sm:$0xff]
  %v156 = vld [vmem:[%s1 + $0x340] sm:$0xff]
  %v157 = vld [vmem:[%s1 + $0x348] sm:$0xff]
  %v158 = vld [vmem:[%s1 + $0x350] sm:$0xff]
  %v159 = vld [vmem:[%s1 + $0x358] sm:$0xff]
  %v160 = vld [vmem:[%s1 + $0x360] sm:$0xff]
  %v161 = vld [vmem:[%s1 + $0x368] sm:$0xff]
  %v162 = vld [vmem:[%s1 + $0x370] sm:$0xff]
  %v163 = vld [vmem:[%s1 + $0x378] sm:$0xff]
  %v164 = vld [vmem:[%s1 + $0x380] sm:$0xff]
  %v165 = vld [vmem:[%s1 + $0x388] sm:$0xff]
  %v166 = vld [vmem:[%s1 + $0x390] sm:$0xff]
  %v167 = vld [vmem:[%s1 + $0x398] sm:$0xff]
  %v168 = vld [vmem:[%s1 + $0x3a0] sm:$0xff]
  %v169 = vld [vmem:[%s1 + $0x3a8] sm:$0xff]
  %v170 = vld [vmem:[%s1 + $0x3b0] sm:$0xff]
  %v171 = vld [vmem:[%s1 + $0x3b8] sm:$0xff]
  %v172 = vld [vmem:[%s1 + $0x3c0] sm:$0xff]
  %v173 = vld [vmem:[%s1 + $0x3c8] sm:$0xff]
  %v174 = vld [vmem:[%s1 + $0x3d0] sm:$0xff]
  %v175 = vld [vmem:[%s1 + $0x3d8] sm:$0xff]
  %v176 = vld [vmem:[%s1 + $0x3e0] sm:$0xff]
  %v177 = vld [vmem:[%s1 + $0x3e8] sm:$0xff]
  %v178 = vld [vmem:[%s1 + $0x3f0] sm:$0xff]
  %v179 = vld [vmem:[%s1 + $0x3f8] sm:$0xff]
  %v180 = vld [vmem:[%s1 + $0x400] sm:$0xff]
  %v181 = vld [vmem:[%s1 + $0x408] sm:$0xff]
  %v182 = vld [vmem:[%s1 + $0x410] sm:$0xff]
  %v183 = vld [vmem:[%s1 + $0x418] sm:$0xff]
  %v184 = vld [vmem:[%s1 + $0x420] sm:$0xff]
  %v185 = vld [vmem:[%s1 + $0x428] sm:$0xff]
  %v186 = vld [vmem:[%s1 + $0x430] sm:$0xff]
  %v187 = vld [vmem:[%s1 + $0x438] sm:$0xff]
  %v188 = vld [vmem:[%s1 + $0x440] sm:$0xff]
  %v189 = vld [vmem:[%s1 + $0x448] sm:$0xff]
  %v190 = vld [vmem:[%s1 + $0x450] sm:$0xff]
  %v191 = vld [vmem:[%s1 + $0x458] sm:$0xff]
  %v192 = vld [vmem:[%s1 + $0x460] sm:$0xff]
  %v193 = vld [vmem:[%s1 + $0x468] sm:$0xff]
  %v194 = vld [vmem:[%s1 + $0x470] sm:$0xff]
  %v195 = vld [vmem:[%s1 + $0x478] sm:$0xff]
  %v196 = vld [vmem:[%s1 + $0x480] sm:$0xff]
  %v197 = vld [vmem:[%s1 + $0x488] sm:$0xff]
  %v198 = vld [vmem:[%s1 + $0x490] sm:$0xff]
  %v199 = vld [vmem:[%s1 + $0x498] sm:$0xff]
  %v200 = vld [vmem:[%s1 + $0x4a0] sm:$0xff]
  %v201 = vld [vmem:[%s1 + $0x4a8] sm:$0xff]
  %v202 = vld [vmem:[%s1 + $0x4b0] sm:$0xff]
  %v203 = vld [vmem:[%s1 + $0x4b8] sm:$0xff]
  %v204 = vld [vmem:[%s1 + $0x4c0] sm:$0xff]
  %v205 = vld [vmem:[%s1 + $0x4c8] sm:$0xff]
  %v206 = vld [vmem:[%s1 + $0x4d0] sm:$0xff]
  %v207 = vld [vmem:[%s1 + $0x4d8] sm:$0xff]
  %v208 = vld [vmem:[%s1 + $0x4e0] sm:$0xff]
  %v209 = vld [vmem:[%s1 + $0x4e8] sm:$0xff]
  %v210 = vld [vmem:[%s1 + $0x4f0] sm:$0xff]
  %v211 = vld [vmem:[%s1 + $0x4f8] sm:$0xff]
  %v212 = vld [vmem:[%s1 + $0x500] sm:$0xff]
  %v213 = vld [vmem:[%s1 + $0x508] sm:$0xff]
  %v214 = vld [vmem:[%s1 + $0x510] sm:$0xff]
  %v215 = vld [vmem:[%s1 + $0x518] sm:$0xff]
  %v216 = vld [vmem:[%s1 + $0x520] sm:$0xff]
  %v217 = vld [vmem:[%s1 + $0x528] sm:$0xff]
  %v218 = vld [vmem:[%s1 + $0x530] sm:$0xff]
  %v219 = vld [vmem:[%s1 + $0x538] sm:$0xff]
  %v220 = vld [vmem:[%s1 + $0x540] sm:$0xff]
  %v221 = vld [vmem:[%s1 + $0x548] sm:$0xff]
  %v222 = vld [vmem:[%s1 + $0x550] sm:$0xff]
  %v223 = vld [vmem:[%s1 + $0x558] sm:$0xff]
  %v224 = vld [vmem:[%s1 + $0x560] sm:$0xff]
  %v225 = vld [vmem:[%s1 + $0x568] sm:$0xff]
  %v226 = vld [vmem:[%s1 + $0x570] sm:$0xff]
  %v227 = vld [vmem:[%s1 + $0x578] sm:$0xff]
  %v228 = vld [vmem:[%s1 + $0x580] sm:$0xff]
  %v229 = vld [vmem:[%s1 + $0x588] sm:$0xff]
  %v230 = vld [vmem:[%s1 + $0x590] sm:$0xff]
  %v231 = vld [vmem:[%s1 + $0x598] sm:$0xff]
  %v232 = vld [vmem:[%s1 + $0x5a0] sm:$0xff]
  %v233 = vld [vmem:[%s1 + $0x5a8] sm:$0xff]
  %v234 = vld [vmem:[%s1 + $0x5b0] sm:$0xff]
  %v235 = vld [vmem:[%s1 + $0x5b8] sm:$0xff]
  %v236 = vld [vmem:[%s1 + $0x5c0] sm:$0xff]
  %v237 = vld [vmem:[%s1 + $0x5c8] sm:$0xff]
  %v238 = vld [vmem:[%s1 + $0x5d0] sm:$0xff]
  %v239 = vld [vmem:[%s1 + $0x5d8] sm:$0xff]
  %v240 = vld [vmem:[%s1 + $0x5e0] sm:$0xff]
  %v241 = vld [vmem:[%s1 + $0x5e8] sm:$0xff]
  %v242 = vld [vmem:[%s1 + $0x5f0] sm:$0xff]
  %v243 = vld [vmem:[%s1 + $0x5f8] sm:$0xff]
  %v244 = vld [vmem:[%s1 + $0x600] sm:$0xff]
  %v245 = vld [vmem:[%s1 + $0x608] sm:$0xff]
  %v246 = vld [vmem:[%s1 + $0x610] sm:$0xff]
  %v247 = vld [vmem:[%s1 + $0x618] sm:$0xff]
  %v248 = vld [vmem:[%s1 + $0x620] sm:$0xff]
  %v249 = vld [vmem:[%s1 + $0x628] sm:$0xff]
  %v250 = vld [vmem:[%s1 + $0x630] sm:$0xff]
  %v251 = vld [vmem:[%s1 + $0x638] sm:$0xff]
  %v252 = vld [vmem:[%s1 + $0x640] sm:$0xff]
  %v253 = vld [vmem:[%s1 + $0x648] sm:$0xff]
  %v254 = vld [vmem:[%s1 + $0x650] sm:$0xff]
  %v255 = vld [vmem:[%s1 + $0x658] sm:$0xff]
  %v256 = vld [vmem:[%s1 + $0x660] sm:$0xff]
  %v257 = vld [vmem:[%s1 + $0x668] sm:$0xff]
  %v258 = vld [vmem:[%s1 + $0x670] sm:$0xff]
  %v259 = vld [vmem:[%s1 + $0x678] sm:$0xff]
  %v260 = vld [vmem:[%s1 + $0x680] sm:$0xff]
  %v261 = vld [vmem:[%s1 + $0x688] sm:$0xff]
  %v262 = vld [vmem:[%s1 + $0x690] sm:$0xff]
  %v263 = vld [vmem:[%s1 + $0x698] sm:$0xff]
  %v264 = vld [vmem:[%s1 + $0x6a0] sm:$0xff]
  %v265 = vld [vmem:[%s1 + $0x6a8] sm:$0xff]
  %v266 = vld [vmem:[%s1 + $0x6b0] sm:$0xff]
  %v267 = vld [vmem:[%s1 + $0x6b8] sm:$0xff]
  %v268 = vld [vmem:[%s1 + $0x6c0] sm:$0xff]
  %v269 = vld [vmem:[%s1 + $0x6c8] sm:$0xff]
  %v270 = vld [vmem:[%s1 + $0x6d0] sm:$0xff]
  %v271 = vld [vmem:[%s1 + $0x6d8] sm:$0xff]
  %v272 = vld [vmem:[%s1 + $0x6e0] sm:$0xff]
  %v273 = vld [vmem:[%s1 + $0x6e8] sm:$0xff]
  %v274 = vld [vmem:[%s1 + $0x6f0] sm:$0xff]
  %v275 = vld [vmem:[%s1 + $0x6f8] sm:$0xff]
  %v276 = vld [vmem:[%s1 + $0x700] sm:$0xff]
  %v277 = vld [vmem:[%s1 + $0x708] sm:$0xff]
  %v278 = vld [vmem:[%s1 + $0x710] sm:$0xff]
  %v279 = vld [vmem:[%s1 + $0x718] sm:$0xff]
  %v280 = vld [vmem:[%s1 + $0x720] sm:$0xff]
  %v281 = vld [vmem:[%s1 + $0x728] sm:$0xff]
  %v282 = vld [vmem:[%s1 + $0x730] sm:$0xff]
  %v283 = vld [vmem:[%s1 + $0x738] sm:$0xff]
  %v284 = vld [vmem:[%s1 + $0x740] sm:$0xff]
  %v285 = vld [vmem:[%s1 + $0x748] sm:$0xff]
  %v286 = vld [vmem:[%s1 + $0x750] sm:$0xff]
  %v287 = vld [vmem:[%s1 + $0x758] sm:$0xff]
  %v288 = vld [vmem:[%s1 + $0x760] sm:$0xff]
  %v289 = vld [vmem:[%s1 + $0x768] sm:$0xff]
  %v290 = vld [vmem:[%s1 + $0x770] sm:$0xff]
  %v291 = vld [vmem:[%s1 + $0x778] sm:$0xff]
  %v292 = vld [vmem:[%s1 + $0x780] sm:$0xff]
  %v293 = vld [vmem:[%s1 + $0x788] sm:$0xff]
  %v294 = vld [vmem:[%s1 + $0x790] sm:$0xff]
  %v295 = vld [vmem:[%s1 + $0x798] sm:$0xff]
  %v296 = vld [vmem:[%s1 + $0x7a0] sm:$0xff]
  %v297 = vld [vmem:[%s1 + $0x7a8] sm:$0xff]
  %v298 = vld [vmem:[%s1 + $0x7b0] sm:$0xff]
  %v299 = vld [vmem:[%s1 + $0x7b8] sm:$0xff]
  %v300 = vld [vmem:[%s1 + $0x7c0] sm:$0xff]
  %v301 = vld [vmem:[%s1 + $0x7c8] sm:$0xff]
  %v302 = vld [vmem:[%s1 + $0x7d0] sm:$0xff]
  %v303 = vld [vmem:[%s1 + $0x7d8] sm:$0xff]
  %v304 = vld [vmem:[%s1 + $0x7e0] sm:$0xff]
  %v305 = vld [vmem:[%s1 + $0x7e8] sm:$0xff]
  %v306 = vld [vmem:[%s1 + $0x7f0] sm:$0xff]
  %v307 = vld [vmem:[%s1 + $0x7f8] sm:$0xff]
  %v308 = vld [vmem:[%s1 + $0x800] sm:$0xff]
  %v309 = vld [vmem:[%s1 + $0x808] sm:$0xff]
  %v310 = vld [vmem:[%s1 + $0x810] sm:$0xff]
  %v311 = vld [vmem:[%s1 + $0x818] sm:$0xff]
  %v312 = vld [vmem:[%s1 + $0x820] sm:$0xff]
  %v313 = vld [vmem:[%s1 + $0x828] sm:$0xff]
  %v314 = vld [vmem:[%s1 + $0x830] sm:$0xff]
  %v315 = vld [vmem:[%s1 + $0x838] sm:$0xff]
  %v316 = vld [vmem:[%s1 + $0x840] sm:$0xff]
  %v317 = vld [vmem:[%s1 + $0x848] sm:$0xff]
  %v318 = vld [vmem:[%s1 + $0x850] sm:$0xff]
  %v319 = vld [vmem:[%s1 + $0x858] sm:$0xff]
  %v320 = vld [vmem:[%s1 + $0x860] sm:$0xff]
  %v321 = vld [vmem:[%s1 + $0x868] sm:$0xff]
  %v322 = vld [vmem:[%s1 + $0x870] sm:$0xff]
  %v323 = vld [vmem:[%s1 + $0x878] sm:$0xff]
  %v324 = vld [vmem:[%s1 + $0x880] sm:$0xff]
  %v325 = vld [vmem:[%s1 + $0x888] sm:$0xff]
  %v326 = vld [vmem:[%s1 + $0x890] sm:$0xff]
  %v327 = vld [vmem:[%s1 + $0x898] sm:$0xff]
  %v328 = vld [vmem:[%s1 + $0x8a0] sm:$0xff]
  %v329 = vld [vmem:[%s1 + $0x8a8] sm:$0xff]
  %v330 = vld [vmem:[%s1 + $0x8b0] sm:$0xff]
  %v331 = vld [vmem:[%s1 + $0x8b8] sm:$0xff]
  %v332 = vld [vmem:[%s1 + $0x8c0] sm:$0xff]
  %v333 = vld [vmem:[%s1 + $0x8c8] sm:$0xff]
  %v334 = vld [vmem:[%s1 + $0x8d0] sm:$0xff]
  %v335 = vld [vmem:[%s1 + $0x8d8] sm:$0xff]
  %v336 = vld [vmem:[%s1 + $0x8e0] sm:$0xff]
  %v337 = vld [vmem:[%s1 + $0x8e8] sm:$0xff]
  %v338 = vld [vmem:[%s1 + $0x8f0] sm:$0xff]
  %v339 = vld [vmem:[%s1 + $0x8f8] sm:$0xff]
  %v340 = vld [vmem:[%s1 + $0x900] sm:$0xff]
  %v341 = vld [vmem:[%s1 + $0x908] sm:$0xff]
  %v342 = vld [vmem:[%s1 + $0x910] sm:$0xff]
  %v343 = vld [vmem:[%s1 + $0x918] sm:$0xff]
  %v344 = vld [vmem:[%s1 + $0x920] sm:$0xff]
  %v345 = vld [vmem:[%s1 + $0x928] sm:$0xff]
  %v346 = vld [vmem:[%s1 + $0x930] sm:$0xff]
  %v347 = vld [vmem:[%s1 + $0x938] sm:$0xff]
  %v348 = vld [vmem:[%s1 + $0x940] sm:$0xff]
  %v349 = vld [vmem:[%s1 + $0x948] sm:$0xff]
  %v350 = vld [vmem:[%s1 + $0x950] sm:$0xff]
  %v351 = vld [vmem:[%s1 + $0x958] sm:$0xff]
  %v352 = vld [vmem:[%s1 + $0x960] sm:$0xff]
  %v353 = vld [vmem:[%s1 + $0x968] sm:$0xff]
  %v354 = vld [vmem:[%s1 + $0x970] sm:$0xff]
  %v355 = vld [vmem:[%s1 + $0x978] sm:$0xff]
  %v356 = vld [vmem:[%s1 + $0x980] sm:$0xff]
  %v357 = vld [vmem:[%s1 + $0x988] sm:$0xff]
  %v358 = vld [vmem:[%s1 + $0x990] sm:$0xff]
  %v359 = vld [vmem:[%s1 + $0x998] sm:$0xff]
  %v360 = vld [vmem:[%s1 + $0x9a0] sm:$0xff]
  %v361 = vld [vmem:[%s1 + $0x9a8] sm:$0xff]
  %v362 = vld [vmem:[%s1 + $0x9b0] sm:$0xff]
  %v363 = vld [vmem:[%s1 + $0x9b8] sm:$0xff]
  %v364 = vld [vmem:[%s1 + $0x9c0] sm:$0xff]
  %v365 = vld [vmem:[%s1 + $0x9c8] sm:$0xff]
  %v366 = vld [vmem:[%s1 + $0x9d0] sm:$0xff]
  %v367 = vld [vmem:[%s1 + $0x9d8] sm:$0xff]
  %v368 = vld [vmem:[%s1 + $0x9e0] sm:$0xff]
  %v369 = vld [vmem:[%s1 + $0x9e8] sm:$0xff]
  %v370 = vld [vmem:[%s1 + $0x9f0] sm:$0xff]
  %v371 = vld [vmem:[%s1 + $0x9f8] sm:$0xff]
  %v372 = vld [vmem:[%s1 + $0xa00] sm:$0xff]
  %v373 = vld [vmem:[%s1 + $0xa08] sm:$0xff]
  %v374 = vld [vmem:[%s1 + $0xa10] sm:$0xff]
  %v375 = vld [vmem:[%s1 + $0xa18] sm:$0xff]
  %v376 = vld [vmem:[%s1 + $0xa20] sm:$0xff]
  %v377 = vld [vmem:[%s1 + $0xa28] sm:$0xff]
  %v378 = vld [vmem:[%s1 + $0xa30] sm:$0xff]
  %v379 = vld [vmem:[%s1 + $0xa38] sm:$0xff]
  %v380 = vld [vmem:[%s1 + $0xa40] sm:$0xff]
  %v381 = vld [vmem:[%s1 + $0xa48] sm:$0xff]
  %v382 = vld [vmem:[%s1 + $0xa50] sm:$0xff]
  %v383 = vld [vmem:[%s1 + $0xa58] sm:$0xff]
  %v384 = vld [vmem:[%s1 + $0xa60] sm:$0xff]
  %v385 = vld [vmem:[%s1 + $0xa68] sm:$0xff]
  %v386 = vld [vmem:[%s1 + $0xa70] sm:$0xff]
  %v387 = vld [vmem:[%s1 + $0xa78] sm:$0xff]
  %v388 = vld [vmem:[%s1 + $0xa80] sm:$0xff]
  %v389 = vld [vmem:[%s1 + $0xa88] sm:$0xff]
  %v390 = vld [vmem:[%s1 + $0xa90] sm:$0xff]
  %v391 = vld [vmem:[%s1 + $0xa98] sm:$0xff]
  %v392 = vld [vmem:[%s1 + $0xaa0] sm:$0xff]
  %v393 = vld [vmem:[%s1 + $0xaa8] sm:$0xff]
  %v394 = vld [vmem:[%s1 + $0xab0] sm:$0xff]
  %v395 = vld [vmem:[%s1 + $0xab8] sm:$0xff]
  %v396 = vld [vmem:[%s1 + $0xac0] sm:$0xff]
  %v397 = vld [vmem:[%s1 + $0xac8] sm:$0xff]
  %v398 = vld [vmem:[%s1 + $0xad0] sm:$0xff]
  %v399 = vld [vmem:[%s1 + $0xad8] sm:$0xff]
  %v400 = vld [vmem:[%s1 + $0xae0] sm:$0xff]
  %v401 = vld [vmem:[%s1 + $0xae8] sm:$0xff]
  %v402 = vld [vmem:[%s1 + $0xaf0] sm:$0xff]
  %v403 = vld [vmem:[%s1 + $0xaf8] sm:$0xff]
  %v404 = vld [vmem:[%s1 + $0xb00] sm:$0xff]
  %v405 = vld [vmem:[%s1 + $0xb08] sm:$0xff]
  %v406 = vld [vmem:[%s1 + $0xb10] sm:$0xff]
  %v407 = vld [vmem:[%s1 + $0xb18] sm:$0xff]
  %v408 = vld [vmem:[%s1 + $0xb20] sm:$0xff]
  %v409 = vld [vmem:[%s1 + $0xb28] sm:$0xff]
  %v410 = vld [vmem:[%s1 + $0xb30] sm:$0xff]
  %v411 = vld [vmem:[%s1 + $0xb38] sm:$0xff]
  %v412 = vld [vmem:[%s1 + $0xb40] sm:$0xff]
  %v413 = vld [vmem:[%s1 + $0xb48] sm:$0xff]
  %v414 = vld [vmem:[%s1 + $0xb50] sm:$0xff]
  %v415 = vld [vmem:[%s1 + $0xb58] sm:$0xff]
  %v416 = vld [vmem:[%s1 + $0xb60] sm:$0xff]
  %v417 = vld [vmem:[%s1 + $0xb68] sm:$0xff]
  %v418 = vld [vmem:[%s1 + $0xb70] sm:$0xff]
  %v419 = vld [vmem:[%s1 + $0xb78] sm:$0xff]
  %v420 = vld [vmem:[%s1 + $0xb80] sm:$0xff]
  %v421 = vld [vmem:[%s1 + $0xb88] sm:$0xff]
  %v422 = vld [vmem:[%s1 + $0xb90] sm:$0xff]
  %v423 = vld [vmem:[%s1 + $0xb98] sm:$0xff]
  %v424 = vld [vmem:[%s1 + $0xba0] sm:$0xff]
  %v425 = vld [vmem:[%s1 + $0xba8] sm:$0xff]
  %v426 = vld [vmem:[%s1 + $0xbb0] sm:$0xff]
  %v427 = vld [vmem:[%s1 + $0xbb8] sm:$0xff]
  %v428 = vld [vmem:[%s1 + $0xbc0] sm:$0xff]
  %v429 = vld [vmem:[%s1 + $0xbc8] sm:$0xff]
  %v430 = vld [vmem:[%s1 + $0xbd0] sm:$0xff]
  %v431 = vld [vmem:[%s1 + $0xbd8] sm:$0xff]
  %v432 = vld [vmem:[%s1 + $0xbe0] sm:$0xff]
  %v433 = vld [vmem:[%s1 + $0xbe8] sm:$0xff]
  %v434 = vld [vmem:[%s1 + $0xbf0] sm:$0xff]
  %v435 = vld [vmem:[%s1 + $0xbf8] sm:$0xff]
  %v436 = vld [vmem:[%s1 + $0xc00] sm:$0xff]
  %v437 = vld [vmem:[%s1 + $0xc08] sm:$0xff]
  %v438 = vld [vmem:[%s1 + $0xc10] sm:$0xff]
  %v439 = vld [vmem:[%s1 + $0xc18] sm:$0xff]
  %v440 = vld [vmem:[%s1 + $0xc20] sm:$0xff]
  %v441 = vld [vmem:[%s1 + $0xc28] sm:$0xff]
  %v442 = vld [vmem:[%s1 + $0xc30] sm:$0xff]
  %v443 = vld [vmem:[%s1 + $0xc38] sm:$0xff]
  %v444 = vld [vmem:[%s1 + $0xc40] sm:$0xff]
  %v445 = vld [vmem:[%s1 + $0xc48] sm:$0xff]
  %v446 = vld [vmem:[%s1 + $0xc50] sm:$0xff]
  %v447 = vld [vmem:[%s1 + $0xc58] sm:$0xff]
  %v448 = vld [vmem:[%s1 + $0xc60] sm:$0xff]
  %v449 = vld [vmem:[%s1 + $0xc68] sm:$0xff]
  %v450 = vld [vmem:[%s1 + $0xc70] sm:$0xff]
  %v451 = vld [vmem:[%s1 + $0xc78] sm:$0xff]
  %v452 = vld [vmem:[%s1 + $0xc80] sm:$0xff]
  %v453 = vld [vmem:[%s1 + $0xc88] sm:$0xff]
  %v454 = vld [vmem:[%s1 + $0xc90] sm:$0xff]
  %v455 = vld [vmem:[%s1 + $0xc98] sm:$0xff]
  %v456 = vld [vmem:[%s1 + $0xca0] sm:$0xff]
  %v457 = vld [vmem:[%s1 + $0xca8] sm:$0xff]
  %v458 = vld [vmem:[%s1 + $0xcb0] sm:$0xff]
  %v459 = vld [vmem:[%s1 + $0xcb8] sm:$0xff]
  %v460 = vld [vmem:[%s1 + $0xcc0] sm:$0xff]
  %v461 = vld [vmem:[%s1 + $0xcc8] sm:$0xff]
  %v462 = vld [vmem:[%s1 + $0xcd0] sm:$0xff]
  %v463 = vld [vmem:[%s1 + $0xcd8] sm:$0xff]
  %v464 = vld [vmem:[%s1 + $0xce0] sm:$0xff]
  %v465 = vld [vmem:[%s1 + $0xce8] sm:$0xff]
  %v466 = vld [vmem:[%s1 + $0xcf0] sm:$0xff]
  %v467 = vld [vmem:[%s1 + $0xcf8] sm:$0xff]
  %v468 = vld [vmem:[%s1 + $0xd00] sm:$0xff]
  %v469 = vld [vmem:[%s1 + $0xd08] sm:$0xff]
  %v470 = vld [vmem:[%s1 + $0xd10] sm:$0xff]
  %v471 = vld [vmem:[%s1 + $0xd18] sm:$0xff]
  %v472 = vld [vmem:[%s1 + $0xd20] sm:$0xff]
  %v473 = vld [vmem:[%s1 + $0xd28] sm:$0xff]
  %v474 = vld [vmem:[%s1 + $0xd30] sm:$0xff]
  %v475 = vld [vmem:[%s1 + $0xd38] sm:$0xff]
  %v476 = vld [vmem:[%s1 + $0xd40] sm:$0xff]
  %v477 = vld [vmem:[%s1 + $0xd48] sm:$0xff]
  %v478 = vld [vmem:[%s1 + $0xd50] sm:$0xff]
  %v479 = vld [vmem:[%s1 + $0xd58] sm:$0xff]
  %v480 = vld [vmem:[%s1 + $0xd60] sm:$0xff]
  %v481 = vld [vmem:[%s1 + $0xd68] sm:$0xff]
  %v482 = vld [vmem:[%s1 + $0xd70] sm:$0xff]
  %v483 = vld [vmem:[%s1 + $0xd78] sm:$0xff]
  %v484 = vld [vmem:[%s1 + $0xd80] sm:$0xff]
  %v485 = vld [vmem:[%s1 + $0xd88] sm:$0xff]
  %v486 = vld [vmem:[%s1 + $0xd90] sm:$0xff]
  %v487 = vld [vmem:[%s1 + $0xd98] sm:$0xff]
  %v488 = vld [vmem:[%s1 + $0xda0] sm:$0xff]
  %v489 = vld [vmem:[%s1 + $0xda8] sm:$0xff]
  %v490 = vld [vmem:[%s1 + $0xdb0] sm:$0xff]
  %v491 = vld [vmem:[%s1 + $0xdb8] sm:$0xff]
  %v492 = vld [vmem:[%s1 + $0xdc0] sm:$0xff]
  %v493 = vld [vmem:[%s1 + $0xdc8] sm:$0xff]
  %v494 = vld [vmem:[%s1 + $0xdd0] sm:$0xff]
  %v495 = vld [vmem:[%s1 + $0xdd8] sm:$0xff]
  %v496 = vld [vmem:[%s1 + $0xde0] sm:$0xff]
  %v497 = vld [vmem:[%s1 + $0xde8] sm:$0xff]
  %v498 = vld [vmem:[%s1 + $0xdf0] sm:$0xff]
  %v499 = vld [vmem:[%s1 + $0xdf8] sm:$0xff]
  %v500 = vld [vmem:[%s1 + $0xe00] sm:$0xff]
  %v501 = vld [vmem:[%s1 + $0xe08] sm:$0xff]
  %v502 = vld [vmem:[%s1 + $0xe10] sm:$0xff]
  %v503 = vld [vmem:[%s1 + $0xe18] sm:$0xff]
  %v504 = vld [vmem:[%s1 + $0xe20] sm:$0xff]
  %v505 = vld [vmem:[%s1 + $0xe28] sm:$0xff]
  %v506 = vld [vmem:[%s1 + $0xe30] sm:$0xff]
  %v507 = vld [vmem:[%s1 + $0xe38] sm:$0xff]
  %v508 = vld [vmem:[%s1 + $0xe40] sm:$0xff]
  %v509 = vld [vmem:[%s1 + $0xe48] sm:$0xff]
  %v510 = vld [vmem:[%s1 + $0xe50] sm:$0xff]
  %v511 = vld [vmem:[%s1 + $0xe58] sm:$0xff]
  %v512 = vld [vmem:[%s1 + $0xe60] sm:$0xff]
  %v513 = vld [vmem:[%s1 + $0xe68] sm:$0xff]
  %v514 = vld [vmem:[%s1 + $0xe70] sm:$0xff]
  %v515 = vld [vmem:[%s1 + $0xe78] sm:$0xff]
  %v516 = vld [vmem:[%s1 + $0xe80] sm:$0xff]
  %v517 = vld [vmem:[%s1 + $0xe88] sm:$0xff]
  %v518 = vld [vmem:[%s1 + $0xe90] sm:$0xff]
  %v519 = vld [vmem:[%s1 + $0xe98] sm:$0xff]
  %v520 = vld [vmem:[%s1 + $0xea0] sm:$0xff]
  %v521 = vld [vmem:[%s1 + $0xea8] sm:$0xff]
  %v522 = vld [vmem:[%s1 + $0xeb0] sm:$0xff]
  %v523 = vld [vmem:[%s1 + $0xeb8] sm:$0xff]
  %v524 = vld [vmem:[%s1 + $0xec0] sm:$0xff]
  %v525 = vld [vmem:[%s1 + $0xec8] sm:$0xff]
  %v526 = vld [vmem:[%s1 + $0xed0] sm:$0xff]
  %v527 = vld [vmem:[%s1 + $0xed8] sm:$0xff]
  %v528 = vld [vmem:[%s1 + $0xee0] sm:$0xff]
  %v529 = vld [vmem:[%s1 + $0xee8] sm:$0xff]
  %v530 = vld [vmem:[%s1 + $0xef0] sm:$0xff]
  %v531 = vld [vmem:[%s1 + $0xef8] sm:$0xff]
  %v532 = vld [vmem:[%s1 + $0xf00] sm:$0xff]
  %v533 = vld [vmem:[%s1 + $0xf08] sm:$0xff]
  %v534 = vld [vmem:[%s1 + $0xf10] sm:$0xff]
  %v535 = vld [vmem:[%s1 + $0xf18] sm:$0xff]
  %v536 = vld [vmem:[%s1 + $0xf20] sm:$0xff]
  %v537 = vld [vmem:[%s1 + $0xf28] sm:$0xff]
  %v538 = vld [vmem:[%s1 + $0xf30] sm:$0xff]
  %v539 = vld [vmem:[%s1 + $0xf38] sm:$0xff]
  %v540 = vld [vmem:[%s1 + $0xf40] sm:$0xff]
  %v541 = vld [vmem:[%s1 + $0xf48] sm:$0xff]
  %v542 = vld [vmem:[%s1 + $0xf50] sm:$0xff]
  %v543 = vld [vmem:[%s1 + $0xf58] sm:$0xff]
  %v544 = vld [vmem:[%s1 + $0xf60] sm:$0xff]
  %v545 = vld [vmem:[%s1 + $0xf68] sm:$0xff]
  %v546 = vld [vmem:[%s1 + $0xf70] sm:$0xff]
  %v547 = vld [vmem:[%s1 + $0xf78] sm:$0xff]
  %v548 = vld [vmem:[%s1 + $0xf80] sm:$0xff]
  %v549 = vld [vmem:[%s1 + $0xf88] sm:$0xff]
  %v550 = vld [vmem:[%s1 + $0xf90] sm:$0xff]
  %v551 = vld [vmem:[%s1 + $0xf98] sm:$0xff]
  %v552 = vld [vmem:[%s1 + $0xfa0] sm:$0xff]
  %v553 = vld [vmem:[%s1 + $0xfa8] sm:$0xff]
  %v554 = vld [vmem:[%s1 + $0xfb0] sm:$0xff]
  %v555 = vld [vmem:[%s1 + $0xfb8] sm:$0xff]
  %v556 = vld [vmem:[%s1 + $0xfc0] sm:$0xff]
  %v557 = vld [vmem:[%s1 + $0xfc8] sm:$0xff]
  %v558 = vld [vmem:[%s1 + $0xfd0] sm:$0xff]
  %v559 = vld [vmem:[%s1 + $0xfd8] sm:$0xff]
  %v560 = vld [vmem:[%s1 + $0xfe0] sm:$0xff]
  %v561 = vld [vmem:[%s1 + $0xfe8] sm:$0xff]
  %v562 = vld [vmem:[%s1 + $0xff0] sm:$0xff]
  %v563 = vld [vmem:[%s1 + $0xff8] sm:$0xff]
  %v564 = vld [vmem:[%s1 + $0x1000] sm:$0xff]
  %v565 = vld [vmem:[%s1 + $0x1008] sm:$0xff]
  %v566 = vld [vmem:[%s1 + $0x1010] sm:$0xff]
  %v567 = vld [vmem:[%s1 + $0x1018] sm:$0xff]
  %v568 = vld [vmem:[%s1 + $0x1020] sm:$0xff]
  %v569 = vld [vmem:[%s1 + $0x1028] sm:$0xff]
  %v570 = vld [vmem:[%s1 + $0x1030] sm:$0xff]
  %v571 = vld [vmem:[%s1 + $0x1038] sm:$0xff]
  %v572 = vld [vmem:[%s1 + $0x1040] sm:$0xff]
  %v573 = vld [vmem:[%s1 + $0x1048] sm:$0xff]
  %v574 = vld [vmem:[%s1 + $0x1050] sm:$0xff]
  %v575 = vld [vmem:[%s1 + $0x1058] sm:$0xff]
  %v576 = vld [vmem:[%s1 + $0x1060] sm:$0xff]
  %v577 = vld [vmem:[%s1 + $0x1068] sm:$0xff]
  %v578 = vld [vmem:[%s1 + $0x1070] sm:$0xff]
  %v579 = vld [vmem:[%s1 + $0x1078] sm:$0xff]
  %v580 = vld [vmem:[%s1 + $0x1080] sm:$0xff]
  %v581 = vld [vmem:[%s1 + $0x1088] sm:$0xff]
  %v582 = vld [vmem:[%s1 + $0x1090] sm:$0xff]
  %v583 = vld [vmem:[%s1 + $0x1098] sm:$0xff]
  %v584 = vld [vmem:[%s1 + $0x10a0] sm:$0xff]
  %v585 = vld [vmem:[%s1 + $0x10a8] sm:$0xff]
  %v586 = vld [vmem:[%s1 + $0x10b0] sm:$0xff]
  %v587 = vld [vmem:[%s1 + $0x10b8] sm:$0xff]
  %v588 = vld [vmem:[%s1 + $0x10c0] sm:$0xff]
  %v589 = vld [vmem:[%s1 + $0x10c8] sm:$0xff]
  %v590 = vld [vmem:[%s1 + $0x10d0] sm:$0xff]
  %v591 = vld [vmem:[%s1 + $0x10d8] sm:$0xff]
  %v592 = vld [vmem:[%s1 + $0x10e0] sm:$0xff]
  %v593 = vld [vmem:[%s1 + $0x10e8] sm:$0xff]
  %v594 = vld [vmem:[%s1 + $0x10f0] sm:$0xff]
  %v595 = vld [vmem:[%s1 + $0x10f8] sm:$0xff]
  %v596 = vld [vmem:[%s1 + $0x1100] sm:$0xff]
  %v597 = vld [vmem:[%s1 + $0x1108] sm:$0xff]
  %v598 = vld [vmem:[%s1 + $0x1110] sm:$0xff]
  %v599 = vld [vmem:[%s1 + $0x1118] sm:$0xff]
  %v600 = vld [vmem:[%s1 + $0x1120] sm:$0xff]
  %v601 = vld [vmem:[%s1 + $0x1128] sm:$0xff]
  %v602 = vld [vmem:[%s1 + $0x1130] sm:$0xff]
  %v603 = vld [vmem:[%s1 + $0x1138] sm:$0xff]
  %v604 = vld [vmem:[%s1 + $0x1140] sm:$0xff]
  %v605 = vld [vmem:[%s1 + $0x1148] sm:$0xff]
  %v606 = vld [vmem:[%s1 + $0x1150] sm:$0xff]
  %v607 = vld [vmem:[%s1 + $0x1158] sm:$0xff]
  %v608 = vld [vmem:[%s1 + $0x1160] sm:$0xff]
  %v609 = vld [vmem:[%s1 + $0x1168] sm:$0xff]
  %v610 = vld [vmem:[%s1 + $0x1170] sm:$0xff]
  %v611 = vld [vmem:[%s1 + $0x1178] sm:$0xff]
  %v612 = vld [vmem:[%s1 + $0x1180] sm:$0xff]
  %v613 = vld [vmem:[%s1 + $0x1188] sm:$0xff]
  %v614 = vld [vmem:[%s1 + $0x1190] sm:$0xff]
  %v615 = vld [vmem:[%s1 + $0x1198] sm:$0xff]
  %v616 = vld [vmem:[%s1 + $0x11a0] sm:$0xff]
  %v617 = vld [vmem:[%s1 + $0x11a8] sm:$0xff]
  %v618 = vld [vmem:[%s1 + $0x11b0] sm:$0xff]
  %v619 = vld [vmem:[%s1 + $0x11b8] sm:$0xff]
  %v620 = vld [vmem:[%s1 + $0x11c0] sm:$0xff]
  %v621 = vld [vmem:[%s1 + $0x11c8] sm:$0xff]
  %v622 = vld [vmem:[%s1 + $0x11d0] sm:$0xff]
  %v623 = vld [vmem:[%s1 + $0x11d8] sm:$0xff]
  %v624 = vld [vmem:[%s1 + $0x11e0] sm:$0xff]
  %v625 = vld [vmem:[%s1 + $0x11e8] sm:$0xff]
  %v626 = vld [vmem:[%s1 + $0x11f0] sm:$0xff]
  %v627 = vld [vmem:[%s1 + $0x11f8] sm:$0xff]
  %v628 = vld [vmem:[%s1 + $0x1200] sm:$0xff]
  %v629 = vld [vmem:[%s1 + $0x1208] sm:$0xff]
  %v630 = vld [vmem:[%s1 + $0x1210] sm:$0xff]
  %v631 = vld [vmem:[%s1 + $0x1218] sm:$0xff]
  %v632 = vld [vmem:[%s1 + $0x1220] sm:$0xff]
  %v633 = vld [vmem:[%s1 + $0x1228] sm:$0xff]
  %v634 = vld [vmem:[%s1 + $0x1230] sm:$0xff]
  %v635 = vld [vmem:[%s1 + $0x1238] sm:$0xff]
  %v636 = vld [vmem:[%s1 + $0x1240] sm:$0xff]
  %v637 = vld [vmem:[%s1 + $0x1248] sm:$0xff]
  %v638 = vld [vmem:[%s1 + $0x1250] sm:$0xff]
  %v639 = vld [vmem:[%s1 + $0x1258] sm:$0xff]
  %v640 = vld [vmem:[%s1 + $0x1260] sm:$0xff]
  %v641 = vld [vmem:[%s1 + $0x1268] sm:$0xff]
  %v642 = vld [vmem:[%s1 + $0x1270] sm:$0xff]
  %v643 = vld [vmem:[%s1 + $0x1278] sm:$0xff]
  %v644 = vld [vmem:[%s1 + $0x1280] sm:$0xff]
  %v645 = vld [vmem:[%s1 + $0x1288] sm:$0xff]
  %v646 = vld [vmem:[%s1 + $0x1290] sm:$0xff]
  %v647 = vld [vmem:[%s1 + $0x1298] sm:$0xff]
  %v648 = vld [vmem:[%s1 + $0x12a0] sm:$0xff]
  %v649 = vld [vmem:[%s1 + $0x12a8] sm:$0xff]
  %v650 = vld [vmem:[%s1 + $0x12b0] sm:$0xff]
  %v651 = vld [vmem:[%s1 + $0x12b8] sm:$0xff]
  %v652 = vld [vmem:[%s1 + $0x12c0] sm:$0xff]
  %v653 = vld [vmem:[%s1 + $0x12c8] sm:$0xff]
  %v654 = vld [vmem:[%s1 + $0x12d0] sm:$0xff]
  %v655 = vld [vmem:[%s1 + $0x12d8] sm:$0xff]
  %v656 = vld [vmem:[%s1 + $0x12e0] sm:$0xff]
  %v657 = vld [vmem:[%s1 + $0x12e8] sm:$0xff]
  %v658 = vld [vmem:[%s1 + $0x12f0] sm:$0xff]
  %v659 = vld [vmem:[%s1 + $0x12f8] sm:$0xff]
  %v660 = vld [vmem:[%s1 + $0x1300] sm:$0xff]
  %v661 = vld [vmem:[%s1 + $0x1308] sm:$0xff]
  %v662 = vld [vmem:[%s1 + $0x1310] sm:$0xff]
  %v663 = vld [vmem:[%s1 + $0x1318] sm:$0xff]
  %v664 = vld [vmem:[%s1 + $0x1320] sm:$0xff]
  %v665 = vld [vmem:[%s1 + $0x1328] sm:$0xff]
  %v666 = vld [vmem:[%s1 + $0x1330] sm:$0xff]
  %v667 = vld [vmem:[%s1 + $0x1338] sm:$0xff]
  %v668 = vld [vmem:[%s1 + $0x1340] sm:$0xff]
  %v669 = vld [vmem:[%s1 + $0x1348] sm:$0xff]
  %v670 = vld [vmem:[%s1 + $0x1350] sm:$0xff]
  %v671 = vld [vmem:[%s1 + $0x1358] sm:$0xff]
  %v672 = vld [vmem:[%s1 + $0x1360] sm:$0xff]
  %v673 = vld [vmem:[%s1 + $0x1368] sm:$0xff]
  %v674 = vld [vmem:[%s1 + $0x1370] sm:$0xff]
  %v675 = vld [vmem:[%s1 + $0x1378] sm:$0xff]
  %v676 = vld [vmem:[%s1 + $0x1380] sm:$0xff]
  %v677 = vld [vmem:[%s1 + $0x1388] sm:$0xff]
  %v678 = vld [vmem:[%s1 + $0x1390] sm:$0xff]
  %v679 = vld [vmem:[%s1 + $0x1398] sm:$0xff]
  %v680 = vld [vmem:[%s1 + $0x13a0] sm:$0xff]
  %v681 = vld [vmem:[%s1 + $0x13a8] sm:$0xff]
  %v682 = vld [vmem:[%s1 + $0x13b0] sm:$0xff]
  %v683 = vld [vmem:[%s1 + $0x13b8] sm:$0xff]
  %v684 = vld [vmem:[%s1 + $0x13c0] sm:$0xff]
  %v685 = vld [vmem:[%s1 + $0x13c8] sm:$0xff]
  %v686 = vld [vmem:[%s1 + $0x13d0] sm:$0xff]
  %v687 = vld [vmem:[%s1 + $0x13d8] sm:$0xff]
  %v688 = vld [vmem:[%s1 + $0x13e0] sm:$0xff]
  %v689 = vld [vmem:[%s1 + $0x13e8] sm:$0xff]
  %v690 = vld [vmem:[%s1 + $0x13f0] sm:$0xff]
  %v691 = vld [vmem:[%s1 + $0x13f8] sm:$0xff]
  %v692 = vld [vmem:[%s1 + $0x1400] sm:$0xff]
  %v693 = vld [vmem:[%s1 + $0x1408] sm:$0xff]
  %v694 = vld [vmem:[%s1 + $0x1410] sm:$0xff]
  %v695 = vld [vmem:[%s1 + $0x1418] sm:$0xff]
  %v696 = vld [vmem:[%s1 + $0x1420] sm:$0xff]
  %v697 = vld [vmem:[%s1 + $0x1428] sm:$0xff]
  %v698 = vld [vmem:[%s1 + $0x1430] sm:$0xff]
  %v699 = vld [vmem:[%s1 + $0x1438] sm:$0xff]
  %v700 = vld [vmem:[%s1 + $0x1440] sm:$0xff]
  %v701 = vld [vmem:[%s1 + $0x1448] sm:$0xff]
  %v702 = vld [vmem:[%s1 + $0x1450] sm:$0xff]
  %v703 = vld [vmem:[%s1 + $0x1458] sm:$0xff]
  %v704 = vld [vmem:[%s1 + $0x1460] sm:$0xff]
  %v705 = vld [vmem:[%s1 + $0x1468] sm:$0xff]
  %v706 = vld [vmem:[%s1 + $0x1470] sm:$0xff]
  %v707 = vld [vmem:[%s1 + $0x1478] sm:$0xff]
  %v708 = vld [vmem:[%s1 + $0x1480] sm:$0xff]
  %v709 = vld [vmem:[%s1 + $0x1488] sm:$0xff]
  %v710 = vld [vmem:[%s1 + $0x1490] sm:$0xff]
  %v711 = vld [vmem:[%s1 + $0x1498] sm:$0xff]
  %v712 = vld [vmem:[%s1 + $0x14a0] sm:$0xff]
  %v713 = vld [vmem:[%s1 + $0x14a8] sm:$0xff]
  %v714 = vld [vmem:[%s1 + $0x14b0] sm:$0xff]
  %v715 = vld [vmem:[%s1 + $0x14b8] sm:$0xff]
  %v716 = vld [vmem:[%s1 + $0x14c0] sm:$0xff]
  %v717 = vld [vmem:[%s1 + $0x14c8] sm:$0xff]
  %v718 = vld [vmem:[%s1 + $0x14d0] sm:$0xff]
  %v719 = vld [vmem:[%s1 + $0x14d8] sm:$0xff]
  %v720 = vld [vmem:[%s1 + $0x14e0] sm:$0xff]
  %v721 = vld [vmem:[%s1 + $0x14e8] sm:$0xff]
  %v722 = vld [vmem:[%s1 + $0x14f0] sm:$0xff]
  %v723 = vld [vmem:[%s1 + $0x14f8] sm:$0xff]
  %v724 = vld [vmem:[%s1 + $0x1500] sm:$0xff]
  %v725 = vld [vmem:[%s1 + $0x1508] sm:$0xff]
  %v726 = vld [vmem:[%s1 + $0x1510] sm:$0xff]
  %v727 = vld [vmem:[%s1 + $0x1518] sm:$0xff]
  %v728 = vld [vmem:[%s1 + $0x1520] sm:$0xff]
  %v729 = vld [vmem:[%s1 + $0x1528] sm:$0xff]
  %v730 = vld [vmem:[%s1 + $0x1530] sm:$0xff]
  %v731 = vld [vmem:[%s1 + $0x1538] sm:$0xff]
  %v732 = vld [vmem:[%s1 + $0x1540] sm:$0xff]
  %v733 = vld [vmem:[%s1 + $0x1548] sm:$0xff]
  %v734 = vld [vmem:[%s1 + $0x1550] sm:$0xff]
  %v735 = vld [vmem:[%s1 + $0x1558] sm:$0xff]
  %v736 = vld [vmem:[%s1 + $0x1560] sm:$0xff]
  %v737 = vld [vmem:[%s1 + $0x1568] sm:$0xff]
  %v738 = vld [vmem:[%s1 + $0x1570] sm:$0xff]
  %v739 = vld [vmem:[%s1 + $0x1578] sm:$0xff]
  %v740 = vld [vmem:[%s1 + $0x1580] sm:$0xff]
  %v741 = vld [vmem:[%s1 + $0x1588] sm:$0xff]
  %v742 = vld [vmem:[%s1 + $0x1590] sm:$0xff]
  %v743 = vld [vmem:[%s1 + $0x1598] sm:$0xff]
  %v744 = vld [vmem:[%s1 + $0x15a0] sm:$0xff]
  %v745 = vld [vmem:[%s1 + $0x15a8] sm:$0xff]
  %v746 = vld [vmem:[%s1 + $0x15b0] sm:$0xff]
  %v747 = vld [vmem:[%s1 + $0x15b8] sm:$0xff]
  %v748 = vld [vmem:[%s1 + $0x15c0] sm:$0xff]
  %v749 = vld [vmem:[%s1 + $0x15c8] sm:$0xff]
  %v750 = vld [vmem:[%s1 + $0x15d0] sm:$0xff]
  %v751 = vld [vmem:[%s1 + $0x15d8] sm:$0xff]
  %v752 = vld [vmem:[%s1 + $0x15e0] sm:$0xff]
  %v753 = vld [vmem:[%s1 + $0x15e8] sm:$0xff]
  %v754 = vld [vmem:[%s1 + $0x15f0] sm:$0xff]
  %v755 = vld [vmem:[%s1 + $0x15f8] sm:$0xff]
  %v756 = vld [vmem:[%s1 + $0x1600] sm:$0xff]
  %v757 = vld [vmem:[%s1 + $0x1608] sm:$0xff]
  %v758 = vld [vmem:[%s1 + $0x1610] sm:$0xff]
  %v759 = vld [vmem:[%s1 + $0x1618] sm:$0xff]
  %v760 = vld [vmem:[%s1 + $0x1620] sm:$0xff]
  %v761 = vld [vmem:[%s1 + $0x1628] sm:$0xff]
  %v762 = vld [vmem:[%s1 + $0x1630] sm:$0xff]
  %v763 = vld [vmem:[%s1 + $0x1638] sm:$0xff]
  %v764 = vld [vmem:[%s1 + $0x1640] sm:$0xff]
  %v765 = vld [vmem:[%s1 + $0x1648] sm:$0xff]
  %v766 = vld [vmem:[%s1 + $0x1650] sm:$0xff]
  %v767 = vld [vmem:[%s1 + $0x1658] sm:$0xff]
  %v768 = vld [vmem:[%s1 + $0x1660] sm:$0xff]
  %v769 = vld [vmem:[%s1 + $0x1668] sm:$0xff]
  %v770 = vld [vmem:[%s1 + $0x1670] sm:$0xff]
  %v771 = vld [vmem:[%s1 + $0x1678] sm:$0xff]
  %v772 = vld [vmem:[%s1 + $0x1680] sm:$0xff]
  %v773 = vld [vmem:[%s1 + $0x1688] sm:$0xff]
  %v774 = vld [vmem:[%s1 + $0x1690] sm:$0xff]
  %v775 = vld [vmem:[%s1 + $0x1698] sm:$0xff]
  %v776 = vld [vmem:[%s1 + $0x16a0] sm:$0xff]
  %v777 = vld [vmem:[%s1 + $0x16a8] sm:$0xff]
  %v778 = vld [vmem:[%s1 + $0x16b0] sm:$0xff]
  %v779 = vld [vmem:[%s1 + $0x16b8] sm:$0xff]
  %v780 = vld [vmem:[%s1 + $0x16c0] sm:$0xff]
  %v781 = vld [vmem:[%s1 + $0x16c8] sm:$0xff]
  %v782 = vld [vmem:[%s1 + $0x16d0] sm:$0xff]
  %v783 = vld [vmem:[%s1 + $0x16d8] sm:$0xff]
  %v784 = vld [vmem:[%s1 + $0x16e0] sm:$0xff]
  %v785 = vld [vmem:[%s1 + $0x16e8] sm:$0xff]
  %v786 = vld [vmem:[%s1 + $0x16f0] sm:$0xff]
  %v787 = vld [vmem:[%s1 + $0x16f8] sm:$0xff]
  %v788 = vld [vmem:[%s1 + $0x1700] sm:$0xff]
  %v789 = vld [vmem:[%s1 + $0x1708] sm:$0xff]
  %v790 = vld [vmem:[%s1 + $0x1710] sm:$0xff]
  %v791 = vld [vmem:[%s1 + $0x1718] sm:$0xff]
  %v792 = vld [vmem:[%s1 + $0x1720] sm:$0xff]
  %v793 = vld [vmem:[%s1 + $0x1728] sm:$0xff]
  %v794 = vld [vmem:[%s1 + $0x1730] sm:$0xff]
  %v795 = vld [vmem:[%s1 + $0x1738] sm:$0xff]
  %v796 = vld [vmem:[%s1 + $0x1740] sm:$0xff]
  %v797 = vld [vmem:[%s1 + $0x1748] sm:$0xff]
  %v798 = vld [vmem:[%s1 + $0x1750] sm:$0xff]
  %v799 = vld [vmem:[%s1 + $0x1758] sm:$0xff]
  %v800 = vld [vmem:[%s1 + $0x1760] sm:$0xff]
  %v801 = vld [vmem:[%s1 + $0x1768] sm:$0xff]
  %v802 = vld [vmem:[%s1 + $0x1770] sm:$0xff]
  %v803 = vld [vmem:[%s1 + $0x1778] sm:$0xff]
  %v804 = vld [vmem:[%s1 + $0x1780] sm:$0xff]
  %v805 = vld [vmem:[%s1 + $0x1788] sm:$0xff]
  %v806 = vld [vmem:[%s1 + $0x1790] sm:$0xff]
  %v807 = vld [vmem:[%s1 + $0x1798] sm:$0xff]
  %v808 = vld [vmem:[%s1 + $0x17a0] sm:$0xff]
  %v809 = vld [vmem:[%s1 + $0x17a8] sm:$0xff]
  %v810 = vld [vmem:[%s1 + $0x17b0] sm:$0xff]
  %v811 = vld [vmem:[%s1 + $0x17b8] sm:$0xff]
  %v812 = vld [vmem:[%s1 + $0x17c0] sm:$0xff]
  %v813 = vld [vmem:[%s1 + $0x17c8] sm:$0xff]
  %v814 = vld [vmem:[%s1 + $0x17d0] sm:$0xff]
  %v815 = vld [vmem:[%s1 + $0x17d8] sm:$0xff]
  %v816 = vld [vmem:[%s1 + $0x17e0] sm:$0xff]
  %v817 = vld [vmem:[%s1 + $0x17e8] sm:$0xff]
  %v818 = vld [vmem:[%s1 + $0x17f0] sm:$0xff]
  %v819 = vld [vmem:[%s1 + $0x17f8] sm:$0xff]
  %v820 = vld [vmem:[%s1 + $0x1800] sm:$0xff]
  %v821 = vld [vmem:[%s1 + $0x1808] sm:$0xff]
  %v822 = vld [vmem:[%s1 + $0x1810] sm:$0xff]
  %v823 = vld [vmem:[%s1 + $0x1818] sm:$0xff]
  %v824 = vld [vmem:[%s1 + $0x1820] sm:$0xff]
  %v825 = vld [vmem:[%s1 + $0x1828] sm:$0xff]
  %v826 = vld [vmem:[%s1 + $0x1830] sm:$0xff]
  %v827 = vld [vmem:[%s1 + $0x1838] sm:$0xff]
  %v828 = vld [vmem:[%s1 + $0x1840] sm:$0xff]
  %v829 = vld [vmem:[%s1 + $0x1848] sm:$0xff]
  %v830 = vld [vmem:[%s1 + $0x1850] sm:$0xff]
  %v831 = vld [vmem:[%s1 + $0x1858] sm:$0xff]
  %v832 = vld [vmem:[%s1 + $0x1860] sm:$0xff]
  %v833 = vld [vmem:[%s1 + $0x1868] sm:$0xff]
  %v834 = vld [vmem:[%s1 + $0x1870] sm:$0xff]
  %v835 = vld [vmem:[%s1 + $0x1878] sm:$0xff]
  %v836 = vld [vmem:[%s1 + $0x1880] sm:$0xff]
  %v837 = vld [vmem:[%s1 + $0x1888] sm:$0xff]
  %v838 = vld [vmem:[%s1 + $0x1890] sm:$0xff]
  %v839 = vld [vmem:[%s1 + $0x1898] sm:$0xff]
  %v840 = vld [vmem:[%s1 + $0x18a0] sm:$0xff]
  %v841 = vld [vmem:[%s1 + $0x18a8] sm:$0xff]
  %v842 = vld [vmem:[%s1 + $0x18b0] sm:$0xff]
  %v843 = vld [vmem:[%s1 + $0x18b8] sm:$0xff]
  %v844 = vld [vmem:[%s1 + $0x18c0] sm:$0xff]
  %v845 = vld [vmem:[%s1 + $0x18c8] sm:$0xff]
  %v846 = vld [vmem:[%s1 + $0x18d0] sm:$0xff]
  %v847 = vld [vmem:[%s1 + $0x18d8] sm:$0xff]
  %v848 = vld [vmem:[%s1 + $0x18e0] sm:$0xff]
  %v849 = vld [vmem:[%s1 + $0x18e8] sm:$0xff]
  %v850 = vld [vmem:[%s1 + $0x18f0] sm:$0xff]
  %v851 = vld [vmem:[%s1 + $0x18f8] sm:$0xff]
  %v852 = vld [vmem:[%s1 + $0x1900] sm:$0xff]
  %v853 = vld [vmem:[%s1 + $0x1908] sm:$0xff]
  %v854 = vld [vmem:[%s1 + $0x1910] sm:$0xff]
  %v855 = vld [vmem:[%s1 + $0x1918] sm:$0xff]
  %v856 = vld [vmem:[%s1 + $0x1920] sm:$0xff]
  %v857 = vld [vmem:[%s1 + $0x1928] sm:$0xff]
  %v858 = vld [vmem:[%s1 + $0x1930] sm:$0xff]
  %v859 = vld [vmem:[%s1 + $0x1938] sm:$0xff]
  %v860 = vld [vmem:[%s1 + $0x1940] sm:$0xff]
  %v861 = vld [vmem:[%s1 + $0x1948] sm:$0xff]
  %v862 = vld [vmem:[%s1 + $0x1950] sm:$0xff]
  %v863 = vld [vmem:[%s1 + $0x1958] sm:$0xff]
  %v864 = vld [vmem:[%s1 + $0x1960] sm:$0xff]
  %v865 = vld [vmem:[%s1 + $0x1968] sm:$0xff]
  %v866 = vld [vmem:[%s1 + $0x1970] sm:$0xff]
  %v867 = vld [vmem:[%s1 + $0x1978] sm:$0xff]
  %v868 = vld [vmem:[%s1 + $0x1980] sm:$0xff]
  %v869 = vld [vmem:[%s1 + $0x1988] sm:$0xff]
  %v870 = vld [vmem:[%s1 + $0x1990] sm:$0xff]
  %v871 = vld [vmem:[%s1 + $0x1998] sm:$0xff]
  %v872 = vld [vmem:[%s1 + $0x19a0] sm:$0xff]
  %v873 = vld [vmem:[%s1 + $0x19a8] sm:$0xff]
  %v874 = vld [vmem:[%s1 + $0x19b0] sm:$0xff]
  %v875 = vld [vmem:[%s1 + $0x19b8] sm:$0xff]
  %v876 = vld [vmem:[%s1 + $0x19c0] sm:$0xff]
  %v877 = vld [vmem:[%s1 + $0x19c8] sm:$0xff]
  %v878 = vld [vmem:[%s1 + $0x19d0] sm:$0xff]
  %v879 = vld [vmem:[%s1 + $0x19d8] sm:$0xff]
  %v880 = vld [vmem:[%s1 + $0x19e0] sm:$0xff]
  %v881 = vld [vmem:[%s1 + $0x19e8] sm:$0xff]
  %v882 = vld [vmem:[%s1 + $0x19f0] sm:$0xff]
  %v883 = vld [vmem:[%s1 + $0x19f8] sm:$0xff]
  %v884 = vld [vmem:[%s1 + $0x1a00] sm:$0xff]
  %v885 = vld [vmem:[%s1 + $0x1a08] sm:$0xff]
  %v886 = vld [vmem:[%s1 + $0x1a10] sm:$0xff]
  %v887 = vld [vmem:[%s1 + $0x1a18] sm:$0xff]
  %v888 = vld [vmem:[%s1 + $0x1a20] sm:$0xff]
  %v889 = vld [vmem:[%s1 + $0x1a28] sm:$0xff]
  %v890 = vld [vmem:[%s1 + $0x1a30] sm:$0xff]
  %v891 = vld [vmem:[%s1 + $0x1a38] sm:$0xff]
  %v892 = vld [vmem:[%s1 + $0x1a40] sm:$0xff]
  %v893 = vld [vmem:[%s1 + $0x1a48] sm:$0xff]
  %v894 = vld [vmem:[%s1 + $0x1a50] sm:$0xff]
  %v895 = vld [vmem:[%s1 + $0x1a58] sm:$0xff]
  %v896 = vld [vmem:[%s1 + $0x1a60] sm:$0xff]
  %v897 = vld [vmem:[%s1 + $0x1a68] sm:$0xff]
  %v898 = vld [vmem:[%s1 + $0x1a70] sm:$0xff]
  %v899 = vld [vmem:[%s1 + $0x1a78] sm:$0xff]
  %v900 = vld [vmem:[%s1 + $0x1a80] sm:$0xff]
  %v901 = vld [vmem:[%s1 + $0x1a88] sm:$0xff]
  %v902 = vld [vmem:[%s1 + $0x1a90] sm:$0xff]
  %v903 = vld [vmem:[%s1 + $0x1a98] sm:$0xff]
  %v904 = vld [vmem:[%s1 + $0x1aa0] sm:$0xff]
  %v905 = vld [vmem:[%s1 + $0x1aa8] sm:$0xff]
  %v906 = vld [vmem:[%s1 + $0x1ab0] sm:$0xff]
  %v907 = vld [vmem:[%s1 + $0x1ab8] sm:$0xff]
  %v908 = vld [vmem:[%s1 + $0x1ac0] sm:$0xff]
  %v909 = vld [vmem:[%s1 + $0x1ac8] sm:$0xff]
  %v910 = vld [vmem:[%s1 + $0x1ad0] sm:$0xff]
  %v911 = vld [vmem:[%s1 + $0x1ad8] sm:$0xff]
  %v912 = vld [vmem:[%s1 + $0x1ae0] sm:$0xff]
  %v913 = vld [vmem:[%s1 + $0x1ae8] sm:$0xff]
  %v914 = vld [vmem:[%s1 + $0x1af0] sm:$0xff]
  %v915 = vld [vmem:[%s1 + $0x1af8] sm:$0xff]
  %v916 = vld [vmem:[%s1 + $0x1b00] sm:$0xff]
  %v917 = vld [vmem:[%s1 + $0x1b08] sm:$0xff]
  %v918 = vld [vmem:[%s1 + $0x1b10] sm:$0xff]
  %v919 = vld [vmem:[%s1 + $0x1b18] sm:$0xff]
  %v920 = vld [vmem:[%s1 + $0x1b20] sm:$0xff]
  %v921 = vld [vmem:[%s1 + $0x1b28] sm:$0xff]
  %v922 = vld [vmem:[%s1 + $0x1b30] sm:$0xff]
  %v923 = vld [vmem:[%s1 + $0x1b38] sm:$0xff]
  %v924 = vld [vmem:[%s1 + $0x1b40] sm:$0xff]
  %v925 = vld [vmem:[%s1 + $0x1b48] sm:$0xff]
  %v926 = vld [vmem:[%s1 + $0x1b50] sm:$0xff]
  %v927 = vld [vmem:[%s1 + $0x1b58] sm:$0xff]
  %v928 = vld [vmem:[%s1 + $0x1b60] sm:$0xff]
  %v929 = vld [vmem:[%s1 + $0x1b68] sm:$0xff]
  %v930 = vld [vmem:[%s1 + $0x1b70] sm:$0xff]
  %v931 = vld [vmem:[%s1 + $0x1b78] sm:$0xff]
  %v932 = vld [vmem:[%s1 + $0x1b80] sm:$0xff]
  %v933 = vld [vmem:[%s1 + $0x1b88] sm:$0xff]
  %v934 = vld [vmem:[%s1 + $0x1b90] sm:$0xff]
  %v935 = vld [vmem:[%s1 + $0x1b98] sm:$0xff]
  %v936 = vld [vmem:[%s1 + $0x1ba0] sm:$0xff]
  %v937 = vld [vmem:[%s1 + $0x1ba8] sm:$0xff]
  %v938 = vld [vmem:[%s1 + $0x1bb0] sm:$0xff]
  %v939 = vld [vmem:[%s1 + $0x1bb8] sm:$0xff]
  %v940 = vld [vmem:[%s1 + $0x1bc0] sm:$0xff]
  %v941 = vld [vmem:[%s1 + $0x1bc8] sm:$0xff]
  %v942 = vld [vmem:[%s1 + $0x1bd0] sm:$0xff]
  %v943 = vld [vmem:[%s1 + $0x1bd8] sm:$0xff]
  %v944 = vld [vmem:[%s1 + $0x1be0] sm:$0xff]
  %v945 = vld [vmem:[%s1 + $0x1be8] sm:$0xff]
  %v946 = vld [vmem:[%s1 + $0x1bf0] sm:$0xff]
  %v947 = vld [vmem:[%s1 + $0x1bf8] sm:$0xff]
  %v948 = vld [vmem:[%s1 + $0x1c00] sm:$0xff]
  %v949 = vld [vmem:[%s1 + $0x1c08] sm:$0xff]
  %v950 = vld [vmem:[%s1 + $0x1c10] sm:$0xff]
  %v951 = vld [vmem:[%s1 + $0x1c18] sm:$0xff]
  %v952 = vld [vmem:[%s1 + $0x1c20] sm:$0xff]
  %v953 = vld [vmem:[%s1 + $0x1c28] sm:$0xff]
  %v954 = vld [vmem:[%s1 + $0x1c30] sm:$0xff]
  %v955 = vld [vmem:[%s1 + $0x1c38] sm:$0xff]
  %v956 = vld [vmem:[%s1 + $0x1c40] sm:$0xff]
  %v957 = vld [vmem:[%s1 + $0x1c48] sm:$0xff]
  %v958 = vld [vmem:[%s1 + $0x1c50] sm:$0xff]
  %v959 = vld [vmem:[%s1 + $0x1c58] sm:$0xff]
  %v960 = vld [vmem:[%s1 + $0x1c60] sm:$0xff]
  %v961 = vld [vmem:[%s1 + $0x1c68] sm:$0xff]
  %v962 = vld [vmem:[%s1 + $0x1c70] sm:$0xff]
  %v963 = vld [vmem:[%s1 + $0x1c78] sm:$0xff]
  %v964 = vld [vmem:[%s1 + $0x1c80] sm:$0xff]
  %v965 = vld [vmem:[%s1 + $0x1c88] sm:$0xff]
  %v966 = vld [vmem:[%s1 + $0x1c90] sm:$0xff]
  %v967 = vld [vmem:[%s1 + $0x1c98] sm:$0xff]
  %v968 = vld [vmem:[%s1 + $0x1ca0] sm:$0xff]
  %v969 = vld [vmem:[%s1 + $0x1ca8] sm:$0xff]
  %v970 = vld [vmem:[%s1 + $0x1cb0] sm:$0xff]
  %v971 = vld [vmem:[%s1 + $0x1cb8] sm:$0xff]
  %v972 = vld [vmem:[%s1 + $0x1cc0] sm:$0xff]
  %v973 = vld [vmem:[%s1 + $0x1cc8] sm:$0xff]
  %v974 = vld [vmem:[%s1 + $0x1cd0] sm:$0xff]
  %v975 = vld [vmem:[%s1 + $0x1cd8] sm:$0xff]
  %v976 = vld [vmem:[%s1 + $0x1ce0] sm:$0xff]
  %v977 = vld [vmem:[%s1 + $0x1ce8] sm:$0xff]
  %v978 = vld [vmem:[%s1 + $0x1cf0] sm:$0xff]
  %v979 = vld [vmem:[%s1 + $0x1cf8] sm:$0xff]
  %v980 = vld [vmem:[%s1 + $0x1d00] sm:$0xff]
  %v981 = vld [vmem:[%s1 + $0x1d08] sm:$0xff]
  %v982 = vld [vmem:[%s1 + $0x1d10] sm:$0xff]
  %v983 = vld [vmem:[%s1 + $0x1d18] sm:$0xff]
  %v984 = vld [vmem:[%s1 + $0x1d20] sm:$0xff]
  %v985 = vld [vmem:[%s1 + $0x1d28] sm:$0xff]
  %v986 = vld [vmem:[%s1 + $0x1d30] sm:$0xff]
  %v987 = vld [vmem:[%s1 + $0x1d38] sm:$0xff]
  %v988 = vld [vmem:[%s1 + $0x1d40] sm:$0xff]
  %v989 = vld [vmem:[%s1 + $0x1d48] sm:$0xff]
  %v990 = vld [vmem:[%s1 + $0x1d50] sm:$0xff]
  %v991 = vld [vmem:[%s1 + $0x1d58] sm:$0xff]
  %v992 = vld [vmem:[%s1 + $0x1d60] sm:$0xff]
  %v993 = vld [vmem:[%s1 + $0x1d68] sm:$0xff]
  %v994 = vld [vmem:[%s1 + $0x1d70] sm:$0xff]
  %v995 = vld [vmem:[%s1 + $0x1d78] sm:$0xff]
  %v996 = vld [vmem:[%s1 + $0x1d80] sm:$0xff]
  %v997 = vld [vmem:[%s1 + $0x1d88] sm:$0xff]
  %v998 = vld [vmem:[%s1 + $0x1d90] sm:$0xff]
  %v999 = vld [vmem:[%s1 + $0x1d98] sm:$0xff]
  %v1000 = vld [vmem:[%s1 + $0x1da0] sm:$0xff]
  %v1001 = vld [vmem:[%s1 + $0x1da8] sm:$0xff]
  %v1002 = vld [vmem:[%s1 + $0x1db0] sm:$0xff]
  %v1003 = vld [vmem:[%s1 + $0x1db8] sm:$0xff]
  %v1004 = vld [vmem:[%s1 + $0x1dc0] sm:$0xff]
  %v1005 = vld [vmem:[%s1 + $0x1dc8] sm:$0xff]
  %v1006 = vld [vmem:[%s1 + $0x1dd0] sm:$0xff]
  %v1007 = vld [vmem:[%s1 + $0x1dd8] sm:$0xff]
  %v1008 = vld [vmem:[%s1 + $0x1de0] sm:$0xff]
  %v1009 = vld [vmem:[%s1 + $0x1de8] sm:$0xff]
  %v1010 = vld [vmem:[%s1 + $0x1df0] sm:$0xff]
  %v1011 = vld [vmem:[%s1 + $0x1df8] sm:$0xff]
  %v1012 = vld [vmem:[%s1 + $0x1e00] sm:$0xff]
  %v1013 = vld [vmem:[%s1 + $0x1e08] sm:$0xff]
  %v1014 = vld [vmem:[%s1 + $0x1e10] sm:$0xff]
  %v1015 = vld [vmem:[%s1 + $0x1e18] sm:$0xff]
  %v1016 = vld [vmem:[%s1 + $0x1e20] sm:$0xff]
  %v1017 = vld [vmem:[%s1 + $0x1e28] sm:$0xff]
  %v1018 = vld [vmem:[%s1 + $0x1e30] sm:$0xff]
  %v1019 = vld [vmem:[%s1 + $0x1e38] sm:$0xff]
  %v1020 = vld [vmem:[%s1 + $0x1e40] sm:$0xff]
  %v1021 = vld [vmem:[%s1 + $0x1e48] sm:$0xff]
  %v1022 = vld [vmem:[%s1 + $0x1e50] sm:$0xff]
  %v1023 = vld [vmem:[%s1 + $0x1e58] sm:$0xff]
  %v1024 = vld [vmem:[%s1 + $0x1e60] sm:$0xff]
  %v1025 = vld [vmem:[%s1 + $0x1e68] sm:$0xff]
  %v1026 = vld [vmem:[%s1 + $0x1e70] sm:$0xff]
  %v1027 = vld [vmem:[%s1 + $0x1e78] sm:$0xff]
  %v1028 = vld [vmem:[%s1 + $0x1e80] sm:$0xff]
  %v1029 = vld [vmem:[%s1 + $0x1e88] sm:$0xff]
  %v1030 = vld [vmem:[%s1 + $0x1e90] sm:$0xff]
  %v1031 = vld [vmem:[%s1 + $0x1e98] sm:$0xff]
  %v1032 = vld [vmem:[%s1 + $0x1ea0] sm:$0xff]
  %v1033 = vld [vmem:[%s1 + $0x1ea8] sm:$0xff]
  %v1034 = vld [vmem:[%s1 + $0x1eb0] sm:$0xff]
  %v1035 = vld [vmem:[%s1 + $0x1eb8] sm:$0xff]
  %v1036 = vld [vmem:[%s1 + $0x1ec0] sm:$0xff]
  %v1037 = vld [vmem:[%s1 + $0x1ec8] sm:$0xff]
  %v1038 = vld [vmem:[%s1 + $0x1ed0] sm:$0xff]
  %v1039 = vld [vmem:[%s1 + $0x1ed8] sm:$0xff]
  %v1040 = vld [vmem:[%s1 + $0x1ee0] sm:$0xff]
  %v1041 = vld [vmem:[%s1 + $0x1ee8] sm:$0xff]
  %v1042 = vld [vmem:[%s1 + $0x1ef0] sm:$0xff]
  %v1043 = vld [vmem:[%s1 + $0x1ef8] sm:$0xff]
  %v1044 = vld [vmem:[%s1 + $0x1f00] sm:$0xff]
  %v1045 = vld [vmem:[%s1 + $0x1f08] sm:$0xff]
  %v1046 = vld [vmem:[%s1 + $0x1f10] sm:$0xff]
  %v1047 = vld [vmem:[%s1 + $0x1f18] sm:$0xff]
  %v1048 = vld [vmem:[%s1 + $0x1f20] sm:$0xff]
  %v1049 = vld [vmem:[%s1 + $0x1f28] sm:$0xff]
  %v1050 = vld [vmem:[%s1 + $0x1f30] sm:$0xff]
  %v1051 = vld [vmem:[%s1 + $0x1f38] sm:$0xff]
  %v1052 = vld [vmem:[%s1 + $0x1f40] sm:$0xff]
  %v1053 = vld [vmem:[%s1 + $0x1f48] sm:$0xff]
  %v1054 = vld [vmem:[%s1 + $0x1f50] sm:$0xff]
  %v1055 = vld [vmem:[%s1 + $0x1f58] sm:$0xff]
  %v1056 = vld [vmem:[%s1 + $0x1f60] sm:$0xff]
  %v1057 = vld [vmem:[%s1 + $0x1f68] sm:$0xff]
  %v1058 = vld [vmem:[%s1 + $0x1f70] sm:$0xff]
  %v1059 = vld [vmem:[%s1 + $0x1f78] sm:$0xff]
  %v1060 = vld [vmem:[%s1 + $0x1f80] sm:$0xff]
  %v1061 = vld [vmem:[%s1 + $0x1f88] sm:$0xff]
  %v1062 = vld [vmem:[%s1 + $0x1f90] sm:$0xff]
  %v1063 = vld [vmem:[%s1 + $0x1f98] sm:$0xff]
  %v1064 = vld [vmem:[%s1 + $0x1fa0] sm:$0xff]
  %v1065 = vld [vmem:[%s1 + $0x1fa8] sm:$0xff]
  %v1066 = vld [vmem:[%s1 + $0x1fb0] sm:$0xff]
  %v1067 = vld [vmem:[%s1 + $0x1fb8] sm:$0xff]
  %v1068 = vld [vmem:[%s1 + $0x1fc0] sm:$0xff]
  %v1069 = vld [vmem:[%s1 + $0x1fc8] sm:$0xff]
  %v1070 = vld [vmem:[%s1 + $0x1fd0] sm:$0xff]
  %v1071 = vld [vmem:[%s1 + $0x1fd8] sm:$0xff]
  %v1072 = vld [vmem:[%s1 + $0x1fe0] sm:$0xff]
  %v1073 = vld [vmem:[%s1 + $0x1fe8] sm:$0xff]
  %v1074 = vld [vmem:[%s1 + $0x1ff0] sm:$0xff]
  %v1075 = vld [vmem:[%s1 + $0x1ff8] sm:$0xff]
  %v1076 = vld [vmem:[%s1 + $0x2000] sm:$0xff]
  %v1077 = vld [vmem:[%s1 + $0x2008] sm:$0xff]
  %v1078 = vld [vmem:[%s1 + $0x2010] sm:$0xff]
  %v1079 = vld [vmem:[%s1 + $0x2018] sm:$0xff]
  %v1080 = vld [vmem:[%s1 + $0x2020] sm:$0xff]
  %v1081 = vld [vmem:[%s1 + $0x2028] sm:$0xff]
  %v1082 = vld [vmem:[%s1 + $0x2030] sm:$0xff]
  %v1083 = vld [vmem:[%s1 + $0x2038] sm:$0xff]
  %v1084 = vld [vmem:[%s1 + $0x2040] sm:$0xff]
  %v1085 = vld [vmem:[%s1 + $0x2048] sm:$0xff]
  %v1086 = vld [vmem:[%s1 + $0x2050] sm:$0xff]
  %v1087 = vld [vmem:[%s1 + $0x2058] sm:$0xff]
  %v1088 = vld [vmem:[%s1 + $0x2060] sm:$0xff]
  %v1089 = vld [vmem:[%s1 + $0x2068] sm:$0xff]
  %v1090 = vld [vmem:[%s1 + $0x2070] sm:$0xff]
  %v1091 = vld [vmem:[%s1 + $0x2078] sm:$0xff]
  %v1092 = vld [vmem:[%s1 + $0x2080] sm:$0xff]
  %v1093 = vld [vmem:[%s1 + $0x2088] sm:$0xff]
  %v1094 = vld [vmem:[%s1 + $0x2090] sm:$0xff]
  %v1095 = vld [vmem:[%s1 + $0x2098] sm:$0xff]
  %v1096 = vld [vmem:[%s1 + $0x20a0] sm:$0xff]
  %v1097 = vld [vmem:[%s1 + $0x20a8] sm:$0xff]
  %v1098 = vld [vmem:[%s1 + $0x20b0] sm:$0xff]
  %v1099 = vld [vmem:[%s1 + $0x20b8] sm:$0xff]
  %v1100 = vld [vmem:[%s1 + $0x20c0] sm:$0xff]
  %v1101 = vld [vmem:[%s1 + $0x20c8] sm:$0xff]
  %v1102 = vld [vmem:[%s1 + $0x20d0] sm:$0xff]
  %v1103 = vld [vmem:[%s1 + $0x20d8] sm:$0xff]
  %v1104 = vld [vmem:[%s1 + $0x20e0] sm:$0xff]
  %v1105 = vld [vmem:[%s1 + $0x20e8] sm:$0xff]
  %v1106 = vld [vmem:[%s1 + $0x20f0] sm:$0xff]
  %v1107 = vld [vmem:[%s1 + $0x20f8] sm:$0xff]
  %v1108 = vld [vmem:[%s1 + $0x2100] sm:$0xff]
  %v1109 = vld [vmem:[%s1 + $0x2108] sm:$0xff]
  %v1110 = vld [vmem:[%s1 + $0x2110] sm:$0xff]
  %v1111 = vld [vmem:[%s1 + $0x2118] sm:$0xff]
  %v1112 = vld [vmem:[%s1 + $0x2120] sm:$0xff]
  %v1113 = vld [vmem:[%s1 + $0x2128] sm:$0xff]
  %v1114 = vld [vmem:[%s1 + $0x2130] sm:$0xff]
  %v1115 = vld [vmem:[%s1 + $0x2138] sm:$0xff]
  %v1116 = vld [vmem:[%s1 + $0x2140] sm:$0xff]
  %v1117 = vld [vmem:[%s1 + $0x2148] sm:$0xff]
  %v1118 = vld [vmem:[%s1 + $0x2150] sm:$0xff]
  %v1119 = vld [vmem:[%s1 + $0x2158] sm:$0xff]
  %v1120 = vld [vmem:[%s1 + $0x2160] sm:$0xff]
  %v1121 = vld [vmem:[%s1 + $0x2168] sm:$0xff]
  %v1122 = vld [vmem:[%s1 + $0x2170] sm:$0xff]
  %v1123 = vld [vmem:[%s1 + $0x2178] sm:$0xff]
  %v1124 = vld [vmem:[%s1 + $0x2180] sm:$0xff]
  %v1125 = vld [vmem:[%s1 + $0x2188] sm:$0xff]
  %v1126 = vld [vmem:[%s1 + $0x2190] sm:$0xff]
  %v1127 = vld [vmem:[%s1 + $0x2198] sm:$0xff]
  %v1128 = vld [vmem:[%s1 + $0x21a0] sm:$0xff]
  %v1129 = vld [vmem:[%s1 + $0x21a8] sm:$0xff]
  %v1130 = vld [vmem:[%s1 + $0x21b0] sm:$0xff]
  %v1131 = vld [vmem:[%s1 + $0x21b8] sm:$0xff]
  %v1132 = vld [vmem:[%s1 + $0x21c0] sm:$0xff]
  %v1133 = vld [vmem:[%s1 + $0x21c8] sm:$0xff]
  %v1134 = vld [vmem:[%s1 + $0x21d0] sm:$0xff]
  %v1135 = vld [vmem:[%s1 + $0x21d8] sm:$0xff]
  %v1136 = vld [vmem:[%s1 + $0x21e0] sm:$0xff]
  %v1137 = vld [vmem:[%s1 + $0x21e8] sm:$0xff]
  %v1138 = vld [vmem:[%s1 + $0x21f0] sm:$0xff]
  %v1139 = vld [vmem:[%s1 + $0x21f8] sm:$0xff]
  %v1140 = vld [vmem:[%s1 + $0x2200] sm:$0xff]
  %v1141 = vld [vmem:[%s1 + $0x2208] sm:$0xff]
  %v1142 = vld [vmem:[%s1 + $0x2210] sm:$0xff]
  %v1143 = vld [vmem:[%s1 + $0x2218] sm:$0xff]
  %v1144 = vld [vmem:[%s1 + $0x2220] sm:$0xff]
  %v1145 = vld [vmem:[%s1 + $0x2228] sm:$0xff]
  %v1146 = vld [vmem:[%s1 + $0x2230] sm:$0xff]
  %v1147 = vld [vmem:[%s1 + $0x2238] sm:$0xff]
  %v1148 = vld [vmem:[%s1 + $0x2240] sm:$0xff]
  %v1149 = vld [vmem:[%s1 + $0x2248] sm:$0xff]
  %v1150 = vld [vmem:[%s1 + $0x2250] sm:$0xff]
  %v1151 = vld [vmem:[%s1 + $0x2258] sm:$0xff]
  %v1152 = vld [vmem:[%s1 + $0x2260] sm:$0xff]
  %v1153 = vld [vmem:[%s1 + $0x2268] sm:$0xff]
  %v1154 = vld [vmem:[%s1 + $0x2270] sm:$0xff]
  %v1155 = vld [vmem:[%s1 + $0x2278] sm:$0xff]
  %v1156 = vld [vmem:[%s1 + $0x2280] sm:$0xff]
  %v1157 = vld [vmem:[%s1 + $0x2288] sm:$0xff]
  %v1158 = vld [vmem:[%s1 + $0x2290] sm:$0xff]
  %v1159 = vld [vmem:[%s1 + $0x2298] sm:$0xff]
  %v1160 = vld [vmem:[%s1 + $0x22a0] sm:$0xff]
  %v1161 = vld [vmem:[%s1 + $0x22a8] sm:$0xff]
  %v1162 = vld [vmem:[%s1 + $0x22b0] sm:$0xff]
  %v1163 = vld [vmem:[%s1 + $0x22b8] sm:$0xff]
  %v1164 = vld [vmem:[%s1 + $0x22c0] sm:$0xff]
  %v1165 = vld [vmem:[%s1 + $0x22c8] sm:$0xff]
  %v1166 = vld [vmem:[%s1 + $0x22d0] sm:$0xff]
  %v1167 = vld [vmem:[%s1 + $0x22d8] sm:$0xff]
  %v1168 = vld [vmem:[%s1 + $0x22e0] sm:$0xff]
  %v1169 = vld [vmem:[%s1 + $0x22e8] sm:$0xff]
  %v1170 = vld [vmem:[%s1 + $0x22f0] sm:$0xff]
  %v1171 = vld [vmem:[%s1 + $0x22f8] sm:$0xff]
  %v1172 = vld [vmem:[%s1 + $0x2300] sm:$0xff]
  %v1173 = vld [vmem:[%s1 + $0x2308] sm:$0xff]
  %v1174 = vld [vmem:[%s1 + $0x2310] sm:$0xff]
  %v1175 = vld [vmem:[%s1 + $0x2318] sm:$0xff]
  %v1176 = vld [vmem:[%s1 + $0x2320] sm:$0xff]
  %v1177 = vld [vmem:[%s1 + $0x2328] sm:$0xff]
  %v1178 = vld [vmem:[%s1 + $0x2330] sm:$0xff]
  %v1179 = vld [vmem:[%s1 + $0x2338] sm:$0xff]
  %v1180 = vld [vmem:[%s1 + $0x2340] sm:$0xff]
  %v1181 = vld [vmem:[%s1 + $0x2348] sm:$0xff]
  %v1182 = vld [vmem:[%s1 + $0x2350] sm:$0xff]
  %v1183 = vld [vmem:[%s1 + $0x2358] sm:$0xff]
  %v1184 = vld [vmem:[%s1 + $0x2360] sm:$0xff]
  %v1185 = vld [vmem:[%s1 + $0x2368] sm:$0xff]
  %v1186 = vld [vmem:[%s1 + $0x2370] sm:$0xff]
  %v1187 = vld [vmem:[%s1 + $0x2378] sm:$0xff]
  %v1188 = vld [vmem:[%s1 + $0x2380] sm:$0xff]
  %v1189 = vld [vmem:[%s1 + $0x2388] sm:$0xff]
  %v1190 = vld [vmem:[%s1 + $0x2390] sm:$0xff]
  %v1191 = vld [vmem:[%s1 + $0x2398] sm:$0xff]
  %v1192 = vld [vmem:[%s1 + $0x23a0] sm:$0xff]
  %v1193 = vld [vmem:[%s1 + $0x23a8] sm:$0xff]
  %v1194 = vld [vmem:[%s1 + $0x23b0] sm:$0xff]
  %v1195 = vld [vmem:[%s1 + $0x23b8] sm:$0xff]
  %v1196 = vld [vmem:[%s1 + $0x23c0] sm:$0xff]
  %v1197 = vld [vmem:[%s1 + $0x23c8] sm:$0xff]
  %v1198 = vld [vmem:[%s1 + $0x23d0] sm:$0xff]
  %v1199 = vld [vmem:[%s1 + $0x23d8] sm:$0xff]
  %v1200 = vld [vmem:[%s1 + $0x23e0] sm:$0xff]
  %v1201 = vld [vmem:[%s1 + $0x23e8] sm:$0xff]
  %v1202 = vld [vmem:[%s1 + $0x23f0] sm:$0xff]
  %v1203 = vld [vmem:[%s1 + $0x23f8] sm:$0xff]
  %v1204 = vld [vmem:[%s1 + $0x2400] sm:$0xff]
  %v1205 = vld [vmem:[%s1 + $0x2408] sm:$0xff]
  %v1206 = vld [vmem:[%s1 + $0x2410] sm:$0xff]
  %v1207 = vld [vmem:[%s1 + $0x2418] sm:$0xff]
  %v1208 = vld [vmem:[%s1 + $0x2420] sm:$0xff]
  %v1209 = vld [vmem:[%s1 + $0x2428] sm:$0xff]
  %v1210 = vld [vmem:[%s1 + $0x2430] sm:$0xff]
  %v1211 = vld [vmem:[%s1 + $0x2438] sm:$0xff]
  %v1212 = vld [vmem:[%s1 + $0x2440] sm:$0xff]
  %v1213 = vld [vmem:[%s1 + $0x2448] sm:$0xff]
  %v1214 = vld [vmem:[%s1 + $0x2450] sm:$0xff]
  %v1215 = vld [vmem:[%s1 + $0x2458] sm:$0xff]
  %v1216 = vld [vmem:[%s1 + $0x2460] sm:$0xff]
  %v1217 = vld [vmem:[%s1 + $0x2468] sm:$0xff]
  %v1218 = vld [vmem:[%s1 + $0x2470] sm:$0xff]
  %v1219 = vld [vmem:[%s1 + $0x2478] sm:$0xff]
  %v1220 = vld [vmem:[%s1 + $0x2480] sm:$0xff]
  %v1221 = vld [vmem:[%s1 + $0x2488] sm:$0xff]
  %v1222 = vld [vmem:[%s1 + $0x2490] sm:$0xff]
  %v1223 = vld [vmem:[%s1 + $0x2498] sm:$0xff]
  %v1224 = vld [vmem:[%s1 + $0x24a0] sm:$0xff]
  %v1225 = vld [vmem:[%s1 + $0x24a8] sm:$0xff]
  %v1226 = vld [vmem:[%s1 + $0x24b0] sm:$0xff]
  %v1227 = vld [vmem:[%s1 + $0x24b8] sm:$0xff]
  %v1228 = vld [vmem:[%s1 + $0x24c0] sm:$0xff]
  %v1229 = vld [vmem:[%s1 + $0x24c8] sm:$0xff]
  %v1230 = vld [vmem:[%s1 + $0x24d0] sm:$0xff]
  %v1231 = vld [vmem:[%s1 + $0x24d8] sm:$0xff]
  %v1232 = vld [vmem:[%s1 + $0x24e0] sm:$0xff]
  %v1233 = vld [vmem:[%s1 + $0x24e8] sm:$0xff]
  %v1234 = vld [vmem:[%s1 + $0x24f0] sm:$0xff]
  %v1235 = vld [vmem:[%s1 + $0x24f8] sm:$0xff]
  %v1236 = vld [vmem:[%s1 + $0x2500] sm:$0xff]
  %v1237 = vld [vmem:[%s1 + $0x2508] sm:$0xff]
  %v1238 = vld [vmem:[%s1 + $0x2510] sm:$0xff]
  %v1239 = vld [vmem:[%s1 + $0x2518] sm:$0xff]
  %v1240 = vld [vmem:[%s1 + $0x2520] sm:$0xff]
  %v1241 = vld [vmem:[%s1 + $0x2528] sm:$0xff]
  %v1242 = vld [vmem:[%s1 + $0x2530] sm:$0xff]
  %v1243 = vld [vmem:[%s1 + $0x2538] sm:$0xff]
  %v1244 = vld [vmem:[%s1 + $0x2540] sm:$0xff]
  %v1245 = vld [vmem:[%s1 + $0x2548] sm:$0xff]
  %v1246 = vld [vmem:[%s1 + $0x2550] sm:$0xff]
  %v1247 = vld [vmem:[%s1 + $0x2558] sm:$0xff]
  %v1248 = vld [vmem:[%s1 + $0x2560] sm:$0xff]
  %v1249 = vld [vmem:[%s1 + $0x2568] sm:$0xff]
  %v1250 = vld [vmem:[%s1 + $0x2570] sm:$0xff]
  %v1251 = vld [vmem:[%s1 + $0x2578] sm:$0xff]
  %v1252 = vld [vmem:[%s1 + $0x2580] sm:$0xff]
  %v1253 = vld [vmem:[%s1 + $0x2588] sm:$0xff]
  %v1254 = vld [vmem:[%s1 + $0x2590] sm:$0xff]
  %v1255 = vld [vmem:[%s1 + $0x2598] sm:$0xff]
  %v1256 = vld [vmem:[%s1 + $0x25a0] sm:$0xff]
  %v1257 = vld [vmem:[%s1 + $0x25a8] sm:$0xff]
  %v1258 = vld [vmem:[%s1 + $0x25b0] sm:$0xff]
  %v1259 = vld [vmem:[%s1 + $0x25b8] sm:$0xff]
  %v1260 = vld [vmem:[%s1 + $0x25c0] sm:$0xff]
  %v1261 = vld [vmem:[%s1 + $0x25c8] sm:$0xff]
  %v1262 = vld [vmem:[%s1 + $0x25d0] sm:$0xff]
  %v1263 = vld [vmem:[%s1 + $0x25d8] sm:$0xff]
  %v1264 = vld [vmem:[%s1 + $0x25e0] sm:$0xff]
  %v1265 = vld [vmem:[%s1 + $0x25e8] sm:$0xff]
  %v1266 = vld [vmem:[%s1 + $0x25f0] sm:$0xff]
  %v1267 = vld [vmem:[%s1 + $0x25f8] sm:$0xff]
  %v1268 = vld [vmem:[%s1 + $0x2600] sm:$0xff]
  %v1269 = vld [vmem:[%s1 + $0x2608] sm:$0xff]
  %v1270 = vld [vmem:[%s1 + $0x2610] sm:$0xff]
  %v1271 = vld [vmem:[%s1 + $0x2618] sm:$0xff]
  %v1272 = vld [vmem:[%s1 + $0x2620] sm:$0xff]
  %v1273 = vld [vmem:[%s1 + $0x2628] sm:$0xff]
  %v1274 = vld [vmem:[%s1 + $0x2630] sm:$0xff]
  %v1275 = vld [vmem:[%s1 + $0x2638] sm:$0xff]
  %v1276 = vld [vmem:[%s1 + $0x2640] sm:$0xff]
  %v1277 = vld [vmem:[%s1 + $0x2648] sm:$0xff]
  %v1278 = vld [vmem:[%s1 + $0x2650] sm:$0xff]
  %v1279 = vld [vmem:[%s1 + $0x2658] sm:$0xff]
  %v1280 = vld [vmem:[%s1 + $0x2660] sm:$0xff]
  %v1281 = vld [vmem:[%s1 + $0x2668] sm:$0xff]
  %v1282 = vld [vmem:[%s1 + $0x2670] sm:$0xff]
  %v1283 = vld [vmem:[%s1 + $0x2678] sm:$0xff]
  %v1284 = vld [vmem:[%s1 + $0x2680] sm:$0xff]
  %v1285 = vld [vmem:[%s1 + $0x2688] sm:$0xff]
  %v1286 = vld [vmem:[%s1 + $0x2690] sm:$0xff]
  %v1287 = vld [vmem:[%s1 + $0x2698] sm:$0xff]
  %v1288 = vld [vmem:[%s1 + $0x26a0] sm:$0xff]
  %v1289 = vld [vmem:[%s1 + $0x26a8] sm:$0xff]
  %v1290 = vld [vmem:[%s1 + $0x26b0] sm:$0xff]
  %v1291 = vld [vmem:[%s1 + $0x26b8] sm:$0xff]
  %v1292 = vld [vmem:[%s1 + $0x26c0] sm:$0xff]
  %v1293 = vld [vmem:[%s1 + $0x26c8] sm:$0xff]
  %v1294 = vld [vmem:[%s1 + $0x26d0] sm:$0xff]
  %v1295 = vld [vmem:[%s1 + $0x26d8] sm:$0xff]
  %v1296 = vld [vmem:[%s1 + $0x26e0] sm:$0xff]
  %v1297 = vld [vmem:[%s1 + $0x26e8] sm:$0xff]
  %v1298 = vld [vmem:[%s1 + $0x26f0] sm:$0xff]
  %v1299 = vld [vmem:[%s1 + $0x26f8] sm:$0xff]
  %v1300 = vld [vmem:[%s1 + $0x2700] sm:$0xff]
  %v1301 = vld [vmem:[%s1 + $0x2708] sm:$0xff]
  %v1302 = vld [vmem:[%s1 + $0x2710] sm:$0xff]
  %v1303 = vld [vmem:[%s1 + $0x2718] sm:$0xff]
  %v1304 = vld [vmem:[%s1 + $0x2720] sm:$0xff]
  %v1305 = vld [vmem:[%s1 + $0x2728] sm:$0xff]
  %v1306 = vld [vmem:[%s1 + $0x2730] sm:$0xff]
  %v1307 = vld [vmem:[%s1 + $0x2738] sm:$0xff]
  %v1308 = vld [vmem:[%s1 + $0x2740] sm:$0xff]
  %v1309 = vld [vmem:[%s1 + $0x2748] sm:$0xff]
  %v1310 = vld [vmem:[%s1 + $0x2750] sm:$0xff]
  %v1311 = vld [vmem:[%s1 + $0x2758] sm:$0xff]
  %v1312 = vld [vmem:[%s1 + $0x2760] sm:$0xff]
  %v1313 = vld [vmem:[%s1 + $0x2768] sm:$0xff]
  %v1314 = vld [vmem:[%s1 + $0x2770] sm:$0xff]
  %v1315 = vld [vmem:[%s1 + $0x2778] sm:$0xff]
  %v1316 = vld [vmem:[%s1 + $0x2780] sm:$0xff]
  %v1317 = vld [vmem:[%s1 + $0x2788] sm:$0xff]
  %v1318 = vld [vmem:[%s1 + $0x2790] sm:$0xff]
  %v1319 = vld [vmem:[%s1 + $0x2798] sm:$0xff]
  %v1320 = vld [vmem:[%s1 + $0x27a0] sm:$0xff]
  %v1321 = vld [vmem:[%s1 + $0x27a8] sm:$0xff]
  %v1322 = vld [vmem:[%s1 + $0x27b0] sm:$0xff]
  %v1323 = vld [vmem:[%s1 + $0x27b8] sm:$0xff]
  %v1324 = vld [vmem:[%s1 + $0x27c0] sm:$0xff]
  %v1325 = vld [vmem:[%s1 + $0x27c8] sm:$0xff]
  %v1326 = vld [vmem:[%s1 + $0x27d0] sm:$0xff]
  %v1327 = vld [vmem:[%s1 + $0x27d8] sm:$0xff]
  %v1328 = vld [vmem:[%s1 + $0x27e0] sm:$0xff]
  %v1329 = vld [vmem:[%s1 + $0x27e8] sm:$0xff]
  %v1330 = vld [vmem:[%s1 + $0x27f0] sm:$0xff]
  %v1331 = vld [vmem:[%s1 + $0x27f8] sm:$0xff]
  %v1332 = vld [vmem:[%s1 + $0x2800] sm:$0xff]
  %v1333 = vld [vmem:[%s1 + $0x2808] sm:$0xff]
  %v1334 = vld [vmem:[%s1 + $0x2810] sm:$0xff]
  %v1335 = vld [vmem:[%s1 + $0x2818] sm:$0xff]
  %v1336 = vld [vmem:[%s1 + $0x2820] sm:$0xff]
  %v1337 = vld [vmem:[%s1 + $0x2828] sm:$0xff]
  %v1338 = vld [vmem:[%s1 + $0x2830] sm:$0xff]
  %v1339 = vld [vmem:[%s1 + $0x2838] sm:$0xff]
  %v1340 = vld [vmem:[%s1 + $0x2840] sm:$0xff]
  %v1341 = vld [vmem:[%s1 + $0x2848] sm:$0xff]
  %v1342 = vld [vmem:[%s1 + $0x2850] sm:$0xff]
  %v1343 = vld [vmem:[%s1 + $0x2858] sm:$0xff]
  %v1344 = vld [vmem:[%s1 + $0x2860] sm:$0xff]
  %v1345 = vld [vmem:[%s1 + $0x2868] sm:$0xff]
  %v1346 = vld [vmem:[%s1 + $0x2870] sm:$0xff]
  %v1347 = vld [vmem:[%s1 + $0x2878] sm:$0xff]
  %v1348 = vld [vmem:[%s1 + $0x2880] sm:$0xff]
  %v1349 = vld [vmem:[%s1 + $0x2888] sm:$0xff]
  %v1350 = vld [vmem:[%s1 + $0x2890] sm:$0xff]
  %v1351 = vld [vmem:[%s1 + $0x2898] sm:$0xff]
  %v1352 = vld [vmem:[%s1 + $0x28a0] sm:$0xff]
  %v1353 = vld [vmem:[%s1 + $0x28a8] sm:$0xff]
  %v1354 = vld [vmem:[%s1 + $0x28b0] sm:$0xff]
  %v1355 = vld [vmem:[%s1 + $0x28b8] sm:$0xff]
  %v1356 = vld [vmem:[%s1 + $0x28c0] sm:$0xff]
  %v1357 = vld [vmem:[%s1 + $0x28c8] sm:$0xff]
  %v1358 = vld [vmem:[%s1 + $0x28d0] sm:$0xff]
  %v1359 = vld [vmem:[%s1 + $0x28d8] sm:$0xff]
  %v1360 = vld [vmem:[%s1 + $0x28e0] sm:$0xff]
  %v1361 = vld [vmem:[%s1 + $0x28e8] sm:$0xff]
  %v1362 = vld [vmem:[%s1 + $0x28f0] sm:$0xff]
  %v1363 = vld [vmem:[%s1 + $0x28f8] sm:$0xff]
  %v1364 = vld [vmem:[%s1 + $0x2900] sm:$0xff]
  %v1365 = vld [vmem:[%s1 + $0x2908] sm:$0xff]
  %v1366 = vld [vmem:[%s1 + $0x2910] sm:$0xff]
  %v1367 = vld [vmem:[%s1 + $0x2918] sm:$0xff]
  %v1368 = vld [vmem:[%s1 + $0x2920] sm:$0xff]
  %v1369 = vld [vmem:[%s1 + $0x2928] sm:$0xff]
  %v1370 = vld [vmem:[%s1 + $0x2930] sm:$0xff]
  %v1371 = vld [vmem:[%s1 + $0x2938] sm:$0xff]
  %v1372 = vld [vmem:[%s1 + $0x2940] sm:$0xff]
  %v1373 = vld [vmem:[%s1 + $0x2948] sm:$0xff]
  %v1374 = vld [vmem:[%s1 + $0x2950] sm:$0xff]
  %v1375 = vld [vmem:[%s1 + $0x2958] sm:$0xff]
  %v1376 = vld [vmem:[%s1 + $0x2960] sm:$0xff]
  %v1377 = vld [vmem:[%s1 + $0x2968] sm:$0xff]
  %v1378 = vld [vmem:[%s1 + $0x2970] sm:$0xff]
  %v1379 = vld [vmem:[%s1 + $0x2978] sm:$0xff]
  %v1380 = vld [vmem:[%s1 + $0x2980] sm:$0xff]
  %v1381 = vld [vmem:[%s1 + $0x2988] sm:$0xff]
  %v1382 = vld [vmem:[%s1 + $0x2990] sm:$0xff]
  %v1383 = vld [vmem:[%s1 + $0x2998] sm:$0xff]
  %v1384 = vld [vmem:[%s1 + $0x29a0] sm:$0xff]
  %v1385 = vld [vmem:[%s1 + $0x29a8] sm:$0xff]
  %v1386 = vld [vmem:[%s1 + $0x29b0] sm:$0xff]
  %v1387 = vld [vmem:[%s1 + $0x29b8] sm:$0xff]
  %v1388 = vld [vmem:[%s1 + $0x29c0] sm:$0xff]
  %v1389 = vld [vmem:[%s1 + $0x29c8] sm:$0xff]
  %v1390 = vld [vmem:[%s1 + $0x29d0] sm:$0xff]
  %v1391 = vld [vmem:[%s1 + $0x29d8] sm:$0xff]
  %v1392 = vld [vmem:[%s1 + $0x29e0] sm:$0xff]
  %v1393 = vld [vmem:[%s1 + $0x29e8] sm:$0xff]
  %v1394 = vld [vmem:[%s1 + $0x29f0] sm:$0xff]
  %v1395 = vld [vmem:[%s1 + $0x29f8] sm:$0xff]
  %v1396 = vld [vmem:[%s1 + $0x2a00] sm:$0xff]
  %v1397 = vld [vmem:[%s1 + $0x2a08] sm:$0xff]
  %v1398 = vld [vmem:[%s1 + $0x2a10] sm:$0xff]
  %v1399 = vld [vmem:[%s1 + $0x2a18] sm:$0xff]
  %v1400 = vld [vmem:[%s1 + $0x2a20] sm:$0xff]
  %v1401 = vld [vmem:[%s1 + $0x2a28] sm:$0xff]
  %v1402 = vld [vmem:[%s1 + $0x2a30] sm:$0xff]
  %v1403 = vld [vmem:[%s1 + $0x2a38] sm:$0xff]
  %v1404 = vld [vmem:[%s1 + $0x2a40] sm:$0xff]
  %v1405 = vld [vmem:[%s1 + $0x2a48] sm:$0xff]
  %v1406 = vld [vmem:[%s1 + $0x2a50] sm:$0xff]
  %v1407 = vld [vmem:[%s1 + $0x2a58] sm:$0xff]
  %v1408 = vld [vmem:[%s1 + $0x2a60] sm:$0xff]
  %v1409 = vld [vmem:[%s1 + $0x2a68] sm:$0xff]
  %v1410 = vld [vmem:[%s1 + $0x2a70] sm:$0xff]
  %v1411 = vld [vmem:[%s1 + $0x2a78] sm:$0xff]
  %v1412 = vld [vmem:[%s1 + $0x2a80] sm:$0xff]
  %v1413 = vld [vmem:[%s1 + $0x2a88] sm:$0xff]
  %v1414 = vld [vmem:[%s1 + $0x2a90] sm:$0xff]
  %v1415 = vld [vmem:[%s1 + $0x2a98] sm:$0xff]
  %v1416 = vld [vmem:[%s1 + $0x2aa0] sm:$0xff]
  %v1417 = vld [vmem:[%s1 + $0x2aa8] sm:$0xff]
  %v1418 = vld [vmem:[%s1 + $0x2ab0] sm:$0xff]
  %v1419 = vld [vmem:[%s1 + $0x2ab8] sm:$0xff]
  %v1420 = vld [vmem:[%s1 + $0x2ac0] sm:$0xff]
  %v1421 = vld [vmem:[%s1 + $0x2ac8] sm:$0xff]
  %v1422 = vld [vmem:[%s1 + $0x2ad0] sm:$0xff]
  %v1423 = vld [vmem:[%s1 + $0x2ad8] sm:$0xff]
  %v1424 = vld [vmem:[%s1 + $0x2ae0] sm:$0xff]
  %v1425 = vld [vmem:[%s1 + $0x2ae8] sm:$0xff]
  %v1426 = vld [vmem:[%s1 + $0x2af0] sm:$0xff]
  %v1427 = vld [vmem:[%s1 + $0x2af8] sm:$0xff]
  %v1428 = vld [vmem:[%s1 + $0x2b00] sm:$0xff]
  %v1429 = vld [vmem:[%s1 + $0x2b08] sm:$0xff]
  %v1430 = vld [vmem:[%s1 + $0x2b10] sm:$0xff]
  %v1431 = vld [vmem:[%s1 + $0x2b18] sm:$0xff]
  %v1432 = vld [vmem:[%s1 + $0x2b20] sm:$0xff]
  %v1433 = vld [vmem:[%s1 + $0x2b28] sm:$0xff]
  %v1434 = vld [vmem:[%s1 + $0x2b30] sm:$0xff]
  %v1435 = vld [vmem:[%s1 + $0x2b38] sm:$0xff]
  %v1436 = vld [vmem:[%s1 + $0x2b40] sm:$0xff]
  %v1437 = vld [vmem:[%s1 + $0x2b48] sm:$0xff]
  %v1438 = vld [vmem:[%s1 + $0x2b50] sm:$0xff]
  %v1439 = vld [vmem:[%s1 + $0x2b58] sm:$0xff]
  %v1440 = vld [vmem:[%s1 + $0x2b60] sm:$0xff]
  %v1441 = vld [vmem:[%s1 + $0x2b68] sm:$0xff]
  %v1442 = vld [vmem:[%s1 + $0x2b70] sm:$0xff]
  %v1443 = vld [vmem:[%s1 + $0x2b78] sm:$0xff]
  %v1444 = vld [vmem:[%s1 + $0x2b80] sm:$0xff]
  %v1445 = vld [vmem:[%s1 + $0x2b88] sm:$0xff]
  %v1446 = vld [vmem:[%s1 + $0x2b90] sm:$0xff]
  %v1447 = vld [vmem:[%s1 + $0x2b98] sm:$0xff]
  %v1448 = vld [vmem:[%s1 + $0x2ba0] sm:$0xff]
  %v1449 = vld [vmem:[%s1 + $0x2ba8] sm:$0xff]
  %v1450 = vld [vmem:[%s1 + $0x2bb0] sm:$0xff]
  %v1451 = vld [vmem:[%s1 + $0x2bb8] sm:$0xff]
  %v1452 = vld [vmem:[%s1 + $0x2bc0] sm:$0xff]
  %v1453 = vld [vmem:[%s1 + $0x2bc8] sm:$0xff]
  %v1454 = vld [vmem:[%s1 + $0x2bd0] sm:$0xff]
  %v1455 = vld [vmem:[%s1 + $0x2bd8] sm:$0xff]
  %v1456 = vld [vmem:[%s1 + $0x2be0] sm:$0xff]
  %v1457 = vld [vmem:[%s1 + $0x2be8] sm:$0xff]
  %v1458 = vld [vmem:[%s1 + $0x2bf0] sm:$0xff]
  %v1459 = vld [vmem:[%s1 + $0x2bf8] sm:$0xff]
  %v1460 = vld [vmem:[%s1 + $0x2c00] sm:$0xff]
  %v1461 = vld [vmem:[%s1 + $0x2c08] sm:$0xff]
  %v1462 = vld [vmem:[%s1 + $0x2c10] sm:$0xff]
  %v1463 = vld [vmem:[%s1 + $0x2c18] sm:$0xff]
  %v1464 = vld [vmem:[%s1 + $0x2c20] sm:$0xff]
  %v1465 = vld [vmem:[%s1 + $0x2c28] sm:$0xff]
  %v1466 = vld [vmem:[%s1 + $0x2c30] sm:$0xff]
  %v1467 = vld [vmem:[%s1 + $0x2c38] sm:$0xff]
  %v1468 = vld [vmem:[%s1 + $0x2c40] sm:$0xff]
  %v1469 = vld [vmem:[%s1 + $0x2c48] sm:$0xff]
  %v1470 = vld [vmem:[%s1 + $0x2c50] sm:$0xff]
  %v1471 = vld [vmem:[%s1 + $0x2c58] sm:$0xff]
  %v1472 = vld [vmem:[%s1 + $0x2c60] sm:$0xff]
  %v1473 = vld [vmem:[%s1 + $0x2c68] sm:$0xff]
  %v1474 = vld [vmem:[%s1 + $0x2c70] sm:$0xff]
  %v1475 = vld [vmem:[%s1 + $0x2c78] sm:$0xff]
  %v1476 = vld [vmem:[%s1 + $0x2c80] sm:$0xff]
  %v1477 = vld [vmem:[%s1 + $0x2c88] sm:$0xff]
  %v1478 = vld [vmem:[%s1 + $0x2c90] sm:$0xff]
  %v1479 = vld [vmem:[%s1 + $0x2c98] sm:$0xff]
  %v1480 = vld [vmem:[%s1 + $0x2ca0] sm:$0xff]
  %v1481 = vld [vmem:[%s1 + $0x2ca8] sm:$0xff]
  %v1482 = vld [vmem:[%s1 + $0x2cb0] sm:$0xff]
  %v1483 = vld [vmem:[%s1 + $0x2cb8] sm:$0xff]
  %v1484 = vld [vmem:[%s1 + $0x2cc0] sm:$0xff]
  %v1485 = vld [vmem:[%s1 + $0x2cc8] sm:$0xff]
  %v1486 = vld [vmem:[%s1 + $0x2cd0] sm:$0xff]
  %v1487 = vld [vmem:[%s1 + $0x2cd8] sm:$0xff]
  %v1488 = vld [vmem:[%s1 + $0x2ce0] sm:$0xff]
  %v1489 = vld [vmem:[%s1 + $0x2ce8] sm:$0xff]
  %v1490 = vld [vmem:[%s1 + $0x2cf0] sm:$0xff]
  %v1491 = vld [vmem:[%s1 + $0x2cf8] sm:$0xff]
  %v1492 = vld [vmem:[%s1 + $0x2d00] sm:$0xff]
  %v1493 = vld [vmem:[%s1 + $0x2d08] sm:$0xff]
  %v1494 = vld [vmem:[%s1 + $0x2d10] sm:$0xff]
  %v1495 = vld [vmem:[%s1 + $0x2d18] sm:$0xff]
  %v1496 = vld [vmem:[%s1 + $0x2d20] sm:$0xff]
  %v1497 = vld [vmem:[%s1 + $0x2d28] sm:$0xff]
  %v1498 = vld [vmem:[%s1 + $0x2d30] sm:$0xff]
  %v1499 = vld [vmem:[%s1 + $0x2d38] sm:$0xff]
  %v1500 = vld [vmem:[%s1 + $0x2d40] sm:$0xff]
  %v1501 = vld [vmem:[%s1 + $0x2d48] sm:$0xff]
  %v1502 = vld [vmem:[%s1 + $0x2d50] sm:$0xff]
  %v1503 = vld [vmem:[%s1 + $0x2d58] sm:$0xff]
  %v1504 = vld [vmem:[%s1 + $0x2d60] sm:$0xff]
  %v1505 = vld [vmem:[%s1 + $0x2d68] sm:$0xff]
  %v1506 = vld [vmem:[%s1 + $0x2d70] sm:$0xff]
  %v1507 = vld [vmem:[%s1 + $0x2d78] sm:$0xff]
  %v1508 = vld [vmem:[%s2] sm:$0x7f]
  %v1510 = vlaneseq
  %v1511 = vshrl.u32 %v1510, 7
  %v1512 = vsub.s32 0, %v1511
  %v1513 = vrot.slane %v1508, %v1512
  %v1514 = vlaneseq
  %v1515 = vshrl.u32 %v1514, 7
  %v1516 = vsub.s32 1, %v1515
  %v1517 = vrot.slane %v1508, %v1516
  %v1518 = vlaneseq
  %v1519 = vshrl.u32 %v1518, 7
  %v1520 = vsub.s32 2, %v1519
  %v1521 = vrot.slane %v1508, %v1520
  %v1522 = vlaneseq
  %v1523 = vshrl.u32 %v1522, 7
  %v1524 = vsub.s32 3, %v1523
  %v1525 = vrot.slane %v1508, %v1524
  %v1526 = vlaneseq
  %v1527 = vshrl.u32 %v1526, 7
  %v1528 = vsub.s32 4, %v1527
  %v1529 = vrot.slane %v1508, %v1528
  %v1530 = vlaneseq
  %v1531 = vshrl.u32 %v1530, 7
  %v1532 = vsub.s32 5, %v1531
  %v1533 = vrot.slane %v1508, %v1532
  %v1534 = vlaneseq
  %v1535 = vshrl.u32 %v1534, 7
  %v1536 = vsub.s32 6, %v1535
  %v1537 = vrot.slane %v1508, %v1536
  %1545 = vmatprep.subr.mxu0 %v53
  %1546 = vmatpush1.msra.mxu0 %v52
  %1547 = vmatprep.subr.mxu0 %v60
  %1548 = vmatpush1.msra.mxu0 %v59
  %1549 = vmatprep.subr.mxu0 %v67
  %1550 = vmatpush1.msra.mxu0 %v66
  %1551 = vmatprep.subr.mxu0 %v74
  %1552 = vmatpush1.msra.mxu0 %v73
  %1553 = vmatprep.subr.mxu0 %v81
  %1554 = vmatpush1.msra.mxu0 %v80
  %1555 = vmatprep.subr.mxu0 %v88
  %1556 = vmatpush1.msra.mxu0 %v87
  %1557 = vmatprep.subr.mxu0 %v95
  %1558 = vmatpush1.msra.mxu0 %v94
  %1559 = vmatprep.subr.mxu0 %v102
  %1560 = vmatpush1.msra.mxu0 %v101
  %1561 = vmatprep.subr.mxu0 %v109
  %1562 = vmatpush1.msra.mxu0 %v108
  %1563 = vmatprep.subr.mxu0 %v116
  %1564 = vmatpush1.msra.mxu0 %v115
  %1565 = vmatprep.subr.mxu0 %v123
  %1566 = vmatpush1.msra.mxu0 %v122
  %1567 = vmatprep.subr.mxu0 %v130
  %1568 = vmatpush1.msra.mxu0 %v129
  %1569 = vmatprep.subr.mxu0 %v137
  %1570 = vmatpush1.msra.mxu0 %v136
  %1571 = vmatprep.subr.mxu0 %v144
  %1572 = vmatpush1.msra.mxu0 %v143
  %1573 = vmatprep.subr.mxu0 %v151
  %1574 = vmatpush1.msra.mxu0 %v150
  %1575 = vmatprep.subr.mxu0 %v158
  %1576 = vmatpush1.msra.mxu0 %v157
  %1577 = vmatprep.subr.mxu0 %v165
  %1578 = vmatpush1.msra.mxu0 %v164
  %1579 = vmatprep.subr.mxu0 %v172
  %1580 = vmatpush1.msra.mxu0 %v171
  %1581 = vmatprep.subr.mxu0 %v179
  %1582 = vmatpush1.msra.mxu0 %v178
  %1583 = vmatprep.subr.mxu0 %v186
  %1584 = vmatpush1.msra.mxu0 %v185
  %1585 = vmatprep.subr.mxu0 %v193
  %1586 = vmatpush1.msra.mxu0 %v192
  %1587 = vmatprep.subr.mxu0 %v200
  %1588 = vmatpush1.msra.mxu0 %v199
  %1589 = vmatprep.subr.mxu0 %v207
  %1590 = vmatpush1.msra.mxu0 %v206
  %1591 = vmatprep.subr.mxu0 %v214
  %1592 = vmatpush1.msra.mxu0 %v213
  %1593 = vmatprep.subr.mxu0 %v221
  %1594 = vmatpush1.msra.mxu0 %v220
  %1595 = vmatprep.subr.mxu0 %v228
  %1596 = vmatpush1.msra.mxu0 %v227
  %1597 = vmatprep.subr.mxu0 %v235
  %1598 = vmatpush1.msra.mxu0 %v234
  %1599 = vmatprep.subr.mxu0 %v242
  %1600 = vmatpush1.msra.mxu0 %v241
  %1601 = vmatprep.subr.mxu0 %v249
  %1602 = vmatpush1.msra.mxu0 %v248
  %1603 = vmatprep.subr.mxu0 %v256
  %1604 = vmatpush1.msra.mxu0 %v255
  %1605 = vmatprep.subr.mxu0 %v263
  %1606 = vmatpush1.msra.mxu0 %v262
  %1607 = vmatprep.subr.mxu0 %v270
  %1608 = vmatpush1.msra.mxu0 %v269
  %1609 = vmatprep.mubr.f32.mxu0 %v27
  %1610 = vmatmul.mubr.f32.gmra.mrb[0].mxu0 %v26
  %v1611 = vpop.f32.mrb[0].mxu0
  %v1612 = vadd.f32 %v1513, %v1611
  %v1613 = vpop.f32.mrb[0].mxu0
  %v1614 = vadd.f32 %v1517, %v1613
  %1615 = vmatprep.mubr.f32.mxu0 %v40
  %1616 = vmatmul.mubr.f32.gmra.mrb[0].mxu0 %v39
  %v1617 = vpop.f32.mrb[0].mxu0
  %v1618 = vadd.f32 %v1513, %v1617
  %v1619 = vpop.f32.mrb[0].mxu0
  %v1620 = vadd.f32 %v1517, %v1619
  %1621 = vdwg.mxu0
  %1622 = vmatprep.subr.mxu0 %v277
  %1623 = vmatpush1.msra.mxu0 %v276
  %1624 = vmatprep.subr.mxu0 %v284
  %1625 = vmatpush1.msra.mxu0 %v283
  %1626 = vmatprep.subr.mxu0 %v291
  %1627 = vmatpush1.msra.mxu0 %v290
  %1628 = vmatprep.subr.mxu0 %v298
  %1629 = vmatpush1.msra.mxu0 %v297
  %1630 = vmatprep.subr.mxu0 %v305
  %1631 = vmatpush1.msra.mxu0 %v304
  %1632 = vmatprep.subr.mxu0 %v312
  %1633 = vmatpush1.msra.mxu0 %v311
  %1634 = vmatprep.subr.mxu0 %v319
  %1635 = vmatpush1.msra.mxu0 %v318
  %1636 = vmatprep.subr.mxu0 %v326
  %1637 = vmatpush1.msra.mxu0 %v325
  %1638 = vmatprep.subr.mxu0 %v333
  %1639 = vmatpush1.msra.mxu0 %v332
  %1640 = vmatprep.subr.mxu0 %v340
  %1641 = vmatpush1.msra.mxu0 %v339
  %1642 = vmatprep.subr.mxu0 %v347
  %1643 = vmatpush1.msra.mxu0 %v346
  %1644 = vmatprep.subr.mxu0 %v354
  %1645 = vmatpush1.msra.mxu0 %v353
  %1646 = vmatprep.subr.mxu0 %v361
  %1647 = vmatpush1.msra.mxu0 %v360
  %1648 = vmatprep.subr.mxu0 %v368
  %1649 = vmatpush1.msra.mxu0 %v367
  %1650 = vmatprep.subr.mxu0 %v375
  %1651 = vmatpush1.msra.mxu0 %v374
  %1652 = vmatprep.subr.mxu0 %v382
  %1653 = vmatpush1.msra.mxu0 %v381
  %1654 = vmatprep.subr.mxu0 %v389
  %1655 = vmatpush1.msra.mxu0 %v388
  %1656 = vmatprep.subr.mxu0 %v396
  %1657 = vmatpush1.msra.mxu0 %v395
  %1658 = vmatprep.subr.mxu0 %v403
  %1659 = vmatpush1.msra.mxu0 %v402
  %1660 = vmatprep.subr.mxu0 %v410
  %1661 = vmatpush1.msra.mxu0 %v409
  %1662 = vmatprep.subr.mxu0 %v417
  %1663 = vmatpush1.msra.mxu0 %v416
  %1664 = vmatprep.subr.mxu0 %v424
  %1665 = vmatpush1.msra.mxu0 %v423
  %1666 = vmatprep.subr.mxu0 %v431
  %1667 = vmatpush1.msra.mxu0 %v430
  %1668 = vmatprep.subr.mxu0 %v438
  %1669 = vmatpush1.msra.mxu0 %v437
  %1670 = vmatprep.subr.mxu0 %v445
  %1671 = vmatpush1.msra.mxu0 %v444
  %1672 = vmatprep.subr.mxu0 %v452
  %1673 = vmatpush1.msra.mxu0 %v451
  %1674 = vmatprep.subr.mxu0 %v459
  %1675 = vmatpush1.msra.mxu0 %v458
  %1676 = vmatprep.subr.mxu0 %v466
  %1677 = vmatpush1.msra.mxu0 %v465
  %1678 = vmatprep.subr.mxu0 %v473
  %1679 = vmatpush1.msra.mxu0 %v472
  %1680 = vmatprep.subr.mxu0 %v480
  %1681 = vmatpush1.msra.mxu0 %v479
  %1682 = vmatprep.subr.mxu0 %v487
  %1683 = vmatpush1.msra.mxu0 %v486
  %1684 = vmatprep.subr.mxu0 %v494
  %1685 = vmatpush1.msra.mxu0 %v493
  %1686 = vmatprep.mubr.f32.mxu0 %v29
  %1687 = vmatmul.mubr.f32.gmra.mrb[0].mxu0 %v28
  %v1688 = vpop.f32.mrb[0].mxu0
  %v1689 = vadd.f32 %v1612, %v1688
  %v1690 = vpop.f32.mrb[0].mxu0
  %v1691 = vadd.f32 %v1614, %v1690
  %1692 = vmatprep.mubr.f32.mxu0 %v42
  %1693 = vmatmul.mubr.f32.gmra.mrb[0].mxu0 %v41
  %v1694 = vpop.f32.mrb[0].mxu0
  %v1695 = vadd.f32 %v1618, %v1694
  %v1696 = vpop.f32.mrb[0].mxu0
  %v1697 = vadd.f32 %v1620, %v1696
  %1698 = vdwg.mxu0
  %1699 = vmatprep.subr.mxu0 %v501
  %1700 = vmatpush1.msra.mxu0 %v500
  %1701 = vmatprep.subr.mxu0 %v508
  %1702 = vmatpush1.msra.mxu0 %v507
  %1703 = vmatprep.subr.mxu0 %v515
  %1704 = vmatpush1.msra.mxu0 %v514
  %1705 = vmatprep.subr.mxu0 %v522
  %1706 = vmatpush1.msra.mxu0 %v521
  %1707 = vmatprep.subr.mxu0 %v529
  %1708 = vmatpush1.msra.mxu0 %v528
  %1709 = vmatprep.subr.mxu0 %v536
  %1710 = vmatpush1.msra.mxu0 %v535
  %1711 = vmatprep.subr.mxu0 %v543
  %1712 = vmatpush1.msra.mxu0 %v542
  %1713 = vmatprep.subr.mxu0 %v550
  %1714 = vmatpush1.msra.mxu0 %v549
  %1715 = vmatprep.subr.mxu0 %v557
  %1716 = vmatpush1.msra.mxu0 %v556
  %1717 = vmatprep.subr.mxu0 %v564
  %1718 = vmatpush1.msra.mxu0 %v563
  %1719 = vmatprep.subr.mxu0 %v571
  %1720 = vmatpush1.msra.mxu0 %v570
  %1721 = vmatprep.subr.mxu0 %v578
  %1722 = vmatpush1.msra.mxu0 %v577
  %1723 = vmatprep.subr.mxu0 %v585
  %1724 = vmatpush1.msra.mxu0 %v584
  %1725 = vmatprep.subr.mxu0 %v592
  %1726 = vmatpush1.msra.mxu0 %v591
  %1727 = vmatprep.subr.mxu0 %v599
  %1728 = vmatpush1.msra.mxu0 %v598
  %1729 = vmatprep.subr.mxu0 %v606
  %1730 = vmatpush1.msra.mxu0 %v605
  %1731 = vmatprep.subr.mxu0 %v613
  %1732 = vmatpush1.msra.mxu0 %v612
  %1733 = vmatprep.subr.mxu0 %v620
  %1734 = vmatpush1.msra.mxu0 %v619
  %1735 = vmatprep.subr.mxu0 %v627
  %1736 = vmatpush1.msra.mxu0 %v626
  %1737 = vmatprep.subr.mxu0 %v634
  %1738 = vmatpush1.msra.mxu0 %v633
  %1739 = vmatprep.subr.mxu0 %v641
  %1740 = vmatpush1.msra.mxu0 %v640
  %1741 = vmatprep.subr.mxu0 %v648
  %1742 = vmatpush1.msra.mxu0 %v647
  %1743 = vmatprep.subr.mxu0 %v655
  %1744 = vmatpush1.msra.mxu0 %v654
  %1745 = vmatprep.subr.mxu0 %v662
  %1746 = vmatpush1.msra.mxu0 %v661
  %1747 = vmatprep.subr.mxu0 %v669
  %1748 = vmatpush1.msra.mxu0 %v668
  %1749 = vmatprep.subr.mxu0 %v676
  %1750 = vmatpush1.msra.mxu0 %v675
  %1751 = vmatprep.subr.mxu0 %v683
  %1752 = vmatpush1.msra.mxu0 %v682
  %1753 = vmatprep.subr.mxu0 %v690
  %1754 = vmatpush1.msra.mxu0 %v689
  %1755 = vmatprep.subr.mxu0 %v697
  %1756 = vmatpush1.msra.mxu0 %v696
  %1757 = vmatprep.subr.mxu0 %v704
  %1758 = vmatpush1.msra.mxu0 %v703
  %1759 = vmatprep.subr.mxu0 %v711
  %1760 = vmatpush1.msra.mxu0 %v710
  %1761 = vmatprep.subr.mxu0 %v718
  %1762 = vmatpush1.msra.mxu0 %v717
  %1763 = vmatprep.mubr.f32.mxu0 %v31
  %1764 = vmatmul.mubr.f32.gmra.mrb[0].mxu0 %v30
  %v1765 = vpop.f32.mrb[0].mxu0
  %v1766 = vadd.f32 %v1689, %v1765
  %v1767 = vpop.f32.mrb[0].mxu0
  %v1768 = vadd.f32 %v1691, %v1767
  %1769 = vmatprep.mubr.f32.mxu0 %v44
  %1770 = vmatmul.mubr.f32.gmra.mrb[0].mxu0 %v43
  %v1771 = vpop.f32.mrb[0].mxu0
  %v1772 = vadd.f32 %v1695, %v1771
  %v1773 = vpop.f32.mrb[0].mxu0
  %v1774 = vadd.f32 %v1697, %v1773
  %1775 = vdwg.mxu0
  %1776 = vmatprep.subr.mxu0 %v725
  %1777 = vmatpush1.msra.mxu0 %v724
  %1778 = vmatprep.subr.mxu0 %v732
  %1779 = vmatpush1.msra.mxu0 %v731
  %1780 = vmatprep.subr.mxu0 %v739
  %1781 = vmatpush1.msra.mxu0 %v738
  %1782 = vmatprep.subr.mxu0 %v746
  %1783 = vmatpush1.msra.mxu0 %v745
  %1784 = vmatprep.subr.mxu0 %v753
  %1785 = vmatpush1.msra.mxu0 %v752
  %1786 = vmatprep.subr.mxu0 %v760
  %1787 = vmatpush1.msra.mxu0 %v759
  %1788 = vmatprep.subr.mxu0 %v767
  %1789 = vmatpush1.msra.mxu0 %v766
  %1790 = vmatprep.subr.mxu0 %v774
  %1791 = vmatpush1.msra.mxu0 %v773
  %1792 = vmatprep.subr.mxu0 %v781
  %1793 = vmatpush1.msra.mxu0 %v780
  %1794 = vmatprep.subr.mxu0 %v788
  %1795 = vmatpush1.msra.mxu0 %v787
  %1796 = vmatprep.subr.mxu0 %v795
  %1797 = vmatpush1.msra.mxu0 %v794
  %1798 = vmatprep.subr.mxu0 %v802
  %1799 = vmatpush1.msra.mxu0 %v801
  %1800 = vmatprep.subr.mxu0 %v809
  %1801 = vmatpush1.msra.mxu0 %v808
  %1802 = vmatprep.subr.mxu0 %v816
  %1803 = vmatpush1.msra.mxu0 %v815
  %1804 = vmatprep.subr.mxu0 %v823
  %1805 = vmatpush1.msra.mxu0 %v822
  %1806 = vmatprep.subr.mxu0 %v830
  %1807 = vmatpush1.msra.mxu0 %v829
  %1808 = vmatprep.subr.mxu0 %v837
  %1809 = vmatpush1.msra.mxu0 %v836
  %1810 = vmatprep.subr.mxu0 %v844
  %1811 = vmatpush1.msra.mxu0 %v843
  %1812 = vmatprep.subr.mxu0 %v851
  %1813 = vmatpush1.msra.mxu0 %v850
  %1814 = vmatprep.subr.mxu0 %v858
  %1815 = vmatpush1.msra.mxu0 %v857
  %1816 = vmatprep.subr.mxu0 %v865
  %1817 = vmatpush1.msra.mxu0 %v864
  %1818 = vmatprep.subr.mxu0 %v872
  %1819 = vmatpush1.msra.mxu0 %v871
  %1820 = vmatprep.subr.mxu0 %v879
  %1821 = vmatpush1.msra.mxu0 %v878
  %1822 = vmatprep.subr.mxu0 %v886
  %1823 = vmatpush1.msra.mxu0 %v885
  %1824 = vmatprep.subr.mxu0 %v893
  %1825 = vmatpush1.msra.mxu0 %v892
  %1826 = vmatprep.subr.mxu0 %v900
  %1827 = vmatpush1.msra.mxu0 %v899
  %1828 = vmatprep.subr.mxu0 %v907
  %1829 = vmatpush1.msra.mxu0 %v906
  %1830 = vmatprep.subr.mxu0 %v914
  %1831 = vmatpush1.msra.mxu0 %v913
  %1832 = vmatprep.subr.mxu0 %v921
  %1833 = vmatpush1.msra.mxu0 %v920
  %1834 = vmatprep.subr.mxu0 %v928
  %1835 = vmatpush1.msra.mxu0 %v927
  %1836 = vmatprep.subr.mxu0 %v935
  %1837 = vmatpush1.msra.mxu0 %v934
  %1838 = vmatprep.subr.mxu0 %v942
  %1839 = vmatpush1.msra.mxu0 %v941
  %1840 = vmatprep.mubr.f32.mxu0 %v33
  %1841 = vmatmul.mubr.f32.gmra.mrb[0].mxu0 %v32
  %v1842 = vpop.f32.mrb[0].mxu0
  %v1843 = vadd.f32 %v1766, %v1842
  %v1844 = vpop.f32.mrb[0].mxu0
  %v1845 = vadd.f32 %v1768, %v1844
  %1846 = vmatprep.mubr.f32.mxu0 %v46
  %1847 = vmatmul.mubr.f32.gmra.mrb[0].mxu0 %v45
  %v1848 = vpop.f32.mrb[0].mxu0
  %v1849 = vadd.f32 %v1772, %v1848
  %v1850 = vpop.f32.mrb[0].mxu0
  %v1851 = vadd.f32 %v1774, %v1850
  %1852 = vdwg.mxu0
  %1853 = vmatprep.subr.mxu0 %v949
  %1854 = vmatpush1.msra.mxu0 %v948
  %1855 = vmatprep.subr.mxu0 %v956
  %1856 = vmatpush1.msra.mxu0 %v955
  %1857 = vmatprep.subr.mxu0 %v963
  %1858 = vmatpush1.msra.mxu0 %v962
  %1859 = vmatprep.subr.mxu0 %v970
  %1860 = vmatpush1.msra.mxu0 %v969
  %1861 = vmatprep.subr.mxu0 %v977
  %1862 = vmatpush1.msra.mxu0 %v976
  %1863 = vmatprep.subr.mxu0 %v984
  %1864 = vmatpush1.msra.mxu0 %v983
  %1865 = vmatprep.subr.mxu0 %v991
  %1866 = vmatpush1.msra.mxu0 %v990
  %1867 = vmatprep.subr.mxu0 %v998
  %1868 = vmatpush1.msra.mxu0 %v997
  %1869 = vmatprep.subr.mxu0 %v1005
  %1870 = vmatpush1.msra.mxu0 %v1004
  %1871 = vmatprep.subr.mxu0 %v1012
  %1872 = vmatpush1.msra.mxu0 %v1011
  %1873 = vmatprep.subr.mxu0 %v1019
  %1874 = vmatpush1.msra.mxu0 %v1018
  %1875 = vmatprep.subr.mxu0 %v1026
  %1876 = vmatpush1.msra.mxu0 %v1025
  %1877 = vmatprep.subr.mxu0 %v1033
  %1878 = vmatpush1.msra.mxu0 %v1032
  %1879 = vmatprep.subr.mxu0 %v1040
  %1880 = vmatpush1.msra.mxu0 %v1039
  %1881 = vmatprep.subr.mxu0 %v1047
  %1882 = vmatpush1.msra.mxu0 %v1046
  %1883 = vmatprep.subr.mxu0 %v1054
  %1884 = vmatpush1.msra.mxu0 %v1053
  %1885 = vmatprep.subr.mxu0 %v1061
  %1886 = vmatpush1.msra.mxu0 %v1060
  %1887 = vmatprep.subr.mxu0 %v1068
  %1888 = vmatpush1.msra.mxu0 %v1067
  %1889 = vmatprep.subr.mxu0 %v1075
  %1890 = vmatpush1.msra.mxu0 %v1074
  %1891 = vmatprep.subr.mxu0 %v1082
  %1892 = vmatpush1.msra.mxu0 %v1081
  %1893 = vmatprep.subr.mxu0 %v1089
  %1894 = vmatpush1.msra.mxu0 %v1088
  %1895 = vmatprep.subr.mxu0 %v1096
  %1896 = vmatpush1.msra.mxu0 %v1095
  %1897 = vmatprep.subr.mxu0 %v1103
  %1898 = vmatpush1.msra.mxu0 %v1102
  %1899 = vmatprep.subr.mxu0 %v1110
  %1900 = vmatpush1.msra.mxu0 %v1109
  %1901 = vmatprep.subr.mxu0 %v1117
  %1902 = vmatpush1.msra.mxu0 %v1116
  %1903 = vmatprep.subr.mxu0 %v1124
  %1904 = vmatpush1.msra.mxu0 %v1123
  %1905 = vmatprep.subr.mxu0 %v1131
  %1906 = vmatpush1.msra.mxu0 %v1130
  %1907 = vmatprep.subr.mxu0 %v1138
  %1908 = vmatpush1.msra.mxu0 %v1137
  %1909 = vmatprep.subr.mxu0 %v1145
  %1910 = vmatpush1.msra.mxu0 %v1144
  %1911 = vmatprep.subr.mxu0 %v1152
  %1912 = vmatpush1.msra.mxu0 %v1151
  %1913 = vmatprep.subr.mxu0 %v1159
  %1914 = vmatpush1.msra.mxu0 %v1158
  %1915 = vmatprep.subr.mxu0 %v1166
  %1916 = vmatpush1.msra.mxu0 %v1165
  %1917 = vmatprep.mubr.f32.mxu0 %v35
  %1918 = vmatmul.mubr.f32.gmra.mrb[0].mxu0 %v34
  %v1919 = vpop.f32.mrb[0].mxu0
  %v1920 = vadd.f32 %v1843, %v1919
  %v1921 = vpop.f32.mrb[0].mxu0
  %v1922 = vadd.f32 %v1845, %v1921
  %1923 = vmatprep.mubr.f32.mxu0 %v48
  %1924 = vmatmul.mubr.f32.gmra.mrb[0].mxu0 %v47
  %v1925 = vpop.f32.mrb[0].mxu0
  %v1926 = vadd.f32 %v1849, %v1925
  %v1927 = vpop.f32.mrb[0].mxu0
  %v1928 = vadd.f32 %v1851, %v1927
  %1929 = vdwg.mxu0
  %1930 = vmatprep.subr.mxu0 %v1173
  %1931 = vmatpush1.msra.mxu0 %v1172
  %1932 = vmatprep.subr.mxu0 %v1180
  %1933 = vmatpush1.msra.mxu0 %v1179
  %1934 = vmatprep.subr.mxu0 %v1187
  %1935 = vmatpush1.msra.mxu0 %v1186
  %1936 = vmatprep.subr.mxu0 %v1194
  %1937 = vmatpush1.msra.mxu0 %v1193
  %1938 = vmatprep.subr.mxu0 %v1201
  %1939 = vmatpush1.msra.mxu0 %v1200
  %1940 = vmatprep.subr.mxu0 %v1208
  %1941 = vmatpush1.msra.mxu0 %v1207
  %1942 = vmatprep.subr.mxu0 %v1215
  %1943 = vmatpush1.msra.mxu0 %v1214
  %1944 = vmatprep.subr.mxu0 %v1222
  %1945 = vmatpush1.msra.mxu0 %v1221
  %1946 = vmatprep.subr.mxu0 %v1229
  %1947 = vmatpush1.msra.mxu0 %v1228
  %1948 = vmatprep.subr.mxu0 %v1236
  %1949 = vmatpush1.msra.mxu0 %v1235
  %1950 = vmatprep.subr.mxu0 %v1243
  %1951 = vmatpush1.msra.mxu0 %v1242
  %1952 = vmatprep.subr.mxu0 %v1250
  %1953 = vmatpush1.msra.mxu0 %v1249
  %1954 = vmatprep.subr.mxu0 %v1257
  %1955 = vmatpush1.msra.mxu0 %v1256
  %1956 = vmatprep.subr.mxu0 %v1264
  %1957 = vmatpush1.msra.mxu0 %v1263
  %1958 = vmatprep.subr.mxu0 %v1271
  %1959 = vmatpush1.msra.mxu0 %v1270
  %1960 = vmatprep.subr.mxu0 %v1278
  %1961 = vmatpush1.msra.mxu0 %v1277
  %1962 = vmatprep.subr.mxu0 %v1285
  %1963 = vmatpush1.msra.mxu0 %v1284
  %1964 = vmatprep.subr.mxu0 %v1292
  %1965 = vmatpush1.msra.mxu0 %v1291
  %1966 = vmatprep.subr.mxu0 %v1299
  %1967 = vmatpush1.msra.mxu0 %v1298
  %1968 = vmatprep.subr.mxu0 %v1306
  %1969 = vmatpush1.msra.mxu0 %v1305
  %1970 = vmatprep.subr.mxu0 %v1313
  %1971 = vmatpush1.msra.mxu0 %v1312
  %1972 = vmatprep.subr.mxu0 %v1320
  %1973 = vmatpush1.msra.mxu0 %v1319
  %1974 = vmatprep.subr.mxu0 %v1327
  %1975 = vmatpush1.msra.mxu0 %v1326
  %1976 = vmatprep.subr.mxu0 %v1334
  %1977 = vmatpush1.msra.mxu0 %v1333
  %1978 = vmatprep.subr.mxu0 %v1341
  %1979 = vmatpush1.msra.mxu0 %v1340
  %1980 = vmatprep.subr.mxu0 %v1348
  %1981 = vmatpush1.msra.mxu0 %v1347
  %1982 = vmatprep.subr.mxu0 %v1355
  %1983 = vmatpush1.msra.mxu0 %v1354
  %1984 = vmatprep.subr.mxu0 %v1362
  %1985 = vmatpush1.msra.mxu0 %v1361
  %1986 = vmatprep.subr.mxu0 %v1369
  %1987 = vmatpush1.msra.mxu0 %v1368
  %1988 = vmatprep.subr.mxu0 %v1376
  %1989 = vmatpush1.msra.mxu0 %v1375
  %1990 = vmatprep.subr.mxu0 %v1383
  %1991 = vmatpush1.msra.mxu0 %v1382
  %1992 = vmatprep.subr.mxu0 %v1390
  %1993 = vmatpush1.msra.mxu0 %v1389
  %1994 = vmatprep.mubr.f32.mxu0 %v37
  %1995 = vmatmul.mubr.f32.gmra.mrb[0].mxu0 %v36
  %v1996 = vpop.f32.mrb[0].mxu0
  %v1997 = vadd.f32 %v1920, %v1996
  %v1998 = vpop.f32.mrb[0].mxu0
  %v1999 = vadd.f32 %v1922, %v1998
  %2000 = vmatprep.mubr.f32.mxu0 %v50
  %2001 = vmatmul.mubr.f32.gmra.mrb[0].mxu0 %v49
  %v2002 = vpop.f32.mrb[0].mxu0
  %v2003 = vadd.f32 %v1926, %v2002
  %v2004 = vpop.f32.mrb[0].mxu0
  %v2005 = vadd.f32 %v1928, %v2004
  %2006 = vdwg.mxu0
  %2007 = vmatprep.subr.mxu0 %v1397
  %2008 = vmatpush1.msra.mxu0 %v1396
  %2009 = vmatprep.subr.mxu0 %v1404
  %2010 = vmatpush1.msra.mxu0 %v1403
  %2011 = vmatprep.subr.mxu0 %v1411
  %2012 = vmatpush1.msra.mxu0 %v1410
  %2013 = vmatprep.subr.mxu0 %v1418
  %2014 = vmatpush1.msra.mxu0 %v1417
  %2015 = vmatprep.subr.mxu0 %v1425
  %2016 = vmatpush1.msra.mxu0 %v1424
  %2017 = vmatprep.subr.mxu0 %v1432
  %2018 = vmatpush1.msra.mxu0 %v1431
  %2019 = vmatprep.subr.mxu0 %v1439
  %2020 = vmatpush1.msra.mxu0 %v1438
  %2021 = vmatprep.subr.mxu0 %v1446
  %2022 = vmatpush1.msra.mxu0 %v1445
  %2023 = vmatprep.subr.mxu0 %v1453
  %2024 = vmatpush1.msra.mxu0 %v1452
  %2025 = vmatprep.subr.mxu0 %v1460
  %2026 = vmatpush1.msra.mxu0 %v1459
  %2027 = vmatprep.subr.mxu0 %v1467
  %2028 = vmatpush1.msra.mxu0 %v1466
  %2029 = vmatprep.subr.mxu0 %v1474
  %2030 = vmatpush1.msra.mxu0 %v1473
  %2031 = vmatprep.subr.mxu0 %v1481
  %2032 = vmatpush1.msra.mxu0 %v1480
  %2033 = vmatprep.subr.mxu0 %v1488
  %2034 = vmatpush1.msra.mxu0 %v1487
  %2035 = vmatprep.subr.mxu0 %v1495
  %2036 = vmatpush1.msra.mxu0 %v1494
  %2037 = vmatprep.subr.mxu0 %v1502
  %2038 = vmatpush1.msra.mxu0 %v1501
  %2039 = vmatprep.subr.mxu0 0.0
  %2040 = vmatpush1.msra.mxu0 0.0
  %2041 = vmatprep.subr.mxu0 0.0
  %2042 = vmatpush1.msra.mxu0 0.0
  %2043 = vmatprep.subr.mxu0 0.0
  %2044 = vmatpush1.msra.mxu0 0.0
  %2045 = vmatprep.subr.mxu0 0.0
  %2046 = vmatpush1.msra.mxu0 0.0
  %2047 = vmatprep.subr.mxu0 0.0
  %2048 = vmatpush1.msra.mxu0 0.0
  %2049 = vmatprep.subr.mxu0 0.0
  %2050 = vmatpush1.msra.mxu0 0.0
  %2051 = vmatprep.subr.mxu0 0.0
  %2052 = vmatpush1.msra.mxu0 0.0
  %2053 = vmatprep.subr.mxu0 0.0
  %2054 = vmatpush1.msra.mxu0 0.0
  %2055 = vmatprep.subr.mxu0 0.0
  %2056 = vmatpush1.msra.mxu0 0.0
  %2057 = vmatprep.subr.mxu0 0.0
  %2058 = vmatpush1.msra.mxu0 0.0
  %2059 = vmatprep.subr.mxu0 0.0
  %2060 = vmatpush1.msra.mxu0 0.0
  %2061 = vmatprep.subr.mxu0 0.0
  %2062 = vmatpush1.msra.mxu0 0.0
  %2063 = vmatprep.subr.mxu0 0.0
  %2064 = vmatpush1.msra.mxu0 0.0
  %2065 = vmatprep.subr.mxu0 0.0
  %2066 = vmatpush1.msra.mxu0 0.0
  %2067 = vmatprep.subr.mxu0 0.0
  %2068 = vmatpush1.msra.mxu0 0.0
  %2069 = vmatprep.subr.mxu0 0.0
  %2070 = vmatpush1.msra.mxu0 0.0
  %2071 = vmatprep.mubr.f32.mxu0 0.0
  %2072 = vmatmul.mubr.f32.gmra.mrb[0].mxu0 %v38
  %v2073 = vpop.f32.mrb[0].mxu0
  %v2074 = vadd.f32 %v1997, %v2073
  %v2075 = vpop.f32.mrb[0].mxu0
  %v2076 = vadd.f32 %v1999, %v2075
  %2077 = vmatprep.mubr.f32.mxu0 0.0
  %2078 = vmatmul.mubr.f32.gmra.mrb[0].mxu0 %v51
  %v2079 = vpop.f32.mrb[0].mxu0
  %v2080 = vadd.f32 %v2003, %v2079
  %v2081 = vpop.f32.mrb[0].mxu0
  %v2082 = vadd.f32 %v2005, %v2081
  %2083 = vdwg.mxu0
  %2084 = vmatprep.subr.mxu0 %v55
  %2085 = vmatpush1.msra.mxu0 %v54
  %2086 = vmatprep.subr.mxu0 %v62
  %2087 = vmatpush1.msra.mxu0 %v61
  %2088 = vmatprep.subr.mxu0 %v69
  %2089 = vmatpush1.msra.mxu0 %v68
  %2090 = vmatprep.subr.mxu0 %v76
  %2091 = vmatpush1.msra.mxu0 %v75
  %2092 = vmatprep.subr.mxu0 %v83
  %2093 = vmatpush1.msra.mxu0 %v82
  %2094 = vmatprep.subr.mxu0 %v90
  %2095 = vmatpush1.msra.mxu0 %v89
  %2096 = vmatprep.subr.mxu0 %v97
  %2097 = vmatpush1.msra.mxu0 %v96
  %2098 = vmatprep.subr.mxu0 %v104
  %2099 = vmatpush1.msra.mxu0 %v103
  %2100 = vmatprep.subr.mxu0 %v111
  %2101 = vmatpush1.msra.mxu0 %v110
  %2102 = vmatprep.subr.mxu0 %v118
  %2103 = vmatpush1.msra.mxu0 %v117
  %2104 = vmatprep.subr.mxu0 %v125
  %2105 = vmatpush1.msra.mxu0 %v124
  %2106 = vmatprep.subr.mxu0 %v132
  %2107 = vmatpush1.msra.mxu0 %v131
  %2108 = vmatprep.subr.mxu0 %v139
  %2109 = vmatpush1.msra.mxu0 %v138
  %2110 = vmatprep.subr.mxu0 %v146
  %2111 = vmatpush1.msra.mxu0 %v145
  %2112 = vmatprep.subr.mxu0 %v153
  %2113 = vmatpush1.msra.mxu0 %v152
  %2114 = vmatprep.subr.mxu0 %v160
  %2115 = vmatpush1.msra.mxu0 %v159
  %2116 = vmatprep.subr.mxu0 %v167
  %2117 = vmatpush1.msra.mxu0 %v166
  %2118 = vmatprep.subr.mxu0 %v174
  %2119 = vmatpush1.msra.mxu0 %v173
  %2120 = vmatprep.subr.mxu0 %v181
  %2121 = vmatpush1.msra.mxu0 %v180
  %2122 = vmatprep.subr.mxu0 %v188
  %2123 = vmatpush1.msra.mxu0 %v187
  %2124 = vmatprep.subr.mxu0 %v195
  %2125 = vmatpush1.msra.mxu0 %v194
  %2126 = vmatprep.subr.mxu0 %v202
  %2127 = vmatpush1.msra.mxu0 %v201
  %2128 = vmatprep.subr.mxu0 %v209
  %2129 = vmatpush1.msra.mxu0 %v208
  %2130 = vmatprep.subr.mxu0 %v216
  %2131 = vmatpush1.msra.mxu0 %v215
  %2132 = vmatprep.subr.mxu0 %v223
  %2133 = vmatpush1.msra.mxu0 %v222
  %2134 = vmatprep.subr.mxu0 %v230
  %2135 = vmatpush1.msra.mxu0 %v229
  %2136 = vmatprep.subr.mxu0 %v237
  %2137 = vmatpush1.msra.mxu0 %v236
  %2138 = vmatprep.subr.mxu0 %v244
  %2139 = vmatpush1.msra.mxu0 %v243
  %2140 = vmatprep.subr.mxu0 %v251
  %2141 = vmatpush1.msra.mxu0 %v250
  %2142 = vmatprep.subr.mxu0 %v258
  %2143 = vmatpush1.msra.mxu0 %v257
  %2144 = vmatprep.subr.mxu0 %v265
  %2145 = vmatpush1.msra.mxu0 %v264
  %2146 = vmatprep.subr.mxu0 %v272
  %2147 = vmatpush1.msra.mxu0 %v271
  %2148 = vmatprep.mubr.f32.mxu0 %v27
  %2149 = vmatmul.mubr.f32.gmra.mrb[0].mxu0 %v26
  %v2150 = vpop.f32.mrb[0].mxu0
  %v2151 = vadd.f32 %v1521, %v2150
  %v2152 = vpop.f32.mrb[0].mxu0
  %v2153 = vadd.f32 %v1525, %v2152
  %2154 = vmatprep.mubr.f32.mxu0 %v40
  %2155 = vmatmul.mubr.f32.gmra.mrb[0].mxu0 %v39
  %v2156 = vpop.f32.mrb[0].mxu0
  %v2157 = vadd.f32 %v1521, %v2156
  %v2158 = vpop.f32.mrb[0].mxu0
  %v2159 = vadd.f32 %v1525, %v2158
  %2160 = vdwg.mxu0
  %2161 = vmatprep.subr.mxu0 %v279
  %2162 = vmatpush1.msra.mxu0 %v278
  %2163 = vmatprep.subr.mxu0 %v286
  %2164 = vmatpush1.msra.mxu0 %v285
  %2165 = vmatprep.subr.mxu0 %v293
  %2166 = vmatpush1.msra.mxu0 %v292
  %2167 = vmatprep.subr.mxu0 %v300
  %2168 = vmatpush1.msra.mxu0 %v299
  %2169 = vmatprep.subr.mxu0 %v307
  %2170 = vmatpush1.msra.mxu0 %v306
  %2171 = vmatprep.subr.mxu0 %v314
  %2172 = vmatpush1.msra.mxu0 %v313
  %2173 = vmatprep.subr.mxu0 %v321
  %2174 = vmatpush1.msra.mxu0 %v320
  %2175 = vmatprep.subr.mxu0 %v328
  %2176 = vmatpush1.msra.mxu0 %v327
  %2177 = vmatprep.subr.mxu0 %v335
  %2178 = vmatpush1.msra.mxu0 %v334
  %2179 = vmatprep.subr.mxu0 %v342
  %2180 = vmatpush1.msra.mxu0 %v341
  %2181 = vmatprep.subr.mxu0 %v349
  %2182 = vmatpush1.msra.mxu0 %v348
  %2183 = vmatprep.subr.mxu0 %v356
  %2184 = vmatpush1.msra.mxu0 %v355
  %2185 = vmatprep.subr.mxu0 %v363
  %2186 = vmatpush1.msra.mxu0 %v362
  %2187 = vmatprep.subr.mxu0 %v370
  %2188 = vmatpush1.msra.mxu0 %v369
  %2189 = vmatprep.subr.mxu0 %v377
  %2190 = vmatpush1.msra.mxu0 %v376
  %2191 = vmatprep.subr.mxu0 %v384
  %2192 = vmatpush1.msra.mxu0 %v383
  %2193 = vmatprep.subr.mxu0 %v391
  %2194 = vmatpush1.msra.mxu0 %v390
  %2195 = vmatprep.subr.mxu0 %v398
  %2196 = vmatpush1.msra.mxu0 %v397
  %2197 = vmatprep.subr.mxu0 %v405
  %2198 = vmatpush1.msra.mxu0 %v404
  %2199 = vmatprep.subr.mxu0 %v412
  %2200 = vmatpush1.msra.mxu0 %v411
  %2201 = vmatprep.subr.mxu0 %v419
  %2202 = vmatpush1.msra.mxu0 %v418
  %2203 = vmatprep.subr.mxu0 %v426
  %2204 = vmatpush1.msra.mxu0 %v425
  %2205 = vmatprep.subr.mxu0 %v433
  %2206 = vmatpush1.msra.mxu0 %v432
  %2207 = vmatprep.subr.mxu0 %v440
  %2208 = vmatpush1.msra.mxu0 %v439
  %2209 = vmatprep.subr.mxu0 %v447
  %2210 = vmatpush1.msra.mxu0 %v446
  %2211 = vmatprep.subr.mxu0 %v454
  %2212 = vmatpush1.msra.mxu0 %v453
  %2213 = vmatprep.subr.mxu0 %v461
  %2214 = vmatpush1.msra.mxu0 %v460
  %2215 = vmatprep.subr.mxu0 %v468
  %2216 = vmatpush1.msra.mxu0 %v467
  %2217 = vmatprep.subr.mxu0 %v475
  %2218 = vmatpush1.msra.mxu0 %v474
  %2219 = vmatprep.subr.mxu0 %v482
  %2220 = vmatpush1.msra.mxu0 %v481
  %2221 = vmatprep.subr.mxu0 %v489
  %2222 = vmatpush1.msra.mxu0 %v488
  %2223 = vmatprep.subr.mxu0 %v496
  %2224 = vmatpush1.msra.mxu0 %v495
  %2225 = vmatprep.mubr.f32.mxu0 %v29
  %2226 = vmatmul.mubr.f32.gmra.mrb[0].mxu0 %v28
  %v2227 = vpop.f32.mrb[0].mxu0
  %v2228 = vadd.f32 %v2151, %v2227
  %v2229 = vpop.f32.mrb[0].mxu0
  %v2230 = vadd.f32 %v2153, %v2229
  %2231 = vmatprep.mubr.f32.mxu0 %v42
  %2232 = vmatmul.mubr.f32.gmra.mrb[0].mxu0 %v41
  %v2233 = vpop.f32.mrb[0].mxu0
  %v2234 = vadd.f32 %v2157, %v2233
  %v2235 = vpop.f32.mrb[0].mxu0
  %v2236 = vadd.f32 %v2159, %v2235
  %2237 = vdwg.mxu0
  %2238 = vmatprep.subr.mxu0 %v503
  %2239 = vmatpush1.msra.mxu0 %v502
  %2240 = vmatprep.subr.mxu0 %v510
  %2241 = vmatpush1.msra.mxu0 %v509
  %2242 = vmatprep.subr.mxu0 %v517
  %2243 = vmatpush1.msra.mxu0 %v516
  %2244 = vmatprep.subr.mxu0 %v524
  %2245 = vmatpush1.msra.mxu0 %v523
  %2246 = vmatprep.subr.mxu0 %v531
  %2247 = vmatpush1.msra.mxu0 %v530
  %2248 = vmatprep.subr.mxu0 %v538
  %2249 = vmatpush1.msra.mxu0 %v537
  %2250 = vmatprep.subr.mxu0 %v545
  %2251 = vmatpush1.msra.mxu0 %v544
  %2252 = vmatprep.subr.mxu0 %v552
  %2253 = vmatpush1.msra.mxu0 %v551
  %2254 = vmatprep.subr.mxu0 %v559
  %2255 = vmatpush1.msra.mxu0 %v558
  %2256 = vmatprep.subr.mxu0 %v566
  %2257 = vmatpush1.msra.mxu0 %v565
  %2258 = vmatprep.subr.mxu0 %v573
  %2259 = vmatpush1.msra.mxu0 %v572
  %2260 = vmatprep.subr.mxu0 %v580
  %2261 = vmatpush1.msra.mxu0 %v579
  %2262 = vmatprep.subr.mxu0 %v587
  %2263 = vmatpush1.msra.mxu0 %v586
  %2264 = vmatprep.subr.mxu0 %v594
  %2265 = vmatpush1.msra.mxu0 %v593
  %2266 = vmatprep.subr.mxu0 %v601
  %2267 = vmatpush1.msra.mxu0 %v600
  %2268 = vmatprep.subr.mxu0 %v608
  %2269 = vmatpush1.msra.mxu0 %v607
  %2270 = vmatprep.subr.mxu0 %v615
  %2271 = vmatpush1.msra.mxu0 %v614
  %2272 = vmatprep.subr.mxu0 %v622
  %2273 = vmatpush1.msra.mxu0 %v621
  %2274 = vmatprep.subr.mxu0 %v629
  %2275 = vmatpush1.msra.mxu0 %v628
  %2276 = vmatprep.subr.mxu0 %v636
  %2277 = vmatpush1.msra.mxu0 %v635
  %2278 = vmatprep.subr.mxu0 %v643
  %2279 = vmatpush1.msra.mxu0 %v642
  %2280 = vmatprep.subr.mxu0 %v650
  %2281 = vmatpush1.msra.mxu0 %v649
  %2282 = vmatprep.subr.mxu0 %v657
  %2283 = vmatpush1.msra.mxu0 %v656
  %2284 = vmatprep.subr.mxu0 %v664
  %2285 = vmatpush1.msra.mxu0 %v663
  %2286 = vmatprep.subr.mxu0 %v671
  %2287 = vmatpush1.msra.mxu0 %v670
  %2288 = vmatprep.subr.mxu0 %v678
  %2289 = vmatpush1.msra.mxu0 %v677
  %2290 = vmatprep.subr.mxu0 %v685
  %2291 = vmatpush1.msra.mxu0 %v684
  %2292 = vmatprep.subr.mxu0 %v692
  %2293 = vmatpush1.msra.mxu0 %v691
  %2294 = vmatprep.subr.mxu0 %v699
  %2295 = vmatpush1.msra.mxu0 %v698
  %2296 = vmatprep.subr.mxu0 %v706
  %2297 = vmatpush1.msra.mxu0 %v705
  %2298 = vmatprep.subr.mxu0 %v713
  %2299 = vmatpush1.msra.mxu0 %v712
  %2300 = vmatprep.subr.mxu0 %v720
  %2301 = vmatpush1.msra.mxu0 %v719
  %2302 = vmatprep.mubr.f32.mxu0 %v31
  %2303 = vmatmul.mubr.f32.gmra.mrb[0].mxu0 %v30
  %v2304 = vpop.f32.mrb[0].mxu0
  %v2305 = vadd.f32 %v2228, %v2304
  %v2306 = vpop.f32.mrb[0].mxu0
  %v2307 = vadd.f32 %v2230, %v2306
  %2308 = vmatprep.mubr.f32.mxu0 %v44
  %2309 = vmatmul.mubr.f32.gmra.mrb[0].mxu0 %v43
  %v2310 = vpop.f32.mrb[0].mxu0
  %v2311 = vadd.f32 %v2234, %v2310
  %v2312 = vpop.f32.mrb[0].mxu0
  %v2313 = vadd.f32 %v2236, %v2312
  %2314 = vdwg.mxu0
  %2315 = vmatprep.subr.mxu0 %v727
  %2316 = vmatpush1.msra.mxu0 %v726
  %2317 = vmatprep.subr.mxu0 %v734
  %2318 = vmatpush1.msra.mxu0 %v733
  %2319 = vmatprep.subr.mxu0 %v741
  %2320 = vmatpush1.msra.mxu0 %v740
  %2321 = vmatprep.subr.mxu0 %v748
  %2322 = vmatpush1.msra.mxu0 %v747
  %2323 = vmatprep.subr.mxu0 %v755
  %2324 = vmatpush1.msra.mxu0 %v754
  %2325 = vmatprep.subr.mxu0 %v762
  %2326 = vmatpush1.msra.mxu0 %v761
  %2327 = vmatprep.subr.mxu0 %v769
  %2328 = vmatpush1.msra.mxu0 %v768
  %2329 = vmatprep.subr.mxu0 %v776
  %2330 = vmatpush1.msra.mxu0 %v775
  %2331 = vmatprep.subr.mxu0 %v783
  %2332 = vmatpush1.msra.mxu0 %v782
  %2333 = vmatprep.subr.mxu0 %v790
  %2334 = vmatpush1.msra.mxu0 %v789
  %2335 = vmatprep.subr.mxu0 %v797
  %2336 = vmatpush1.msra.mxu0 %v796
  %2337 = vmatprep.subr.mxu0 %v804
  %2338 = vmatpush1.msra.mxu0 %v803
  %2339 = vmatprep.subr.mxu0 %v811
  %2340 = vmatpush1.msra.mxu0 %v810
  %2341 = vmatprep.subr.mxu0 %v818
  %2342 = vmatpush1.msra.mxu0 %v817
  %2343 = vmatprep.subr.mxu0 %v825
  %2344 = vmatpush1.msra.mxu0 %v824
  %2345 = vmatprep.subr.mxu0 %v832
  %2346 = vmatpush1.msra.mxu0 %v831
  %2347 = vmatprep.subr.mxu0 %v839
  %2348 = vmatpush1.msra.mxu0 %v838
  %2349 = vmatprep.subr.mxu0 %v846
  %2350 = vmatpush1.msra.mxu0 %v845
  %2351 = vmatprep.subr.mxu0 %v853
  %2352 = vmatpush1.msra.mxu0 %v852
  %2353 = vmatprep.subr.mxu0 %v860
  %2354 = vmatpush1.msra.mxu0 %v859
  %2355 = vmatprep.subr.mxu0 %v867
  %2356 = vmatpush1.msra.mxu0 %v866
  %2357 = vmatprep.subr.mxu0 %v874
  %2358 = vmatpush1.msra.mxu0 %v873
  %2359 = vmatprep.subr.mxu0 %v881
  %2360 = vmatpush1.msra.mxu0 %v880
  %2361 = vmatprep.subr.mxu0 %v888
  %2362 = vmatpush1.msra.mxu0 %v887
  %2363 = vmatprep.subr.mxu0 %v895
  %2364 = vmatpush1.msra.mxu0 %v894
  %2365 = vmatprep.subr.mxu0 %v902
  %2366 = vmatpush1.msra.mxu0 %v901
  %2367 = vmatprep.subr.mxu0 %v909
  %2368 = vmatpush1.msra.mxu0 %v908
  %2369 = vmatprep.subr.mxu0 %v916
  %2370 = vmatpush1.msra.mxu0 %v915
  %2371 = vmatprep.subr.mxu0 %v923
  %2372 = vmatpush1.msra.mxu0 %v922
  %2373 = vmatprep.subr.mxu0 %v930
  %2374 = vmatpush1.msra.mxu0 %v929
  %2375 = vmatprep.subr.mxu0 %v937
  %2376 = vmatpush1.msra.mxu0 %v936
  %2377 = vmatprep.subr.mxu0 %v944
  %2378 = vmatpush1.msra.mxu0 %v943
  %2379 = vmatprep.mubr.f32.mxu0 %v33
  %2380 = vmatmul.mubr.f32.gmra.mrb[0].mxu0 %v32
  %v2381 = vpop.f32.mrb[0].mxu0
  %v2382 = vadd.f32 %v2305, %v2381
  %v2383 = vpop.f32.mrb[0].mxu0
  %v2384 = vadd.f32 %v2307, %v2383
  %2385 = vmatprep.mubr.f32.mxu0 %v46
  %2386 = vmatmul.mubr.f32.gmra.mrb[0].mxu0 %v45
  %v2387 = vpop.f32.mrb[0].mxu0
  %v2388 = vadd.f32 %v2311, %v2387
  %v2389 = vpop.f32.mrb[0].mxu0
  %v2390 = vadd.f32 %v2313, %v2389
  %2391 = vdwg.mxu0
  %2392 = vmatprep.subr.mxu0 %v951
  %2393 = vmatpush1.msra.mxu0 %v950
  %2394 = vmatprep.subr.mxu0 %v958
  %2395 = vmatpush1.msra.mxu0 %v957
  %2396 = vmatprep.subr.mxu0 %v965
  %2397 = vmatpush1.msra.mxu0 %v964
  %2398 = vmatprep.subr.mxu0 %v972
  %2399 = vmatpush1.msra.mxu0 %v971
  %2400 = vmatprep.subr.mxu0 %v979
  %2401 = vmatpush1.msra.mxu0 %v978
  %2402 = vmatprep.subr.mxu0 %v986
  %2403 = vmatpush1.msra.mxu0 %v985
  %2404 = vmatprep.subr.mxu0 %v993
  %2405 = vmatpush1.msra.mxu0 %v992
  %2406 = vmatprep.subr.mxu0 %v1000
  %2407 = vmatpush1.msra.mxu0 %v999
  %2408 = vmatprep.subr.mxu0 %v1007
  %2409 = vmatpush1.msra.mxu0 %v1006
  %2410 = vmatprep.subr.mxu0 %v1014
  %2411 = vmatpush1.msra.mxu0 %v1013
  %2412 = vmatprep.subr.mxu0 %v1021
  %2413 = vmatpush1.msra.mxu0 %v1020
  %2414 = vmatprep.subr.mxu0 %v1028
  %2415 = vmatpush1.msra.mxu0 %v1027
  %2416 = vmatprep.subr.mxu0 %v1035
  %2417 = vmatpush1.msra.mxu0 %v1034
  %2418 = vmatprep.subr.mxu0 %v1042
  %2419 = vmatpush1.msra.mxu0 %v1041
  %2420 = vmatprep.subr.mxu0 %v1049
  %2421 = vmatpush1.msra.mxu0 %v1048
  %2422 = vmatprep.subr.mxu0 %v1056
  %2423 = vmatpush1.msra.mxu0 %v1055
  %2424 = vmatprep.subr.mxu0 %v1063
  %2425 = vmatpush1.msra.mxu0 %v1062
  %2426 = vmatprep.subr.mxu0 %v1070
  %2427 = vmatpush1.msra.mxu0 %v1069
  %2428 = vmatprep.subr.mxu0 %v1077
  %2429 = vmatpush1.msra.mxu0 %v1076
  %2430 = vmatprep.subr.mxu0 %v1084
  %2431 = vmatpush1.msra.mxu0 %v1083
  %2432 = vmatprep.subr.mxu0 %v1091
  %2433 = vmatpush1.msra.mxu0 %v1090
  %2434 = vmatprep.subr.mxu0 %v1098
  %2435 = vmatpush1.msra.mxu0 %v1097
  %2436 = vmatprep.subr.mxu0 %v1105
  %2437 = vmatpush1.msra.mxu0 %v1104
  %2438 = vmatprep.subr.mxu0 %v1112
  %2439 = vmatpush1.msra.mxu0 %v1111
  %2440 = vmatprep.subr.mxu0 %v1119
  %2441 = vmatpush1.msra.mxu0 %v1118
  %2442 = vmatprep.subr.mxu0 %v1126
  %2443 = vmatpush1.msra.mxu0 %v1125
  %2444 = vmatprep.subr.mxu0 %v1133
  %2445 = vmatpush1.msra.mxu0 %v1132
  %2446 = vmatprep.subr.mxu0 %v1140
  %2447 = vmatpush1.msra.mxu0 %v1139
  %2448 = vmatprep.subr.mxu0 %v1147
  %2449 = vmatpush1.msra.mxu0 %v1146
  %2450 = vmatprep.subr.mxu0 %v1154
  %2451 = vmatpush1.msra.mxu0 %v1153
  %2452 = vmatprep.subr.mxu0 %v1161
  %2453 = vmatpush1.msra.mxu0 %v1160
  %2454 = vmatprep.subr.mxu0 %v1168
  %2455 = vmatpush1.msra.mxu0 %v1167
  %2456 = vmatprep.mubr.f32.mxu0 %v35
  %2457 = vmatmul.mubr.f32.gmra.mrb[0].mxu0 %v34
  %v2458 = vpop.f32.mrb[0].mxu0
  %v2459 = vadd.f32 %v2382, %v2458
  %v2460 = vpop.f32.mrb[0].mxu0
  %v2461 = vadd.f32 %v2384, %v2460
  %2462 = vmatprep.mubr.f32.mxu0 %v48
  %2463 = vmatmul.mubr.f32.gmra.mrb[0].mxu0 %v47
  %v2464 = vpop.f32.mrb[0].mxu0
  %v2465 = vadd.f32 %v2388, %v2464
  %v2466 = vpop.f32.mrb[0].mxu0
  %v2467 = vadd.f32 %v2390, %v2466
  %2468 = vdwg.mxu0
  %2469 = vmatprep.subr.mxu0 %v1175
  %2470 = vmatpush1.msra.mxu0 %v1174
  %2471 = vmatprep.subr.mxu0 %v1182
  %2472 = vmatpush1.msra.mxu0 %v1181
  %2473 = vmatprep.subr.mxu0 %v1189
  %2474 = vmatpush1.msra.mxu0 %v1188
  %2475 = vmatprep.subr.mxu0 %v1196
  %2476 = vmatpush1.msra.mxu0 %v1195
  %2477 = vmatprep.subr.mxu0 %v1203
  %2478 = vmatpush1.msra.mxu0 %v1202
  %2479 = vmatprep.subr.mxu0 %v1210
  %2480 = vmatpush1.msra.mxu0 %v1209
  %2481 = vmatprep.subr.mxu0 %v1217
  %2482 = vmatpush1.msra.mxu0 %v1216
  %2483 = vmatprep.subr.mxu0 %v1224
  %2484 = vmatpush1.msra.mxu0 %v1223
  %2485 = vmatprep.subr.mxu0 %v1231
  %2486 = vmatpush1.msra.mxu0 %v1230
  %2487 = vmatprep.subr.mxu0 %v1238
  %2488 = vmatpush1.msra.mxu0 %v1237
  %2489 = vmatprep.subr.mxu0 %v1245
  %2490 = vmatpush1.msra.mxu0 %v1244
  %2491 = vmatprep.subr.mxu0 %v1252
  %2492 = vmatpush1.msra.mxu0 %v1251
  %2493 = vmatprep.subr.mxu0 %v1259
  %2494 = vmatpush1.msra.mxu0 %v1258
  %2495 = vmatprep.subr.mxu0 %v1266
  %2496 = vmatpush1.msra.mxu0 %v1265
  %2497 = vmatprep.subr.mxu0 %v1273
  %2498 = vmatpush1.msra.mxu0 %v1272
  %2499 = vmatprep.subr.mxu0 %v1280
  %2500 = vmatpush1.msra.mxu0 %v1279
  %2501 = vmatprep.subr.mxu0 %v1287
  %2502 = vmatpush1.msra.mxu0 %v1286
  %2503 = vmatprep.subr.mxu0 %v1294
  %2504 = vmatpush1.msra.mxu0 %v1293
  %2505 = vmatprep.subr.mxu0 %v1301
  %2506 = vmatpush1.msra.mxu0 %v1300
  %2507 = vmatprep.subr.mxu0 %v1308
  %2508 = vmatpush1.msra.mxu0 %v1307
  %2509 = vmatprep.subr.mxu0 %v1315
  %2510 = vmatpush1.msra.mxu0 %v1314
  %2511 = vmatprep.subr.mxu0 %v1322
  %2512 = vmatpush1.msra.mxu0 %v1321
  %2513 = vmatprep.subr.mxu0 %v1329
  %2514 = vmatpush1.msra.mxu0 %v1328
  %2515 = vmatprep.subr.mxu0 %v1336
  %2516 = vmatpush1.msra.mxu0 %v1335
  %2517 = vmatprep.subr.mxu0 %v1343
  %2518 = vmatpush1.msra.mxu0 %v1342
  %2519 = vmatprep.subr.mxu0 %v1350
  %2520 = vmatpush1.msra.mxu0 %v1349
  %2521 = vmatprep.subr.mxu0 %v1357
  %2522 = vmatpush1.msra.mxu0 %v1356
  %2523 = vmatprep.subr.mxu0 %v1364
  %2524 = vmatpush1.msra.mxu0 %v1363
  %2525 = vmatprep.subr.mxu0 %v1371
  %2526 = vmatpush1.msra.mxu0 %v1370
  %2527 = vmatprep.subr.mxu0 %v1378
  %2528 = vmatpush1.msra.mxu0 %v1377
  %2529 = vmatprep.subr.mxu0 %v1385
  %2530 = vmatpush1.msra.mxu0 %v1384
  %2531 = vmatprep.subr.mxu0 %v1392
  %2532 = vmatpush1.msra.mxu0 %v1391
  %2533 = vmatprep.mubr.f32.mxu0 %v37
  %2534 = vmatmul.mubr.f32.gmra.mrb[0].mxu0 %v36
  %v2535 = vpop.f32.mrb[0].mxu0
  %v2536 = vadd.f32 %v2459, %v2535
  %v2537 = vpop.f32.mrb[0].mxu0
  %v2538 = vadd.f32 %v2461, %v2537
  %2539 = vmatprep.mubr.f32.mxu0 %v50
  %2540 = vmatmul.mubr.f32.gmra.mrb[0].mxu0 %v49
  %v2541 = vpop.f32.mrb[0].mxu0
  %v2542 = vadd.f32 %v2465, %v2541
  %v2543 = vpop.f32.mrb[0].mxu0
  %v2544 = vadd.f32 %v2467, %v2543
  %2545 = vdwg.mxu0
  %2546 = vmatprep.subr.mxu0 %v1399
  %2547 = vmatpush1.msra.mxu0 %v1398
  %2548 = vmatprep.subr.mxu0 %v1406
  %2549 = vmatpush1.msra.mxu0 %v1405
  %2550 = vmatprep.subr.mxu0 %v1413
  %2551 = vmatpush1.msra.mxu0 %v1412
  %2552 = vmatprep.subr.mxu0 %v1420
  %2553 = vmatpush1.msra.mxu0 %v1419
  %2554 = vmatprep.subr.mxu0 %v1427
  %2555 = vmatpush1.msra.mxu0 %v1426
  %2556 = vmatprep.subr.mxu0 %v1434
  %2557 = vmatpush1.msra.mxu0 %v1433
  %2558 = vmatprep.subr.mxu0 %v1441
  %2559 = vmatpush1.msra.mxu0 %v1440
  %2560 = vmatprep.subr.mxu0 %v1448
  %2561 = vmatpush1.msra.mxu0 %v1447
  %2562 = vmatprep.subr.mxu0 %v1455
  %2563 = vmatpush1.msra.mxu0 %v1454
  %2564 = vmatprep.subr.mxu0 %v1462
  %2565 = vmatpush1.msra.mxu0 %v1461
  %2566 = vmatprep.subr.mxu0 %v1469
  %2567 = vmatpush1.msra.mxu0 %v1468
  %2568 = vmatprep.subr.mxu0 %v1476
  %2569 = vmatpush1.msra.mxu0 %v1475
  %2570 = vmatprep.subr.mxu0 %v1483
  %2571 = vmatpush1.msra.mxu0 %v1482
  %2572 = vmatprep.subr.mxu0 %v1490
  %2573 = vmatpush1.msra.mxu0 %v1489
  %2574 = vmatprep.subr.mxu0 %v1497
  %2575 = vmatpush1.msra.mxu0 %v1496
  %2576 = vmatprep.subr.mxu0 %v1504
  %2577 = vmatpush1.msra.mxu0 %v1503
  %2578 = vmatprep.subr.mxu0 0.0
  %2579 = vmatpush1.msra.mxu0 0.0
  %2580 = vmatprep.subr.mxu0 0.0
  %2581 = vmatpush1.msra.mxu0 0.0
  %2582 = vmatprep.subr.mxu0 0.0
  %2583 = vmatpush1.msra.mxu0 0.0
  %2584 = vmatprep.subr.mxu0 0.0
  %2585 = vmatpush1.msra.mxu0 0.0
  %2586 = vmatprep.subr.mxu0 0.0
  %2587 = vmatpush1.msra.mxu0 0.0
  %2588 = vmatprep.subr.mxu0 0.0
  %2589 = vmatpush1.msra.mxu0 0.0
  %2590 = vmatprep.subr.mxu0 0.0
  %2591 = vmatpush1.msra.mxu0 0.0
  %2592 = vmatprep.subr.mxu0 0.0
  %2593 = vmatpush1.msra.mxu0 0.0
  %2594 = vmatprep.subr.mxu0 0.0
  %2595 = vmatpush1.msra.mxu0 0.0
  %2596 = vmatprep.subr.mxu0 0.0
  %2597 = vmatpush1.msra.mxu0 0.0
  %2598 = vmatprep.subr.mxu0 0.0
  %2599 = vmatpush1.msra.mxu0 0.0
  %2600 = vmatprep.subr.mxu0 0.0
  %2601 = vmatpush1.msra.mxu0 0.0
  %2602 = vmatprep.subr.mxu0 0.0
  %2603 = vmatpush1.msra.mxu0 0.0
  %2604 = vmatprep.subr.mxu0 0.0
  %2605 = vmatpush1.msra.mxu0 0.0
  %2606 = vmatprep.subr.mxu0 0.0
  %2607 = vmatpush1.msra.mxu0 0.0
  %2608 = vmatprep.subr.mxu0 0.0
  %2609 = vmatpush1.msra.mxu0 0.0
  %2610 = vmatprep.mubr.f32.mxu0 0.0
  %2611 = vmatmul.mubr.f32.gmra.mrb[0].mxu0 %v38
  %v2612 = vpop.f32.mrb[0].mxu0
  %v2613 = vadd.f32 %v2536, %v2612
  %v2614 = vpop.f32.mrb[0].mxu0
  %v2615 = vadd.f32 %v2538, %v2614
  %2616 = vmatprep.mubr.f32.mxu0 0.0
  %2617 = vmatmul.mubr.f32.gmra.mrb[0].mxu0 %v51
  %v2618 = vpop.f32.mrb[0].mxu0
  %v2619 = vadd.f32 %v2542, %v2618
  %v2620 = vpop.f32.mrb[0].mxu0
  %v2621 = vadd.f32 %v2544, %v2620
  %2622 = vdwg.mxu0
  %2623 = vmatprep.subr.mxu0 %v57
  %2624 = vmatpush1.msra.mxu0 %v56
  %2625 = vmatprep.subr.mxu0 %v64
  %2626 = vmatpush1.msra.mxu0 %v63
  %2627 = vmatprep.subr.mxu0 %v71
  %2628 = vmatpush1.msra.mxu0 %v70
  %2629 = vmatprep.subr.mxu0 %v78
  %2630 = vmatpush1.msra.mxu0 %v77
  %2631 = vmatprep.subr.mxu0 %v85
  %2632 = vmatpush1.msra.mxu0 %v84
  %2633 = vmatprep.subr.mxu0 %v92
  %2634 = vmatpush1.msra.mxu0 %v91
  %2635 = vmatprep.subr.mxu0 %v99
  %2636 = vmatpush1.msra.mxu0 %v98
  %2637 = vmatprep.subr.mxu0 %v106
  %2638 = vmatpush1.msra.mxu0 %v105
  %2639 = vmatprep.subr.mxu0 %v113
  %2640 = vmatpush1.msra.mxu0 %v112
  %2641 = vmatprep.subr.mxu0 %v120
  %2642 = vmatpush1.msra.mxu0 %v119
  %2643 = vmatprep.subr.mxu0 %v127
  %2644 = vmatpush1.msra.mxu0 %v126
  %2645 = vmatprep.subr.mxu0 %v134
  %2646 = vmatpush1.msra.mxu0 %v133
  %2647 = vmatprep.subr.mxu0 %v141
  %2648 = vmatpush1.msra.mxu0 %v140
  %2649 = vmatprep.subr.mxu0 %v148
  %2650 = vmatpush1.msra.mxu0 %v147
  %2651 = vmatprep.subr.mxu0 %v155
  %2652 = vmatpush1.msra.mxu0 %v154
  %2653 = vmatprep.subr.mxu0 %v162
  %2654 = vmatpush1.msra.mxu0 %v161
  %2655 = vmatprep.subr.mxu0 %v169
  %2656 = vmatpush1.msra.mxu0 %v168
  %2657 = vmatprep.subr.mxu0 %v176
  %2658 = vmatpush1.msra.mxu0 %v175
  %2659 = vmatprep.subr.mxu0 %v183
  %2660 = vmatpush1.msra.mxu0 %v182
  %2661 = vmatprep.subr.mxu0 %v190
  %2662 = vmatpush1.msra.mxu0 %v189
  %2663 = vmatprep.subr.mxu0 %v197
  %2664 = vmatpush1.msra.mxu0 %v196
  %2665 = vmatprep.subr.mxu0 %v204
  %2666 = vmatpush1.msra.mxu0 %v203
  %2667 = vmatprep.subr.mxu0 %v211
  %2668 = vmatpush1.msra.mxu0 %v210
  %2669 = vmatprep.subr.mxu0 %v218
  %2670 = vmatpush1.msra.mxu0 %v217
  %2671 = vmatprep.subr.mxu0 %v225
  %2672 = vmatpush1.msra.mxu0 %v224
  %2673 = vmatprep.subr.mxu0 %v232
  %2674 = vmatpush1.msra.mxu0 %v231
  %2675 = vmatprep.subr.mxu0 %v239
  %2676 = vmatpush1.msra.mxu0 %v238
  %2677 = vmatprep.subr.mxu0 %v246
  %2678 = vmatpush1.msra.mxu0 %v245
  %2679 = vmatprep.subr.mxu0 %v253
  %2680 = vmatpush1.msra.mxu0 %v252
  %2681 = vmatprep.subr.mxu0 %v260
  %2682 = vmatpush1.msra.mxu0 %v259
  %2683 = vmatprep.subr.mxu0 %v267
  %2684 = vmatpush1.msra.mxu0 %v266
  %2685 = vmatprep.subr.mxu0 %v274
  %2686 = vmatpush1.msra.mxu0 %v273
  %2687 = vmatprep.mubr.f32.mxu0 %v27
  %2688 = vmatmul.mubr.f32.gmra.mrb[0].mxu0 %v26
  %v2689 = vpop.f32.mrb[0].mxu0
  %v2690 = vadd.f32 %v1529, %v2689
  %v2691 = vpop.f32.mrb[0].mxu0
  %v2692 = vadd.f32 %v1533, %v2691
  %2693 = vmatprep.mubr.f32.mxu0 %v40
  %2694 = vmatmul.mubr.f32.gmra.mrb[0].mxu0 %v39
  %v2695 = vpop.f32.mrb[0].mxu0
  %v2696 = vadd.f32 %v1529, %v2695
  %v2697 = vpop.f32.mrb[0].mxu0
  %v2698 = vadd.f32 %v1533, %v2697
  %2699 = vdwg.mxu0
  %2700 = vmatprep.subr.mxu0 %v281
  %2701 = vmatpush1.msra.mxu0 %v280
  %2702 = vmatprep.subr.mxu0 %v288
  %2703 = vmatpush1.msra.mxu0 %v287
  %2704 = vmatprep.subr.mxu0 %v295
  %2705 = vmatpush1.msra.mxu0 %v294
  %2706 = vmatprep.subr.mxu0 %v302
  %2707 = vmatpush1.msra.mxu0 %v301
  %2708 = vmatprep.subr.mxu0 %v309
  %2709 = vmatpush1.msra.mxu0 %v308
  %2710 = vmatprep.subr.mxu0 %v316
  %2711 = vmatpush1.msra.mxu0 %v315
  %2712 = vmatprep.subr.mxu0 %v323
  %2713 = vmatpush1.msra.mxu0 %v322
  %2714 = vmatprep.subr.mxu0 %v330
  %2715 = vmatpush1.msra.mxu0 %v329
  %2716 = vmatprep.subr.mxu0 %v337
  %2717 = vmatpush1.msra.mxu0 %v336
  %2718 = vmatprep.subr.mxu0 %v344
  %2719 = vmatpush1.msra.mxu0 %v343
  %2720 = vmatprep.subr.mxu0 %v351
  %2721 = vmatpush1.msra.mxu0 %v350
  %2722 = vmatprep.subr.mxu0 %v358
  %2723 = vmatpush1.msra.mxu0 %v357
  %2724 = vmatprep.subr.mxu0 %v365
  %2725 = vmatpush1.msra.mxu0 %v364
  %2726 = vmatprep.subr.mxu0 %v372
  %2727 = vmatpush1.msra.mxu0 %v371
  %2728 = vmatprep.subr.mxu0 %v379
  %2729 = vmatpush1.msra.mxu0 %v378
  %2730 = vmatprep.subr.mxu0 %v386
  %2731 = vmatpush1.msra.mxu0 %v385
  %2732 = vmatprep.subr.mxu0 %v393
  %2733 = vmatpush1.msra.mxu0 %v392
  %2734 = vmatprep.subr.mxu0 %v400
  %2735 = vmatpush1.msra.mxu0 %v399
  %2736 = vmatprep.subr.mxu0 %v407
  %2737 = vmatpush1.msra.mxu0 %v406
  %2738 = vmatprep.subr.mxu0 %v414
  %2739 = vmatpush1.msra.mxu0 %v413
  %2740 = vmatprep.subr.mxu0 %v421
  %2741 = vmatpush1.msra.mxu0 %v420
  %2742 = vmatprep.subr.mxu0 %v428
  %2743 = vmatpush1.msra.mxu0 %v427
  %2744 = vmatprep.subr.mxu0 %v435
  %2745 = vmatpush1.msra.mxu0 %v434
  %2746 = vmatprep.subr.mxu0 %v442
  %2747 = vmatpush1.msra.mxu0 %v441
  %2748 = vmatprep.subr.mxu0 %v449
  %2749 = vmatpush1.msra.mxu0 %v448
  %2750 = vmatprep.subr.mxu0 %v456
  %2751 = vmatpush1.msra.mxu0 %v455
  %2752 = vmatprep.subr.mxu0 %v463
  %2753 = vmatpush1.msra.mxu0 %v462
  %2754 = vmatprep.subr.mxu0 %v470
  %2755 = vmatpush1.msra.mxu0 %v469
  %2756 = vmatprep.subr.mxu0 %v477
  %2757 = vmatpush1.msra.mxu0 %v476
  %2758 = vmatprep.subr.mxu0 %v484
  %2759 = vmatpush1.msra.mxu0 %v483
  %2760 = vmatprep.subr.mxu0 %v491
  %2761 = vmatpush1.msra.mxu0 %v490
  %2762 = vmatprep.subr.mxu0 %v498
  %2763 = vmatpush1.msra.mxu0 %v497
  %2764 = vmatprep.mubr.f32.mxu0 %v29
  %2765 = vmatmul.mubr.f32.gmra.mrb[0].mxu0 %v28
  %v2766 = vpop.f32.mrb[0].mxu0
  %v2767 = vadd.f32 %v2690, %v2766
  %v2768 = vpop.f32.mrb[0].mxu0
  %v2769 = vadd.f32 %v2692, %v2768
  %2770 = vmatprep.mubr.f32.mxu0 %v42
  %2771 = vmatmul.mubr.f32.gmra.mrb[0].mxu0 %v41
  %v2772 = vpop.f32.mrb[0].mxu0
  %v2773 = vadd.f32 %v2696, %v2772
  %v2774 = vpop.f32.mrb[0].mxu0
  %v2775 = vadd.f32 %v2698, %v2774
  %2776 = vdwg.mxu0
  %2777 = vmatprep.subr.mxu0 %v505
  %2778 = vmatpush1.msra.mxu0 %v504
  %2779 = vmatprep.subr.mxu0 %v512
  %2780 = vmatpush1.msra.mxu0 %v511
  %2781 = vmatprep.subr.mxu0 %v519
  %2782 = vmatpush1.msra.mxu0 %v518
  %2783 = vmatprep.subr.mxu0 %v526
  %2784 = vmatpush1.msra.mxu0 %v525
  %2785 = vmatprep.subr.mxu0 %v533
  %2786 = vmatpush1.msra.mxu0 %v532
  %2787 = vmatprep.subr.mxu0 %v540
  %2788 = vmatpush1.msra.mxu0 %v539
  %2789 = vmatprep.subr.mxu0 %v547
  %2790 = vmatpush1.msra.mxu0 %v546
  %2791 = vmatprep.subr.mxu0 %v554
  %2792 = vmatpush1.msra.mxu0 %v553
  %2793 = vmatprep.subr.mxu0 %v561
  %2794 = vmatpush1.msra.mxu0 %v560
  %2795 = vmatprep.subr.mxu0 %v568
  %2796 = vmatpush1.msra.mxu0 %v567
  %2797 = vmatprep.subr.mxu0 %v575
  %2798 = vmatpush1.msra.mxu0 %v574
  %2799 = vmatprep.subr.mxu0 %v582
  %2800 = vmatpush1.msra.mxu0 %v581
  %2801 = vmatprep.subr.mxu0 %v589
  %2802 = vmatpush1.msra.mxu0 %v588
  %2803 = vmatprep.subr.mxu0 %v596
  %2804 = vmatpush1.msra.mxu0 %v595
  %2805 = vmatprep.subr.mxu0 %v603
  %2806 = vmatpush1.msra.mxu0 %v602
  %2807 = vmatprep.subr.mxu0 %v610
  %2808 = vmatpush1.msra.mxu0 %v609
  %2809 = vmatprep.subr.mxu0 %v617
  %2810 = vmatpush1.msra.mxu0 %v616
  %2811 = vmatprep.subr.mxu0 %v624
  %2812 = vmatpush1.msra.mxu0 %v623
  %2813 = vmatprep.subr.mxu0 %v631
  %2814 = vmatpush1.msra.mxu0 %v630
  %2815 = vmatprep.subr.mxu0 %v638
  %2816 = vmatpush1.msra.mxu0 %v637
  %2817 = vmatprep.subr.mxu0 %v645
  %2818 = vmatpush1.msra.mxu0 %v644
  %2819 = vmatprep.subr.mxu0 %v652
  %2820 = vmatpush1.msra.mxu0 %v651
  %2821 = vmatprep.subr.mxu0 %v659
  %2822 = vmatpush1.msra.mxu0 %v658
  %2823 = vmatprep.subr.mxu0 %v666
  %2824 = vmatpush1.msra.mxu0 %v665
  %2825 = vmatprep.subr.mxu0 %v673
  %2826 = vmatpush1.msra.mxu0 %v672
  %2827 = vmatprep.subr.mxu0 %v680
  %2828 = vmatpush1.msra.mxu0 %v679
  %2829 = vmatprep.subr.mxu0 %v687
  %2830 = vmatpush1.msra.mxu0 %v686
  %2831 = vmatprep.subr.mxu0 %v694
  %2832 = vmatpush1.msra.mxu0 %v693
  %2833 = vmatprep.subr.mxu0 %v701
  %2834 = vmatpush1.msra.mxu0 %v700
  %2835 = vmatprep.subr.mxu0 %v708
  %2836 = vmatpush1.msra.mxu0 %v707
  %2837 = vmatprep.subr.mxu0 %v715
  %2838 = vmatpush1.msra.mxu0 %v714
  %2839 = vmatprep.subr.mxu0 %v722
  %2840 = vmatpush1.msra.mxu0 %v721
  %2841 = vmatprep.mubr.f32.mxu0 %v31
  %2842 = vmatmul.mubr.f32.gmra.mrb[0].mxu0 %v30
  %v2843 = vpop.f32.mrb[0].mxu0
  %v2844 = vadd.f32 %v2767, %v2843
  %v2845 = vpop.f32.mrb[0].mxu0
  %v2846 = vadd.f32 %v2769, %v2845
  %2847 = vmatprep.mubr.f32.mxu0 %v44
  %2848 = vmatmul.mubr.f32.gmra.mrb[0].mxu0 %v43
  %v2849 = vpop.f32.mrb[0].mxu0
  %v2850 = vadd.f32 %v2773, %v2849
  %v2851 = vpop.f32.mrb[0].mxu0
  %v2852 = vadd.f32 %v2775, %v2851
  %2853 = vdwg.mxu0
  %2854 = vmatprep.subr.mxu0 %v729
  %2855 = vmatpush1.msra.mxu0 %v728
  %2856 = vmatprep.subr.mxu0 %v736
  %2857 = vmatpush1.msra.mxu0 %v735
  %2858 = vmatprep.subr.mxu0 %v743
  %2859 = vmatpush1.msra.mxu0 %v742
  %2860 = vmatprep.subr.mxu0 %v750
  %2861 = vmatpush1.msra.mxu0 %v749
  %2862 = vmatprep.subr.mxu0 %v757
  %2863 = vmatpush1.msra.mxu0 %v756
  %2864 = vmatprep.subr.mxu0 %v764
  %2865 = vmatpush1.msra.mxu0 %v763
  %2866 = vmatprep.subr.mxu0 %v771
  %2867 = vmatpush1.msra.mxu0 %v770
  %2868 = vmatprep.subr.mxu0 %v778
  %2869 = vmatpush1.msra.mxu0 %v777
  %2870 = vmatprep.subr.mxu0 %v785
  %2871 = vmatpush1.msra.mxu0 %v784
  %2872 = vmatprep.subr.mxu0 %v792
  %2873 = vmatpush1.msra.mxu0 %v791
  %2874 = vmatprep.subr.mxu0 %v799
  %2875 = vmatpush1.msra.mxu0 %v798
  %2876 = vmatprep.subr.mxu0 %v806
  %2877 = vmatpush1.msra.mxu0 %v805
  %2878 = vmatprep.subr.mxu0 %v813
  %2879 = vmatpush1.msra.mxu0 %v812
  %2880 = vmatprep.subr.mxu0 %v820
  %2881 = vmatpush1.msra.mxu0 %v819
  %2882 = vmatprep.subr.mxu0 %v827
  %2883 = vmatpush1.msra.mxu0 %v826
  %2884 = vmatprep.subr.mxu0 %v834
  %2885 = vmatpush1.msra.mxu0 %v833
  %2886 = vmatprep.subr.mxu0 %v841
  %2887 = vmatpush1.msra.mxu0 %v840
  %2888 = vmatprep.subr.mxu0 %v848
  %2889 = vmatpush1.msra.mxu0 %v847
  %2890 = vmatprep.subr.mxu0 %v855
  %2891 = vmatpush1.msra.mxu0 %v854
  %2892 = vmatprep.subr.mxu0 %v862
  %2893 = vmatpush1.msra.mxu0 %v861
  %2894 = vmatprep.subr.mxu0 %v869
  %2895 = vmatpush1.msra.mxu0 %v868
  %2896 = vmatprep.subr.mxu0 %v876
  %2897 = vmatpush1.msra.mxu0 %v875
  %2898 = vmatprep.subr.mxu0 %v883
  %2899 = vmatpush1.msra.mxu0 %v882
  %2900 = vmatprep.subr.mxu0 %v890
  %2901 = vmatpush1.msra.mxu0 %v889
  %2902 = vmatprep.subr.mxu0 %v897
  %2903 = vmatpush1.msra.mxu0 %v896
  %2904 = vmatprep.subr.mxu0 %v904
  %2905 = vmatpush1.msra.mxu0 %v903
  %2906 = vmatprep.subr.mxu0 %v911
  %2907 = vmatpush1.msra.mxu0 %v910
  %2908 = vmatprep.subr.mxu0 %v918
  %2909 = vmatpush1.msra.mxu0 %v917
  %2910 = vmatprep.subr.mxu0 %v925
  %2911 = vmatpush1.msra.mxu0 %v924
  %2912 = vmatprep.subr.mxu0 %v932
  %2913 = vmatpush1.msra.mxu0 %v931
  %2914 = vmatprep.subr.mxu0 %v939
  %2915 = vmatpush1.msra.mxu0 %v938
  %2916 = vmatprep.subr.mxu0 %v946
  %2917 = vmatpush1.msra.mxu0 %v945
  %2918 = vmatprep.mubr.f32.mxu0 %v33
  %2919 = vmatmul.mubr.f32.gmra.mrb[0].mxu0 %v32
  %v2920 = vpop.f32.mrb[0].mxu0
  %v2921 = vadd.f32 %v2844, %v2920
  %v2922 = vpop.f32.mrb[0].mxu0
  %v2923 = vadd.f32 %v2846, %v2922
  %2924 = vmatprep.mubr.f32.mxu0 %v46
  %2925 = vmatmul.mubr.f32.gmra.mrb[0].mxu0 %v45
  %v2926 = vpop.f32.mrb[0].mxu0
  %v2927 = vadd.f32 %v2850, %v2926
  %v2928 = vpop.f32.mrb[0].mxu0
  %v2929 = vadd.f32 %v2852, %v2928
  %2930 = vdwg.mxu0
  %2931 = vmatprep.subr.mxu0 %v953
  %2932 = vmatpush1.msra.mxu0 %v952
  %2933 = vmatprep.subr.mxu0 %v960
  %2934 = vmatpush1.msra.mxu0 %v959
  %2935 = vmatprep.subr.mxu0 %v967
  %2936 = vmatpush1.msra.mxu0 %v966
  %2937 = vmatprep.subr.mxu0 %v974
  %2938 = vmatpush1.msra.mxu0 %v973
  %2939 = vmatprep.subr.mxu0 %v981
  %2940 = vmatpush1.msra.mxu0 %v980
  %2941 = vmatprep.subr.mxu0 %v988
  %2942 = vmatpush1.msra.mxu0 %v987
  %2943 = vmatprep.subr.mxu0 %v995
  %2944 = vmatpush1.msra.mxu0 %v994
  %2945 = vmatprep.subr.mxu0 %v1002
  %2946 = vmatpush1.msra.mxu0 %v1001
  %2947 = vmatprep.subr.mxu0 %v1009
  %2948 = vmatpush1.msra.mxu0 %v1008
  %2949 = vmatprep.subr.mxu0 %v1016
  %2950 = vmatpush1.msra.mxu0 %v1015
  %2951 = vmatprep.subr.mxu0 %v1023
  %2952 = vmatpush1.msra.mxu0 %v1022
  %2953 = vmatprep.subr.mxu0 %v1030
  %2954 = vmatpush1.msra.mxu0 %v1029
  %2955 = vmatprep.subr.mxu0 %v1037
  %2956 = vmatpush1.msra.mxu0 %v1036
  %2957 = vmatprep.subr.mxu0 %v1044
  %2958 = vmatpush1.msra.mxu0 %v1043
  %2959 = vmatprep.subr.mxu0 %v1051
  %2960 = vmatpush1.msra.mxu0 %v1050
  %2961 = vmatprep.subr.mxu0 %v1058
  %2962 = vmatpush1.msra.mxu0 %v1057
  %2963 = vmatprep.subr.mxu0 %v1065
  %2964 = vmatpush1.msra.mxu0 %v1064
  %2965 = vmatprep.subr.mxu0 %v1072
  %2966 = vmatpush1.msra.mxu0 %v1071
  %2967 = vmatprep.subr.mxu0 %v1079
  %2968 = vmatpush1.msra.mxu0 %v1078
  %2969 = vmatprep.subr.mxu0 %v1086
  %2970 = vmatpush1.msra.mxu0 %v1085
  %2971 = vmatprep.subr.mxu0 %v1093
  %2972 = vmatpush1.msra.mxu0 %v1092
  %2973 = vmatprep.subr.mxu0 %v1100
  %2974 = vmatpush1.msra.mxu0 %v1099
  %2975 = vmatprep.subr.mxu0 %v1107
  %2976 = vmatpush1.msra.mxu0 %v1106
  %2977 = vmatprep.subr.mxu0 %v1114
  %2978 = vmatpush1.msra.mxu0 %v1113
  %2979 = vmatprep.subr.mxu0 %v1121
  %2980 = vmatpush1.msra.mxu0 %v1120
  %2981 = vmatprep.subr.mxu0 %v1128
  %2982 = vmatpush1.msra.mxu0 %v1127
  %2983 = vmatprep.subr.mxu0 %v1135
  %2984 = vmatpush1.msra.mxu0 %v1134
  %2985 = vmatprep.subr.mxu0 %v1142
  %2986 = vmatpush1.msra.mxu0 %v1141
  %2987 = vmatprep.subr.mxu0 %v1149
  %2988 = vmatpush1.msra.mxu0 %v1148
  %2989 = vmatprep.subr.mxu0 %v1156
  %2990 = vmatpush1.msra.mxu0 %v1155
  %2991 = vmatprep.subr.mxu0 %v1163
  %2992 = vmatpush1.msra.mxu0 %v1162
  %2993 = vmatprep.subr.mxu0 %v1170
  %2994 = vmatpush1.msra.mxu0 %v1169
  %2995 = vmatprep.mubr.f32.mxu0 %v35
  %2996 = vmatmul.mubr.f32.gmra.mrb[0].mxu0 %v34
  %v2997 = vpop.f32.mrb[0].mxu0
  %v2998 = vadd.f32 %v2921, %v2997
  %v2999 = vpop.f32.mrb[0].mxu0
  %v3000 = vadd.f32 %v2923, %v2999
  %3001 = vmatprep.mubr.f32.mxu0 %v48
  %3002 = vmatmul.mubr.f32.gmra.mrb[0].mxu0 %v47
  %v3003 = vpop.f32.mrb[0].mxu0
  %v3004 = vadd.f32 %v2927, %v3003
  %v3005 = vpop.f32.mrb[0].mxu0
  %v3006 = vadd.f32 %v2929, %v3005
  %3007 = vdwg.mxu0
  %3008 = vmatprep.subr.mxu0 %v1177
  %3009 = vmatpush1.msra.mxu0 %v1176
  %3010 = vmatprep.subr.mxu0 %v1184
  %3011 = vmatpush1.msra.mxu0 %v1183
  %3012 = vmatprep.subr.mxu0 %v1191
  %3013 = vmatpush1.msra.mxu0 %v1190
  %3014 = vmatprep.subr.mxu0 %v1198
  %3015 = vmatpush1.msra.mxu0 %v1197
  %3016 = vmatprep.subr.mxu0 %v1205
  %3017 = vmatpush1.msra.mxu0 %v1204
  %3018 = vmatprep.subr.mxu0 %v1212
  %3019 = vmatpush1.msra.mxu0 %v1211
  %3020 = vmatprep.subr.mxu0 %v1219
  %3021 = vmatpush1.msra.mxu0 %v1218
  %3022 = vmatprep.subr.mxu0 %v1226
  %3023 = vmatpush1.msra.mxu0 %v1225
  %3024 = vmatprep.subr.mxu0 %v1233
  %3025 = vmatpush1.msra.mxu0 %v1232
  %3026 = vmatprep.subr.mxu0 %v1240
  %3027 = vmatpush1.msra.mxu0 %v1239
  %3028 = vmatprep.subr.mxu0 %v1247
  %3029 = vmatpush1.msra.mxu0 %v1246
  %3030 = vmatprep.subr.mxu0 %v1254
  %3031 = vmatpush1.msra.mxu0 %v1253
  %3032 = vmatprep.subr.mxu0 %v1261
  %3033 = vmatpush1.msra.mxu0 %v1260
  %3034 = vmatprep.subr.mxu0 %v1268
  %3035 = vmatpush1.msra.mxu0 %v1267
  %3036 = vmatprep.subr.mxu0 %v1275
  %3037 = vmatpush1.msra.mxu0 %v1274
  %3038 = vmatprep.subr.mxu0 %v1282
  %3039 = vmatpush1.msra.mxu0 %v1281
  %3040 = vmatprep.subr.mxu0 %v1289
  %3041 = vmatpush1.msra.mxu0 %v1288
  %3042 = vmatprep.subr.mxu0 %v1296
  %3043 = vmatpush1.msra.mxu0 %v1295
  %3044 = vmatprep.subr.mxu0 %v1303
  %3045 = vmatpush1.msra.mxu0 %v1302
  %3046 = vmatprep.subr.mxu0 %v1310
  %3047 = vmatpush1.msra.mxu0 %v1309
  %3048 = vmatprep.subr.mxu0 %v1317
  %3049 = vmatpush1.msra.mxu0 %v1316
  %3050 = vmatprep.subr.mxu0 %v1324
  %3051 = vmatpush1.msra.mxu0 %v1323
  %3052 = vmatprep.subr.mxu0 %v1331
  %3053 = vmatpush1.msra.mxu0 %v1330
  %3054 = vmatprep.subr.mxu0 %v1338
  %3055 = vmatpush1.msra.mxu0 %v1337
  %3056 = vmatprep.subr.mxu0 %v1345
  %3057 = vmatpush1.msra.mxu0 %v1344
  %3058 = vmatprep.subr.mxu0 %v1352
  %3059 = vmatpush1.msra.mxu0 %v1351
  %3060 = vmatprep.subr.mxu0 %v1359
  %3061 = vmatpush1.msra.mxu0 %v1358
  %3062 = vmatprep.subr.mxu0 %v1366
  %3063 = vmatpush1.msra.mxu0 %v1365
  %3064 = vmatprep.subr.mxu0 %v1373
  %3065 = vmatpush1.msra.mxu0 %v1372
  %3066 = vmatprep.subr.mxu0 %v1380
  %3067 = vmatpush1.msra.mxu0 %v1379
  %3068 = vmatprep.subr.mxu0 %v1387
  %3069 = vmatpush1.msra.mxu0 %v1386
  %3070 = vmatprep.subr.mxu0 %v1394
  %3071 = vmatpush1.msra.mxu0 %v1393
  %3072 = vmatprep.mubr.f32.mxu0 %v37
  %3073 = vmatmul.mubr.f32.gmra.mrb[0].mxu0 %v36
  %v3074 = vpop.f32.mrb[0].mxu0
  %v3075 = vadd.f32 %v2998, %v3074
  %v3076 = vpop.f32.mrb[0].mxu0
  %v3077 = vadd.f32 %v3000, %v3076
  %3078 = vmatprep.mubr.f32.mxu0 %v50
  %3079 = vmatmul.mubr.f32.gmra.mrb[0].mxu0 %v49
  %v3080 = vpop.f32.mrb[0].mxu0
  %v3081 = vadd.f32 %v3004, %v3080
  %v3082 = vpop.f32.mrb[0].mxu0
  %v3083 = vadd.f32 %v3006, %v3082
  %3084 = vdwg.mxu0
  %3085 = vmatprep.subr.mxu0 %v1401
  %3086 = vmatpush1.msra.mxu0 %v1400
  %3087 = vmatprep.subr.mxu0 %v1408
  %3088 = vmatpush1.msra.mxu0 %v1407
  %3089 = vmatprep.subr.mxu0 %v1415
  %3090 = vmatpush1.msra.mxu0 %v1414
  %3091 = vmatprep.subr.mxu0 %v1422
  %3092 = vmatpush1.msra.mxu0 %v1421
  %3093 = vmatprep.subr.mxu0 %v1429
  %3094 = vmatpush1.msra.mxu0 %v1428
  %3095 = vmatprep.subr.mxu0 %v1436
  %3096 = vmatpush1.msra.mxu0 %v1435
  %3097 = vmatprep.subr.mxu0 %v1443
  %3098 = vmatpush1.msra.mxu0 %v1442
  %3099 = vmatprep.subr.mxu0 %v1450
  %3100 = vmatpush1.msra.mxu0 %v1449
  %3101 = vmatprep.subr.mxu0 %v1457
  %3102 = vmatpush1.msra.mxu0 %v1456
  %3103 = vmatprep.subr.mxu0 %v1464
  %3104 = vmatpush1.msra.mxu0 %v1463
  %3105 = vmatprep.subr.mxu0 %v1471
  %3106 = vmatpush1.msra.mxu0 %v1470
  %3107 = vmatprep.subr.mxu0 %v1478
  %3108 = vmatpush1.msra.mxu0 %v1477
  %3109 = vmatprep.subr.mxu0 %v1485
  %3110 = vmatpush1.msra.mxu0 %v1484
  %3111 = vmatprep.subr.mxu0 %v1492
  %3112 = vmatpush1.msra.mxu0 %v1491
  %3113 = vmatprep.subr.mxu0 %v1499
  %3114 = vmatpush1.msra.mxu0 %v1498
  %3115 = vmatprep.subr.mxu0 %v1506
  %3116 = vmatpush1.msra.mxu0 %v1505
  %3117 = vmatprep.subr.mxu0 0.0
  %3118 = vmatpush1.msra.mxu0 0.0
  %3119 = vmatprep.subr.mxu0 0.0
  %3120 = vmatpush1.msra.mxu0 0.0
  %3121 = vmatprep.subr.mxu0 0.0
  %3122 = vmatpush1.msra.mxu0 0.0
  %3123 = vmatprep.subr.mxu0 0.0
  %3124 = vmatpush1.msra.mxu0 0.0
  %3125 = vmatprep.subr.mxu0 0.0
  %3126 = vmatpush1.msra.mxu0 0.0
  %3127 = vmatprep.subr.mxu0 0.0
  %3128 = vmatpush1.msra.mxu0 0.0
  %3129 = vmatprep.subr.mxu0 0.0
  %3130 = vmatpush1.msra.mxu0 0.0
  %3131 = vmatprep.subr.mxu0 0.0
  %3132 = vmatpush1.msra.mxu0 0.0
  %3133 = vmatprep.subr.mxu0 0.0
  %3134 = vmatpush1.msra.mxu0 0.0
  %3135 = vmatprep.subr.mxu0 0.0
  %3136 = vmatpush1.msra.mxu0 0.0
  %3137 = vmatprep.subr.mxu0 0.0
  %3138 = vmatpush1.msra.mxu0 0.0
  %3139 = vmatprep.subr.mxu0 0.0
  %3140 = vmatpush1.msra.mxu0 0.0
  %3141 = vmatprep.subr.mxu0 0.0
  %3142 = vmatpush1.msra.mxu0 0.0
  %3143 = vmatprep.subr.mxu0 0.0
  %3144 = vmatpush1.msra.mxu0 0.0
  %3145 = vmatprep.subr.mxu0 0.0
  %3146 = vmatpush1.msra.mxu0 0.0
  %3147 = vmatprep.subr.mxu0 0.0
  %3148 = vmatpush1.msra.mxu0 0.0
  %3149 = vmatprep.mubr.f32.mxu0 0.0
  %3150 = vmatmul.mubr.f32.gmra.mrb[0].mxu0 %v38
  %v3151 = vpop.f32.mrb[0].mxu0
  %v3152 = vadd.f32 %v3075, %v3151
  %v3153 = vpop.f32.mrb[0].mxu0
  %v3154 = vadd.f32 %v3077, %v3153
  %3155 = vmatprep.mubr.f32.mxu0 0.0
  %3156 = vmatmul.mubr.f32.gmra.mrb[0].mxu0 %v51
  %v3157 = vpop.f32.mrb[0].mxu0
  %v3158 = vadd.f32 %v3081, %v3157
  %v3159 = vpop.f32.mrb[0].mxu0
  %v3160 = vadd.f32 %v3083, %v3159
  %3161 = vdwg.mxu0
  %3162 = vmatprep.subr.mxu0 0.0
  %3163 = vmatpush1.msra.mxu0 %v58
  %3164 = vmatprep.subr.mxu0 0.0
  %3165 = vmatpush1.msra.mxu0 %v65
  %3166 = vmatprep.subr.mxu0 0.0
  %3167 = vmatpush1.msra.mxu0 %v72
  %3168 = vmatprep.subr.mxu0 0.0
  %3169 = vmatpush1.msra.mxu0 %v79
  %3170 = vmatprep.subr.mxu0 0.0
  %3171 = vmatpush1.msra.mxu0 %v86
  %3172 = vmatprep.subr.mxu0 0.0
  %3173 = vmatpush1.msra.mxu0 %v93
  %3174 = vmatprep.subr.mxu0 0.0
  %3175 = vmatpush1.msra.mxu0 %v100
  %3176 = vmatprep.subr.mxu0 0.0
  %3177 = vmatpush1.msra.mxu0 %v107
  %3178 = vmatprep.subr.mxu0 0.0
  %3179 = vmatpush1.msra.mxu0 %v114
  %3180 = vmatprep.subr.mxu0 0.0
  %3181 = vmatpush1.msra.mxu0 %v121
  %3182 = vmatprep.subr.mxu0 0.0
  %3183 = vmatpush1.msra.mxu0 %v128
  %3184 = vmatprep.subr.mxu0 0.0
  %3185 = vmatpush1.msra.mxu0 %v135
  %3186 = vmatprep.subr.mxu0 0.0
  %3187 = vmatpush1.msra.mxu0 %v142
  %3188 = vmatprep.subr.mxu0 0.0
  %3189 = vmatpush1.msra.mxu0 %v149
  %3190 = vmatprep.subr.mxu0 0.0
  %3191 = vmatpush1.msra.mxu0 %v156
  %3192 = vmatprep.subr.mxu0 0.0
  %3193 = vmatpush1.msra.mxu0 %v163
  %3194 = vmatprep.subr.mxu0 0.0
  %3195 = vmatpush1.msra.mxu0 %v170
  %3196 = vmatprep.subr.mxu0 0.0
  %3197 = vmatpush1.msra.mxu0 %v177
  %3198 = vmatprep.subr.mxu0 0.0
  %3199 = vmatpush1.msra.mxu0 %v184
  %3200 = vmatprep.subr.mxu0 0.0
  %3201 = vmatpush1.msra.mxu0 %v191
  %3202 = vmatprep.subr.mxu0 0.0
  %3203 = vmatpush1.msra.mxu0 %v198
  %3204 = vmatprep.subr.mxu0 0.0
  %3205 = vmatpush1.msra.mxu0 %v205
  %3206 = vmatprep.subr.mxu0 0.0
  %3207 = vmatpush1.msra.mxu0 %v212
  %3208 = vmatprep.subr.mxu0 0.0
  %3209 = vmatpush1.msra.mxu0 %v219
  %3210 = vmatprep.subr.mxu0 0.0
  %3211 = vmatpush1.msra.mxu0 %v226
  %3212 = vmatprep.subr.mxu0 0.0
  %3213 = vmatpush1.msra.mxu0 %v233
  %3214 = vmatprep.subr.mxu0 0.0
  %3215 = vmatpush1.msra.mxu0 %v240
  %3216 = vmatprep.subr.mxu0 0.0
  %3217 = vmatpush1.msra.mxu0 %v247
  %3218 = vmatprep.subr.mxu0 0.0
  %3219 = vmatpush1.msra.mxu0 %v254
  %3220 = vmatprep.subr.mxu0 0.0
  %3221 = vmatpush1.msra.mxu0 %v261
  %3222 = vmatprep.subr.mxu0 0.0
  %3223 = vmatpush1.msra.mxu0 %v268
  %3224 = vmatprep.subr.mxu0 0.0
  %3225 = vmatpush1.msra.mxu0 %v275
  %3226 = vmatprep.mubr.f32.mxu0 %v27
  %3227 = vmatmul.mubr.f32.gmra.mrb[0].mxu0 %v26
  %v3228 = vpop.f32.mrb[0].mxu0
  %v3229 = vadd.f32 %v1537, %v3228
  %v3230 = vpop.f32.mrb[0].mxu0
  %3231 = vmatprep.mubr.f32.mxu0 %v40
  %3232 = vmatmul.mubr.f32.gmra.mrb[0].mxu0 %v39
  %v3233 = vpop.f32.mrb[0].mxu0
  %v3234 = vadd.f32 %v1537, %v3233
  %v3235 = vpop.f32.mrb[0].mxu0
  %3236 = vdwg.mxu0
  %3237 = vmatprep.subr.mxu0 0.0
  %3238 = vmatpush1.msra.mxu0 %v282
  %3239 = vmatprep.subr.mxu0 0.0
  %3240 = vmatpush1.msra.mxu0 %v289
  %3241 = vmatprep.subr.mxu0 0.0
  %3242 = vmatpush1.msra.mxu0 %v296
  %3243 = vmatprep.subr.mxu0 0.0
  %3244 = vmatpush1.msra.mxu0 %v303
  %3245 = vmatprep.subr.mxu0 0.0
  %3246 = vmatpush1.msra.mxu0 %v310
  %3247 = vmatprep.subr.mxu0 0.0
  %3248 = vmatpush1.msra.mxu0 %v317
  %3249 = vmatprep.subr.mxu0 0.0
  %3250 = vmatpush1.msra.mxu0 %v324
  %3251 = vmatprep.subr.mxu0 0.0
  %3252 = vmatpush1.msra.mxu0 %v331
  %3253 = vmatprep.subr.mxu0 0.0
  %3254 = vmatpush1.msra.mxu0 %v338
  %3255 = vmatprep.subr.mxu0 0.0
  %3256 = vmatpush1.msra.mxu0 %v345
  %3257 = vmatprep.subr.mxu0 0.0
  %3258 = vmatpush1.msra.mxu0 %v352
  %3259 = vmatprep.subr.mxu0 0.0
  %3260 = vmatpush1.msra.mxu0 %v359
  %3261 = vmatprep.subr.mxu0 0.0
  %3262 = vmatpush1.msra.mxu0 %v366
  %3263 = vmatprep.subr.mxu0 0.0
  %3264 = vmatpush1.msra.mxu0 %v373
  %3265 = vmatprep.subr.mxu0 0.0
  %3266 = vmatpush1.msra.mxu0 %v380
  %3267 = vmatprep.subr.mxu0 0.0
  %3268 = vmatpush1.msra.mxu0 %v387
  %3269 = vmatprep.subr.mxu0 0.0
  %3270 = vmatpush1.msra.mxu0 %v394
  %3271 = vmatprep.subr.mxu0 0.0
  %3272 = vmatpush1.msra.mxu0 %v401
  %3273 = vmatprep.subr.mxu0 0.0
  %3274 = vmatpush1.msra.mxu0 %v408
  %3275 = vmatprep.subr.mxu0 0.0
  %3276 = vmatpush1.msra.mxu0 %v415
  %3277 = vmatprep.subr.mxu0 0.0
  %3278 = vmatpush1.msra.mxu0 %v422
  %3279 = vmatprep.subr.mxu0 0.0
  %3280 = vmatpush1.msra.mxu0 %v429
  %3281 = vmatprep.subr.mxu0 0.0
  %3282 = vmatpush1.msra.mxu0 %v436
  %3283 = vmatprep.subr.mxu0 0.0
  %3284 = vmatpush1.msra.mxu0 %v443
  %3285 = vmatprep.subr.mxu0 0.0
  %3286 = vmatpush1.msra.mxu0 %v450
  %3287 = vmatprep.subr.mxu0 0.0
  %3288 = vmatpush1.msra.mxu0 %v457
  %3289 = vmatprep.subr.mxu0 0.0
  %3290 = vmatpush1.msra.mxu0 %v464
  %3291 = vmatprep.subr.mxu0 0.0
  %3292 = vmatpush1.msra.mxu0 %v471
  %3293 = vmatprep.subr.mxu0 0.0
  %3294 = vmatpush1.msra.mxu0 %v478
  %3295 = vmatprep.subr.mxu0 0.0
  %3296 = vmatpush1.msra.mxu0 %v485
  %3297 = vmatprep.subr.mxu0 0.0
  %3298 = vmatpush1.msra.mxu0 %v492
  %3299 = vmatprep.subr.mxu0 0.0
  %3300 = vmatpush1.msra.mxu0 %v499
  %3301 = vmatprep.mubr.f32.mxu0 %v29
  %3302 = vmatmul.mubr.f32.gmra.mrb[0].mxu0 %v28
  %v3303 = vpop.f32.mrb[0].mxu0
  %v3304 = vadd.f32 %v3229, %v3303
  %v3305 = vpop.f32.mrb[0].mxu0
  %3306 = vmatprep.mubr.f32.mxu0 %v42
  %3307 = vmatmul.mubr.f32.gmra.mrb[0].mxu0 %v41
  %v3308 = vpop.f32.mrb[0].mxu0
  %v3309 = vadd.f32 %v3234, %v3308
  %v3310 = vpop.f32.mrb[0].mxu0
  %3311 = vdwg.mxu0
  %3312 = vmatprep.subr.mxu0 0.0
  %3313 = vmatpush1.msra.mxu0 %v506
  %3314 = vmatprep.subr.mxu0 0.0
  %3315 = vmatpush1.msra.mxu0 %v513
  %3316 = vmatprep.subr.mxu0 0.0
  %3317 = vmatpush1.msra.mxu0 %v520
  %3318 = vmatprep.subr.mxu0 0.0
  %3319 = vmatpush1.msra.mxu0 %v527
  %3320 = vmatprep.subr.mxu0 0.0
  %3321 = vmatpush1.msra.mxu0 %v534
  %3322 = vmatprep.subr.mxu0 0.0
  %3323 = vmatpush1.msra.mxu0 %v541
  %3324 = vmatprep.subr.mxu0 0.0
  %3325 = vmatpush1.msra.mxu0 %v548
  %3326 = vmatprep.subr.mxu0 0.0
  %3327 = vmatpush1.msra.mxu0 %v555
  %3328 = vmatprep.subr.mxu0 0.0
  %3329 = vmatpush1.msra.mxu0 %v562
  %3330 = vmatprep.subr.mxu0 0.0
  %3331 = vmatpush1.msra.mxu0 %v569
  %3332 = vmatprep.subr.mxu0 0.0
  %3333 = vmatpush1.msra.mxu0 %v576
  %3334 = vmatprep.subr.mxu0 0.0
  %3335 = vmatpush1.msra.mxu0 %v583
  %3336 = vmatprep.subr.mxu0 0.0
  %3337 = vmatpush1.msra.mxu0 %v590
  %3338 = vmatprep.subr.mxu0 0.0
  %3339 = vmatpush1.msra.mxu0 %v597
  %3340 = vmatprep.subr.mxu0 0.0
  %3341 = vmatpush1.msra.mxu0 %v604
  %3342 = vmatprep.subr.mxu0 0.0
  %3343 = vmatpush1.msra.mxu0 %v611
  %3344 = vmatprep.subr.mxu0 0.0
  %3345 = vmatpush1.msra.mxu0 %v618
  %3346 = vmatprep.subr.mxu0 0.0
  %3347 = vmatpush1.msra.mxu0 %v625
  %3348 = vmatprep.subr.mxu0 0.0
  %3349 = vmatpush1.msra.mxu0 %v632
  %3350 = vmatprep.subr.mxu0 0.0
  %3351 = vmatpush1.msra.mxu0 %v639
  %3352 = vmatprep.subr.mxu0 0.0
  %3353 = vmatpush1.msra.mxu0 %v646
  %3354 = vmatprep.subr.mxu0 0.0
  %3355 = vmatpush1.msra.mxu0 %v653
  %3356 = vmatprep.subr.mxu0 0.0
  %3357 = vmatpush1.msra.mxu0 %v660
  %3358 = vmatprep.subr.mxu0 0.0
  %3359 = vmatpush1.msra.mxu0 %v667
  %3360 = vmatprep.subr.mxu0 0.0
  %3361 = vmatpush1.msra.mxu0 %v674
  %3362 = vmatprep.subr.mxu0 0.0
  %3363 = vmatpush1.msra.mxu0 %v681
  %3364 = vmatprep.subr.mxu0 0.0
  %3365 = vmatpush1.msra.mxu0 %v688
  %3366 = vmatprep.subr.mxu0 0.0
  %3367 = vmatpush1.msra.mxu0 %v695
  %3368 = vmatprep.subr.mxu0 0.0
  %3369 = vmatpush1.msra.mxu0 %v702
  %3370 = vmatprep.subr.mxu0 0.0
  %3371 = vmatpush1.msra.mxu0 %v709
  %3372 = vmatprep.subr.mxu0 0.0
  %3373 = vmatpush1.msra.mxu0 %v716
  %3374 = vmatprep.subr.mxu0 0.0
  %3375 = vmatpush1.msra.mxu0 %v723
  %3376 = vmatprep.mubr.f32.mxu0 %v31
  %3377 = vmatmul.mubr.f32.gmra.mrb[0].mxu0 %v30
  %v3378 = vpop.f32.mrb[0].mxu0
  %v3379 = vadd.f32 %v3304, %v3378
  %v3380 = vpop.f32.mrb[0].mxu0
  %3381 = vmatprep.mubr.f32.mxu0 %v44
  %3382 = vmatmul.mubr.f32.gmra.mrb[0].mxu0 %v43
  %v3383 = vpop.f32.mrb[0].mxu0
  %v3384 = vadd.f32 %v3309, %v3383
  %v3385 = vpop.f32.mrb[0].mxu0
  %3386 = vdwg.mxu0
  %3387 = vmatprep.subr.mxu0 0.0
  %3388 = vmatpush1.msra.mxu0 %v730
  %3389 = vmatprep.subr.mxu0 0.0
  %3390 = vmatpush1.msra.mxu0 %v737
  %3391 = vmatprep.subr.mxu0 0.0
  %3392 = vmatpush1.msra.mxu0 %v744
  %3393 = vmatprep.subr.mxu0 0.0
  %3394 = vmatpush1.msra.mxu0 %v751
  %3395 = vmatprep.subr.mxu0 0.0
  %3396 = vmatpush1.msra.mxu0 %v758
  %3397 = vmatprep.subr.mxu0 0.0
  %3398 = vmatpush1.msra.mxu0 %v765
  %3399 = vmatprep.subr.mxu0 0.0
  %3400 = vmatpush1.msra.mxu0 %v772
  %3401 = vmatprep.subr.mxu0 0.0
  %3402 = vmatpush1.msra.mxu0 %v779
  %3403 = vmatprep.subr.mxu0 0.0
  %3404 = vmatpush1.msra.mxu0 %v786
  %3405 = vmatprep.subr.mxu0 0.0
  %3406 = vmatpush1.msra.mxu0 %v793
  %3407 = vmatprep.subr.mxu0 0.0
  %3408 = vmatpush1.msra.mxu0 %v800
  %3409 = vmatprep.subr.mxu0 0.0
  %3410 = vmatpush1.msra.mxu0 %v807
  %3411 = vmatprep.subr.mxu0 0.0
  %3412 = vmatpush1.msra.mxu0 %v814
  %3413 = vmatprep.subr.mxu0 0.0
  %3414 = vmatpush1.msra.mxu0 %v821
  %3415 = vmatprep.subr.mxu0 0.0
  %3416 = vmatpush1.msra.mxu0 %v828
  %3417 = vmatprep.subr.mxu0 0.0
  %3418 = vmatpush1.msra.mxu0 %v835
  %3419 = vmatprep.subr.mxu0 0.0
  %3420 = vmatpush1.msra.mxu0 %v842
  %3421 = vmatprep.subr.mxu0 0.0
  %3422 = vmatpush1.msra.mxu0 %v849
  %3423 = vmatprep.subr.mxu0 0.0
  %3424 = vmatpush1.msra.mxu0 %v856
  %3425 = vmatprep.subr.mxu0 0.0
  %3426 = vmatpush1.msra.mxu0 %v863
  %3427 = vmatprep.subr.mxu0 0.0
  %3428 = vmatpush1.msra.mxu0 %v870
  %3429 = vmatprep.subr.mxu0 0.0
  %3430 = vmatpush1.msra.mxu0 %v877
  %3431 = vmatprep.subr.mxu0 0.0
  %3432 = vmatpush1.msra.mxu0 %v884
  %3433 = vmatprep.subr.mxu0 0.0
  %3434 = vmatpush1.msra.mxu0 %v891
  %3435 = vmatprep.subr.mxu0 0.0
  %3436 = vmatpush1.msra.mxu0 %v898
  %3437 = vmatprep.subr.mxu0 0.0
  %3438 = vmatpush1.msra.mxu0 %v905
  %3439 = vmatprep.subr.mxu0 0.0
  %3440 = vmatpush1.msra.mxu0 %v912
  %3441 = vmatprep.subr.mxu0 0.0
  %3442 = vmatpush1.msra.mxu0 %v919
  %3443 = vmatprep.subr.mxu0 0.0
  %3444 = vmatpush1.msra.mxu0 %v926
  %3445 = vmatprep.subr.mxu0 0.0
  %3446 = vmatpush1.msra.mxu0 %v933
  %3447 = vmatprep.subr.mxu0 0.0
  %3448 = vmatpush1.msra.mxu0 %v940
  %3449 = vmatprep.subr.mxu0 0.0
  %3450 = vmatpush1.msra.mxu0 %v947
  %3451 = vmatprep.mubr.f32.mxu0 %v33
  %3452 = vmatmul.mubr.f32.gmra.mrb[0].mxu0 %v32
  %v3453 = vpop.f32.mrb[0].mxu0
  %v3454 = vadd.f32 %v3379, %v3453
  %v3455 = vpop.f32.mrb[0].mxu0
  %3456 = vmatprep.mubr.f32.mxu0 %v46
  %3457 = vmatmul.mubr.f32.gmra.mrb[0].mxu0 %v45
  %v3458 = vpop.f32.mrb[0].mxu0
  %v3459 = vadd.f32 %v3384, %v3458
  %v3460 = vpop.f32.mrb[0].mxu0
  %3461 = vdwg.mxu0
  %3462 = vmatprep.subr.mxu0 0.0
  %3463 = vmatpush1.msra.mxu0 %v954
  %3464 = vmatprep.subr.mxu0 0.0
  %3465 = vmatpush1.msra.mxu0 %v961
  %3466 = vmatprep.subr.mxu0 0.0
  %3467 = vmatpush1.msra.mxu0 %v968
  %3468 = vmatprep.subr.mxu0 0.0
  %3469 = vmatpush1.msra.mxu0 %v975
  %3470 = vmatprep.subr.mxu0 0.0
  %3471 = vmatpush1.msra.mxu0 %v982
  %3472 = vmatprep.subr.mxu0 0.0
  %3473 = vmatpush1.msra.mxu0 %v989
  %3474 = vmatprep.subr.mxu0 0.0
  %3475 = vmatpush1.msra.mxu0 %v996
  %3476 = vmatprep.subr.mxu0 0.0
  %3477 = vmatpush1.msra.mxu0 %v1003
  %3478 = vmatprep.subr.mxu0 0.0
  %3479 = vmatpush1.msra.mxu0 %v1010
  %3480 = vmatprep.subr.mxu0 0.0
  %3481 = vmatpush1.msra.mxu0 %v1017
  %3482 = vmatprep.subr.mxu0 0.0
  %3483 = vmatpush1.msra.mxu0 %v1024
  %3484 = vmatprep.subr.mxu0 0.0
  %3485 = vmatpush1.msra.mxu0 %v1031
  %3486 = vmatprep.subr.mxu0 0.0
  %3487 = vmatpush1.msra.mxu0 %v1038
  %3488 = vmatprep.subr.mxu0 0.0
  %3489 = vmatpush1.msra.mxu0 %v1045
  %3490 = vmatprep.subr.mxu0 0.0
  %3491 = vmatpush1.msra.mxu0 %v1052
  %3492 = vmatprep.subr.mxu0 0.0
  %3493 = vmatpush1.msra.mxu0 %v1059
  %3494 = vmatprep.subr.mxu0 0.0
  %3495 = vmatpush1.msra.mxu0 %v1066
  %3496 = vmatprep.subr.mxu0 0.0
  %3497 = vmatpush1.msra.mxu0 %v1073
  %3498 = vmatprep.subr.mxu0 0.0
  %3499 = vmatpush1.msra.mxu0 %v1080
  %3500 = vmatprep.subr.mxu0 0.0
  %3501 = vmatpush1.msra.mxu0 %v1087
  %3502 = vmatprep.subr.mxu0 0.0
  %3503 = vmatpush1.msra.mxu0 %v1094
  %3504 = vmatprep.subr.mxu0 0.0
  %3505 = vmatpush1.msra.mxu0 %v1101
  %3506 = vmatprep.subr.mxu0 0.0
  %3507 = vmatpush1.msra.mxu0 %v1108
  %3508 = vmatprep.subr.mxu0 0.0
  %3509 = vmatpush1.msra.mxu0 %v1115
  %3510 = vmatprep.subr.mxu0 0.0
  %3511 = vmatpush1.msra.mxu0 %v1122
  %3512 = vmatprep.subr.mxu0 0.0
  %3513 = vmatpush1.msra.mxu0 %v1129
  %3514 = vmatprep.subr.mxu0 0.0
  %3515 = vmatpush1.msra.mxu0 %v1136
  %3516 = vmatprep.subr.mxu0 0.0
  %3517 = vmatpush1.msra.mxu0 %v1143
  %3518 = vmatprep.subr.mxu0 0.0
  %3519 = vmatpush1.msra.mxu0 %v1150
  %3520 = vmatprep.subr.mxu0 0.0
  %3521 = vmatpush1.msra.mxu0 %v1157
  %3522 = vmatprep.subr.mxu0 0.0
  %3523 = vmatpush1.msra.mxu0 %v1164
  %3524 = vmatprep.subr.mxu0 0.0
  %3525 = vmatpush1.msra.mxu0 %v1171
  %3526 = vmatprep.mubr.f32.mxu0 %v35
  %3527 = vmatmul.mubr.f32.gmra.mrb[0].mxu0 %v34
  %v3528 = vpop.f32.mrb[0].mxu0
  %v3529 = vadd.f32 %v3454, %v3528
  %v3530 = vpop.f32.mrb[0].mxu0
  %3531 = vmatprep.mubr.f32.mxu0 %v48
  %3532 = vmatmul.mubr.f32.gmra.mrb[0].mxu0 %v47
  %v3533 = vpop.f32.mrb[0].mxu0
  %v3534 = vadd.f32 %v3459, %v3533
  %v3535 = vpop.f32.mrb[0].mxu0
  %3536 = vdwg.mxu0
  %3537 = vmatprep.subr.mxu0 0.0
  %3538 = vmatpush1.msra.mxu0 %v1178
  %3539 = vmatprep.subr.mxu0 0.0
  %3540 = vmatpush1.msra.mxu0 %v1185
  %3541 = vmatprep.subr.mxu0 0.0
  %3542 = vmatpush1.msra.mxu0 %v1192
  %3543 = vmatprep.subr.mxu0 0.0
  %3544 = vmatpush1.msra.mxu0 %v1199
  %3545 = vmatprep.subr.mxu0 0.0
  %3546 = vmatpush1.msra.mxu0 %v1206
  %3547 = vmatprep.subr.mxu0 0.0
  %3548 = vmatpush1.msra.mxu0 %v1213
  %3549 = vmatprep.subr.mxu0 0.0
  %3550 = vmatpush1.msra.mxu0 %v1220
  %3551 = vmatprep.subr.mxu0 0.0
  %3552 = vmatpush1.msra.mxu0 %v1227
  %3553 = vmatprep.subr.mxu0 0.0
  %3554 = vmatpush1.msra.mxu0 %v1234
  %3555 = vmatprep.subr.mxu0 0.0
  %3556 = vmatpush1.msra.mxu0 %v1241
  %3557 = vmatprep.subr.mxu0 0.0
  %3558 = vmatpush1.msra.mxu0 %v1248
  %3559 = vmatprep.subr.mxu0 0.0
  %3560 = vmatpush1.msra.mxu0 %v1255
  %3561 = vmatprep.subr.mxu0 0.0
  %3562 = vmatpush1.msra.mxu0 %v1262
  %3563 = vmatprep.subr.mxu0 0.0
  %3564 = vmatpush1.msra.mxu0 %v1269
  %3565 = vmatprep.subr.mxu0 0.0
  %3566 = vmatpush1.msra.mxu0 %v1276
  %3567 = vmatprep.subr.mxu0 0.0
  %3568 = vmatpush1.msra.mxu0 %v1283
  %3569 = vmatprep.subr.mxu0 0.0
  %3570 = vmatpush1.msra.mxu0 %v1290
  %3571 = vmatprep.subr.mxu0 0.0
  %3572 = vmatpush1.msra.mxu0 %v1297
  %3573 = vmatprep.subr.mxu0 0.0
  %3574 = vmatpush1.msra.mxu0 %v1304
  %3575 = vmatprep.subr.mxu0 0.0
  %3576 = vmatpush1.msra.mxu0 %v1311
  %3577 = vmatprep.subr.mxu0 0.0
  %3578 = vmatpush1.msra.mxu0 %v1318
  %3579 = vmatprep.subr.mxu0 0.0
  %3580 = vmatpush1.msra.mxu0 %v1325
  %3581 = vmatprep.subr.mxu0 0.0
  %3582 = vmatpush1.msra.mxu0 %v1332
  %3583 = vmatprep.subr.mxu0 0.0
  %3584 = vmatpush1.msra.mxu0 %v1339
  %3585 = vmatprep.subr.mxu0 0.0
  %3586 = vmatpush1.msra.mxu0 %v1346
  %3587 = vmatprep.subr.mxu0 0.0
  %3588 = vmatpush1.msra.mxu0 %v1353
  %3589 = vmatprep.subr.mxu0 0.0
  %3590 = vmatpush1.msra.mxu0 %v1360
  %3591 = vmatprep.subr.mxu0 0.0
  %3592 = vmatpush1.msra.mxu0 %v1367
  %3593 = vmatprep.subr.mxu0 0.0
  %3594 = vmatpush1.msra.mxu0 %v1374
  %3595 = vmatprep.subr.mxu0 0.0
  %3596 = vmatpush1.msra.mxu0 %v1381
  %3597 = vmatprep.subr.mxu0 0.0
  %3598 = vmatpush1.msra.mxu0 %v1388
  %3599 = vmatprep.subr.mxu0 0.0
  %3600 = vmatpush1.msra.mxu0 %v1395
  %3601 = vmatprep.mubr.f32.mxu0 %v37
  %3602 = vmatmul.mubr.f32.gmra.mrb[0].mxu0 %v36
  %v3603 = vpop.f32.mrb[0].mxu0
  %v3604 = vadd.f32 %v3529, %v3603
  %v3605 = vpop.f32.mrb[0].mxu0
  %3606 = vmatprep.mubr.f32.mxu0 %v50
  %3607 = vmatmul.mubr.f32.gmra.mrb[0].mxu0 %v49
  %v3608 = vpop.f32.mrb[0].mxu0
  %v3609 = vadd.f32 %v3534, %v3608
  %v3610 = vpop.f32.mrb[0].mxu0
  %3611 = vdwg.mxu0
  %3612 = vmatprep.subr.mxu0 0.0
  %3613 = vmatpush1.msra.mxu0 %v1402
  %3614 = vmatprep.subr.mxu0 0.0
  %3615 = vmatpush1.msra.mxu0 %v1409
  %3616 = vmatprep.subr.mxu0 0.0
  %3617 = vmatpush1.msra.mxu0 %v1416
  %3618 = vmatprep.subr.mxu0 0.0
  %3619 = vmatpush1.msra.mxu0 %v1423
  %3620 = vmatprep.subr.mxu0 0.0
  %3621 = vmatpush1.msra.mxu0 %v1430
  %3622 = vmatprep.subr.mxu0 0.0
  %3623 = vmatpush1.msra.mxu0 %v1437
  %3624 = vmatprep.subr.mxu0 0.0
  %3625 = vmatpush1.msra.mxu0 %v1444
  %3626 = vmatprep.subr.mxu0 0.0
  %3627 = vmatpush1.msra.mxu0 %v1451
  %3628 = vmatprep.subr.mxu0 0.0
  %3629 = vmatpush1.msra.mxu0 %v1458
  %3630 = vmatprep.subr.mxu0 0.0
  %3631 = vmatpush1.msra.mxu0 %v1465
  %3632 = vmatprep.subr.mxu0 0.0
  %3633 = vmatpush1.msra.mxu0 %v1472
  %3634 = vmatprep.subr.mxu0 0.0
  %3635 = vmatpush1.msra.mxu0 %v1479
  %3636 = vmatprep.subr.mxu0 0.0
  %3637 = vmatpush1.msra.mxu0 %v1486
  %3638 = vmatprep.subr.mxu0 0.0
  %3639 = vmatpush1.msra.mxu0 %v1493
  %3640 = vmatprep.subr.mxu0 0.0
  %3641 = vmatpush1.msra.mxu0 %v1500
  %3642 = vmatprep.subr.mxu0 0.0
  %3643 = vmatpush1.msra.mxu0 %v1507
  %3644 = vmatprep.subr.mxu0 0.0
  %3645 = vmatpush1.msra.mxu0 0.0
  %3646 = vmatprep.subr.mxu0 0.0
  %3647 = vmatpush1.msra.mxu0 0.0
  %3648 = vmatprep.subr.mxu0 0.0
  %3649 = vmatpush1.msra.mxu0 0.0
  %3650 = vmatprep.subr.mxu0 0.0
  %3651 = vmatpush1.msra.mxu0 0.0
  %3652 = vmatprep.subr.mxu0 0.0
  %3653 = vmatpush1.msra.mxu0 0.0
  %3654 = vmatprep.subr.mxu0 0.0
  %3655 = vmatpush1.msra.mxu0 0.0
  %3656 = vmatprep.subr.mxu0 0.0
  %3657 = vmatpush1.msra.mxu0 0.0
  %3658 = vmatprep.subr.mxu0 0.0
  %3659 = vmatpush1.msra.mxu0 0.0
  %3660 = vmatprep.subr.mxu0 0.0
  %3661 = vmatpush1.msra.mxu0 0.0
  %3662 = vmatprep.subr.mxu0 0.0
  %3663 = vmatpush1.msra.mxu0 0.0
  %3664 = vmatprep.subr.mxu0 0.0
  %3665 = vmatpush1.msra.mxu0 0.0
  %3666 = vmatprep.subr.mxu0 0.0
  %3667 = vmatpush1.msra.mxu0 0.0
  %3668 = vmatprep.subr.mxu0 0.0
  %3669 = vmatpush1.msra.mxu0 0.0
  %3670 = vmatprep.subr.mxu0 0.0
  %3671 = vmatpush1.msra.mxu0 0.0
  %3672 = vmatprep.subr.mxu0 0.0
  %3673 = vmatpush1.msra.mxu0 0.0
  %3674 = vmatprep.subr.mxu0 0.0
  %3675 = vmatpush1.msra.mxu0 0.0
  %3676 = vmatprep.mubr.f32.mxu0 0.0
  %3677 = vmatmul.mubr.f32.gmra.mrb[0].mxu0 %v38
  %v3678 = vpop.f32.mrb[0].mxu0
  %v3679 = vadd.f32 %v3604, %v3678
  %v3680 = vpop.f32.mrb[0].mxu0
  %3681 = vmatprep.mubr.f32.mxu0 0.0
  %3682 = vmatmul.mubr.f32.gmra.mrb[0].mxu0 %v51
  %v3683 = vpop.f32.mrb[0].mxu0
  %v3684 = vadd.f32 %v3609, %v3683
  %v3685 = vpop.f32.mrb[0].mxu0
  %3686 = vdwg.mxu0
  %v3687 = vld [vmem:[%s3] sm:$0xff]
  %v3688 = vld [vmem:[%s3 + $0x8] sm:$0xff]
  %v3689 = vld [vmem:[%s3 + $0x10] sm:$0xff]
  %v3690 = vld [vmem:[%s3 + $0x18] sm:$0xff]
  %v3691 = vld [vmem:[%s3 + $0x20] sm:$0xff]
  %v3692 = vld [vmem:[%s3 + $0x28] sm:$0xff]
  %v3693 = vld [vmem:[%s3 + $0x30] sm:$0xff]
  %v3694 = vld [vmem:[%s3 + $0x38] sm:$0xff]
  %v3695 = vld [vmem:[%s3 + $0x40] sm:$0xff]
  %v3696 = vld [vmem:[%s3 + $0x48] sm:$0xff]
  %v3697 = vld [vmem:[%s3 + $0x50] sm:$0xff]
  %v3698 = vld [vmem:[%s3 + $0x58] sm:$0xff]
  %v3699 = vld [vmem:[%s3 + $0x60] sm:$0xff]
  %v3700 = vld [vmem:[%s3 + $0x68] sm:$0xff]
  %v3701 = vld [vmem:[%s3 + $0x70] sm:$0xff]
  %v3702 = vld [vmem:[%s3 + $0x78] sm:$0xff]
  %v3703 = vld [vmem:[%s3 + $0x80] sm:$0xff]
  %v3704 = vld [vmem:[%s3 + $0x88] sm:$0xff]
  %v3705 = vld [vmem:[%s3 + $0x90] sm:$0xff]
  %v3706 = vld [vmem:[%s3 + $0x98] sm:$0xff]
  %v3707 = vld [vmem:[%s3 + $0xa0] sm:$0xff]
  %v3708 = vld [vmem:[%s3 + $0xa8] sm:$0xff]
  %v3709 = vld [vmem:[%s3 + $0xb0] sm:$0xff]
  %v3710 = vld [vmem:[%s3 + $0xb8] sm:$0xff]
  %v3711 = vld [vmem:[%s3 + $0xc0] sm:$0xff]
  %v3712 = vld [vmem:[%s3 + $0xc8] sm:$0xff]
  %v3713 = vld [vmem:[%s3 + $0xd0] sm:$0xff]
  %v3714 = vld [vmem:[%s3 + $0xd8] sm:$0xff]
  %v3715 = vld [vmem:[%s3 + $0xe0] sm:$0xff]
  %v3716 = vld [vmem:[%s3 + $0xe8] sm:$0xff]
  %v3717 = vld [vmem:[%s3 + $0xf0] sm:$0xff]
  %v3718 = vld [vmem:[%s3 + $0xf8] sm:$0xff]
  %v3719 = vld [vmem:[%s3 + $0x100] sm:$0xff]
  %v3720 = vld [vmem:[%s3 + $0x108] sm:$0xff]
  %v3721 = vld [vmem:[%s3 + $0x110] sm:$0xff]
  %v3722 = vld [vmem:[%s3 + $0x118] sm:$0xff]
  %v3723 = vld [vmem:[%s3 + $0x120] sm:$0xff]
  %v3724 = vld [vmem:[%s3 + $0x128] sm:$0xff]
  %v3725 = vld [vmem:[%s3 + $0x130] sm:$0xff]
  %v3726 = vld [vmem:[%s3 + $0x138] sm:$0xff]
  %v3727 = vld [vmem:[%s3 + $0x140] sm:$0xff]
  %v3728 = vld [vmem:[%s3 + $0x148] sm:$0xff]
  %v3729 = vld [vmem:[%s3 + $0x150] sm:$0xff]
  %v3730 = vld [vmem:[%s3 + $0x158] sm:$0xff]
  %v3731 = vld [vmem:[%s3 + $0x160] sm:$0xff]
  %v3732 = vld [vmem:[%s3 + $0x168] sm:$0xff]
  %v3733 = vld [vmem:[%s3 + $0x170] sm:$0xff]
  %v3734 = vld [vmem:[%s3 + $0x178] sm:$0xff]
  %v3735 = vld [vmem:[%s3 + $0x180] sm:$0xff]
  %v3736 = vld [vmem:[%s3 + $0x188] sm:$0xff]
  %v3737 = vld [vmem:[%s3 + $0x190] sm:$0xff]
  %v3738 = vld [vmem:[%s3 + $0x198] sm:$0xff]
  %v3739 = vld [vmem:[%s3 + $0x1a0] sm:$0xff]
  %v3740 = vld [vmem:[%s3 + $0x1a8] sm:$0xff]
  %v3741 = vld [vmem:[%s3 + $0x1b0] sm:$0xff]
  %v3742 = vld [vmem:[%s3 + $0x1b8] sm:$0xff]
  %v3743 = vld [vmem:[%s3 + $0x1c0] sm:$0xff]
  %v3744 = vld [vmem:[%s3 + $0x1c8] sm:$0xff]
  %v3745 = vld [vmem:[%s3 + $0x1d0] sm:$0xff]
  %v3746 = vld [vmem:[%s3 + $0x1d8] sm:$0xff]
  %v3747 = vld [vmem:[%s3 + $0x1e0] sm:$0xff]
  %v3748 = vld [vmem:[%s3 + $0x1e8] sm:$0xff]
  %v3749 = vld [vmem:[%s3 + $0x1f0] sm:$0xff]
  %v3750 = vld [vmem:[%s3 + $0x1f8] sm:$0xff]
  %v3751 = vld [vmem:[%s3 + $0x200] sm:$0xff]
  %v3752 = vld [vmem:[%s3 + $0x208] sm:$0xff]
  %v3753 = vld [vmem:[%s3 + $0x210] sm:$0xff]
  %v3754 = vld [vmem:[%s3 + $0x218] sm:$0xff]
  %v3755 = vld [vmem:[%s3 + $0x220] sm:$0xff]
  %v3756 = vld [vmem:[%s3 + $0x228] sm:$0xff]
  %v3757 = vld [vmem:[%s3 + $0x230] sm:$0xff]
  %v3758 = vld [vmem:[%s3 + $0x238] sm:$0xff]
  %v3759 = vld [vmem:[%s3 + $0x240] sm:$0xff]
  %v3760 = vld [vmem:[%s3 + $0x248] sm:$0xff]
  %v3761 = vld [vmem:[%s3 + $0x250] sm:$0xff]
  %v3762 = vld [vmem:[%s3 + $0x258] sm:$0xff]
  %v3763 = vld [vmem:[%s3 + $0x260] sm:$0xff]
  %v3764 = vld [vmem:[%s3 + $0x268] sm:$0xff]
  %v3765 = vld [vmem:[%s3 + $0x270] sm:$0xff]
  %v3766 = vld [vmem:[%s3 + $0x278] sm:$0xff]
  %v3767 = vld [vmem:[%s3 + $0x280] sm:$0xff]
  %v3768 = vld [vmem:[%s3 + $0x288] sm:$0xff]
  %v3769 = vld [vmem:[%s3 + $0x290] sm:$0xff]
  %v3770 = vld [vmem:[%s3 + $0x298] sm:$0xff]
  %v3771 = vld [vmem:[%s3 + $0x2a0] sm:$0xff]
  %v3772 = vld [vmem:[%s3 + $0x2a8] sm:$0xff]
  %v3773 = vld [vmem:[%s3 + $0x2b0] sm:$0xff]
  %v3774 = vld [vmem:[%s3 + $0x2b8] sm:$0xff]
  %v3775 = vld [vmem:[%s3 + $0x2c0] sm:$0xff]
  %v3776 = vld [vmem:[%s3 + $0x2c8] sm:$0xff]
  %v3777 = vld [vmem:[%s3 + $0x2d0] sm:$0xff]
  %v3778 = vld [vmem:[%s3 + $0x2d8] sm:$0xff]
  %v3779 = vld [vmem:[%s3 + $0x2e0] sm:$0xff]
  %v3780 = vld [vmem:[%s3 + $0x2e8] sm:$0xff]
  %v3781 = vld [vmem:[%s3 + $0x2f0] sm:$0xff]
  %v3782 = vld [vmem:[%s3 + $0x2f8] sm:$0xff]
  %v3783 = vld [vmem:[%s3 + $0x300] sm:$0xff]
  %v3784 = vld [vmem:[%s3 + $0x308] sm:$0xff]
  %v3785 = vld [vmem:[%s3 + $0x310] sm:$0xff]
  %v3786 = vld [vmem:[%s3 + $0x318] sm:$0xff]
  %v3787 = vld [vmem:[%s3 + $0x320] sm:$0xff]
  %v3788 = vld [vmem:[%s3 + $0x328] sm:$0xff]
  %v3789 = vld [vmem:[%s3 + $0x330] sm:$0xff]
  %v3790 = vld [vmem:[%s3 + $0x338] sm:$0xff]
  %v3791 = vld [vmem:[%s3 + $0x340] sm:$0xff]
  %v3792 = vld [vmem:[%s3 + $0x348] sm:$0xff]
  %v3793 = vld [vmem:[%s3 + $0x350] sm:$0xff]
  %v3794 = vld [vmem:[%s3 + $0x358] sm:$0xff]
  %v3795 = vld [vmem:[%s3 + $0x360] sm:$0xff]
  %v3796 = vld [vmem:[%s3 + $0x368] sm:$0xff]
  %v3797 = vld [vmem:[%s3 + $0x370] sm:$0xff]
  %v3798 = vld [vmem:[%s3 + $0x378] sm:$0xff]
  %v3799 = vld [vmem:[%s3 + $0x380] sm:$0xff]
  %v3800 = vld [vmem:[%s3 + $0x388] sm:$0xff]
  %v3801 = vld [vmem:[%s3 + $0x390] sm:$0xff]
  %v3802 = vld [vmem:[%s3 + $0x398] sm:$0xff]
  %v3803 = vld [vmem:[%s3 + $0x3a0] sm:$0xff]
  %v3804 = vld [vmem:[%s3 + $0x3a8] sm:$0xff]
  %v3805 = vld [vmem:[%s3 + $0x3b0] sm:$0xff]
  %v3806 = vld [vmem:[%s3 + $0x3b8] sm:$0xff]
  %v3807 = vld [vmem:[%s3 + $0x3c0] sm:$0xff]
  %v3808 = vld [vmem:[%s3 + $0x3c8] sm:$0xff]
  %v3809 = vld [vmem:[%s3 + $0x3d0] sm:$0xff]
  %v3810 = vld [vmem:[%s3 + $0x3d8] sm:$0xff]
  %v3811 = vld [vmem:[%s3 + $0x3e0] sm:$0xff]
  %v3812 = vld [vmem:[%s3 + $0x3e8] sm:$0xff]
  %v3813 = vld [vmem:[%s3 + $0x3f0] sm:$0xff]
  %v3814 = vld [vmem:[%s3 + $0x3f8] sm:$0xff]
  %v3815 = vld [vmem:[%s3 + $0x400] sm:$0xff]
  %v3816 = vld [vmem:[%s3 + $0x408] sm:$0xff]
  %v3817 = vld [vmem:[%s3 + $0x410] sm:$0xff]
  %v3818 = vld [vmem:[%s3 + $0x418] sm:$0xff]
  %v3819 = vld [vmem:[%s3 + $0x420] sm:$0xff]
  %v3820 = vld [vmem:[%s3 + $0x428] sm:$0xff]
  %v3821 = vld [vmem:[%s3 + $0x430] sm:$0xff]
  %v3822 = vld [vmem:[%s3 + $0x438] sm:$0xff]
  %v3823 = vld [vmem:[%s3 + $0x440] sm:$0xff]
  %v3824 = vld [vmem:[%s3 + $0x448] sm:$0xff]
  %v3825 = vld [vmem:[%s3 + $0x450] sm:$0xff]
  %v3826 = vld [vmem:[%s3 + $0x458] sm:$0xff]
  %v3827 = vld [vmem:[%s3 + $0x460] sm:$0xff]
  %v3828 = vld [vmem:[%s3 + $0x468] sm:$0xff]
  %v3829 = vld [vmem:[%s3 + $0x470] sm:$0xff]
  %v3830 = vld [vmem:[%s3 + $0x478] sm:$0xff]
  %v3831 = vld [vmem:[%s3 + $0x480] sm:$0xff]
  %v3832 = vld [vmem:[%s3 + $0x488] sm:$0xff]
  %v3833 = vld [vmem:[%s3 + $0x490] sm:$0xff]
  %v3834 = vld [vmem:[%s3 + $0x498] sm:$0xff]
  %v3835 = vld [vmem:[%s3 + $0x4a0] sm:$0xff]
  %v3836 = vld [vmem:[%s3 + $0x4a8] sm:$0xff]
  %v3837 = vld [vmem:[%s3 + $0x4b0] sm:$0xff]
  %v3838 = vld [vmem:[%s3 + $0x4b8] sm:$0xff]
  %v3839 = vld [vmem:[%s3 + $0x4c0] sm:$0xff]
  %v3840 = vld [vmem:[%s3 + $0x4c8] sm:$0xff]
  %v3841 = vld [vmem:[%s3 + $0x4d0] sm:$0xff]
  %v3842 = vld [vmem:[%s3 + $0x4d8] sm:$0xff]
  %v3843 = vld [vmem:[%s3 + $0x4e0] sm:$0xff]
  %v3844 = vld [vmem:[%s3 + $0x4e8] sm:$0xff]
  %v3845 = vld [vmem:[%s3 + $0x4f0] sm:$0xff]
  %v3846 = vld [vmem:[%s3 + $0x4f8] sm:$0xff]
  %v3847 = vld [vmem:[%s3 + $0x500] sm:$0xff]
  %v3848 = vld [vmem:[%s3 + $0x508] sm:$0xff]
  %v3849 = vld [vmem:[%s3 + $0x510] sm:$0xff]
  %v3850 = vld [vmem:[%s3 + $0x518] sm:$0xff]
  %v3851 = vld [vmem:[%s3 + $0x520] sm:$0xff]
  %v3852 = vld [vmem:[%s3 + $0x528] sm:$0xff]
  %v3853 = vld [vmem:[%s3 + $0x530] sm:$0xff]
  %v3854 = vld [vmem:[%s3 + $0x538] sm:$0xff]
  %v3855 = vld [vmem:[%s3 + $0x540] sm:$0xff]
  %v3856 = vld [vmem:[%s3 + $0x548] sm:$0xff]
  %v3857 = vld [vmem:[%s3 + $0x550] sm:$0xff]
  %v3858 = vld [vmem:[%s3 + $0x558] sm:$0xff]
  %v3859 = vld [vmem:[%s3 + $0x560] sm:$0xff]
  %v3860 = vld [vmem:[%s3 + $0x568] sm:$0xff]
  %v3861 = vld [vmem:[%s3 + $0x570] sm:$0xff]
  %v3862 = vld [vmem:[%s3 + $0x578] sm:$0xff]
  %v3863 = vld [vmem:[%s3 + $0x580] sm:$0xff]
  %v3864 = vld [vmem:[%s3 + $0x588] sm:$0xff]
  %v3865 = vld [vmem:[%s3 + $0x590] sm:$0xff]
  %v3866 = vld [vmem:[%s3 + $0x598] sm:$0xff]
  %v3867 = vld [vmem:[%s3 + $0x5a0] sm:$0xff]
  %v3868 = vld [vmem:[%s3 + $0x5a8] sm:$0xff]
  %v3869 = vld [vmem:[%s3 + $0x5b0] sm:$0xff]
  %v3870 = vld [vmem:[%s3 + $0x5b8] sm:$0xff]
  %v3871 = vld [vmem:[%s3 + $0x5c0] sm:$0xff]
  %v3872 = vld [vmem:[%s3 + $0x5c8] sm:$0xff]
  %v3873 = vld [vmem:[%s3 + $0x5d0] sm:$0xff]
  %v3874 = vld [vmem:[%s3 + $0x5d8] sm:$0xff]
  %v3875 = vld [vmem:[%s3 + $0x5e0] sm:$0xff]
  %v3876 = vld [vmem:[%s3 + $0x5e8] sm:$0xff]
  %v3877 = vld [vmem:[%s3 + $0x5f0] sm:$0xff]
  %v3878 = vld [vmem:[%s3 + $0x5f8] sm:$0xff]
  %v3879 = vld [vmem:[%s3 + $0x600] sm:$0xff]
  %v3880 = vld [vmem:[%s3 + $0x608] sm:$0xff]
  %v3881 = vld [vmem:[%s3 + $0x610] sm:$0xff]
  %v3882 = vld [vmem:[%s3 + $0x618] sm:$0xff]
  %v3883 = vld [vmem:[%s3 + $0x620] sm:$0xff]
  %v3884 = vld [vmem:[%s3 + $0x628] sm:$0xff]
  %v3885 = vld [vmem:[%s3 + $0x630] sm:$0xff]
  %v3886 = vld [vmem:[%s3 + $0x638] sm:$0xff]
  %v3887 = vld [vmem:[%s3 + $0x640] sm:$0xff]
  %v3888 = vld [vmem:[%s3 + $0x648] sm:$0xff]
  %v3889 = vld [vmem:[%s3 + $0x650] sm:$0xff]
  %v3890 = vld [vmem:[%s3 + $0x658] sm:$0xff]
  %v3891 = vld [vmem:[%s3 + $0x660] sm:$0xff]
  %v3892 = vld [vmem:[%s3 + $0x668] sm:$0xff]
  %v3893 = vld [vmem:[%s3 + $0x670] sm:$0xff]
  %v3894 = vld [vmem:[%s3 + $0x678] sm:$0xff]
  %v3895 = vld [vmem:[%s3 + $0x680] sm:$0xff]
  %v3896 = vld [vmem:[%s3 + $0x688] sm:$0xff]
  %v3897 = vld [vmem:[%s3 + $0x690] sm:$0xff]
  %v3898 = vld [vmem:[%s3 + $0x698] sm:$0xff]
  %v3899 = vld [vmem:[%s3 + $0x6a0] sm:$0xff]
  %v3900 = vld [vmem:[%s3 + $0x6a8] sm:$0xff]
  %v3901 = vld [vmem:[%s3 + $0x6b0] sm:$0xff]
  %v3902 = vld [vmem:[%s3 + $0x6b8] sm:$0xff]
  %v3903 = vld [vmem:[%s3 + $0x6c0] sm:$0xff]
  %v3904 = vld [vmem:[%s3 + $0x6c8] sm:$0xff]
  %v3905 = vld [vmem:[%s3 + $0x6d0] sm:$0xff]
  %v3906 = vld [vmem:[%s3 + $0x6d8] sm:$0xff]
  %v3907 = vld [vmem:[%s3 + $0x6e0] sm:$0xff]
  %v3908 = vld [vmem:[%s3 + $0x6e8] sm:$0xff]
  %v3909 = vld [vmem:[%s3 + $0x6f0] sm:$0xff]
  %v3910 = vld [vmem:[%s3 + $0x6f8] sm:$0xff]
  %v3911 = vld [vmem:[%s3 + $0x700] sm:$0xff]
  %v3912 = vld [vmem:[%s3 + $0x708] sm:$0xff]
  %v3913 = vld [vmem:[%s3 + $0x710] sm:$0xff]
  %v3914 = vld [vmem:[%s3 + $0x718] sm:$0xff]
  %v3915 = vld [vmem:[%s3 + $0x720] sm:$0xff]
  %v3916 = vld [vmem:[%s3 + $0x728] sm:$0xff]
  %v3917 = vld [vmem:[%s3 + $0x730] sm:$0xff]
  %v3918 = vld [vmem:[%s3 + $0x738] sm:$0xff]
  %v3919 = vld [vmem:[%s3 + $0x740] sm:$0xff]
  %v3920 = vld [vmem:[%s3 + $0x748] sm:$0xff]
  %v3921 = vld [vmem:[%s3 + $0x750] sm:$0xff]
  %v3922 = vld [vmem:[%s3 + $0x758] sm:$0xff]
  %v3923 = vld [vmem:[%s3 + $0x760] sm:$0xff]
  %v3924 = vld [vmem:[%s3 + $0x768] sm:$0xff]
  %v3925 = vld [vmem:[%s3 + $0x770] sm:$0xff]
  %v3926 = vld [vmem:[%s3 + $0x778] sm:$0xff]
  %v3927 = vld [vmem:[%s3 + $0x780] sm:$0xff]
  %v3928 = vld [vmem:[%s3 + $0x788] sm:$0xff]
  %v3929 = vld [vmem:[%s3 + $0x790] sm:$0xff]
  %v3930 = vld [vmem:[%s3 + $0x798] sm:$0xff]
  %v3931 = vld [vmem:[%s3 + $0x7a0] sm:$0xff]
  %v3932 = vld [vmem:[%s3 + $0x7a8] sm:$0xff]
  %v3933 = vld [vmem:[%s3 + $0x7b0] sm:$0xff]
  %v3934 = vld [vmem:[%s3 + $0x7b8] sm:$0xff]
  %v3935 = vld [vmem:[%s3 + $0x7c0] sm:$0xff]
  %v3936 = vld [vmem:[%s3 + $0x7c8] sm:$0xff]
  %v3937 = vld [vmem:[%s3 + $0x7d0] sm:$0xff]
  %v3938 = vld [vmem:[%s3 + $0x7d8] sm:$0xff]
  %v3939 = vld [vmem:[%s3 + $0x7e0] sm:$0xff]
  %v3940 = vld [vmem:[%s3 + $0x7e8] sm:$0xff]
  %v3941 = vld [vmem:[%s3 + $0x7f0] sm:$0xff]
  %v3942 = vld [vmem:[%s3 + $0x7f8] sm:$0xff]
  %v3943 = vld [vmem:[%s3 + $0x800] sm:$0xff]
  %v3944 = vld [vmem:[%s3 + $0x808] sm:$0xff]
  %v3945 = vld [vmem:[%s3 + $0x810] sm:$0xff]
  %v3946 = vld [vmem:[%s3 + $0x818] sm:$0xff]
  %v3947 = vld [vmem:[%s3 + $0x820] sm:$0xff]
  %v3948 = vld [vmem:[%s3 + $0x828] sm:$0xff]
  %v3949 = vld [vmem:[%s3 + $0x830] sm:$0xff]
  %v3950 = vld [vmem:[%s3 + $0x838] sm:$0xff]
  %v3951 = vld [vmem:[%s3 + $0x840] sm:$0xff]
  %v3952 = vld [vmem:[%s3 + $0x848] sm:$0xff]
  %v3953 = vld [vmem:[%s3 + $0x850] sm:$0xff]
  %v3954 = vld [vmem:[%s3 + $0x858] sm:$0xff]
  %v3955 = vld [vmem:[%s3 + $0x860] sm:$0xff]
  %v3956 = vld [vmem:[%s3 + $0x868] sm:$0xff]
  %v3957 = vld [vmem:[%s3 + $0x870] sm:$0xff]
  %v3958 = vld [vmem:[%s3 + $0x878] sm:$0xff]
  %v3959 = vld [vmem:[%s3 + $0x880] sm:$0xff]
  %v3960 = vld [vmem:[%s3 + $0x888] sm:$0xff]
  %v3961 = vld [vmem:[%s3 + $0x890] sm:$0xff]
  %v3962 = vld [vmem:[%s3 + $0x898] sm:$0xff]
  %v3963 = vld [vmem:[%s3 + $0x8a0] sm:$0xff]
  %v3964 = vld [vmem:[%s3 + $0x8a8] sm:$0xff]
  %v3965 = vld [vmem:[%s3 + $0x8b0] sm:$0xff]
  %v3966 = vld [vmem:[%s3 + $0x8b8] sm:$0xff]
  %v3967 = vld [vmem:[%s3 + $0x8c0] sm:$0xff]
  %v3968 = vld [vmem:[%s3 + $0x8c8] sm:$0xff]
  %v3969 = vld [vmem:[%s3 + $0x8d0] sm:$0xff]
  %v3970 = vld [vmem:[%s3 + $0x8d8] sm:$0xff]
  %v3971 = vld [vmem:[%s3 + $0x8e0] sm:$0xff]
  %v3972 = vld [vmem:[%s3 + $0x8e8] sm:$0xff]
  %v3973 = vld [vmem:[%s3 + $0x8f0] sm:$0xff]
  %v3974 = vld [vmem:[%s3 + $0x8f8] sm:$0xff]
  %v3975 = vld [vmem:[%s3 + $0x900] sm:$0xff]
  %v3976 = vld [vmem:[%s3 + $0x908] sm:$0xff]
  %v3977 = vld [vmem:[%s3 + $0x910] sm:$0xff]
  %v3978 = vld [vmem:[%s3 + $0x918] sm:$0xff]
  %v3979 = vld [vmem:[%s3 + $0x920] sm:$0xff]
  %v3980 = vld [vmem:[%s3 + $0x928] sm:$0xff]
  %v3981 = vld [vmem:[%s3 + $0x930] sm:$0xff]
  %v3982 = vld [vmem:[%s3 + $0x938] sm:$0xff]
  %v3983 = vld [vmem:[%s3 + $0x940] sm:$0xff]
  %v3984 = vld [vmem:[%s3 + $0x948] sm:$0xff]
  %v3985 = vld [vmem:[%s3 + $0x950] sm:$0xff]
  %v3986 = vld [vmem:[%s3 + $0x958] sm:$0xff]
  %v3987 = vld [vmem:[%s3 + $0x960] sm:$0xff]
  %v3988 = vld [vmem:[%s3 + $0x968] sm:$0xff]
  %v3989 = vld [vmem:[%s3 + $0x970] sm:$0xff]
  %v3990 = vld [vmem:[%s3 + $0x978] sm:$0xff]
  %v3991 = vld [vmem:[%s3 + $0x980] sm:$0xff]
  %v3992 = vld [vmem:[%s3 + $0x988] sm:$0xff]
  %v3993 = vld [vmem:[%s3 + $0x990] sm:$0xff]
  %v3994 = vld [vmem:[%s3 + $0x998] sm:$0xff]
  %v3995 = vld [vmem:[%s3 + $0x9a0] sm:$0xff]
  %v3996 = vld [vmem:[%s3 + $0x9a8] sm:$0xff]
  %v3997 = vld [vmem:[%s3 + $0x9b0] sm:$0xff]
  %v3998 = vld [vmem:[%s3 + $0x9b8] sm:$0xff]
  %v3999 = vld [vmem:[%s3 + $0x9c0] sm:$0xff]
  %v4000 = vld [vmem:[%s3 + $0x9c8] sm:$0xff]
  %v4001 = vld [vmem:[%s3 + $0x9d0] sm:$0xff]
  %v4002 = vld [vmem:[%s3 + $0x9d8] sm:$0xff]
  %v4003 = vld [vmem:[%s3 + $0x9e0] sm:$0xff]
  %v4004 = vld [vmem:[%s3 + $0x9e8] sm:$0xff]
  %v4005 = vld [vmem:[%s3 + $0x9f0] sm:$0xff]
  %v4006 = vld [vmem:[%s3 + $0x9f8] sm:$0xff]
  %v4007 = vld [vmem:[%s3 + $0xa00] sm:$0xff]
  %v4008 = vld [vmem:[%s3 + $0xa08] sm:$0xff]
  %v4009 = vld [vmem:[%s3 + $0xa10] sm:$0xff]
  %v4010 = vld [vmem:[%s3 + $0xa18] sm:$0xff]
  %v4011 = vld [vmem:[%s3 + $0xa20] sm:$0xff]
  %v4012 = vld [vmem:[%s3 + $0xa28] sm:$0xff]
  %v4013 = vld [vmem:[%s3 + $0xa30] sm:$0xff]
  %v4014 = vld [vmem:[%s3 + $0xa38] sm:$0xff]
  %v4015 = vld [vmem:[%s3 + $0xa40] sm:$0xff]
  %v4016 = vld [vmem:[%s3 + $0xa48] sm:$0xff]
  %v4017 = vld [vmem:[%s3 + $0xa50] sm:$0xff]
  %v4018 = vld [vmem:[%s3 + $0xa58] sm:$0xff]
  %v4019 = vld [vmem:[%s3 + $0xa60] sm:$0xff]
  %v4020 = vld [vmem:[%s3 + $0xa68] sm:$0xff]
  %v4021 = vld [vmem:[%s3 + $0xa70] sm:$0xff]
  %v4022 = vld [vmem:[%s3 + $0xa78] sm:$0xff]
  %v4023 = vld [vmem:[%s3 + $0xa80] sm:$0xff]
  %v4024 = vld [vmem:[%s3 + $0xa88] sm:$0xff]
  %v4025 = vld [vmem:[%s3 + $0xa90] sm:$0xff]
  %v4026 = vld [vmem:[%s3 + $0xa98] sm:$0xff]
  %v4027 = vld [vmem:[%s3 + $0xaa0] sm:$0xff]
  %v4028 = vld [vmem:[%s3 + $0xaa8] sm:$0xff]
  %v4029 = vld [vmem:[%s3 + $0xab0] sm:$0xff]
  %v4030 = vld [vmem:[%s3 + $0xab8] sm:$0xff]
  %v4031 = vld [vmem:[%s3 + $0xac0] sm:$0xff]
  %v4032 = vld [vmem:[%s3 + $0xac8] sm:$0xff]
  %v4033 = vld [vmem:[%s3 + $0xad0] sm:$0xff]
  %v4034 = vld [vmem:[%s3 + $0xad8] sm:$0xff]
  %v4035 = vld [vmem:[%s3 + $0xae0] sm:$0xff]
  %v4036 = vld [vmem:[%s3 + $0xae8] sm:$0xff]
  %v4037 = vld [vmem:[%s3 + $0xaf0] sm:$0xff]
  %v4038 = vld [vmem:[%s3 + $0xaf8] sm:$0xff]
  %v4039 = vld [vmem:[%s3 + $0xb00] sm:$0xff]
  %v4040 = vld [vmem:[%s3 + $0xb08] sm:$0xff]
  %v4041 = vld [vmem:[%s3 + $0xb10] sm:$0xff]
  %v4042 = vld [vmem:[%s3 + $0xb18] sm:$0xff]
  %v4043 = vld [vmem:[%s3 + $0xb20] sm:$0xff]
  %v4044 = vld [vmem:[%s3 + $0xb28] sm:$0xff]
  %v4045 = vld [vmem:[%s3 + $0xb30] sm:$0xff]
  %v4046 = vld [vmem:[%s3 + $0xb38] sm:$0xff]
  %v4047 = vld [vmem:[%s3 + $0xb40] sm:$0xff]
  %v4048 = vld [vmem:[%s3 + $0xb48] sm:$0xff]
  %v4049 = vld [vmem:[%s3 + $0xb50] sm:$0xff]
  %v4050 = vld [vmem:[%s3 + $0xb58] sm:$0xff]
  %v4051 = vld [vmem:[%s3 + $0xb60] sm:$0xff]
  %v4052 = vld [vmem:[%s3 + $0xb68] sm:$0xff]
  %v4053 = vld [vmem:[%s3 + $0xb70] sm:$0xff]
  %v4054 = vld [vmem:[%s3 + $0xb78] sm:$0xff]
  %v4055 = vld [vmem:[%s3 + $0xb80] sm:$0xff]
  %v4056 = vld [vmem:[%s3 + $0xb88] sm:$0xff]
  %v4057 = vld [vmem:[%s3 + $0xb90] sm:$0xff]
  %v4058 = vld [vmem:[%s3 + $0xb98] sm:$0xff]
  %v4059 = vld [vmem:[%s3 + $0xba0] sm:$0xff]
  %v4060 = vld [vmem:[%s3 + $0xba8] sm:$0xff]
  %v4061 = vld [vmem:[%s3 + $0xbb0] sm:$0xff]
  %v4062 = vld [vmem:[%s3 + $0xbb8] sm:$0xff]
  %v4063 = vld [vmem:[%s3 + $0xbc0] sm:$0xff]
  %v4064 = vld [vmem:[%s3 + $0xbc8] sm:$0xff]
  %v4065 = vld [vmem:[%s3 + $0xbd0] sm:$0xff]
  %v4066 = vld [vmem:[%s3 + $0xbd8] sm:$0xff]
  %v4067 = vld [vmem:[%s3 + $0xbe0] sm:$0xff]
  %v4068 = vld [vmem:[%s3 + $0xbe8] sm:$0xff]
  %v4069 = vld [vmem:[%s3 + $0xbf0] sm:$0xff]
  %v4070 = vld [vmem:[%s3 + $0xbf8] sm:$0xff]
  %v4071 = vld [vmem:[%s3 + $0xc00] sm:$0xff]
  %v4072 = vld [vmem:[%s3 + $0xc08] sm:$0xff]
  %v4073 = vld [vmem:[%s3 + $0xc10] sm:$0xff]
  %v4074 = vld [vmem:[%s3 + $0xc18] sm:$0xff]
  %v4075 = vld [vmem:[%s3 + $0xc20] sm:$0xff]
  %v4076 = vld [vmem:[%s3 + $0xc28] sm:$0xff]
  %v4077 = vld [vmem:[%s3 + $0xc30] sm:$0xff]
  %v4078 = vld [vmem:[%s3 + $0xc38] sm:$0xff]
  %v4079 = vld [vmem:[%s3 + $0xc40] sm:$0xff]
  %v4080 = vld [vmem:[%s3 + $0xc48] sm:$0xff]
  %v4081 = vld [vmem:[%s3 + $0xc50] sm:$0xff]
  %v4082 = vld [vmem:[%s3 + $0xc58] sm:$0xff]
  %v4083 = vld [vmem:[%s3 + $0xc60] sm:$0xff]
  %v4084 = vld [vmem:[%s3 + $0xc68] sm:$0xff]
  %v4085 = vld [vmem:[%s3 + $0xc70] sm:$0xff]
  %v4086 = vld [vmem:[%s3 + $0xc78] sm:$0xff]
  %v4087 = vld [vmem:[%s3 + $0xc80] sm:$0xff]
  %v4088 = vld [vmem:[%s3 + $0xc88] sm:$0xff]
  %v4089 = vld [vmem:[%s3 + $0xc90] sm:$0xff]
  %v4090 = vld [vmem:[%s3 + $0xc98] sm:$0xff]
  %v4091 = vld [vmem:[%s3 + $0xca0] sm:$0xff]
  %v4092 = vld [vmem:[%s3 + $0xca8] sm:$0xff]
  %v4093 = vld [vmem:[%s3 + $0xcb0] sm:$0xff]
  %v4094 = vld [vmem:[%s3 + $0xcb8] sm:$0xff]
  %v4095 = vld [vmem:[%s3 + $0xcc0] sm:$0xff]
  %v4096 = vld [vmem:[%s3 + $0xcc8] sm:$0xff]
  %v4097 = vld [vmem:[%s3 + $0xcd0] sm:$0xff]
  %v4098 = vld [vmem:[%s3 + $0xcd8] sm:$0xff]
  %v4099 = vld [vmem:[%s3 + $0xce0] sm:$0xff]
  %v4100 = vld [vmem:[%s3 + $0xce8] sm:$0xff]
  %v4101 = vld [vmem:[%s3 + $0xcf0] sm:$0xff]
  %v4102 = vld [vmem:[%s3 + $0xcf8] sm:$0xff]
  %v4103 = vld [vmem:[%s3 + $0xd00] sm:$0xff]
  %v4104 = vld [vmem:[%s3 + $0xd08] sm:$0xff]
  %v4105 = vld [vmem:[%s3 + $0xd10] sm:$0xff]
  %v4106 = vld [vmem:[%s3 + $0xd18] sm:$0xff]
  %v4107 = vld [vmem:[%s3 + $0xd20] sm:$0xff]
  %v4108 = vld [vmem:[%s3 + $0xd28] sm:$0xff]
  %v4109 = vld [vmem:[%s3 + $0xd30] sm:$0xff]
  %v4110 = vld [vmem:[%s3 + $0xd38] sm:$0xff]
  %v4111 = vld [vmem:[%s3 + $0xd40] sm:$0xff]
  %v4112 = vld [vmem:[%s3 + $0xd48] sm:$0xff]
  %v4113 = vld [vmem:[%s3 + $0xd50] sm:$0xff]
  %v4114 = vld [vmem:[%s3 + $0xd58] sm:$0xff]
  %v4115 = vld [vmem:[%s3 + $0xd60] sm:$0xff]
  %v4116 = vld [vmem:[%s3 + $0xd68] sm:$0xff]
  %v4117 = vld [vmem:[%s3 + $0xd70] sm:$0xff]
  %v4118 = vld [vmem:[%s3 + $0xd78] sm:$0xff]
  %v4119 = vld [vmem:[%s3 + $0xd80] sm:$0xff]
  %v4120 = vld [vmem:[%s3 + $0xd88] sm:$0xff]
  %v4121 = vld [vmem:[%s3 + $0xd90] sm:$0xff]
  %v4122 = vld [vmem:[%s3 + $0xd98] sm:$0xff]
  %v4123 = vld [vmem:[%s3 + $0xda0] sm:$0xff]
  %v4124 = vld [vmem:[%s3 + $0xda8] sm:$0xff]
  %v4125 = vld [vmem:[%s3 + $0xdb0] sm:$0xff]
  %v4126 = vld [vmem:[%s3 + $0xdb8] sm:$0xff]
  %v4127 = vld [vmem:[%s3 + $0xdc0] sm:$0xff]
  %v4128 = vld [vmem:[%s3 + $0xdc8] sm:$0xff]
  %v4129 = vld [vmem:[%s3 + $0xdd0] sm:$0xff]
  %v4130 = vld [vmem:[%s3 + $0xdd8] sm:$0xff]
  %v4131 = vld [vmem:[%s3 + $0xde0] sm:$0xff]
  %v4132 = vld [vmem:[%s3 + $0xde8] sm:$0xff]
  %v4133 = vld [vmem:[%s3 + $0xdf0] sm:$0xff]
  %v4134 = vld [vmem:[%s3 + $0xdf8] sm:$0xff]
  %v4135 = vld [vmem:[%s3 + $0xe00] sm:$0xff]
  %v4136 = vld [vmem:[%s3 + $0xe08] sm:$0xff]
  %v4137 = vld [vmem:[%s3 + $0xe10] sm:$0xff]
  %v4138 = vld [vmem:[%s3 + $0xe18] sm:$0xff]
  %v4139 = vld [vmem:[%s3 + $0xe20] sm:$0xff]
  %v4140 = vld [vmem:[%s3 + $0xe28] sm:$0xff]
  %v4141 = vld [vmem:[%s3 + $0xe30] sm:$0xff]
  %v4142 = vld [vmem:[%s3 + $0xe38] sm:$0xff]
  %v4143 = vld [vmem:[%s3 + $0xe40] sm:$0xff]
  %v4144 = vld [vmem:[%s3 + $0xe48] sm:$0xff]
  %v4145 = vld [vmem:[%s3 + $0xe50] sm:$0xff]
  %v4146 = vld [vmem:[%s3 + $0xe58] sm:$0xff]
  %v4147 = vld [vmem:[%s3 + $0xe60] sm:$0xff]
  %v4148 = vld [vmem:[%s3 + $0xe68] sm:$0xff]
  %v4149 = vld [vmem:[%s3 + $0xe70] sm:$0xff]
  %v4150 = vld [vmem:[%s3 + $0xe78] sm:$0xff]
  %v4151 = vld [vmem:[%s3 + $0xe80] sm:$0xff]
  %v4152 = vld [vmem:[%s3 + $0xe88] sm:$0xff]
  %v4153 = vld [vmem:[%s3 + $0xe90] sm:$0xff]
  %v4154 = vld [vmem:[%s3 + $0xe98] sm:$0xff]
  %v4155 = vld [vmem:[%s3 + $0xea0] sm:$0xff]
  %v4156 = vld [vmem:[%s3 + $0xea8] sm:$0xff]
  %v4157 = vld [vmem:[%s3 + $0xeb0] sm:$0xff]
  %v4158 = vld [vmem:[%s3 + $0xeb8] sm:$0xff]
  %v4159 = vld [vmem:[%s3 + $0xec0] sm:$0xff]
  %v4160 = vld [vmem:[%s3 + $0xec8] sm:$0xff]
  %v4161 = vld [vmem:[%s3 + $0xed0] sm:$0xff]
  %v4162 = vld [vmem:[%s3 + $0xed8] sm:$0xff]
  %v4163 = vld [vmem:[%s3 + $0xee0] sm:$0xff]
  %v4164 = vld [vmem:[%s3 + $0xee8] sm:$0xff]
  %v4165 = vld [vmem:[%s3 + $0xef0] sm:$0xff]
  %v4166 = vld [vmem:[%s3 + $0xef8] sm:$0xff]
  %v4167 = vld [vmem:[%s3 + $0xf00] sm:$0xff]
  %v4168 = vld [vmem:[%s3 + $0xf08] sm:$0xff]
  %v4169 = vld [vmem:[%s3 + $0xf10] sm:$0xff]
  %v4170 = vld [vmem:[%s3 + $0xf18] sm:$0xff]
  %v4171 = vld [vmem:[%s3 + $0xf20] sm:$0xff]
  %v4172 = vld [vmem:[%s3 + $0xf28] sm:$0xff]
  %v4173 = vld [vmem:[%s3 + $0xf30] sm:$0xff]
  %v4174 = vld [vmem:[%s3 + $0xf38] sm:$0xff]
  %v4175 = vld [vmem:[%s3 + $0xf40] sm:$0xff]
  %v4176 = vld [vmem:[%s3 + $0xf48] sm:$0xff]
  %v4177 = vld [vmem:[%s3 + $0xf50] sm:$0xff]
  %v4178 = vld [vmem:[%s3 + $0xf58] sm:$0xff]
  %v4179 = vld [vmem:[%s3 + $0xf60] sm:$0xff]
  %v4180 = vld [vmem:[%s3 + $0xf68] sm:$0xff]
  %v4181 = vld [vmem:[%s3 + $0xf70] sm:$0xff]
  %v4182 = vld [vmem:[%s3 + $0xf78] sm:$0xff]
  %v4183 = vld [vmem:[%s3 + $0xf80] sm:$0xff]
  %v4184 = vld [vmem:[%s3 + $0xf88] sm:$0xff]
  %v4185 = vld [vmem:[%s3 + $0xf90] sm:$0xff]
  %v4186 = vld [vmem:[%s3 + $0xf98] sm:$0xff]
  %v4187 = vld [vmem:[%s3 + $0xfa0] sm:$0xff]
  %v4188 = vld [vmem:[%s3 + $0xfa8] sm:$0xff]
  %v4189 = vld [vmem:[%s3 + $0xfb0] sm:$0xff]
  %v4190 = vld [vmem:[%s3 + $0xfb8] sm:$0xff]
  %v4191 = vld [vmem:[%s3 + $0xfc0] sm:$0xff]
  %v4192 = vld [vmem:[%s3 + $0xfc8] sm:$0xff]
  %v4193 = vld [vmem:[%s3 + $0xfd0] sm:$0xff]
  %v4194 = vld [vmem:[%s3 + $0xfd8] sm:$0xff]
  %v4195 = vld [vmem:[%s3 + $0xfe0] sm:$0xff]
  %v4196 = vld [vmem:[%s3 + $0xfe8] sm:$0xff]
  %v4197 = vld [vmem:[%s3 + $0xff0] sm:$0xff]
  %v4198 = vld [vmem:[%s3 + $0xff8] sm:$0xff]
  %v4199 = vld [vmem:[%s3 + $0x1000] sm:$0xff]
  %v4200 = vld [vmem:[%s3 + $0x1008] sm:$0xff]
  %v4201 = vld [vmem:[%s3 + $0x1010] sm:$0xff]
  %v4202 = vld [vmem:[%s3 + $0x1018] sm:$0xff]
  %v4203 = vld [vmem:[%s3 + $0x1020] sm:$0xff]
  %v4204 = vld [vmem:[%s3 + $0x1028] sm:$0xff]
  %v4205 = vld [vmem:[%s3 + $0x1030] sm:$0xff]
  %v4206 = vld [vmem:[%s3 + $0x1038] sm:$0xff]
  %v4207 = vld [vmem:[%s3 + $0x1040] sm:$0xff]
  %v4208 = vld [vmem:[%s3 + $0x1048] sm:$0xff]
  %v4209 = vld [vmem:[%s3 + $0x1050] sm:$0xff]
  %v4210 = vld [vmem:[%s3 + $0x1058] sm:$0xff]
  %v4211 = vld [vmem:[%s3 + $0x1060] sm:$0xff]
  %v4212 = vld [vmem:[%s3 + $0x1068] sm:$0xff]
  %v4213 = vld [vmem:[%s3 + $0x1070] sm:$0xff]
  %v4214 = vld [vmem:[%s3 + $0x1078] sm:$0xff]
  %v4215 = vld [vmem:[%s3 + $0x1080] sm:$0xff]
  %v4216 = vld [vmem:[%s3 + $0x1088] sm:$0xff]
  %v4217 = vld [vmem:[%s3 + $0x1090] sm:$0xff]
  %v4218 = vld [vmem:[%s3 + $0x1098] sm:$0xff]
  %v4219 = vld [vmem:[%s3 + $0x10a0] sm:$0xff]
  %v4220 = vld [vmem:[%s3 + $0x10a8] sm:$0xff]
  %v4221 = vld [vmem:[%s3 + $0x10b0] sm:$0xff]
  %v4222 = vld [vmem:[%s3 + $0x10b8] sm:$0xff]
  %v4223 = vld [vmem:[%s3 + $0x10c0] sm:$0xff]
  %v4224 = vld [vmem:[%s3 + $0x10c8] sm:$0xff]
  %v4225 = vld [vmem:[%s3 + $0x10d0] sm:$0xff]
  %v4226 = vld [vmem:[%s3 + $0x10d8] sm:$0xff]
  %v4227 = vld [vmem:[%s3 + $0x10e0] sm:$0xff]
  %v4228 = vld [vmem:[%s3 + $0x10e8] sm:$0xff]
  %v4229 = vld [vmem:[%s3 + $0x10f0] sm:$0xff]
  %v4230 = vld [vmem:[%s3 + $0x10f8] sm:$0xff]
  %v4231 = vld [vmem:[%s3 + $0x1100] sm:$0xff]
  %v4232 = vld [vmem:[%s3 + $0x1108] sm:$0xff]
  %v4233 = vld [vmem:[%s3 + $0x1110] sm:$0xff]
  %v4234 = vld [vmem:[%s3 + $0x1118] sm:$0xff]
  %v4235 = vld [vmem:[%s3 + $0x1120] sm:$0xff]
  %v4236 = vld [vmem:[%s3 + $0x1128] sm:$0xff]
  %v4237 = vld [vmem:[%s3 + $0x1130] sm:$0xff]
  %v4238 = vld [vmem:[%s3 + $0x1138] sm:$0xff]
  %v4239 = vld [vmem:[%s3 + $0x1140] sm:$0xff]
  %v4240 = vld [vmem:[%s3 + $0x1148] sm:$0xff]
  %v4241 = vld [vmem:[%s3 + $0x1150] sm:$0xff]
  %v4242 = vld [vmem:[%s3 + $0x1158] sm:$0xff]
  %v4243 = vld [vmem:[%s3 + $0x1160] sm:$0xff]
  %v4244 = vld [vmem:[%s3 + $0x1168] sm:$0xff]
  %v4245 = vld [vmem:[%s3 + $0x1170] sm:$0xff]
  %v4246 = vld [vmem:[%s3 + $0x1178] sm:$0xff]
  %v4247 = vld [vmem:[%s3 + $0x1180] sm:$0xff]
  %v4248 = vld [vmem:[%s3 + $0x1188] sm:$0xff]
  %v4249 = vld [vmem:[%s3 + $0x1190] sm:$0xff]
  %v4250 = vld [vmem:[%s3 + $0x1198] sm:$0xff]
  %v4251 = vld [vmem:[%s3 + $0x11a0] sm:$0xff]
  %v4252 = vld [vmem:[%s3 + $0x11a8] sm:$0xff]
  %v4253 = vld [vmem:[%s3 + $0x11b0] sm:$0xff]
  %v4254 = vld [vmem:[%s3 + $0x11b8] sm:$0xff]
  %v4255 = vld [vmem:[%s3 + $0x11c0] sm:$0xff]
  %v4256 = vld [vmem:[%s3 + $0x11c8] sm:$0xff]
  %v4257 = vld [vmem:[%s3 + $0x11d0] sm:$0xff]
  %v4258 = vld [vmem:[%s3 + $0x11d8] sm:$0xff]
  %v4259 = vld [vmem:[%s3 + $0x11e0] sm:$0xff]
  %v4260 = vld [vmem:[%s3 + $0x11e8] sm:$0xff]
  %v4261 = vld [vmem:[%s3 + $0x11f0] sm:$0xff]
  %v4262 = vld [vmem:[%s3 + $0x11f8] sm:$0xff]
  %v4263 = vld [vmem:[%s3 + $0x1200] sm:$0xff]
  %v4264 = vld [vmem:[%s3 + $0x1208] sm:$0xff]
  %v4265 = vld [vmem:[%s3 + $0x1210] sm:$0xff]
  %v4266 = vld [vmem:[%s3 + $0x1218] sm:$0xff]
  %v4267 = vld [vmem:[%s3 + $0x1220] sm:$0xff]
  %v4268 = vld [vmem:[%s3 + $0x1228] sm:$0xff]
  %v4269 = vld [vmem:[%s3 + $0x1230] sm:$0xff]
  %v4270 = vld [vmem:[%s3 + $0x1238] sm:$0xff]
  %v4271 = vld [vmem:[%s3 + $0x1240] sm:$0xff]
  %v4272 = vld [vmem:[%s3 + $0x1248] sm:$0xff]
  %v4273 = vld [vmem:[%s3 + $0x1250] sm:$0xff]
  %v4274 = vld [vmem:[%s3 + $0x1258] sm:$0xff]
  %v4275 = vld [vmem:[%s3 + $0x1260] sm:$0xff]
  %v4276 = vld [vmem:[%s3 + $0x1268] sm:$0xff]
  %v4277 = vld [vmem:[%s3 + $0x1270] sm:$0xff]
  %v4278 = vld [vmem:[%s3 + $0x1278] sm:$0xff]
  %v4279 = vld [vmem:[%s3 + $0x1280] sm:$0xff]
  %v4280 = vld [vmem:[%s3 + $0x1288] sm:$0xff]
  %v4281 = vld [vmem:[%s3 + $0x1290] sm:$0xff]
  %v4282 = vld [vmem:[%s3 + $0x1298] sm:$0xff]
  %v4283 = vld [vmem:[%s3 + $0x12a0] sm:$0xff]
  %v4284 = vld [vmem:[%s3 + $0x12a8] sm:$0xff]
  %v4285 = vld [vmem:[%s3 + $0x12b0] sm:$0xff]
  %v4286 = vld [vmem:[%s3 + $0x12b8] sm:$0xff]
  %v4287 = vld [vmem:[%s3 + $0x12c0] sm:$0xff]
  %v4288 = vld [vmem:[%s3 + $0x12c8] sm:$0xff]
  %v4289 = vld [vmem:[%s3 + $0x12d0] sm:$0xff]
  %v4290 = vld [vmem:[%s3 + $0x12d8] sm:$0xff]
  %v4291 = vld [vmem:[%s3 + $0x12e0] sm:$0xff]
  %v4292 = vld [vmem:[%s3 + $0x12e8] sm:$0xff]
  %v4293 = vld [vmem:[%s3 + $0x12f0] sm:$0xff]
  %v4294 = vld [vmem:[%s3 + $0x12f8] sm:$0xff]
  %v4295 = vld [vmem:[%s3 + $0x1300] sm:$0xff]
  %v4296 = vld [vmem:[%s3 + $0x1308] sm:$0xff]
  %v4297 = vld [vmem:[%s3 + $0x1310] sm:$0xff]
  %v4298 = vld [vmem:[%s3 + $0x1318] sm:$0xff]
  %v4299 = vld [vmem:[%s3 + $0x1320] sm:$0xff]
  %v4300 = vld [vmem:[%s3 + $0x1328] sm:$0xff]
  %v4301 = vld [vmem:[%s3 + $0x1330] sm:$0xff]
  %v4302 = vld [vmem:[%s3 + $0x1338] sm:$0xff]
  %v4303 = vld [vmem:[%s3 + $0x1340] sm:$0xff]
  %v4304 = vld [vmem:[%s3 + $0x1348] sm:$0xff]
  %v4305 = vld [vmem:[%s3 + $0x1350] sm:$0xff]
  %v4306 = vld [vmem:[%s3 + $0x1358] sm:$0xff]
  %v4307 = vld [vmem:[%s3 + $0x1360] sm:$0xff]
  %v4308 = vld [vmem:[%s3 + $0x1368] sm:$0xff]
  %v4309 = vld [vmem:[%s3 + $0x1370] sm:$0xff]
  %v4310 = vld [vmem:[%s3 + $0x1378] sm:$0xff]
  %v4311 = vld [vmem:[%s3 + $0x1380] sm:$0xff]
  %v4312 = vld [vmem:[%s3 + $0x1388] sm:$0xff]
  %v4313 = vld [vmem:[%s3 + $0x1390] sm:$0xff]
  %v4314 = vld [vmem:[%s3 + $0x1398] sm:$0xff]
  %v4315 = vld [vmem:[%s3 + $0x13a0] sm:$0xff]
  %v4316 = vld [vmem:[%s3 + $0x13a8] sm:$0xff]
  %v4317 = vld [vmem:[%s3 + $0x13b0] sm:$0xff]
  %v4318 = vld [vmem:[%s3 + $0x13b8] sm:$0xff]
  %v4319 = vld [vmem:[%s3 + $0x13c0] sm:$0xff]
  %v4320 = vld [vmem:[%s3 + $0x13c8] sm:$0xff]
  %v4321 = vld [vmem:[%s3 + $0x13d0] sm:$0xff]
  %v4322 = vld [vmem:[%s3 + $0x13d8] sm:$0xff]
  %v4323 = vld [vmem:[%s3 + $0x13e0] sm:$0xff]
  %v4324 = vld [vmem:[%s3 + $0x13e8] sm:$0xff]
  %v4325 = vld [vmem:[%s3 + $0x13f0] sm:$0xff]
  %v4326 = vld [vmem:[%s3 + $0x13f8] sm:$0xff]
  %v4327 = vld [vmem:[%s3 + $0x1400] sm:$0xff]
  %v4328 = vld [vmem:[%s3 + $0x1408] sm:$0xff]
  %v4329 = vld [vmem:[%s3 + $0x1410] sm:$0xff]
  %v4330 = vld [vmem:[%s3 + $0x1418] sm:$0xff]
  %v4331 = vld [vmem:[%s3 + $0x1420] sm:$0xff]
  %v4332 = vld [vmem:[%s3 + $0x1428] sm:$0xff]
  %v4333 = vld [vmem:[%s3 + $0x1430] sm:$0xff]
  %v4334 = vld [vmem:[%s3 + $0x1438] sm:$0xff]
  %v4335 = vld [vmem:[%s3 + $0x1440] sm:$0xff]
  %v4336 = vld [vmem:[%s3 + $0x1448] sm:$0xff]
  %v4337 = vld [vmem:[%s3 + $0x1450] sm:$0xff]
  %v4338 = vld [vmem:[%s3 + $0x1458] sm:$0xff]
  %v4339 = vld [vmem:[%s3 + $0x1460] sm:$0xff]
  %v4340 = vld [vmem:[%s3 + $0x1468] sm:$0xff]
  %v4341 = vld [vmem:[%s3 + $0x1470] sm:$0xff]
  %v4342 = vld [vmem:[%s3 + $0x1478] sm:$0xff]
  %v4343 = vld [vmem:[%s3 + $0x1480] sm:$0xff]
  %v4344 = vld [vmem:[%s3 + $0x1488] sm:$0xff]
  %v4345 = vld [vmem:[%s3 + $0x1490] sm:$0xff]
  %v4346 = vld [vmem:[%s3 + $0x1498] sm:$0xff]
  %v4347 = vld [vmem:[%s3 + $0x14a0] sm:$0xff]
  %v4348 = vld [vmem:[%s3 + $0x14a8] sm:$0xff]
  %v4349 = vld [vmem:[%s3 + $0x14b0] sm:$0xff]
  %v4350 = vld [vmem:[%s3 + $0x14b8] sm:$0xff]
  %v4351 = vld [vmem:[%s3 + $0x14c0] sm:$0xff]
  %v4352 = vld [vmem:[%s3 + $0x14c8] sm:$0xff]
  %v4353 = vld [vmem:[%s3 + $0x14d0] sm:$0xff]
  %v4354 = vld [vmem:[%s3 + $0x14d8] sm:$0xff]
  %v4355 = vld [vmem:[%s3 + $0x14e0] sm:$0xff]
  %v4356 = vld [vmem:[%s3 + $0x14e8] sm:$0xff]
  %v4357 = vld [vmem:[%s3 + $0x14f0] sm:$0xff]
  %v4358 = vld [vmem:[%s3 + $0x14f8] sm:$0xff]
  %v4359 = vld [vmem:[%s3 + $0x1500] sm:$0xff]
  %v4360 = vld [vmem:[%s3 + $0x1508] sm:$0xff]
  %v4361 = vld [vmem:[%s3 + $0x1510] sm:$0xff]
  %v4362 = vld [vmem:[%s3 + $0x1518] sm:$0xff]
  %v4363 = vld [vmem:[%s3 + $0x1520] sm:$0xff]
  %v4364 = vld [vmem:[%s3 + $0x1528] sm:$0xff]
  %v4365 = vld [vmem:[%s3 + $0x1530] sm:$0xff]
  %v4366 = vld [vmem:[%s3 + $0x1538] sm:$0xff]
  %v4367 = vld [vmem:[%s3 + $0x1540] sm:$0xff]
  %v4368 = vld [vmem:[%s3 + $0x1548] sm:$0xff]
  %v4369 = vld [vmem:[%s3 + $0x1550] sm:$0xff]
  %v4370 = vld [vmem:[%s3 + $0x1558] sm:$0xff]
  %v4371 = vld [vmem:[%s3 + $0x1560] sm:$0xff]
  %v4372 = vld [vmem:[%s3 + $0x1568] sm:$0xff]
  %v4373 = vld [vmem:[%s3 + $0x1570] sm:$0xff]
  %v4374 = vld [vmem:[%s3 + $0x1578] sm:$0xff]
  %v4375 = vld [vmem:[%s3 + $0x1580] sm:$0xff]
  %v4376 = vld [vmem:[%s3 + $0x1588] sm:$0xff]
  %v4377 = vld [vmem:[%s3 + $0x1590] sm:$0xff]
  %v4378 = vld [vmem:[%s3 + $0x1598] sm:$0xff]
  %v4379 = vld [vmem:[%s3 + $0x15a0] sm:$0xff]
  %v4380 = vld [vmem:[%s3 + $0x15a8] sm:$0xff]
  %v4381 = vld [vmem:[%s3 + $0x15b0] sm:$0xff]
  %v4382 = vld [vmem:[%s3 + $0x15b8] sm:$0xff]
  %v4383 = vld [vmem:[%s3 + $0x15c0] sm:$0xff]
  %v4384 = vld [vmem:[%s3 + $0x15c8] sm:$0xff]
  %v4385 = vld [vmem:[%s3 + $0x15d0] sm:$0xff]
  %v4386 = vld [vmem:[%s3 + $0x15d8] sm:$0xff]
  %v4387 = vld [vmem:[%s3 + $0x15e0] sm:$0xff]
  %v4388 = vld [vmem:[%s3 + $0x15e8] sm:$0xff]
  %v4389 = vld [vmem:[%s3 + $0x15f0] sm:$0xff]
  %v4390 = vld [vmem:[%s3 + $0x15f8] sm:$0xff]
  %v4391 = vld [vmem:[%s3 + $0x1600] sm:$0xff]
  %v4392 = vld [vmem:[%s3 + $0x1608] sm:$0xff]
  %v4393 = vld [vmem:[%s3 + $0x1610] sm:$0xff]
  %v4394 = vld [vmem:[%s3 + $0x1618] sm:$0xff]
  %v4395 = vld [vmem:[%s3 + $0x1620] sm:$0xff]
  %v4396 = vld [vmem:[%s3 + $0x1628] sm:$0xff]
  %v4397 = vld [vmem:[%s3 + $0x1630] sm:$0xff]
  %v4398 = vld [vmem:[%s3 + $0x1638] sm:$0xff]
  %v4399 = vld [vmem:[%s3 + $0x1640] sm:$0xff]
  %v4400 = vld [vmem:[%s3 + $0x1648] sm:$0xff]
  %v4401 = vld [vmem:[%s3 + $0x1650] sm:$0xff]
  %v4402 = vld [vmem:[%s3 + $0x1658] sm:$0xff]
  %v4403 = vld [vmem:[%s3 + $0x1660] sm:$0xff]
  %v4404 = vld [vmem:[%s3 + $0x1668] sm:$0xff]
  %v4405 = vld [vmem:[%s3 + $0x1670] sm:$0xff]
  %v4406 = vld [vmem:[%s3 + $0x1678] sm:$0xff]
  %v4407 = vld [vmem:[%s3 + $0x1680] sm:$0xff]
  %v4408 = vld [vmem:[%s3 + $0x1688] sm:$0xff]
  %v4409 = vld [vmem:[%s3 + $0x1690] sm:$0xff]
  %v4410 = vld [vmem:[%s3 + $0x1698] sm:$0xff]
  %v4411 = vld [vmem:[%s3 + $0x16a0] sm:$0xff]
  %v4412 = vld [vmem:[%s3 + $0x16a8] sm:$0xff]
  %v4413 = vld [vmem:[%s3 + $0x16b0] sm:$0xff]
  %v4414 = vld [vmem:[%s3 + $0x16b8] sm:$0xff]
  %v4415 = vld [vmem:[%s3 + $0x16c0] sm:$0xff]
  %v4416 = vld [vmem:[%s3 + $0x16c8] sm:$0xff]
  %v4417 = vld [vmem:[%s3 + $0x16d0] sm:$0xff]
  %v4418 = vld [vmem:[%s3 + $0x16d8] sm:$0xff]
  %v4419 = vld [vmem:[%s3 + $0x16e0] sm:$0xff]
  %v4420 = vld [vmem:[%s3 + $0x16e8] sm:$0xff]
  %v4421 = vld [vmem:[%s3 + $0x16f0] sm:$0xff]
  %v4422 = vld [vmem:[%s3 + $0x16f8] sm:$0xff]
  %v4423 = vld [vmem:[%s3 + $0x1700] sm:$0xff]
  %v4424 = vld [vmem:[%s3 + $0x1708] sm:$0xff]
  %v4425 = vld [vmem:[%s3 + $0x1710] sm:$0xff]
  %v4426 = vld [vmem:[%s3 + $0x1718] sm:$0xff]
  %v4427 = vld [vmem:[%s3 + $0x1720] sm:$0xff]
  %v4428 = vld [vmem:[%s3 + $0x1728] sm:$0xff]
  %v4429 = vld [vmem:[%s3 + $0x1730] sm:$0xff]
  %v4430 = vld [vmem:[%s3 + $0x1738] sm:$0xff]
  %v4431 = vld [vmem:[%s3 + $0x1740] sm:$0xff]
  %v4432 = vld [vmem:[%s3 + $0x1748] sm:$0xff]
  %v4433 = vld [vmem:[%s3 + $0x1750] sm:$0xff]
  %v4434 = vld [vmem:[%s3 + $0x1758] sm:$0xff]
  %v4435 = vld [vmem:[%s3 + $0x1760] sm:$0xff]
  %v4436 = vld [vmem:[%s3 + $0x1768] sm:$0xff]
  %v4437 = vld [vmem:[%s3 + $0x1770] sm:$0xff]
  %v4438 = vld [vmem:[%s3 + $0x1778] sm:$0xff]
  %v4439 = vld [vmem:[%s3 + $0x1780] sm:$0xff]
  %v4440 = vld [vmem:[%s3 + $0x1788] sm:$0xff]
  %v4441 = vld [vmem:[%s3 + $0x1790] sm:$0xff]
  %v4442 = vld [vmem:[%s3 + $0x1798] sm:$0xff]
  %v4443 = vld [vmem:[%s3 + $0x17a0] sm:$0xff]
  %v4444 = vld [vmem:[%s3 + $0x17a8] sm:$0xff]
  %v4445 = vld [vmem:[%s3 + $0x17b0] sm:$0xff]
  %v4446 = vld [vmem:[%s3 + $0x17b8] sm:$0xff]
  %v4447 = vld [vmem:[%s3 + $0x17c0] sm:$0xff]
  %v4448 = vld [vmem:[%s3 + $0x17c8] sm:$0xff]
  %v4449 = vld [vmem:[%s3 + $0x17d0] sm:$0xff]
  %v4450 = vld [vmem:[%s3 + $0x17d8] sm:$0xff]
  %v4451 = vld [vmem:[%s3 + $0x17e0] sm:$0xff]
  %v4452 = vld [vmem:[%s3 + $0x17e8] sm:$0xff]
  %v4453 = vld [vmem:[%s3 + $0x17f0] sm:$0xff]
  %v4454 = vld [vmem:[%s3 + $0x17f8] sm:$0xff]
  %v4455 = vld [vmem:[%s3 + $0x1800] sm:$0xff]
  %v4456 = vld [vmem:[%s3 + $0x1808] sm:$0xff]
  %v4457 = vld [vmem:[%s3 + $0x1810] sm:$0xff]
  %v4458 = vld [vmem:[%s3 + $0x1818] sm:$0xff]
  %v4459 = vld [vmem:[%s3 + $0x1820] sm:$0xff]
  %v4460 = vld [vmem:[%s3 + $0x1828] sm:$0xff]
  %v4461 = vld [vmem:[%s3 + $0x1830] sm:$0xff]
  %v4462 = vld [vmem:[%s3 + $0x1838] sm:$0xff]
  %v4463 = vld [vmem:[%s3 + $0x1840] sm:$0xff]
  %v4464 = vld [vmem:[%s3 + $0x1848] sm:$0xff]
  %v4465 = vld [vmem:[%s3 + $0x1850] sm:$0xff]
  %v4466 = vld [vmem:[%s3 + $0x1858] sm:$0xff]
  %v4467 = vld [vmem:[%s3 + $0x1860] sm:$0xff]
  %v4468 = vld [vmem:[%s3 + $0x1868] sm:$0xff]
  %v4469 = vld [vmem:[%s3 + $0x1870] sm:$0xff]
  %v4470 = vld [vmem:[%s3 + $0x1878] sm:$0xff]
  %v4471 = vld [vmem:[%s3 + $0x1880] sm:$0xff]
  %v4472 = vld [vmem:[%s3 + $0x1888] sm:$0xff]
  %v4473 = vld [vmem:[%s3 + $0x1890] sm:$0xff]
  %v4474 = vld [vmem:[%s3 + $0x1898] sm:$0xff]
  %v4475 = vld [vmem:[%s3 + $0x18a0] sm:$0xff]
  %v4476 = vld [vmem:[%s3 + $0x18a8] sm:$0xff]
  %v4477 = vld [vmem:[%s3 + $0x18b0] sm:$0xff]
  %v4478 = vld [vmem:[%s3 + $0x18b8] sm:$0xff]
  %v4479 = vld [vmem:[%s3 + $0x18c0] sm:$0xff]
  %v4480 = vld [vmem:[%s3 + $0x18c8] sm:$0xff]
  %v4481 = vld [vmem:[%s3 + $0x18d0] sm:$0xff]
  %v4482 = vld [vmem:[%s3 + $0x18d8] sm:$0xff]
  %v4483 = vld [vmem:[%s3 + $0x18e0] sm:$0xff]
  %v4484 = vld [vmem:[%s3 + $0x18e8] sm:$0xff]
  %v4485 = vld [vmem:[%s3 + $0x18f0] sm:$0xff]
  %v4486 = vld [vmem:[%s3 + $0x18f8] sm:$0xff]
  %v4487 = vld [vmem:[%s3 + $0x1900] sm:$0xff]
  %v4488 = vld [vmem:[%s3 + $0x1908] sm:$0xff]
  %v4489 = vld [vmem:[%s3 + $0x1910] sm:$0xff]
  %v4490 = vld [vmem:[%s3 + $0x1918] sm:$0xff]
  %v4491 = vld [vmem:[%s3 + $0x1920] sm:$0xff]
  %v4492 = vld [vmem:[%s3 + $0x1928] sm:$0xff]
  %v4493 = vld [vmem:[%s3 + $0x1930] sm:$0xff]
  %v4494 = vld [vmem:[%s3 + $0x1938] sm:$0xff]
  %v4495 = vld [vmem:[%s3 + $0x1940] sm:$0xff]
  %v4496 = vld [vmem:[%s3 + $0x1948] sm:$0xff]
  %v4497 = vld [vmem:[%s3 + $0x1950] sm:$0xff]
  %v4498 = vld [vmem:[%s3 + $0x1958] sm:$0xff]
  %v4499 = vld [vmem:[%s3 + $0x1960] sm:$0xff]
  %v4500 = vld [vmem:[%s3 + $0x1968] sm:$0xff]
  %v4501 = vld [vmem:[%s3 + $0x1970] sm:$0xff]
  %v4502 = vld [vmem:[%s3 + $0x1978] sm:$0xff]
  %v4503 = vld [vmem:[%s3 + $0x1980] sm:$0xff]
  %v4504 = vld [vmem:[%s3 + $0x1988] sm:$0xff]
  %v4505 = vld [vmem:[%s3 + $0x1990] sm:$0xff]
  %v4506 = vld [vmem:[%s3 + $0x1998] sm:$0xff]
  %v4507 = vld [vmem:[%s3 + $0x19a0] sm:$0xff]
  %v4508 = vld [vmem:[%s3 + $0x19a8] sm:$0xff]
  %v4509 = vld [vmem:[%s3 + $0x19b0] sm:$0xff]
  %v4510 = vld [vmem:[%s3 + $0x19b8] sm:$0xff]
  %v4511 = vld [vmem:[%s3 + $0x19c0] sm:$0xff]
  %v4512 = vld [vmem:[%s3 + $0x19c8] sm:$0xff]
  %v4513 = vld [vmem:[%s3 + $0x19d0] sm:$0xff]
  %v4514 = vld [vmem:[%s3 + $0x19d8] sm:$0xff]
  %v4515 = vld [vmem:[%s3 + $0x19e0] sm:$0xff]
  %v4516 = vld [vmem:[%s3 + $0x19e8] sm:$0xff]
  %v4517 = vld [vmem:[%s3 + $0x19f0] sm:$0xff]
  %v4518 = vld [vmem:[%s3 + $0x19f8] sm:$0xff]
  %v4519 = vld [vmem:[%s4] sm:$0xff]
  %v4521 = vlaneseq
  %v4522 = vshrl.u32 %v4521, 7
  %v4523 = vsub.s32 0, %v4522
  %v4524 = vrot.slane %v4519, %v4523
  %v4525 = vlaneseq
  %v4526 = vshrl.u32 %v4525, 7
  %v4527 = vsub.s32 1, %v4526
  %v4528 = vrot.slane %v4519, %v4527
  %v4529 = vlaneseq
  %v4530 = vshrl.u32 %v4529, 7
  %v4531 = vsub.s32 2, %v4530
  %v4532 = vrot.slane %v4519, %v4531
  %v4533 = vlaneseq
  %v4534 = vshrl.u32 %v4533, 7
  %v4535 = vsub.s32 3, %v4534
  %v4536 = vrot.slane %v4519, %v4535
  %v4537 = vlaneseq
  %v4538 = vshrl.u32 %v4537, 7
  %v4539 = vsub.s32 4, %v4538
  %v4540 = vrot.slane %v4519, %v4539
  %v4541 = vlaneseq
  %v4542 = vshrl.u32 %v4541, 7
  %v4543 = vsub.s32 5, %v4542
  %v4544 = vrot.slane %v4519, %v4543
  %v4545 = vlaneseq
  %v4546 = vshrl.u32 %v4545, 7
  %v4547 = vsub.s32 6, %v4546
  %v4548 = vrot.slane %v4519, %v4547
  %v4549 = vlaneseq
  %v4550 = vshrl.u32 %v4549, 7
  %v4551 = vsub.s32 7, %v4550
  %v4552 = vrot.slane %v4519, %v4551
  %vm4561 = vcmask 523264
  %v4563 = vsel %vm4561, %v3679, 0
  %v4566 = vsel %vm4561, %v3684, 0
  %4568 = vmatprep.subr.mxu0 %v3688
  %4569 = vmatpush1.msra.mxu0 %v3687
  %4570 = vmatprep.subr.mxu0 %v3696
  %4571 = vmatpush1.msra.mxu0 %v3695
  %4572 = vmatprep.subr.mxu0 %v3704
  %4573 = vmatpush1.msra.mxu0 %v3703
  %4574 = vmatprep.subr.mxu0 %v3712
  %4575 = vmatpush1.msra.mxu0 %v3711
  %4576 = vmatprep.subr.mxu0 %v3720
  %4577 = vmatpush1.msra.mxu0 %v3719
  %4578 = vmatprep.subr.mxu0 %v3728
  %4579 = vmatpush1.msra.mxu0 %v3727
  %4580 = vmatprep.subr.mxu0 %v3736
  %4581 = vmatpush1.msra.mxu0 %v3735
  %4582 = vmatprep.subr.mxu0 %v3744
  %4583 = vmatpush1.msra.mxu0 %v3743
  %4584 = vmatprep.subr.mxu0 %v3752
  %4585 = vmatpush1.msra.mxu0 %v3751
  %4586 = vmatprep.subr.mxu0 %v3760
  %4587 = vmatpush1.msra.mxu0 %v3759
  %4588 = vmatprep.subr.mxu0 %v3768
  %4589 = vmatpush1.msra.mxu0 %v3767
  %4590 = vmatprep.subr.mxu0 %v3776
  %4591 = vmatpush1.msra.mxu0 %v3775
  %4592 = vmatprep.subr.mxu0 %v3784
  %4593 = vmatpush1.msra.mxu0 %v3783
  %4594 = vmatprep.subr.mxu0 %v3792
  %4595 = vmatpush1.msra.mxu0 %v3791
  %4596 = vmatprep.subr.mxu0 %v3800
  %4597 = vmatpush1.msra.mxu0 %v3799
  %4598 = vmatprep.subr.mxu0 %v3808
  %4599 = vmatpush1.msra.mxu0 %v3807
  %4600 = vmatprep.subr.mxu0 %v3816
  %4601 = vmatpush1.msra.mxu0 %v3815
  %4602 = vmatprep.subr.mxu0 %v3824
  %4603 = vmatpush1.msra.mxu0 %v3823
  %4604 = vmatprep.subr.mxu0 %v3832
  %4605 = vmatpush1.msra.mxu0 %v3831
  %4606 = vmatprep.subr.mxu0 %v3840
  %4607 = vmatpush1.msra.mxu0 %v3839
  %4608 = vmatprep.subr.mxu0 %v3848
  %4609 = vmatpush1.msra.mxu0 %v3847
  %4610 = vmatprep.subr.mxu0 %v3856
  %4611 = vmatpush1.msra.mxu0 %v3855
  %4612 = vmatprep.subr.mxu0 %v3864
  %4613 = vmatpush1.msra.mxu0 %v3863
  %4614 = vmatprep.subr.mxu0 %v3872
  %4615 = vmatpush1.msra.mxu0 %v3871
  %4616 = vmatprep.subr.mxu0 %v3880
  %4617 = vmatpush1.msra.mxu0 %v3879
  %4618 = vmatprep.subr.mxu0 %v3888
  %4619 = vmatpush1.msra.mxu0 %v3887
  %4620 = vmatprep.subr.mxu0 %v3896
  %4621 = vmatpush1.msra.mxu0 %v3895
  %4622 = vmatprep.subr.mxu0 %v3904
  %4623 = vmatpush1.msra.mxu0 %v3903
  %4624 = vmatprep.subr.mxu0 %v3912
  %4625 = vmatpush1.msra.mxu0 %v3911
  %4626 = vmatprep.subr.mxu0 %v3920
  %4627 = vmatpush1.msra.mxu0 %v3919
  %4628 = vmatprep.subr.mxu0 %v3928
  %4629 = vmatpush1.msra.mxu0 %v3927
  %4630 = vmatprep.subr.mxu0 %v3936
  %4631 = vmatpush1.msra.mxu0 %v3935
  %4632 = vmatprep.mubr.f32.mxu0 %v2076
  %4633 = vmatmul.mubr.f32.gmra.mrb[0].mxu0 %v2074
  %v4634 = vpop.f32.mrb[0].mxu0
  %v4635 = vadd.f32 %v4524, %v4634
  %v4636 = vpop.f32.mrb[0].mxu0
  %v4637 = vadd.f32 %v4528, %v4636
  %4638 = vmatprep.mubr.f32.mxu0 %v2082
  %4639 = vmatmul.mubr.f32.gmra.mrb[0].mxu0 %v2080
  %v4640 = vpop.f32.mrb[0].mxu0
  %v4641 = vadd.f32 %v4524, %v4640
  %v4642 = vpop.f32.mrb[0].mxu0
  %v4643 = vadd.f32 %v4528, %v4642
  %4644 = vdwg.mxu0
  %4645 = vmatprep.subr.mxu0 %v3944
  %4646 = vmatpush1.msra.mxu0 %v3943
  %4647 = vmatprep.subr.mxu0 %v3952
  %4648 = vmatpush1.msra.mxu0 %v3951
  %4649 = vmatprep.subr.mxu0 %v3960
  %4650 = vmatpush1.msra.mxu0 %v3959
  %4651 = vmatprep.subr.mxu0 %v3968
  %4652 = vmatpush1.msra.mxu0 %v3967
  %4653 = vmatprep.subr.mxu0 %v3976
  %4654 = vmatpush1.msra.mxu0 %v3975
  %4655 = vmatprep.subr.mxu0 %v3984
  %4656 = vmatpush1.msra.mxu0 %v3983
  %4657 = vmatprep.subr.mxu0 %v3992
  %4658 = vmatpush1.msra.mxu0 %v3991
  %4659 = vmatprep.subr.mxu0 %v4000
  %4660 = vmatpush1.msra.mxu0 %v3999
  %4661 = vmatprep.subr.mxu0 %v4008
  %4662 = vmatpush1.msra.mxu0 %v4007
  %4663 = vmatprep.subr.mxu0 %v4016
  %4664 = vmatpush1.msra.mxu0 %v4015
  %4665 = vmatprep.subr.mxu0 %v4024
  %4666 = vmatpush1.msra.mxu0 %v4023
  %4667 = vmatprep.subr.mxu0 %v4032
  %4668 = vmatpush1.msra.mxu0 %v4031
  %4669 = vmatprep.subr.mxu0 %v4040
  %4670 = vmatpush1.msra.mxu0 %v4039
  %4671 = vmatprep.subr.mxu0 %v4048
  %4672 = vmatpush1.msra.mxu0 %v4047
  %4673 = vmatprep.subr.mxu0 %v4056
  %4674 = vmatpush1.msra.mxu0 %v4055
  %4675 = vmatprep.subr.mxu0 %v4064
  %4676 = vmatpush1.msra.mxu0 %v4063
  %4677 = vmatprep.subr.mxu0 %v4072
  %4678 = vmatpush1.msra.mxu0 %v4071
  %4679 = vmatprep.subr.mxu0 %v4080
  %4680 = vmatpush1.msra.mxu0 %v4079
  %4681 = vmatprep.subr.mxu0 %v4088
  %4682 = vmatpush1.msra.mxu0 %v4087
  %4683 = vmatprep.subr.mxu0 %v4096
  %4684 = vmatpush1.msra.mxu0 %v4095
  %4685 = vmatprep.subr.mxu0 %v4104
  %4686 = vmatpush1.msra.mxu0 %v4103
  %4687 = vmatprep.subr.mxu0 %v4112
  %4688 = vmatpush1.msra.mxu0 %v4111
  %4689 = vmatprep.subr.mxu0 %v4120
  %4690 = vmatpush1.msra.mxu0 %v4119
  %4691 = vmatprep.subr.mxu0 %v4128
  %4692 = vmatpush1.msra.mxu0 %v4127
  %4693 = vmatprep.subr.mxu0 %v4136
  %4694 = vmatpush1.msra.mxu0 %v4135
  %4695 = vmatprep.subr.mxu0 %v4144
  %4696 = vmatpush1.msra.mxu0 %v4143
  %4697 = vmatprep.subr.mxu0 %v4152
  %4698 = vmatpush1.msra.mxu0 %v4151
  %4699 = vmatprep.subr.mxu0 %v4160
  %4700 = vmatpush1.msra.mxu0 %v4159
  %4701 = vmatprep.subr.mxu0 %v4168
  %4702 = vmatpush1.msra.mxu0 %v4167
  %4703 = vmatprep.subr.mxu0 %v4176
  %4704 = vmatpush1.msra.mxu0 %v4175
  %4705 = vmatprep.subr.mxu0 %v4184
  %4706 = vmatpush1.msra.mxu0 %v4183
  %4707 = vmatprep.subr.mxu0 %v4192
  %4708 = vmatpush1.msra.mxu0 %v4191
  %4709 = vmatprep.mubr.f32.mxu0 %v2615
  %4710 = vmatmul.mubr.f32.gmra.mrb[0].mxu0 %v2613
  %v4711 = vpop.f32.mrb[0].mxu0
  %v4712 = vadd.f32 %v4635, %v4711
  %v4713 = vpop.f32.mrb[0].mxu0
  %v4714 = vadd.f32 %v4637, %v4713
  %4715 = vmatprep.mubr.f32.mxu0 %v2621
  %4716 = vmatmul.mubr.f32.gmra.mrb[0].mxu0 %v2619
  %v4717 = vpop.f32.mrb[0].mxu0
  %v4718 = vadd.f32 %v4641, %v4717
  %v4719 = vpop.f32.mrb[0].mxu0
  %v4720 = vadd.f32 %v4643, %v4719
  %4721 = vdwg.mxu0
  %4722 = vmatprep.subr.mxu0 %v4200
  %4723 = vmatpush1.msra.mxu0 %v4199
  %4724 = vmatprep.subr.mxu0 %v4208
  %4725 = vmatpush1.msra.mxu0 %v4207
  %4726 = vmatprep.subr.mxu0 %v4216
  %4727 = vmatpush1.msra.mxu0 %v4215
  %4728 = vmatprep.subr.mxu0 %v4224
  %4729 = vmatpush1.msra.mxu0 %v4223
  %4730 = vmatprep.subr.mxu0 %v4232
  %4731 = vmatpush1.msra.mxu0 %v4231
  %4732 = vmatprep.subr.mxu0 %v4240
  %4733 = vmatpush1.msra.mxu0 %v4239
  %4734 = vmatprep.subr.mxu0 %v4248
  %4735 = vmatpush1.msra.mxu0 %v4247
  %4736 = vmatprep.subr.mxu0 %v4256
  %4737 = vmatpush1.msra.mxu0 %v4255
  %4738 = vmatprep.subr.mxu0 %v4264
  %4739 = vmatpush1.msra.mxu0 %v4263
  %4740 = vmatprep.subr.mxu0 %v4272
  %4741 = vmatpush1.msra.mxu0 %v4271
  %4742 = vmatprep.subr.mxu0 %v4280
  %4743 = vmatpush1.msra.mxu0 %v4279
  %4744 = vmatprep.subr.mxu0 %v4288
  %4745 = vmatpush1.msra.mxu0 %v4287
  %4746 = vmatprep.subr.mxu0 %v4296
  %4747 = vmatpush1.msra.mxu0 %v4295
  %4748 = vmatprep.subr.mxu0 %v4304
  %4749 = vmatpush1.msra.mxu0 %v4303
  %4750 = vmatprep.subr.mxu0 %v4312
  %4751 = vmatpush1.msra.mxu0 %v4311
  %4752 = vmatprep.subr.mxu0 %v4320
  %4753 = vmatpush1.msra.mxu0 %v4319
  %4754 = vmatprep.subr.mxu0 %v4328
  %4755 = vmatpush1.msra.mxu0 %v4327
  %4756 = vmatprep.subr.mxu0 %v4336
  %4757 = vmatpush1.msra.mxu0 %v4335
  %4758 = vmatprep.subr.mxu0 %v4344
  %4759 = vmatpush1.msra.mxu0 %v4343
  %4760 = vmatprep.subr.mxu0 %v4352
  %4761 = vmatpush1.msra.mxu0 %v4351
  %4762 = vmatprep.subr.mxu0 %v4360
  %4763 = vmatpush1.msra.mxu0 %v4359
  %4764 = vmatprep.subr.mxu0 %v4368
  %4765 = vmatpush1.msra.mxu0 %v4367
  %4766 = vmatprep.subr.mxu0 %v4376
  %4767 = vmatpush1.msra.mxu0 %v4375
  %4768 = vmatprep.subr.mxu0 %v4384
  %4769 = vmatpush1.msra.mxu0 %v4383
  %4770 = vmatprep.subr.mxu0 %v4392
  %4771 = vmatpush1.msra.mxu0 %v4391
  %4772 = vmatprep.subr.mxu0 %v4400
  %4773 = vmatpush1.msra.mxu0 %v4399
  %4774 = vmatprep.subr.mxu0 %v4408
  %4775 = vmatpush1.msra.mxu0 %v4407
  %4776 = vmatprep.subr.mxu0 %v4416
  %4777 = vmatpush1.msra.mxu0 %v4415
  %4778 = vmatprep.subr.mxu0 %v4424
  %4779 = vmatpush1.msra.mxu0 %v4423
  %4780 = vmatprep.subr.mxu0 %v4432
  %4781 = vmatpush1.msra.mxu0 %v4431
  %4782 = vmatprep.subr.mxu0 %v4440
  %4783 = vmatpush1.msra.mxu0 %v4439
  %4784 = vmatprep.subr.mxu0 %v4448
  %4785 = vmatpush1.msra.mxu0 %v4447
  %4786 = vmatprep.mubr.f32.mxu0 %v3154
  %4787 = vmatmul.mubr.f32.gmra.mrb[0].mxu0 %v3152
  %v4788 = vpop.f32.mrb[0].mxu0
  %v4789 = vadd.f32 %v4712, %v4788
  %v4790 = vpop.f32.mrb[0].mxu0
  %v4791 = vadd.f32 %v4714, %v4790
  %4792 = vmatprep.mubr.f32.mxu0 %v3160
  %4793 = vmatmul.mubr.f32.gmra.mrb[0].mxu0 %v3158
  %v4794 = vpop.f32.mrb[0].mxu0
  %v4795 = vadd.f32 %v4718, %v4794
  %v4796 = vpop.f32.mrb[0].mxu0
  %v4797 = vadd.f32 %v4720, %v4796
  %4798 = vdwg.mxu0
  %4799 = vmatprep.subr.mxu0 %v4456
  %4800 = vmatpush1.msra.mxu0 %v4455
  %4801 = vmatprep.subr.mxu0 %v4464
  %4802 = vmatpush1.msra.mxu0 %v4463
  %4803 = vmatprep.subr.mxu0 %v4472
  %4804 = vmatpush1.msra.mxu0 %v4471
  %4805 = vmatprep.subr.mxu0 %v4480
  %4806 = vmatpush1.msra.mxu0 %v4479
  %4807 = vmatprep.subr.mxu0 %v4488
  %4808 = vmatpush1.msra.mxu0 %v4487
  %4809 = vmatprep.subr.mxu0 %v4496
  %4810 = vmatpush1.msra.mxu0 %v4495
  %4811 = vmatprep.subr.mxu0 %v4504
  %4812 = vmatpush1.msra.mxu0 %v4503
  %4813 = vmatprep.subr.mxu0 %v4512
  %4814 = vmatpush1.msra.mxu0 %v4511
  %4815 = vmatprep.subr.mxu0 0.0
  %4816 = vmatpush1.msra.mxu0 0.0
  %4817 = vmatprep.subr.mxu0 0.0
  %4818 = vmatpush1.msra.mxu0 0.0
  %4819 = vmatprep.subr.mxu0 0.0
  %4820 = vmatpush1.msra.mxu0 0.0
  %4821 = vmatprep.subr.mxu0 0.0
  %4822 = vmatpush1.msra.mxu0 0.0
  %4823 = vmatprep.subr.mxu0 0.0
  %4824 = vmatpush1.msra.mxu0 0.0
  %4825 = vmatprep.subr.mxu0 0.0
  %4826 = vmatpush1.msra.mxu0 0.0
  %4827 = vmatprep.subr.mxu0 0.0
  %4828 = vmatpush1.msra.mxu0 0.0
  %4829 = vmatprep.subr.mxu0 0.0
  %4830 = vmatpush1.msra.mxu0 0.0
  %4831 = vmatprep.subr.mxu0 0.0
  %4832 = vmatpush1.msra.mxu0 0.0
  %4833 = vmatprep.subr.mxu0 0.0
  %4834 = vmatpush1.msra.mxu0 0.0
  %4835 = vmatprep.subr.mxu0 0.0
  %4836 = vmatpush1.msra.mxu0 0.0
  %4837 = vmatprep.subr.mxu0 0.0
  %4838 = vmatpush1.msra.mxu0 0.0
  %4839 = vmatprep.subr.mxu0 0.0
  %4840 = vmatpush1.msra.mxu0 0.0
  %4841 = vmatprep.subr.mxu0 0.0
  %4842 = vmatpush1.msra.mxu0 0.0
  %4843 = vmatprep.subr.mxu0 0.0
  %4844 = vmatpush1.msra.mxu0 0.0
  %4845 = vmatprep.subr.mxu0 0.0
  %4846 = vmatpush1.msra.mxu0 0.0
  %4847 = vmatprep.subr.mxu0 0.0
  %4848 = vmatpush1.msra.mxu0 0.0
  %4849 = vmatprep.subr.mxu0 0.0
  %4850 = vmatpush1.msra.mxu0 0.0
  %4851 = vmatprep.subr.mxu0 0.0
  %4852 = vmatpush1.msra.mxu0 0.0
  %4853 = vmatprep.subr.mxu0 0.0
  %4854 = vmatpush1.msra.mxu0 0.0
  %4855 = vmatprep.subr.mxu0 0.0
  %4856 = vmatpush1.msra.mxu0 0.0
  %4857 = vmatprep.subr.mxu0 0.0
  %4858 = vmatpush1.msra.mxu0 0.0
  %4859 = vmatprep.subr.mxu0 0.0
  %4860 = vmatpush1.msra.mxu0 0.0
  %4861 = vmatprep.subr.mxu0 0.0
  %4862 = vmatpush1.msra.mxu0 0.0
  %4863 = vmatprep.mubr.f32.mxu0 0.0
  %4864 = vmatmul.mubr.f32.gmra.mrb[0].mxu0 %v4563
  %v4865 = vpop.f32.mrb[0].mxu0
  %v4866 = vadd.f32 %v4789, %v4865
  %v4867 = vpop.f32.mrb[0].mxu0
  %v4868 = vadd.f32 %v4791, %v4867
  %4869 = vmatprep.mubr.f32.mxu0 0.0
  %4870 = vmatmul.mubr.f32.gmra.mrb[0].mxu0 %v4566
  %v4871 = vpop.f32.mrb[0].mxu0
  %v4872 = vadd.f32 %v4795, %v4871
  %v4873 = vpop.f32.mrb[0].mxu0
  %v4874 = vadd.f32 %v4797, %v4873
  %4875 = vdwg.mxu0
  %4876 = vmatprep.subr.mxu0 %v3690
  %4877 = vmatpush1.msra.mxu0 %v3689
  %4878 = vmatprep.subr.mxu0 %v3698
  %4879 = vmatpush1.msra.mxu0 %v3697
  %4880 = vmatprep.subr.mxu0 %v3706
  %4881 = vmatpush1.msra.mxu0 %v3705
  %4882 = vmatprep.subr.mxu0 %v3714
  %4883 = vmatpush1.msra.mxu0 %v3713
  %4884 = vmatprep.subr.mxu0 %v3722
  %4885 = vmatpush1.msra.mxu0 %v3721
  %4886 = vmatprep.subr.mxu0 %v3730
  %4887 = vmatpush1.msra.mxu0 %v3729
  %4888 = vmatprep.subr.mxu0 %v3738
  %4889 = vmatpush1.msra.mxu0 %v3737
  %4890 = vmatprep.subr.mxu0 %v3746
  %4891 = vmatpush1.msra.mxu0 %v3745
  %4892 = vmatprep.subr.mxu0 %v3754
  %4893 = vmatpush1.msra.mxu0 %v3753
  %4894 = vmatprep.subr.mxu0 %v3762
  %4895 = vmatpush1.msra.mxu0 %v3761
  %4896 = vmatprep.subr.mxu0 %v3770
  %4897 = vmatpush1.msra.mxu0 %v3769
  %4898 = vmatprep.subr.mxu0 %v3778
  %4899 = vmatpush1.msra.mxu0 %v3777
  %4900 = vmatprep.subr.mxu0 %v3786
  %4901 = vmatpush1.msra.mxu0 %v3785
  %4902 = vmatprep.subr.mxu0 %v3794
  %4903 = vmatpush1.msra.mxu0 %v3793
  %4904 = vmatprep.subr.mxu0 %v3802
  %4905 = vmatpush1.msra.mxu0 %v3801
  %4906 = vmatprep.subr.mxu0 %v3810
  %4907 = vmatpush1.msra.mxu0 %v3809
  %4908 = vmatprep.subr.mxu0 %v3818
  %4909 = vmatpush1.msra.mxu0 %v3817
  %4910 = vmatprep.subr.mxu0 %v3826
  %4911 = vmatpush1.msra.mxu0 %v3825
  %4912 = vmatprep.subr.mxu0 %v3834
  %4913 = vmatpush1.msra.mxu0 %v3833
  %4914 = vmatprep.subr.mxu0 %v3842
  %4915 = vmatpush1.msra.mxu0 %v3841
  %4916 = vmatprep.subr.mxu0 %v3850
  %4917 = vmatpush1.msra.mxu0 %v3849
  %4918 = vmatprep.subr.mxu0 %v3858
  %4919 = vmatpush1.msra.mxu0 %v3857
  %4920 = vmatprep.subr.mxu0 %v3866
  %4921 = vmatpush1.msra.mxu0 %v3865
  %4922 = vmatprep.subr.mxu0 %v3874
  %4923 = vmatpush1.msra.mxu0 %v3873
  %4924 = vmatprep.subr.mxu0 %v3882
  %4925 = vmatpush1.msra.mxu0 %v3881
  %4926 = vmatprep.subr.mxu0 %v3890
  %4927 = vmatpush1.msra.mxu0 %v3889
  %4928 = vmatprep.subr.mxu0 %v3898
  %4929 = vmatpush1.msra.mxu0 %v3897
  %4930 = vmatprep.subr.mxu0 %v3906
  %4931 = vmatpush1.msra.mxu0 %v3905
  %4932 = vmatprep.subr.mxu0 %v3914
  %4933 = vmatpush1.msra.mxu0 %v3913
  %4934 = vmatprep.subr.mxu0 %v3922
  %4935 = vmatpush1.msra.mxu0 %v3921
  %4936 = vmatprep.subr.mxu0 %v3930
  %4937 = vmatpush1.msra.mxu0 %v3929
  %4938 = vmatprep.subr.mxu0 %v3938
  %4939 = vmatpush1.msra.mxu0 %v3937
  %4940 = vmatprep.mubr.f32.mxu0 %v2076
  %4941 = vmatmul.mubr.f32.gmra.mrb[0].mxu0 %v2074
  %v4942 = vpop.f32.mrb[0].mxu0
  %v4943 = vadd.f32 %v4532, %v4942
  %v4944 = vpop.f32.mrb[0].mxu0
  %v4945 = vadd.f32 %v4536, %v4944
  %4946 = vmatprep.mubr.f32.mxu0 %v2082
  %4947 = vmatmul.mubr.f32.gmra.mrb[0].mxu0 %v2080
  %v4948 = vpop.f32.mrb[0].mxu0
  %v4949 = vadd.f32 %v4532, %v4948
  %v4950 = vpop.f32.mrb[0].mxu0
  %v4951 = vadd.f32 %v4536, %v4950
  %4952 = vdwg.mxu0
  %4953 = vmatprep.subr.mxu0 %v3946
  %4954 = vmatpush1.msra.mxu0 %v3945
  %4955 = vmatprep.subr.mxu0 %v3954
  %4956 = vmatpush1.msra.mxu0 %v3953
  %4957 = vmatprep.subr.mxu0 %v3962
  %4958 = vmatpush1.msra.mxu0 %v3961
  %4959 = vmatprep.subr.mxu0 %v3970
  %4960 = vmatpush1.msra.mxu0 %v3969
  %4961 = vmatprep.subr.mxu0 %v3978
  %4962 = vmatpush1.msra.mxu0 %v3977
  %4963 = vmatprep.subr.mxu0 %v3986
  %4964 = vmatpush1.msra.mxu0 %v3985
  %4965 = vmatprep.subr.mxu0 %v3994
  %4966 = vmatpush1.msra.mxu0 %v3993
  %4967 = vmatprep.subr.mxu0 %v4002
  %4968 = vmatpush1.msra.mxu0 %v4001
  %4969 = vmatprep.subr.mxu0 %v4010
  %4970 = vmatpush1.msra.mxu0 %v4009
  %4971 = vmatprep.subr.mxu0 %v4018
  %4972 = vmatpush1.msra.mxu0 %v4017
  %4973 = vmatprep.subr.mxu0 %v4026
  %4974 = vmatpush1.msra.mxu0 %v4025
  %4975 = vmatprep.subr.mxu0 %v4034
  %4976 = vmatpush1.msra.mxu0 %v4033
  %4977 = vmatprep.subr.mxu0 %v4042
  %4978 = vmatpush1.msra.mxu0 %v4041
  %4979 = vmatprep.subr.mxu0 %v4050
  %4980 = vmatpush1.msra.mxu0 %v4049
  %4981 = vmatprep.subr.mxu0 %v4058
  %4982 = vmatpush1.msra.mxu0 %v4057
  %4983 = vmatprep.subr.mxu0 %v4066
  %4984 = vmatpush1.msra.mxu0 %v4065
  %4985 = vmatprep.subr.mxu0 %v4074
  %4986 = vmatpush1.msra.mxu0 %v4073
  %4987 = vmatprep.subr.mxu0 %v4082
  %4988 = vmatpush1.msra.mxu0 %v4081
  %4989 = vmatprep.subr.mxu0 %v4090
  %4990 = vmatpush1.msra.mxu0 %v4089
  %4991 = vmatprep.subr.mxu0 %v4098
  %4992 = vmatpush1.msra.mxu0 %v4097
  %4993 = vmatprep.subr.mxu0 %v4106
  %4994 = vmatpush1.msra.mxu0 %v4105
  %4995 = vmatprep.subr.mxu0 %v4114
  %4996 = vmatpush1.msra.mxu0 %v4113
  %4997 = vmatprep.subr.mxu0 %v4122
  %4998 = vmatpush1.msra.mxu0 %v4121
  %4999 = vmatprep.subr.mxu0 %v4130
  %5000 = vmatpush1.msra.mxu0 %v4129
  %5001 = vmatprep.subr.mxu0 %v4138
  %5002 = vmatpush1.msra.mxu0 %v4137
  %5003 = vmatprep.subr.mxu0 %v4146
  %5004 = vmatpush1.msra.mxu0 %v4145
  %5005 = vmatprep.subr.mxu0 %v4154
  %5006 = vmatpush1.msra.mxu0 %v4153
  %5007 = vmatprep.subr.mxu0 %v4162
  %5008 = vmatpush1.msra.mxu0 %v4161
  %5009 = vmatprep.subr.mxu0 %v4170
  %5010 = vmatpush1.msra.mxu0 %v4169
  %5011 = vmatprep.subr.mxu0 %v4178
  %5012 = vmatpush1.msra.mxu0 %v4177
  %5013 = vmatprep.subr.mxu0 %v4186
  %5014 = vmatpush1.msra.mxu0 %v4185
  %5015 = vmatprep.subr.mxu0 %v4194
  %5016 = vmatpush1.msra.mxu0 %v4193
  %5017 = vmatprep.mubr.f32.mxu0 %v2615
  %5018 = vmatmul.mubr.f32.gmra.mrb[0].mxu0 %v2613
  %v5019 = vpop.f32.mrb[0].mxu0
  %v5020 = vadd.f32 %v4943, %v5019
  %v5021 = vpop.f32.mrb[0].mxu0
  %v5022 = vadd.f32 %v4945, %v5021
  %5023 = vmatprep.mubr.f32.mxu0 %v2621
  %5024 = vmatmul.mubr.f32.gmra.mrb[0].mxu0 %v2619
  %v5025 = vpop.f32.mrb[0].mxu0
  %v5026 = vadd.f32 %v4949, %v5025
  %v5027 = vpop.f32.mrb[0].mxu0
  %v5028 = vadd.f32 %v4951, %v5027
  %5029 = vdwg.mxu0
  %5030 = vmatprep.subr.mxu0 %v4202
  %5031 = vmatpush1.msra.mxu0 %v4201
  %5032 = vmatprep.subr.mxu0 %v4210
  %5033 = vmatpush1.msra.mxu0 %v4209
  %5034 = vmatprep.subr.mxu0 %v4218
  %5035 = vmatpush1.msra.mxu0 %v4217
  %5036 = vmatprep.subr.mxu0 %v4226
  %5037 = vmatpush1.msra.mxu0 %v4225
  %5038 = vmatprep.subr.mxu0 %v4234
  %5039 = vmatpush1.msra.mxu0 %v4233
  %5040 = vmatprep.subr.mxu0 %v4242
  %5041 = vmatpush1.msra.mxu0 %v4241
  %5042 = vmatprep.subr.mxu0 %v4250
  %5043 = vmatpush1.msra.mxu0 %v4249
  %5044 = vmatprep.subr.mxu0 %v4258
  %5045 = vmatpush1.msra.mxu0 %v4257
  %5046 = vmatprep.subr.mxu0 %v4266
  %5047 = vmatpush1.msra.mxu0 %v4265
  %5048 = vmatprep.subr.mxu0 %v4274
  %5049 = vmatpush1.msra.mxu0 %v4273
  %5050 = vmatprep.subr.mxu0 %v4282
  %5051 = vmatpush1.msra.mxu0 %v4281
  %5052 = vmatprep.subr.mxu0 %v4290
  %5053 = vmatpush1.msra.mxu0 %v4289
  %5054 = vmatprep.subr.mxu0 %v4298
  %5055 = vmatpush1.msra.mxu0 %v4297
  %5056 = vmatprep.subr.mxu0 %v4306
  %5057 = vmatpush1.msra.mxu0 %v4305
  %5058 = vmatprep.subr.mxu0 %v4314
  %5059 = vmatpush1.msra.mxu0 %v4313
  %5060 = vmatprep.subr.mxu0 %v4322
  %5061 = vmatpush1.msra.mxu0 %v4321
  %5062 = vmatprep.subr.mxu0 %v4330
  %5063 = vmatpush1.msra.mxu0 %v4329
  %5064 = vmatprep.subr.mxu0 %v4338
  %5065 = vmatpush1.msra.mxu0 %v4337
  %5066 = vmatprep.subr.mxu0 %v4346
  %5067 = vmatpush1.msra.mxu0 %v4345
  %5068 = vmatprep.subr.mxu0 %v4354
  %5069 = vmatpush1.msra.mxu0 %v4353
  %5070 = vmatprep.subr.mxu0 %v4362
  %5071 = vmatpush1.msra.mxu0 %v4361
  %5072 = vmatprep.subr.mxu0 %v4370
  %5073 = vmatpush1.msra.mxu0 %v4369
  %5074 = vmatprep.subr.mxu0 %v4378
  %5075 = vmatpush1.msra.mxu0 %v4377
  %5076 = vmatprep.subr.mxu0 %v4386
  %5077 = vmatpush1.msra.mxu0 %v4385
  %5078 = vmatprep.subr.mxu0 %v4394
  %5079 = vmatpush1.msra.mxu0 %v4393
  %5080 = vmatprep.subr.mxu0 %v4402
  %5081 = vmatpush1.msra.mxu0 %v4401
  %5082 = vmatprep.subr.mxu0 %v4410
  %5083 = vmatpush1.msra.mxu0 %v4409
  %5084 = vmatprep.subr.mxu0 %v4418
  %5085 = vmatpush1.msra.mxu0 %v4417
  %5086 = vmatprep.subr.mxu0 %v4426
  %5087 = vmatpush1.msra.mxu0 %v4425
  %5088 = vmatprep.subr.mxu0 %v4434
  %5089 = vmatpush1.msra.mxu0 %v4433
  %5090 = vmatprep.subr.mxu0 %v4442
  %5091 = vmatpush1.msra.mxu0 %v4441
  %5092 = vmatprep.subr.mxu0 %v4450
  %5093 = vmatpush1.msra.mxu0 %v4449
  %5094 = vmatprep.mubr.f32.mxu0 %v3154
  %5095 = vmatmul.mubr.f32.gmra.mrb[0].mxu0 %v3152
  %v5096 = vpop.f32.mrb[0].mxu0
  %v5097 = vadd.f32 %v5020, %v5096
  %v5098 = vpop.f32.mrb[0].mxu0
  %v5099 = vadd.f32 %v5022, %v5098
  %5100 = vmatprep.mubr.f32.mxu0 %v3160
  %5101 = vmatmul.mubr.f32.gmra.mrb[0].mxu0 %v3158
  %v5102 = vpop.f32.mrb[0].mxu0
  %v5103 = vadd.f32 %v5026, %v5102
  %v5104 = vpop.f32.mrb[0].mxu0
  %v5105 = vadd.f32 %v5028, %v5104
  %5106 = vdwg.mxu0
  %5107 = vmatprep.subr.mxu0 %v4458
  %5108 = vmatpush1.msra.mxu0 %v4457
  %5109 = vmatprep.subr.mxu0 %v4466
  %5110 = vmatpush1.msra.mxu0 %v4465
  %5111 = vmatprep.subr.mxu0 %v4474
  %5112 = vmatpush1.msra.mxu0 %v4473
  %5113 = vmatprep.subr.mxu0 %v4482
  %5114 = vmatpush1.msra.mxu0 %v4481
  %5115 = vmatprep.subr.mxu0 %v4490
  %5116 = vmatpush1.msra.mxu0 %v4489
  %5117 = vmatprep.subr.mxu0 %v4498
  %5118 = vmatpush1.msra.mxu0 %v4497
  %5119 = vmatprep.subr.mxu0 %v4506
  %5120 = vmatpush1.msra.mxu0 %v4505
  %5121 = vmatprep.subr.mxu0 %v4514
  %5122 = vmatpush1.msra.mxu0 %v4513
  %5123 = vmatprep.subr.mxu0 0.0
  %5124 = vmatpush1.msra.mxu0 0.0
  %5125 = vmatprep.subr.mxu0 0.0
  %5126 = vmatpush1.msra.mxu0 0.0
  %5127 = vmatprep.subr.mxu0 0.0
  %5128 = vmatpush1.msra.mxu0 0.0
  %5129 = vmatprep.subr.mxu0 0.0
  %5130 = vmatpush1.msra.mxu0 0.0
  %5131 = vmatprep.subr.mxu0 0.0
  %5132 = vmatpush1.msra.mxu0 0.0
  %5133 = vmatprep.subr.mxu0 0.0
  %5134 = vmatpush1.msra.mxu0 0.0
  %5135 = vmatprep.subr.mxu0 0.0
  %5136 = vmatpush1.msra.mxu0 0.0
  %5137 = vmatprep.subr.mxu0 0.0
  %5138 = vmatpush1.msra.mxu0 0.0
  %5139 = vmatprep.subr.mxu0 0.0
  %5140 = vmatpush1.msra.mxu0 0.0
  %5141 = vmatprep.subr.mxu0 0.0
  %5142 = vmatpush1.msra.mxu0 0.0
  %5143 = vmatprep.subr.mxu0 0.0
  %5144 = vmatpush1.msra.mxu0 0.0
  %5145 = vmatprep.subr.mxu0 0.0
  %5146 = vmatpush1.msra.mxu0 0.0
  %5147 = vmatprep.subr.mxu0 0.0
  %5148 = vmatpush1.msra.mxu0 0.0
  %5149 = vmatprep.subr.mxu0 0.0
  %5150 = vmatpush1.msra.mxu0 0.0
  %5151 = vmatprep.subr.mxu0 0.0
  %5152 = vmatpush1.msra.mxu0 0.0
  %5153 = vmatprep.subr.mxu0 0.0
  %5154 = vmatpush1.msra.mxu0 0.0
  %5155 = vmatprep.subr.mxu0 0.0
  %5156 = vmatpush1.msra.mxu0 0.0
  %5157 = vmatprep.subr.mxu0 0.0
  %5158 = vmatpush1.msra.mxu0 0.0
  %5159 = vmatprep.subr.mxu0 0.0
  %5160 = vmatpush1.msra.mxu0 0.0
  %5161 = vmatprep.subr.mxu0 0.0
  %5162 = vmatpush1.msra.mxu0 0.0
  %5163 = vmatprep.subr.mxu0 0.0
  %5164 = vmatpush1.msra.mxu0 0.0
  %5165 = vmatprep.subr.mxu0 0.0
  %5166 = vmatpush1.msra.mxu0 0.0
  %5167 = vmatprep.subr.mxu0 0.0
  %5168 = vmatpush1.msra.mxu0 0.0
  %5169 = vmatprep.subr.mxu0 0.0
  %5170 = vmatpush1.msra.mxu0 0.0
  %5171 = vmatprep.mubr.f32.mxu0 0.0
  %5172 = vmatmul.mubr.f32.gmra.mrb[0].mxu0 %v4563
  %v5173 = vpop.f32.mrb[0].mxu0
  %v5174 = vadd.f32 %v5097, %v5173
  %v5175 = vpop.f32.mrb[0].mxu0
  %v5176 = vadd.f32 %v5099, %v5175
  %5177 = vmatprep.mubr.f32.mxu0 0.0
  %5178 = vmatmul.mubr.f32.gmra.mrb[0].mxu0 %v4566
  %v5179 = vpop.f32.mrb[0].mxu0
  %v5180 = vadd.f32 %v5103, %v5179
  %v5181 = vpop.f32.mrb[0].mxu0
  %v5182 = vadd.f32 %v5105, %v5181
  %5183 = vdwg.mxu0
  %5184 = vmatprep.subr.mxu0 %v3692
  %5185 = vmatpush1.msra.mxu0 %v3691
  %5186 = vmatprep.subr.mxu0 %v3700
  %5187 = vmatpush1.msra.mxu0 %v3699
  %5188 = vmatprep.subr.mxu0 %v3708
  %5189 = vmatpush1.msra.mxu0 %v3707
  %5190 = vmatprep.subr.mxu0 %v3716
  %5191 = vmatpush1.msra.mxu0 %v3715
  %5192 = vmatprep.subr.mxu0 %v3724
  %5193 = vmatpush1.msra.mxu0 %v3723
  %5194 = vmatprep.subr.mxu0 %v3732
  %5195 = vmatpush1.msra.mxu0 %v3731
  %5196 = vmatprep.subr.mxu0 %v3740
  %5197 = vmatpush1.msra.mxu0 %v3739
  %5198 = vmatprep.subr.mxu0 %v3748
  %5199 = vmatpush1.msra.mxu0 %v3747
  %5200 = vmatprep.subr.mxu0 %v3756
  %5201 = vmatpush1.msra.mxu0 %v3755
  %5202 = vmatprep.subr.mxu0 %v3764
  %5203 = vmatpush1.msra.mxu0 %v3763
  %5204 = vmatprep.subr.mxu0 %v3772
  %5205 = vmatpush1.msra.mxu0 %v3771
  %5206 = vmatprep.subr.mxu0 %v3780
  %5207 = vmatpush1.msra.mxu0 %v3779
  %5208 = vmatprep.subr.mxu0 %v3788
  %5209 = vmatpush1.msra.mxu0 %v3787
  %5210 = vmatprep.subr.mxu0 %v3796
  %5211 = vmatpush1.msra.mxu0 %v3795
  %5212 = vmatprep.subr.mxu0 %v3804
  %5213 = vmatpush1.msra.mxu0 %v3803
  %5214 = vmatprep.subr.mxu0 %v3812
  %5215 = vmatpush1.msra.mxu0 %v3811
  %5216 = vmatprep.subr.mxu0 %v3820
  %5217 = vmatpush1.msra.mxu0 %v3819
  %5218 = vmatprep.subr.mxu0 %v3828
  %5219 = vmatpush1.msra.mxu0 %v3827
  %5220 = vmatprep.subr.mxu0 %v3836
  %5221 = vmatpush1.msra.mxu0 %v3835
  %5222 = vmatprep.subr.mxu0 %v3844
  %5223 = vmatpush1.msra.mxu0 %v3843
  %5224 = vmatprep.subr.mxu0 %v3852
  %5225 = vmatpush1.msra.mxu0 %v3851
  %5226 = vmatprep.subr.mxu0 %v3860
  %5227 = vmatpush1.msra.mxu0 %v3859
  %5228 = vmatprep.subr.mxu0 %v3868
  %5229 = vmatpush1.msra.mxu0 %v3867
  %5230 = vmatprep.subr.mxu0 %v3876
  %5231 = vmatpush1.msra.mxu0 %v3875
  %5232 = vmatprep.subr.mxu0 %v3884
  %5233 = vmatpush1.msra.mxu0 %v3883
  %5234 = vmatprep.subr.mxu0 %v3892
  %5235 = vmatpush1.msra.mxu0 %v3891
  %5236 = vmatprep.subr.mxu0 %v3900
  %5237 = vmatpush1.msra.mxu0 %v3899
  %5238 = vmatprep.subr.mxu0 %v3908
  %5239 = vmatpush1.msra.mxu0 %v3907
  %5240 = vmatprep.subr.mxu0 %v3916
  %5241 = vmatpush1.msra.mxu0 %v3915
  %5242 = vmatprep.subr.mxu0 %v3924
  %5243 = vmatpush1.msra.mxu0 %v3923
  %5244 = vmatprep.subr.mxu0 %v3932
  %5245 = vmatpush1.msra.mxu0 %v3931
  %5246 = vmatprep.subr.mxu0 %v3940
  %5247 = vmatpush1.msra.mxu0 %v3939
  %5248 = vmatprep.mubr.f32.mxu0 %v2076
  %5249 = vmatmul.mubr.f32.gmra.mrb[0].mxu0 %v2074
  %v5250 = vpop.f32.mrb[0].mxu0
  %v5251 = vadd.f32 %v4540, %v5250
  %v5252 = vpop.f32.mrb[0].mxu0
  %v5253 = vadd.f32 %v4544, %v5252
  %5254 = vmatprep.mubr.f32.mxu0 %v2082
  %5255 = vmatmul.mubr.f32.gmra.mrb[0].mxu0 %v2080
  %v5256 = vpop.f32.mrb[0].mxu0
  %v5257 = vadd.f32 %v4540, %v5256
  %v5258 = vpop.f32.mrb[0].mxu0
  %v5259 = vadd.f32 %v4544, %v5258
  %5260 = vdwg.mxu0
  %5261 = vmatprep.subr.mxu0 %v3948
  %5262 = vmatpush1.msra.mxu0 %v3947
  %5263 = vmatprep.subr.mxu0 %v3956
  %5264 = vmatpush1.msra.mxu0 %v3955
  %5265 = vmatprep.subr.mxu0 %v3964
  %5266 = vmatpush1.msra.mxu0 %v3963
  %5267 = vmatprep.subr.mxu0 %v3972
  %5268 = vmatpush1.msra.mxu0 %v3971
  %5269 = vmatprep.subr.mxu0 %v3980
  %5270 = vmatpush1.msra.mxu0 %v3979
  %5271 = vmatprep.subr.mxu0 %v3988
  %5272 = vmatpush1.msra.mxu0 %v3987
  %5273 = vmatprep.subr.mxu0 %v3996
  %5274 = vmatpush1.msra.mxu0 %v3995
  %5275 = vmatprep.subr.mxu0 %v4004
  %5276 = vmatpush1.msra.mxu0 %v4003
  %5277 = vmatprep.subr.mxu0 %v4012
  %5278 = vmatpush1.msra.mxu0 %v4011
  %5279 = vmatprep.subr.mxu0 %v4020
  %5280 = vmatpush1.msra.mxu0 %v4019
  %5281 = vmatprep.subr.mxu0 %v4028
  %5282 = vmatpush1.msra.mxu0 %v4027
  %5283 = vmatprep.subr.mxu0 %v4036
  %5284 = vmatpush1.msra.mxu0 %v4035
  %5285 = vmatprep.subr.mxu0 %v4044
  %5286 = vmatpush1.msra.mxu0 %v4043
  %5287 = vmatprep.subr.mxu0 %v4052
  %5288 = vmatpush1.msra.mxu0 %v4051
  %5289 = vmatprep.subr.mxu0 %v4060
  %5290 = vmatpush1.msra.mxu0 %v4059
  %5291 = vmatprep.subr.mxu0 %v4068
  %5292 = vmatpush1.msra.mxu0 %v4067
  %5293 = vmatprep.subr.mxu0 %v4076
  %5294 = vmatpush1.msra.mxu0 %v4075
  %5295 = vmatprep.subr.mxu0 %v4084
  %5296 = vmatpush1.msra.mxu0 %v4083
  %5297 = vmatprep.subr.mxu0 %v4092
  %5298 = vmatpush1.msra.mxu0 %v4091
  %5299 = vmatprep.subr.mxu0 %v4100
  %5300 = vmatpush1.msra.mxu0 %v4099
  %5301 = vmatprep.subr.mxu0 %v4108
  %5302 = vmatpush1.msra.mxu0 %v4107
  %5303 = vmatprep.subr.mxu0 %v4116
  %5304 = vmatpush1.msra.mxu0 %v4115
  %5305 = vmatprep.subr.mxu0 %v4124
  %5306 = vmatpush1.msra.mxu0 %v4123
  %5307 = vmatprep.subr.mxu0 %v4132
  %5308 = vmatpush1.msra.mxu0 %v4131
  %5309 = vmatprep.subr.mxu0 %v4140
  %5310 = vmatpush1.msra.mxu0 %v4139
  %5311 = vmatprep.subr.mxu0 %v4148
  %5312 = vmatpush1.msra.mxu0 %v4147
  %5313 = vmatprep.subr.mxu0 %v4156
  %5314 = vmatpush1.msra.mxu0 %v4155
  %5315 = vmatprep.subr.mxu0 %v4164
  %5316 = vmatpush1.msra.mxu0 %v4163
  %5317 = vmatprep.subr.mxu0 %v4172
  %5318 = vmatpush1.msra.mxu0 %v4171
  %5319 = vmatprep.subr.mxu0 %v4180
  %5320 = vmatpush1.msra.mxu0 %v4179
  %5321 = vmatprep.subr.mxu0 %v4188
  %5322 = vmatpush1.msra.mxu0 %v4187
  %5323 = vmatprep.subr.mxu0 %v4196
  %5324 = vmatpush1.msra.mxu0 %v4195
  %5325 = vmatprep.mubr.f32.mxu0 %v2615
  %5326 = vmatmul.mubr.f32.gmra.mrb[0].mxu0 %v2613
  %v5327 = vpop.f32.mrb[0].mxu0
  %v5328 = vadd.f32 %v5251, %v5327
  %v5329 = vpop.f32.mrb[0].mxu0
  %v5330 = vadd.f32 %v5253, %v5329
  %5331 = vmatprep.mubr.f32.mxu0 %v2621
  %5332 = vmatmul.mubr.f32.gmra.mrb[0].mxu0 %v2619
  %v5333 = vpop.f32.mrb[0].mxu0
  %v5334 = vadd.f32 %v5257, %v5333
  %v5335 = vpop.f32.mrb[0].mxu0
  %v5336 = vadd.f32 %v5259, %v5335
  %5337 = vdwg.mxu0
  %5338 = vmatprep.subr.mxu0 %v4204
  %5339 = vmatpush1.msra.mxu0 %v4203
  %5340 = vmatprep.subr.mxu0 %v4212
  %5341 = vmatpush1.msra.mxu0 %v4211
  %5342 = vmatprep.subr.mxu0 %v4220
  %5343 = vmatpush1.msra.mxu0 %v4219
  %5344 = vmatprep.subr.mxu0 %v4228
  %5345 = vmatpush1.msra.mxu0 %v4227
  %5346 = vmatprep.subr.mxu0 %v4236
  %5347 = vmatpush1.msra.mxu0 %v4235
  %5348 = vmatprep.subr.mxu0 %v4244
  %5349 = vmatpush1.msra.mxu0 %v4243
  %5350 = vmatprep.subr.mxu0 %v4252
  %5351 = vmatpush1.msra.mxu0 %v4251
  %5352 = vmatprep.subr.mxu0 %v4260
  %5353 = vmatpush1.msra.mxu0 %v4259
  %5354 = vmatprep.subr.mxu0 %v4268
  %5355 = vmatpush1.msra.mxu0 %v4267
  %5356 = vmatprep.subr.mxu0 %v4276
  %5357 = vmatpush1.msra.mxu0 %v4275
  %5358 = vmatprep.subr.mxu0 %v4284
  %5359 = vmatpush1.msra.mxu0 %v4283
  %5360 = vmatprep.subr.mxu0 %v4292
  %5361 = vmatpush1.msra.mxu0 %v4291
  %5362 = vmatprep.subr.mxu0 %v4300
  %5363 = vmatpush1.msra.mxu0 %v4299
  %5364 = vmatprep.subr.mxu0 %v4308
  %5365 = vmatpush1.msra.mxu0 %v4307
  %5366 = vmatprep.subr.mxu0 %v4316
  %5367 = vmatpush1.msra.mxu0 %v4315
  %5368 = vmatprep.subr.mxu0 %v4324
  %5369 = vmatpush1.msra.mxu0 %v4323
  %5370 = vmatprep.subr.mxu0 %v4332
  %5371 = vmatpush1.msra.mxu0 %v4331
  %5372 = vmatprep.subr.mxu0 %v4340
  %5373 = vmatpush1.msra.mxu0 %v4339
  %5374 = vmatprep.subr.mxu0 %v4348
  %5375 = vmatpush1.msra.mxu0 %v4347
  %5376 = vmatprep.subr.mxu0 %v4356
  %5377 = vmatpush1.msra.mxu0 %v4355
  %5378 = vmatprep.subr.mxu0 %v4364
  %5379 = vmatpush1.msra.mxu0 %v4363
  %5380 = vmatprep.subr.mxu0 %v4372
  %5381 = vmatpush1.msra.mxu0 %v4371
  %5382 = vmatprep.subr.mxu0 %v4380
  %5383 = vmatpush1.msra.mxu0 %v4379
  %5384 = vmatprep.subr.mxu0 %v4388
  %5385 = vmatpush1.msra.mxu0 %v4387
  %5386 = vmatprep.subr.mxu0 %v4396
  %5387 = vmatpush1.msra.mxu0 %v4395
  %5388 = vmatprep.subr.mxu0 %v4404
  %5389 = vmatpush1.msra.mxu0 %v4403
  %5390 = vmatprep.subr.mxu0 %v4412
  %5391 = vmatpush1.msra.mxu0 %v4411
  %5392 = vmatprep.subr.mxu0 %v4420
  %5393 = vmatpush1.msra.mxu0 %v4419
  %5394 = vmatprep.subr.mxu0 %v4428
  %5395 = vmatpush1.msra.mxu0 %v4427
  %5396 = vmatprep.subr.mxu0 %v4436
  %5397 = vmatpush1.msra.mxu0 %v4435
  %5398 = vmatprep.subr.mxu0 %v4444
  %5399 = vmatpush1.msra.mxu0 %v4443
  %5400 = vmatprep.subr.mxu0 %v4452
  %5401 = vmatpush1.msra.mxu0 %v4451
  %5402 = vmatprep.mubr.f32.mxu0 %v3154
  %5403 = vmatmul.mubr.f32.gmra.mrb[0].mxu0 %v3152
  %v5404 = vpop.f32.mrb[0].mxu0
  %v5405 = vadd.f32 %v5328, %v5404
  %v5406 = vpop.f32.mrb[0].mxu0
  %v5407 = vadd.f32 %v5330, %v5406
  %5408 = vmatprep.mubr.f32.mxu0 %v3160
  %5409 = vmatmul.mubr.f32.gmra.mrb[0].mxu0 %v3158
  %v5410 = vpop.f32.mrb[0].mxu0
  %v5411 = vadd.f32 %v5334, %v5410
  %v5412 = vpop.f32.mrb[0].mxu0
  %v5413 = vadd.f32 %v5336, %v5412
  %5414 = vdwg.mxu0
  %5415 = vmatprep.subr.mxu0 %v4460
  %5416 = vmatpush1.msra.mxu0 %v4459
  %5417 = vmatprep.subr.mxu0 %v4468
  %5418 = vmatpush1.msra.mxu0 %v4467
  %5419 = vmatprep.subr.mxu0 %v4476
  %5420 = vmatpush1.msra.mxu0 %v4475
  %5421 = vmatprep.subr.mxu0 %v4484
  %5422 = vmatpush1.msra.mxu0 %v4483
  %5423 = vmatprep.subr.mxu0 %v4492
  %5424 = vmatpush1.msra.mxu0 %v4491
  %5425 = vmatprep.subr.mxu0 %v4500
  %5426 = vmatpush1.msra.mxu0 %v4499
  %5427 = vmatprep.subr.mxu0 %v4508
  %5428 = vmatpush1.msra.mxu0 %v4507
  %5429 = vmatprep.subr.mxu0 %v4516
  %5430 = vmatpush1.msra.mxu0 %v4515
  %5431 = vmatprep.subr.mxu0 0.0
  %5432 = vmatpush1.msra.mxu0 0.0
  %5433 = vmatprep.subr.mxu0 0.0
  %5434 = vmatpush1.msra.mxu0 0.0
  %5435 = vmatprep.subr.mxu0 0.0
  %5436 = vmatpush1.msra.mxu0 0.0
  %5437 = vmatprep.subr.mxu0 0.0
  %5438 = vmatpush1.msra.mxu0 0.0
  %5439 = vmatprep.subr.mxu0 0.0
  %5440 = vmatpush1.msra.mxu0 0.0
  %5441 = vmatprep.subr.mxu0 0.0
  %5442 = vmatpush1.msra.mxu0 0.0
  %5443 = vmatprep.subr.mxu0 0.0
  %5444 = vmatpush1.msra.mxu0 0.0
  %5445 = vmatprep.subr.mxu0 0.0
  %5446 = vmatpush1.msra.mxu0 0.0
  %5447 = vmatprep.subr.mxu0 0.0
  %5448 = vmatpush1.msra.mxu0 0.0
  %5449 = vmatprep.subr.mxu0 0.0
  %5450 = vmatpush1.msra.mxu0 0.0
  %5451 = vmatprep.subr.mxu0 0.0
  %5452 = vmatpush1.msra.mxu0 0.0
  %5453 = vmatprep.subr.mxu0 0.0
  %5454 = vmatpush1.msra.mxu0 0.0
  %5455 = vmatprep.subr.mxu0 0.0
  %5456 = vmatpush1.msra.mxu0 0.0
  %5457 = vmatprep.subr.mxu0 0.0
  %5458 = vmatpush1.msra.mxu0 0.0
  %5459 = vmatprep.subr.mxu0 0.0
  %5460 = vmatpush1.msra.mxu0 0.0
  %5461 = vmatprep.subr.mxu0 0.0
  %5462 = vmatpush1.msra.mxu0 0.0
  %5463 = vmatprep.subr.mxu0 0.0
  %5464 = vmatpush1.msra.mxu0 0.0
  %5465 = vmatprep.subr.mxu0 0.0
  %5466 = vmatpush1.msra.mxu0 0.0
  %5467 = vmatprep.subr.mxu0 0.0
  %5468 = vmatpush1.msra.mxu0 0.0
  %5469 = vmatprep.subr.mxu0 0.0
  %5470 = vmatpush1.msra.mxu0 0.0
  %5471 = vmatprep.subr.mxu0 0.0
  %5472 = vmatpush1.msra.mxu0 0.0
  %5473 = vmatprep.subr.mxu0 0.0
  %5474 = vmatpush1.msra.mxu0 0.0
  %5475 = vmatprep.subr.mxu0 0.0
  %5476 = vmatpush1.msra.mxu0 0.0
  %5477 = vmatprep.subr.mxu0 0.0
  %5478 = vmatpush1.msra.mxu0 0.0
  %5479 = vmatprep.mubr.f32.mxu0 0.0
  %5480 = vmatmul.mubr.f32.gmra.mrb[0].mxu0 %v4563
  %v5481 = vpop.f32.mrb[0].mxu0
  %v5482 = vadd.f32 %v5405, %v5481
  %v5483 = vpop.f32.mrb[0].mxu0
  %v5484 = vadd.f32 %v5407, %v5483
  %5485 = vmatprep.mubr.f32.mxu0 0.0
  %5486 = vmatmul.mubr.f32.gmra.mrb[0].mxu0 %v4566
  %v5487 = vpop.f32.mrb[0].mxu0
  %v5488 = vadd.f32 %v5411, %v5487
  %v5489 = vpop.f32.mrb[0].mxu0
  %v5490 = vadd.f32 %v5413, %v5489
  %5491 = vdwg.mxu0
  %5492 = vmatprep.subr.mxu0 %v3694
  %5493 = vmatpush1.msra.mxu0 %v3693
  %5494 = vmatprep.subr.mxu0 %v3702
  %5495 = vmatpush1.msra.mxu0 %v3701
  %5496 = vmatprep.subr.mxu0 %v3710
  %5497 = vmatpush1.msra.mxu0 %v3709
  %5498 = vmatprep.subr.mxu0 %v3718
  %5499 = vmatpush1.msra.mxu0 %v3717
  %5500 = vmatprep.subr.mxu0 %v3726
  %5501 = vmatpush1.msra.mxu0 %v3725
  %5502 = vmatprep.subr.mxu0 %v3734
  %5503 = vmatpush1.msra.mxu0 %v3733
  %5504 = vmatprep.subr.mxu0 %v3742
  %5505 = vmatpush1.msra.mxu0 %v3741
  %5506 = vmatprep.subr.mxu0 %v3750
  %5507 = vmatpush1.msra.mxu0 %v3749
  %5508 = vmatprep.subr.mxu0 %v3758
  %5509 = vmatpush1.msra.mxu0 %v3757
  %5510 = vmatprep.subr.mxu0 %v3766
  %5511 = vmatpush1.msra.mxu0 %v3765
  %5512 = vmatprep.subr.mxu0 %v3774
  %5513 = vmatpush1.msra.mxu0 %v3773
  %5514 = vmatprep.subr.mxu0 %v3782
  %5515 = vmatpush1.msra.mxu0 %v3781
  %5516 = vmatprep.subr.mxu0 %v3790
  %5517 = vmatpush1.msra.mxu0 %v3789
  %5518 = vmatprep.subr.mxu0 %v3798
  %5519 = vmatpush1.msra.mxu0 %v3797
  %5520 = vmatprep.subr.mxu0 %v3806
  %5521 = vmatpush1.msra.mxu0 %v3805
  %5522 = vmatprep.subr.mxu0 %v3814
  %5523 = vmatpush1.msra.mxu0 %v3813
  %5524 = vmatprep.subr.mxu0 %v3822
  %5525 = vmatpush1.msra.mxu0 %v3821
  %5526 = vmatprep.subr.mxu0 %v3830
  %5527 = vmatpush1.msra.mxu0 %v3829
  %5528 = vmatprep.subr.mxu0 %v3838
  %5529 = vmatpush1.msra.mxu0 %v3837
  %5530 = vmatprep.subr.mxu0 %v3846
  %5531 = vmatpush1.msra.mxu0 %v3845
  %5532 = vmatprep.subr.mxu0 %v3854
  %5533 = vmatpush1.msra.mxu0 %v3853
  %5534 = vmatprep.subr.mxu0 %v3862
  %5535 = vmatpush1.msra.mxu0 %v3861
  %5536 = vmatprep.subr.mxu0 %v3870
  %5537 = vmatpush1.msra.mxu0 %v3869
  %5538 = vmatprep.subr.mxu0 %v3878
  %5539 = vmatpush1.msra.mxu0 %v3877
  %5540 = vmatprep.subr.mxu0 %v3886
  %5541 = vmatpush1.msra.mxu0 %v3885
  %5542 = vmatprep.subr.mxu0 %v3894
  %5543 = vmatpush1.msra.mxu0 %v3893
  %5544 = vmatprep.subr.mxu0 %v3902
  %5545 = vmatpush1.msra.mxu0 %v3901
  %5546 = vmatprep.subr.mxu0 %v3910
  %5547 = vmatpush1.msra.mxu0 %v3909
  %5548 = vmatprep.subr.mxu0 %v3918
  %5549 = vmatpush1.msra.mxu0 %v3917
  %5550 = vmatprep.subr.mxu0 %v3926
  %5551 = vmatpush1.msra.mxu0 %v3925
  %5552 = vmatprep.subr.mxu0 %v3934
  %5553 = vmatpush1.msra.mxu0 %v3933
  %5554 = vmatprep.subr.mxu0 %v3942
  %5555 = vmatpush1.msra.mxu0 %v3941
  %5556 = vmatprep.mubr.f32.mxu0 %v2076
  %5557 = vmatmul.mubr.f32.gmra.mrb[0].mxu0 %v2074
  %v5558 = vpop.f32.mrb[0].mxu0
  %v5559 = vadd.f32 %v4548, %v5558
  %v5560 = vpop.f32.mrb[0].mxu0
  %v5561 = vadd.f32 %v4552, %v5560
  %5562 = vmatprep.mubr.f32.mxu0 %v2082
  %5563 = vmatmul.mubr.f32.gmra.mrb[0].mxu0 %v2080
  %v5564 = vpop.f32.mrb[0].mxu0
  %v5565 = vadd.f32 %v4548, %v5564
  %v5566 = vpop.f32.mrb[0].mxu0
  %v5567 = vadd.f32 %v4552, %v5566
  %5568 = vdwg.mxu0
  %5569 = vmatprep.subr.mxu0 %v3950
  %5570 = vmatpush1.msra.mxu0 %v3949
  %5571 = vmatprep.subr.mxu0 %v3958
  %5572 = vmatpush1.msra.mxu0 %v3957
  %5573 = vmatprep.subr.mxu0 %v3966
  %5574 = vmatpush1.msra.mxu0 %v3965
  %5575 = vmatprep.subr.mxu0 %v3974
  %5576 = vmatpush1.msra.mxu0 %v3973
  %5577 = vmatprep.subr.mxu0 %v3982
  %5578 = vmatpush1.msra.mxu0 %v3981
  %5579 = vmatprep.subr.mxu0 %v3990
  %5580 = vmatpush1.msra.mxu0 %v3989
  %5581 = vmatprep.subr.mxu0 %v3998
  %5582 = vmatpush1.msra.mxu0 %v3997
  %5583 = vmatprep.subr.mxu0 %v4006
  %5584 = vmatpush1.msra.mxu0 %v4005
  %5585 = vmatprep.subr.mxu0 %v4014
  %5586 = vmatpush1.msra.mxu0 %v4013
  %5587 = vmatprep.subr.mxu0 %v4022
  %5588 = vmatpush1.msra.mxu0 %v4021
  %5589 = vmatprep.subr.mxu0 %v4030
  %5590 = vmatpush1.msra.mxu0 %v4029
  %5591 = vmatprep.subr.mxu0 %v4038
  %5592 = vmatpush1.msra.mxu0 %v4037
  %5593 = vmatprep.subr.mxu0 %v4046
  %5594 = vmatpush1.msra.mxu0 %v4045
  %5595 = vmatprep.subr.mxu0 %v4054
  %5596 = vmatpush1.msra.mxu0 %v4053
  %5597 = vmatprep.subr.mxu0 %v4062
  %5598 = vmatpush1.msra.mxu0 %v4061
  %5599 = vmatprep.subr.mxu0 %v4070
  %5600 = vmatpush1.msra.mxu0 %v4069
  %5601 = vmatprep.subr.mxu0 %v4078
  %5602 = vmatpush1.msra.mxu0 %v4077
  %5603 = vmatprep.subr.mxu0 %v4086
  %5604 = vmatpush1.msra.mxu0 %v4085
  %5605 = vmatprep.subr.mxu0 %v4094
  %5606 = vmatpush1.msra.mxu0 %v4093
  %5607 = vmatprep.subr.mxu0 %v4102
  %5608 = vmatpush1.msra.mxu0 %v4101
  %5609 = vmatprep.subr.mxu0 %v4110
  %5610 = vmatpush1.msra.mxu0 %v4109
  %5611 = vmatprep.subr.mxu0 %v4118
  %5612 = vmatpush1.msra.mxu0 %v4117
  %5613 = vmatprep.subr.mxu0 %v4126
  %5614 = vmatpush1.msra.mxu0 %v4125
  %5615 = vmatprep.subr.mxu0 %v4134
  %5616 = vmatpush1.msra.mxu0 %v4133
  %5617 = vmatprep.subr.mxu0 %v4142
  %5618 = vmatpush1.msra.mxu0 %v4141
  %5619 = vmatprep.subr.mxu0 %v4150
  %5620 = vmatpush1.msra.mxu0 %v4149
  %5621 = vmatprep.subr.mxu0 %v4158
  %5622 = vmatpush1.msra.mxu0 %v4157
  %5623 = vmatprep.subr.mxu0 %v4166
  %5624 = vmatpush1.msra.mxu0 %v4165
  %5625 = vmatprep.subr.mxu0 %v4174
  %5626 = vmatpush1.msra.mxu0 %v4173
  %5627 = vmatprep.subr.mxu0 %v4182
  %5628 = vmatpush1.msra.mxu0 %v4181
  %5629 = vmatprep.subr.mxu0 %v4190
  %5630 = vmatpush1.msra.mxu0 %v4189
  %5631 = vmatprep.subr.mxu0 %v4198
  %5632 = vmatpush1.msra.mxu0 %v4197
  %5633 = vmatprep.mubr.f32.mxu0 %v2615
  %5634 = vmatmul.mubr.f32.gmra.mrb[0].mxu0 %v2613
  %v5635 = vpop.f32.mrb[0].mxu0
  %v5636 = vadd.f32 %v5559, %v5635
  %v5637 = vpop.f32.mrb[0].mxu0
  %v5638 = vadd.f32 %v5561, %v5637
  %5639 = vmatprep.mubr.f32.mxu0 %v2621
  %5640 = vmatmul.mubr.f32.gmra.mrb[0].mxu0 %v2619
  %v5641 = vpop.f32.mrb[0].mxu0
  %v5642 = vadd.f32 %v5565, %v5641
  %v5643 = vpop.f32.mrb[0].mxu0
  %v5644 = vadd.f32 %v5567, %v5643
  %5645 = vdwg.mxu0
  %5646 = vmatprep.subr.mxu0 %v4206
  %5647 = vmatpush1.msra.mxu0 %v4205
  %5648 = vmatprep.subr.mxu0 %v4214
  %5649 = vmatpush1.msra.mxu0 %v4213
  %5650 = vmatprep.subr.mxu0 %v4222
  %5651 = vmatpush1.msra.mxu0 %v4221
  %5652 = vmatprep.subr.mxu0 %v4230
  %5653 = vmatpush1.msra.mxu0 %v4229
  %5654 = vmatprep.subr.mxu0 %v4238
  %5655 = vmatpush1.msra.mxu0 %v4237
  %5656 = vmatprep.subr.mxu0 %v4246
  %5657 = vmatpush1.msra.mxu0 %v4245
  %5658 = vmatprep.subr.mxu0 %v4254
  %5659 = vmatpush1.msra.mxu0 %v4253
  %5660 = vmatprep.subr.mxu0 %v4262
  %5661 = vmatpush1.msra.mxu0 %v4261
  %5662 = vmatprep.subr.mxu0 %v4270
  %5663 = vmatpush1.msra.mxu0 %v4269
  %5664 = vmatprep.subr.mxu0 %v4278
  %5665 = vmatpush1.msra.mxu0 %v4277
  %5666 = vmatprep.subr.mxu0 %v4286
  %5667 = vmatpush1.msra.mxu0 %v4285
  %5668 = vmatprep.subr.mxu0 %v4294
  %5669 = vmatpush1.msra.mxu0 %v4293
  %5670 = vmatprep.subr.mxu0 %v4302
  %5671 = vmatpush1.msra.mxu0 %v4301
  %5672 = vmatprep.subr.mxu0 %v4310
  %5673 = vmatpush1.msra.mxu0 %v4309
  %5674 = vmatprep.subr.mxu0 %v4318
  %5675 = vmatpush1.msra.mxu0 %v4317
  %5676 = vmatprep.subr.mxu0 %v4326
  %5677 = vmatpush1.msra.mxu0 %v4325
  %5678 = vmatprep.subr.mxu0 %v4334
  %5679 = vmatpush1.msra.mxu0 %v4333
  %5680 = vmatprep.subr.mxu0 %v4342
  %5681 = vmatpush1.msra.mxu0 %v4341
  %5682 = vmatprep.subr.mxu0 %v4350
  %5683 = vmatpush1.msra.mxu0 %v4349
  %5684 = vmatprep.subr.mxu0 %v4358
  %5685 = vmatpush1.msra.mxu0 %v4357
  %5686 = vmatprep.subr.mxu0 %v4366
  %5687 = vmatpush1.msra.mxu0 %v4365
  %5688 = vmatprep.subr.mxu0 %v4374
  %5689 = vmatpush1.msra.mxu0 %v4373
  %5690 = vmatprep.subr.mxu0 %v4382
  %5691 = vmatpush1.msra.mxu0 %v4381
  %5692 = vmatprep.subr.mxu0 %v4390
  %5693 = vmatpush1.msra.mxu0 %v4389
  %5694 = vmatprep.subr.mxu0 %v4398
  %5695 = vmatpush1.msra.mxu0 %v4397
  %5696 = vmatprep.subr.mxu0 %v4406
  %5697 = vmatpush1.msra.mxu0 %v4405
  %5698 = vmatprep.subr.mxu0 %v4414
  %5699 = vmatpush1.msra.mxu0 %v4413
  %5700 = vmatprep.subr.mxu0 %v4422
  %5701 = vmatpush1.msra.mxu0 %v4421
  %5702 = vmatprep.subr.mxu0 %v4430
  %5703 = vmatpush1.msra.mxu0 %v4429
  %5704 = vmatprep.subr.mxu0 %v4438
  %5705 = vmatpush1.msra.mxu0 %v4437
  %5706 = vmatprep.subr.mxu0 %v4446
  %5707 = vmatpush1.msra.mxu0 %v4445
  %5708 = vmatprep.subr.mxu0 %v4454
  %5709 = vmatpush1.msra.mxu0 %v4453
  %5710 = vmatprep.mubr.f32.mxu0 %v3154
  %5711 = vmatmul.mubr.f32.gmra.mrb[0].mxu0 %v3152
  %v5712 = vpop.f32.mrb[0].mxu0
  %v5713 = vadd.f32 %v5636, %v5712
  %v5714 = vpop.f32.mrb[0].mxu0
  %v5715 = vadd.f32 %v5638, %v5714
  %5716 = vmatprep.mubr.f32.mxu0 %v3160
  %5717 = vmatmul.mubr.f32.gmra.mrb[0].mxu0 %v3158
  %v5718 = vpop.f32.mrb[0].mxu0
  %v5719 = vadd.f32 %v5642, %v5718
  %v5720 = vpop.f32.mrb[0].mxu0
  %v5721 = vadd.f32 %v5644, %v5720
  %5722 = vdwg.mxu0
  %5723 = vmatprep.subr.mxu0 %v4462
  %5724 = vmatpush1.msra.mxu0 %v4461
  %5725 = vmatprep.subr.mxu0 %v4470
  %5726 = vmatpush1.msra.mxu0 %v4469
  %5727 = vmatprep.subr.mxu0 %v4478
  %5728 = vmatpush1.msra.mxu0 %v4477
  %5729 = vmatprep.subr.mxu0 %v4486
  %5730 = vmatpush1.msra.mxu0 %v4485
  %5731 = vmatprep.subr.mxu0 %v4494
  %5732 = vmatpush1.msra.mxu0 %v4493
  %5733 = vmatprep.subr.mxu0 %v4502
  %5734 = vmatpush1.msra.mxu0 %v4501
  %5735 = vmatprep.subr.mxu0 %v4510
  %5736 = vmatpush1.msra.mxu0 %v4509
  %5737 = vmatprep.subr.mxu0 %v4518
  %5738 = vmatpush1.msra.mxu0 %v4517
  %5739 = vmatprep.subr.mxu0 0.0
  %5740 = vmatpush1.msra.mxu0 0.0
  %5741 = vmatprep.subr.mxu0 0.0
  %5742 = vmatpush1.msra.mxu0 0.0
  %5743 = vmatprep.subr.mxu0 0.0
  %5744 = vmatpush1.msra.mxu0 0.0
  %5745 = vmatprep.subr.mxu0 0.0
  %5746 = vmatpush1.msra.mxu0 0.0
  %5747 = vmatprep.subr.mxu0 0.0
  %5748 = vmatpush1.msra.mxu0 0.0
  %5749 = vmatprep.subr.mxu0 0.0
  %5750 = vmatpush1.msra.mxu0 0.0
  %5751 = vmatprep.subr.mxu0 0.0
  %5752 = vmatpush1.msra.mxu0 0.0
  %5753 = vmatprep.subr.mxu0 0.0
  %5754 = vmatpush1.msra.mxu0 0.0
  %5755 = vmatprep.subr.mxu0 0.0
  %5756 = vmatpush1.msra.mxu0 0.0
  %5757 = vmatprep.subr.mxu0 0.0
  %5758 = vmatpush1.msra.mxu0 0.0
  %5759 = vmatprep.subr.mxu0 0.0
  %5760 = vmatpush1.msra.mxu0 0.0
  %5761 = vmatprep.subr.mxu0 0.0
  %5762 = vmatpush1.msra.mxu0 0.0
  %5763 = vmatprep.subr.mxu0 0.0
  %5764 = vmatpush1.msra.mxu0 0.0
  %5765 = vmatprep.subr.mxu0 0.0
  %5766 = vmatpush1.msra.mxu0 0.0
  %5767 = vmatprep.subr.mxu0 0.0
  %5768 = vmatpush1.msra.mxu0 0.0
  %5769 = vmatprep.subr.mxu0 0.0
  %5770 = vmatpush1.msra.mxu0 0.0
  %5771 = vmatprep.subr.mxu0 0.0
  %5772 = vmatpush1.msra.mxu0 0.0
  %5773 = vmatprep.subr.mxu0 0.0
  %5774 = vmatpush1.msra.mxu0 0.0
  %5775 = vmatprep.subr.mxu0 0.0
  %5776 = vmatpush1.msra.mxu0 0.0
  %5777 = vmatprep.subr.mxu0 0.0
  %5778 = vmatpush1.msra.mxu0 0.0
  %5779 = vmatprep.subr.mxu0 0.0
  %5780 = vmatpush1.msra.mxu0 0.0
  %5781 = vmatprep.subr.mxu0 0.0
  %5782 = vmatpush1.msra.mxu0 0.0
  %5783 = vmatprep.subr.mxu0 0.0
  %5784 = vmatpush1.msra.mxu0 0.0
  %5785 = vmatprep.subr.mxu0 0.0
  %5786 = vmatpush1.msra.mxu0 0.0
  %5787 = vmatprep.mubr.f32.mxu0 0.0
  %5788 = vmatmul.mubr.f32.gmra.mrb[0].mxu0 %v4563
  %v5789 = vpop.f32.mrb[0].mxu0
  %v5790 = vadd.f32 %v5713, %v5789
  %v5791 = vpop.f32.mrb[0].mxu0
  %v5792 = vadd.f32 %v5715, %v5791
  %5793 = vmatprep.mubr.f32.mxu0 0.0
  %5794 = vmatmul.mubr.f32.gmra.mrb[0].mxu0 %v4566
  %v5795 = vpop.f32.mrb[0].mxu0
  %v5796 = vadd.f32 %v5719, %v5795
  %v5797 = vpop.f32.mrb[0].mxu0
  %v5798 = vadd.f32 %v5721, %v5797
  %5799 = vdwg.mxu0
  %v5800 = vld [vmem:[%s5] sm:$0xff]
  %v5801 = vld [vmem:[%s5 + $0x8] sm:$0xff]
  %v5802 = vld [vmem:[%s5 + $0x10] sm:$0xff]
  %v5803 = vld [vmem:[%s5 + $0x18] sm:$0xff]
  %v5804 = vld [vmem:[%s5 + $0x20] sm:$0xff]
  %v5805 = vld [vmem:[%s5 + $0x28] sm:$0xff]
  %v5806 = vld [vmem:[%s5 + $0x30] sm:$0xff]
  %v5807 = vld [vmem:[%s5 + $0x38] sm:$0xff]
  %v5808 = vld [vmem:[%s5 + $0x40] sm:$0xff]
  %v5809 = vld [vmem:[%s5 + $0x48] sm:$0xff]
  %v5810 = vld [vmem:[%s5 + $0x50] sm:$0xff]
  %v5811 = vld [vmem:[%s5 + $0x58] sm:$0xff]
  %v5812 = vld [vmem:[%s5 + $0x60] sm:$0xff]
  %v5813 = vld [vmem:[%s5 + $0x68] sm:$0xff]
  %v5814 = vld [vmem:[%s5 + $0x70] sm:$0xff]
  %v5815 = vld [vmem:[%s5 + $0x78] sm:$0xff]
  %v5816 = vld [vmem:[%s5 + $0x80] sm:$0xff]
  %v5817 = vld [vmem:[%s5 + $0x88] sm:$0xff]
  %v5818 = vld [vmem:[%s5 + $0x90] sm:$0xff]
  %v5819 = vld [vmem:[%s5 + $0x98] sm:$0xff]
  %v5820 = vld [vmem:[%s5 + $0xa0] sm:$0xff]
  %v5821 = vld [vmem:[%s5 + $0xa8] sm:$0xff]
  %v5822 = vld [vmem:[%s5 + $0xb0] sm:$0xff]
  %v5823 = vld [vmem:[%s5 + $0xb8] sm:$0xff]
  %v5824 = vld [vmem:[%s5 + $0xc0] sm:$0xff]
  %v5825 = vld [vmem:[%s5 + $0xc8] sm:$0xff]
  %v5826 = vld [vmem:[%s5 + $0xd0] sm:$0xff]
  %v5827 = vld [vmem:[%s5 + $0xd8] sm:$0xff]
  %v5828 = vld [vmem:[%s5 + $0xe0] sm:$0xff]
  %v5829 = vld [vmem:[%s5 + $0xe8] sm:$0xff]
  %v5830 = vld [vmem:[%s5 + $0xf0] sm:$0xff]
  %v5831 = vld [vmem:[%s5 + $0xf8] sm:$0xff]
  %v5832 = vld [vmem:[%s5 + $0x100] sm:$0xff]
  %v5833 = vld [vmem:[%s5 + $0x108] sm:$0xff]
  %v5834 = vld [vmem:[%s5 + $0x110] sm:$0xff]
  %v5835 = vld [vmem:[%s5 + $0x118] sm:$0xff]
  %v5836 = vld [vmem:[%s5 + $0x120] sm:$0xff]
  %v5837 = vld [vmem:[%s5 + $0x128] sm:$0xff]
  %v5838 = vld [vmem:[%s5 + $0x130] sm:$0xff]
  %v5839 = vld [vmem:[%s5 + $0x138] sm:$0xff]
  %v5840 = vld [vmem:[%s5 + $0x140] sm:$0xff]
  %v5841 = vld [vmem:[%s5 + $0x148] sm:$0xff]
  %v5842 = vld [vmem:[%s5 + $0x150] sm:$0xff]
  %v5843 = vld [vmem:[%s5 + $0x158] sm:$0xff]
  %v5844 = vld [vmem:[%s5 + $0x160] sm:$0xff]
  %v5845 = vld [vmem:[%s5 + $0x168] sm:$0xff]
  %v5846 = vld [vmem:[%s5 + $0x170] sm:$0xff]
  %v5847 = vld [vmem:[%s5 + $0x178] sm:$0xff]
  %v5848 = vld [vmem:[%s5 + $0x180] sm:$0xff]
  %v5849 = vld [vmem:[%s5 + $0x188] sm:$0xff]
  %v5850 = vld [vmem:[%s5 + $0x190] sm:$0xff]
  %v5851 = vld [vmem:[%s5 + $0x198] sm:$0xff]
  %v5852 = vld [vmem:[%s5 + $0x1a0] sm:$0xff]
  %v5853 = vld [vmem:[%s5 + $0x1a8] sm:$0xff]
  %v5854 = vld [vmem:[%s5 + $0x1b0] sm:$0xff]
  %v5855 = vld [vmem:[%s5 + $0x1b8] sm:$0xff]
  %v5856 = vld [vmem:[%s5 + $0x1c0] sm:$0xff]
  %v5857 = vld [vmem:[%s5 + $0x1c8] sm:$0xff]
  %v5858 = vld [vmem:[%s5 + $0x1d0] sm:$0xff]
  %v5859 = vld [vmem:[%s5 + $0x1d8] sm:$0xff]
  %v5860 = vld [vmem:[%s5 + $0x1e0] sm:$0xff]
  %v5861 = vld [vmem:[%s5 + $0x1e8] sm:$0xff]
  %v5862 = vld [vmem:[%s5 + $0x1f0] sm:$0xff]
  %v5863 = vld [vmem:[%s5 + $0x1f8] sm:$0xff]
  %v5864 = vld [vmem:[%s5 + $0x200] sm:$0xff]
  %v5865 = vld [vmem:[%s5 + $0x208] sm:$0xff]
  %v5866 = vld [vmem:[%s5 + $0x210] sm:$0xff]
  %v5867 = vld [vmem:[%s5 + $0x218] sm:$0xff]
  %v5868 = vld [vmem:[%s5 + $0x220] sm:$0xff]
  %v5869 = vld [vmem:[%s5 + $0x228] sm:$0xff]
  %v5870 = vld [vmem:[%s5 + $0x230] sm:$0xff]
  %v5871 = vld [vmem:[%s5 + $0x238] sm:$0xff]
  %v5872 = vld [vmem:[%s5 + $0x240] sm:$0xff]
  %v5873 = vld [vmem:[%s5 + $0x248] sm:$0xff]
  %v5874 = vld [vmem:[%s5 + $0x250] sm:$0xff]
  %v5875 = vld [vmem:[%s5 + $0x258] sm:$0xff]
  %v5876 = vld [vmem:[%s5 + $0x260] sm:$0xff]
  %v5877 = vld [vmem:[%s5 + $0x268] sm:$0xff]
  %v5878 = vld [vmem:[%s5 + $0x270] sm:$0xff]
  %v5879 = vld [vmem:[%s5 + $0x278] sm:$0xff]
  %v5880 = vld [vmem:[%s5 + $0x280] sm:$0xff]
  %v5881 = vld [vmem:[%s5 + $0x288] sm:$0xff]
  %v5882 = vld [vmem:[%s5 + $0x290] sm:$0xff]
  %v5883 = vld [vmem:[%s5 + $0x298] sm:$0xff]
  %v5884 = vld [vmem:[%s5 + $0x2a0] sm:$0xff]
  %v5885 = vld [vmem:[%s5 + $0x2a8] sm:$0xff]
  %v5886 = vld [vmem:[%s5 + $0x2b0] sm:$0xff]
  %v5887 = vld [vmem:[%s5 + $0x2b8] sm:$0xff]
  %v5888 = vld [vmem:[%s5 + $0x2c0] sm:$0xff]
  %v5889 = vld [vmem:[%s5 + $0x2c8] sm:$0xff]
  %v5890 = vld [vmem:[%s5 + $0x2d0] sm:$0xff]
  %v5891 = vld [vmem:[%s5 + $0x2d8] sm:$0xff]
  %v5892 = vld [vmem:[%s5 + $0x2e0] sm:$0xff]
  %v5893 = vld [vmem:[%s5 + $0x2e8] sm:$0xff]
  %v5894 = vld [vmem:[%s5 + $0x2f0] sm:$0xff]
  %v5895 = vld [vmem:[%s5 + $0x2f8] sm:$0xff]
  %v5896 = vld [vmem:[%s5 + $0x300] sm:$0xff]
  %v5897 = vld [vmem:[%s5 + $0x308] sm:$0xff]
  %v5898 = vld [vmem:[%s5 + $0x310] sm:$0xff]
  %v5899 = vld [vmem:[%s5 + $0x318] sm:$0xff]
  %v5900 = vld [vmem:[%s5 + $0x320] sm:$0xff]
  %v5901 = vld [vmem:[%s5 + $0x328] sm:$0xff]
  %v5902 = vld [vmem:[%s5 + $0x330] sm:$0xff]
  %v5903 = vld [vmem:[%s5 + $0x338] sm:$0xff]
  %v5904 = vld [vmem:[%s5 + $0x340] sm:$0xff]
  %v5905 = vld [vmem:[%s5 + $0x348] sm:$0xff]
  %v5906 = vld [vmem:[%s5 + $0x350] sm:$0xff]
  %v5907 = vld [vmem:[%s5 + $0x358] sm:$0xff]
  %v5908 = vld [vmem:[%s5 + $0x360] sm:$0xff]
  %v5909 = vld [vmem:[%s5 + $0x368] sm:$0xff]
  %v5910 = vld [vmem:[%s5 + $0x370] sm:$0xff]
  %v5911 = vld [vmem:[%s5 + $0x378] sm:$0xff]
  %v5912 = vld [vmem:[%s5 + $0x380] sm:$0xff]
  %v5913 = vld [vmem:[%s5 + $0x388] sm:$0xff]
  %v5914 = vld [vmem:[%s5 + $0x390] sm:$0xff]
  %v5915 = vld [vmem:[%s5 + $0x398] sm:$0xff]
  %v5916 = vld [vmem:[%s5 + $0x3a0] sm:$0xff]
  %v5917 = vld [vmem:[%s5 + $0x3a8] sm:$0xff]
  %v5918 = vld [vmem:[%s5 + $0x3b0] sm:$0xff]
  %v5919 = vld [vmem:[%s5 + $0x3b8] sm:$0xff]
  %v5920 = vld [vmem:[%s5 + $0x3c0] sm:$0xff]
  %v5921 = vld [vmem:[%s5 + $0x3c8] sm:$0xff]
  %v5922 = vld [vmem:[%s5 + $0x3d0] sm:$0xff]
  %v5923 = vld [vmem:[%s5 + $0x3d8] sm:$0xff]
  %v5924 = vld [vmem:[%s5 + $0x3e0] sm:$0xff]
  %v5925 = vld [vmem:[%s5 + $0x3e8] sm:$0xff]
  %v5926 = vld [vmem:[%s5 + $0x3f0] sm:$0xff]
  %v5927 = vld [vmem:[%s5 + $0x3f8] sm:$0xff]
  %v5928 = vld [vmem:[%s5 + $0x400] sm:$0xff]
  %v5929 = vld [vmem:[%s5 + $0x408] sm:$0xff]
  %v5930 = vld [vmem:[%s5 + $0x410] sm:$0xff]
  %v5931 = vld [vmem:[%s5 + $0x418] sm:$0xff]
  %v5932 = vld [vmem:[%s5 + $0x420] sm:$0xff]
  %v5933 = vld [vmem:[%s5 + $0x428] sm:$0xff]
  %v5934 = vld [vmem:[%s5 + $0x430] sm:$0xff]
  %v5935 = vld [vmem:[%s5 + $0x438] sm:$0xff]
  %v5936 = vld [vmem:[%s5 + $0x440] sm:$0xff]
  %v5937 = vld [vmem:[%s5 + $0x448] sm:$0xff]
  %v5938 = vld [vmem:[%s5 + $0x450] sm:$0xff]
  %v5939 = vld [vmem:[%s5 + $0x458] sm:$0xff]
  %v5940 = vld [vmem:[%s5 + $0x460] sm:$0xff]
  %v5941 = vld [vmem:[%s5 + $0x468] sm:$0xff]
  %v5942 = vld [vmem:[%s5 + $0x470] sm:$0xff]
  %v5943 = vld [vmem:[%s5 + $0x478] sm:$0xff]
  %v5944 = vld [vmem:[%s5 + $0x480] sm:$0xff]
  %v5945 = vld [vmem:[%s5 + $0x488] sm:$0xff]
  %v5946 = vld [vmem:[%s5 + $0x490] sm:$0xff]
  %v5947 = vld [vmem:[%s5 + $0x498] sm:$0xff]
  %v5948 = vld [vmem:[%s5 + $0x4a0] sm:$0xff]
  %v5949 = vld [vmem:[%s5 + $0x4a8] sm:$0xff]
  %v5950 = vld [vmem:[%s5 + $0x4b0] sm:$0xff]
  %v5951 = vld [vmem:[%s5 + $0x4b8] sm:$0xff]
  %v5952 = vld [vmem:[%s5 + $0x4c0] sm:$0xff]
  %v5953 = vld [vmem:[%s5 + $0x4c8] sm:$0xff]
  %v5954 = vld [vmem:[%s5 + $0x4d0] sm:$0xff]
  %v5955 = vld [vmem:[%s5 + $0x4d8] sm:$0xff]
  %v5956 = vld [vmem:[%s5 + $0x4e0] sm:$0xff]
  %v5957 = vld [vmem:[%s5 + $0x4e8] sm:$0xff]
  %v5958 = vld [vmem:[%s5 + $0x4f0] sm:$0xff]
  %v5959 = vld [vmem:[%s5 + $0x4f8] sm:$0xff]
  %v5960 = vld [vmem:[%s5 + $0x500] sm:$0xff]
  %v5961 = vld [vmem:[%s5 + $0x508] sm:$0xff]
  %v5962 = vld [vmem:[%s5 + $0x510] sm:$0xff]
  %v5963 = vld [vmem:[%s5 + $0x518] sm:$0xff]
  %v5964 = vld [vmem:[%s5 + $0x520] sm:$0xff]
  %v5965 = vld [vmem:[%s5 + $0x528] sm:$0xff]
  %v5966 = vld [vmem:[%s5 + $0x530] sm:$0xff]
  %v5967 = vld [vmem:[%s5 + $0x538] sm:$0xff]
  %v5968 = vld [vmem:[%s5 + $0x540] sm:$0xff]
  %v5969 = vld [vmem:[%s5 + $0x548] sm:$0xff]
  %v5970 = vld [vmem:[%s5 + $0x550] sm:$0xff]
  %v5971 = vld [vmem:[%s5 + $0x558] sm:$0xff]
  %v5972 = vld [vmem:[%s5 + $0x560] sm:$0xff]
  %v5973 = vld [vmem:[%s5 + $0x568] sm:$0xff]
  %v5974 = vld [vmem:[%s5 + $0x570] sm:$0xff]
  %v5975 = vld [vmem:[%s5 + $0x578] sm:$0xff]
  %v5976 = vld [vmem:[%s5 + $0x580] sm:$0xff]
  %v5977 = vld [vmem:[%s5 + $0x588] sm:$0xff]
  %v5978 = vld [vmem:[%s5 + $0x590] sm:$0xff]
  %v5979 = vld [vmem:[%s5 + $0x598] sm:$0xff]
  %v5980 = vld [vmem:[%s5 + $0x5a0] sm:$0xff]
  %v5981 = vld [vmem:[%s5 + $0x5a8] sm:$0xff]
  %v5982 = vld [vmem:[%s5 + $0x5b0] sm:$0xff]
  %v5983 = vld [vmem:[%s5 + $0x5b8] sm:$0xff]
  %v5984 = vld [vmem:[%s5 + $0x5c0] sm:$0xff]
  %v5985 = vld [vmem:[%s5 + $0x5c8] sm:$0xff]
  %v5986 = vld [vmem:[%s5 + $0x5d0] sm:$0xff]
  %v5987 = vld [vmem:[%s5 + $0x5d8] sm:$0xff]
  %v5988 = vld [vmem:[%s5 + $0x5e0] sm:$0xff]
  %v5989 = vld [vmem:[%s5 + $0x5e8] sm:$0xff]
  %v5990 = vld [vmem:[%s5 + $0x5f0] sm:$0xff]
  %v5991 = vld [vmem:[%s5 + $0x5f8] sm:$0xff]
  %v5992 = vld [vmem:[%s5 + $0x600] sm:$0xff]
  %v5993 = vld [vmem:[%s5 + $0x608] sm:$0xff]
  %v5994 = vld [vmem:[%s5 + $0x610] sm:$0xff]
  %v5995 = vld [vmem:[%s5 + $0x618] sm:$0xff]
  %v5996 = vld [vmem:[%s5 + $0x620] sm:$0xff]
  %v5997 = vld [vmem:[%s5 + $0x628] sm:$0xff]
  %v5998 = vld [vmem:[%s5 + $0x630] sm:$0xff]
  %v5999 = vld [vmem:[%s5 + $0x638] sm:$0xff]
  %v6000 = vld [vmem:[%s5 + $0x640] sm:$0xff]
  %v6001 = vld [vmem:[%s5 + $0x648] sm:$0xff]
  %v6002 = vld [vmem:[%s5 + $0x650] sm:$0xff]
  %v6003 = vld [vmem:[%s5 + $0x658] sm:$0xff]
  %v6004 = vld [vmem:[%s5 + $0x660] sm:$0xff]
  %v6005 = vld [vmem:[%s5 + $0x668] sm:$0xff]
  %v6006 = vld [vmem:[%s5 + $0x670] sm:$0xff]
  %v6007 = vld [vmem:[%s5 + $0x678] sm:$0xff]
  %v6008 = vld [vmem:[%s5 + $0x680] sm:$0xff]
  %v6009 = vld [vmem:[%s5 + $0x688] sm:$0xff]
  %v6010 = vld [vmem:[%s5 + $0x690] sm:$0xff]
  %v6011 = vld [vmem:[%s5 + $0x698] sm:$0xff]
  %v6012 = vld [vmem:[%s5 + $0x6a0] sm:$0xff]
  %v6013 = vld [vmem:[%s5 + $0x6a8] sm:$0xff]
  %v6014 = vld [vmem:[%s5 + $0x6b0] sm:$0xff]
  %v6015 = vld [vmem:[%s5 + $0x6b8] sm:$0xff]
  %v6016 = vld [vmem:[%s5 + $0x6c0] sm:$0xff]
  %v6017 = vld [vmem:[%s5 + $0x6c8] sm:$0xff]
  %v6018 = vld [vmem:[%s5 + $0x6d0] sm:$0xff]
  %v6019 = vld [vmem:[%s5 + $0x6d8] sm:$0xff]
  %v6020 = vld [vmem:[%s5 + $0x6e0] sm:$0xff]
  %v6021 = vld [vmem:[%s5 + $0x6e8] sm:$0xff]
  %v6022 = vld [vmem:[%s5 + $0x6f0] sm:$0xff]
  %v6023 = vld [vmem:[%s5 + $0x6f8] sm:$0xff]
  %v6024 = vld [vmem:[%s5 + $0x700] sm:$0xff]
  %v6025 = vld [vmem:[%s5 + $0x708] sm:$0xff]
  %v6026 = vld [vmem:[%s5 + $0x710] sm:$0xff]
  %v6027 = vld [vmem:[%s5 + $0x718] sm:$0xff]
  %v6028 = vld [vmem:[%s5 + $0x720] sm:$0xff]
  %v6029 = vld [vmem:[%s5 + $0x728] sm:$0xff]
  %v6030 = vld [vmem:[%s5 + $0x730] sm:$0xff]
  %v6031 = vld [vmem:[%s5 + $0x738] sm:$0xff]
  %v6032 = vld [vmem:[%s5 + $0x740] sm:$0xff]
  %v6033 = vld [vmem:[%s5 + $0x748] sm:$0xff]
  %v6034 = vld [vmem:[%s5 + $0x750] sm:$0xff]
  %v6035 = vld [vmem:[%s5 + $0x758] sm:$0xff]
  %v6036 = vld [vmem:[%s5 + $0x760] sm:$0xff]
  %v6037 = vld [vmem:[%s5 + $0x768] sm:$0xff]
  %v6038 = vld [vmem:[%s5 + $0x770] sm:$0xff]
  %v6039 = vld [vmem:[%s5 + $0x778] sm:$0xff]
  %v6040 = vld [vmem:[%s5 + $0x780] sm:$0xff]
  %v6041 = vld [vmem:[%s5 + $0x788] sm:$0xff]
  %v6042 = vld [vmem:[%s5 + $0x790] sm:$0xff]
  %v6043 = vld [vmem:[%s5 + $0x798] sm:$0xff]
  %v6044 = vld [vmem:[%s5 + $0x7a0] sm:$0xff]
  %v6045 = vld [vmem:[%s5 + $0x7a8] sm:$0xff]
  %v6046 = vld [vmem:[%s5 + $0x7b0] sm:$0xff]
  %v6047 = vld [vmem:[%s5 + $0x7b8] sm:$0xff]
  %v6048 = vld [vmem:[%s5 + $0x7c0] sm:$0xff]
  %v6049 = vld [vmem:[%s5 + $0x7c8] sm:$0xff]
  %v6050 = vld [vmem:[%s5 + $0x7d0] sm:$0xff]
  %v6051 = vld [vmem:[%s5 + $0x7d8] sm:$0xff]
  %v6052 = vld [vmem:[%s5 + $0x7e0] sm:$0xff]
  %v6053 = vld [vmem:[%s5 + $0x7e8] sm:$0xff]
  %v6054 = vld [vmem:[%s5 + $0x7f0] sm:$0xff]
  %v6055 = vld [vmem:[%s5 + $0x7f8] sm:$0xff]
  %v6056 = vld [vmem:[%s6] sm:$0x3]
  %v6058 = vlaneseq
  %v6059 = vshrl.u32 %v6058, 7
  %v6060 = vsub.s32 0, %v6059
  %v6061 = vrot.slane %v6056, %v6060
  %v6062 = vlaneseq
  %v6063 = vshrl.u32 %v6062, 7
  %v6064 = vsub.s32 1, %v6063
  %v6065 = vrot.slane %v6056, %v6064
  %6068 = vmatprep.subr.mxu0 %v5801
  %6069 = vmatpush1.msra.mxu0 %v5800
  %6070 = vmatprep.subr.mxu0 %v5803
  %6071 = vmatpush1.msra.mxu0 %v5802
  %6072 = vmatprep.subr.mxu0 %v5805
  %6073 = vmatpush1.msra.mxu0 %v5804
  %6074 = vmatprep.subr.mxu0 %v5807
  %6075 = vmatpush1.msra.mxu0 %v5806
  %6076 = vmatprep.subr.mxu0 %v5809
  %6077 = vmatpush1.msra.mxu0 %v5808
  %6078 = vmatprep.subr.mxu0 %v5811
  %6079 = vmatpush1.msra.mxu0 %v5810
  %6080 = vmatprep.subr.mxu0 %v5813
  %6081 = vmatpush1.msra.mxu0 %v5812
  %6082 = vmatprep.subr.mxu0 %v5815
  %6083 = vmatpush1.msra.mxu0 %v5814
  %6084 = vmatprep.subr.mxu0 %v5817
  %6085 = vmatpush1.msra.mxu0 %v5816
  %6086 = vmatprep.subr.mxu0 %v5819
  %6087 = vmatpush1.msra.mxu0 %v5818
  %6088 = vmatprep.subr.mxu0 %v5821
  %6089 = vmatpush1.msra.mxu0 %v5820
  %6090 = vmatprep.subr.mxu0 %v5823
  %6091 = vmatpush1.msra.mxu0 %v5822
  %6092 = vmatprep.subr.mxu0 %v5825
  %6093 = vmatpush1.msra.mxu0 %v5824
  %6094 = vmatprep.subr.mxu0 %v5827
  %6095 = vmatpush1.msra.mxu0 %v5826
  %6096 = vmatprep.subr.mxu0 %v5829
  %6097 = vmatpush1.msra.mxu0 %v5828
  %6098 = vmatprep.subr.mxu0 %v5831
  %6099 = vmatpush1.msra.mxu0 %v5830
  %6100 = vmatprep.subr.mxu0 %v5833
  %6101 = vmatpush1.msra.mxu0 %v5832
  %6102 = vmatprep.subr.mxu0 %v5835
  %6103 = vmatpush1.msra.mxu0 %v5834
  %6104 = vmatprep.subr.mxu0 %v5837
  %6105 = vmatpush1.msra.mxu0 %v5836
  %6106 = vmatprep.subr.mxu0 %v5839
  %6107 = vmatpush1.msra.mxu0 %v5838
  %6108 = vmatprep.subr.mxu0 %v5841
  %6109 = vmatpush1.msra.mxu0 %v5840
  %6110 = vmatprep.subr.mxu0 %v5843
  %6111 = vmatpush1.msra.mxu0 %v5842
  %6112 = vmatprep.subr.mxu0 %v5845
  %6113 = vmatpush1.msra.mxu0 %v5844
  %6114 = vmatprep.subr.mxu0 %v5847
  %6115 = vmatpush1.msra.mxu0 %v5846
  %6116 = vmatprep.subr.mxu0 %v5849
  %6117 = vmatpush1.msra.mxu0 %v5848
  %6118 = vmatprep.subr.mxu0 %v5851
  %6119 = vmatpush1.msra.mxu0 %v5850
  %6120 = vmatprep.subr.mxu0 %v5853
  %6121 = vmatpush1.msra.mxu0 %v5852
  %6122 = vmatprep.subr.mxu0 %v5855
  %6123 = vmatpush1.msra.mxu0 %v5854
  %6124 = vmatprep.subr.mxu0 %v5857
  %6125 = vmatpush1.msra.mxu0 %v5856
  %6126 = vmatprep.subr.mxu0 %v5859
  %6127 = vmatpush1.msra.mxu0 %v5858
  %6128 = vmatprep.subr.mxu0 %v5861
  %6129 = vmatpush1.msra.mxu0 %v5860
  %6130 = vmatprep.subr.mxu0 %v5863
  %6131 = vmatpush1.msra.mxu0 %v5862
  %6132 = vmatprep.mubr.f32.mxu0 %v4868
  %6133 = vmatmul.mubr.f32.gmra.mrb[0].mxu0 %v4866
  %v6134 = vpop.f32.mrb[0].mxu0
  %v6135 = vadd.f32 %v6061, %v6134
  %v6136 = vpop.f32.mrb[0].mxu0
  %v6137 = vadd.f32 %v6065, %v6136
  %6138 = vmatprep.mubr.f32.mxu0 %v4874
  %6139 = vmatmul.mubr.f32.gmra.mrb[0].mxu0 %v4872
  %v6140 = vpop.f32.mrb[0].mxu0
  %v6141 = vadd.f32 %v6061, %v6140
  %v6142 = vpop.f32.mrb[0].mxu0
  %v6143 = vadd.f32 %v6065, %v6142
  %6144 = vdwg.mxu0
  %6145 = vmatprep.subr.mxu0 %v5865
  %6146 = vmatpush1.msra.mxu0 %v5864
  %6147 = vmatprep.subr.mxu0 %v5867
  %6148 = vmatpush1.msra.mxu0 %v5866
  %6149 = vmatprep.subr.mxu0 %v5869
  %6150 = vmatpush1.msra.mxu0 %v5868
  %6151 = vmatprep.subr.mxu0 %v5871
  %6152 = vmatpush1.msra.mxu0 %v5870
  %6153 = vmatprep.subr.mxu0 %v5873
  %6154 = vmatpush1.msra.mxu0 %v5872
  %6155 = vmatprep.subr.mxu0 %v5875
  %6156 = vmatpush1.msra.mxu0 %v5874
  %6157 = vmatprep.subr.mxu0 %v5877
  %6158 = vmatpush1.msra.mxu0 %v5876
  %6159 = vmatprep.subr.mxu0 %v5879
  %6160 = vmatpush1.msra.mxu0 %v5878
  %6161 = vmatprep.subr.mxu0 %v5881
  %6162 = vmatpush1.msra.mxu0 %v5880
  %6163 = vmatprep.subr.mxu0 %v5883
  %6164 = vmatpush1.msra.mxu0 %v5882
  %6165 = vmatprep.subr.mxu0 %v5885
  %6166 = vmatpush1.msra.mxu0 %v5884
  %6167 = vmatprep.subr.mxu0 %v5887
  %6168 = vmatpush1.msra.mxu0 %v5886
  %6169 = vmatprep.subr.mxu0 %v5889
  %6170 = vmatpush1.msra.mxu0 %v5888
  %6171 = vmatprep.subr.mxu0 %v5891
  %6172 = vmatpush1.msra.mxu0 %v5890
  %6173 = vmatprep.subr.mxu0 %v5893
  %6174 = vmatpush1.msra.mxu0 %v5892
  %6175 = vmatprep.subr.mxu0 %v5895
  %6176 = vmatpush1.msra.mxu0 %v5894
  %6177 = vmatprep.subr.mxu0 %v5897
  %6178 = vmatpush1.msra.mxu0 %v5896
  %6179 = vmatprep.subr.mxu0 %v5899
  %6180 = vmatpush1.msra.mxu0 %v5898
  %6181 = vmatprep.subr.mxu0 %v5901
  %6182 = vmatpush1.msra.mxu0 %v5900
  %6183 = vmatprep.subr.mxu0 %v5903
  %6184 = vmatpush1.msra.mxu0 %v5902
  %6185 = vmatprep.subr.mxu0 %v5905
  %6186 = vmatpush1.msra.mxu0 %v5904
  %6187 = vmatprep.subr.mxu0 %v5907
  %6188 = vmatpush1.msra.mxu0 %v5906
  %6189 = vmatprep.subr.mxu0 %v5909
  %6190 = vmatpush1.msra.mxu0 %v5908
  %6191 = vmatprep.subr.mxu0 %v5911
  %6192 = vmatpush1.msra.mxu0 %v5910
  %6193 = vmatprep.subr.mxu0 %v5913
  %6194 = vmatpush1.msra.mxu0 %v5912
  %6195 = vmatprep.subr.mxu0 %v5915
  %6196 = vmatpush1.msra.mxu0 %v5914
  %6197 = vmatprep.subr.mxu0 %v5917
  %6198 = vmatpush1.msra.mxu0 %v5916
  %6199 = vmatprep.subr.mxu0 %v5919
  %6200 = vmatpush1.msra.mxu0 %v5918
  %6201 = vmatprep.subr.mxu0 %v5921
  %6202 = vmatpush1.msra.mxu0 %v5920
  %6203 = vmatprep.subr.mxu0 %v5923
  %6204 = vmatpush1.msra.mxu0 %v5922
  %6205 = vmatprep.subr.mxu0 %v5925
  %6206 = vmatpush1.msra.mxu0 %v5924
  %6207 = vmatprep.subr.mxu0 %v5927
  %6208 = vmatpush1.msra.mxu0 %v5926
  %6209 = vmatprep.mubr.f32.mxu0 %v5176
  %6210 = vmatmul.mubr.f32.gmra.mrb[0].mxu0 %v5174
  %v6211 = vpop.f32.mrb[0].mxu0
  %v6212 = vadd.f32 %v6135, %v6211
  %v6213 = vpop.f32.mrb[0].mxu0
  %v6214 = vadd.f32 %v6137, %v6213
  %6215 = vmatprep.mubr.f32.mxu0 %v5182
  %6216 = vmatmul.mubr.f32.gmra.mrb[0].mxu0 %v5180
  %v6217 = vpop.f32.mrb[0].mxu0
  %v6218 = vadd.f32 %v6141, %v6217
  %v6219 = vpop.f32.mrb[0].mxu0
  %v6220 = vadd.f32 %v6143, %v6219
  %6221 = vdwg.mxu0
  %6222 = vmatprep.subr.mxu0 %v5929
  %6223 = vmatpush1.msra.mxu0 %v5928
  %6224 = vmatprep.subr.mxu0 %v5931
  %6225 = vmatpush1.msra.mxu0 %v5930
  %6226 = vmatprep.subr.mxu0 %v5933
  %6227 = vmatpush1.msra.mxu0 %v5932
  %6228 = vmatprep.subr.mxu0 %v5935
  %6229 = vmatpush1.msra.mxu0 %v5934
  %6230 = vmatprep.subr.mxu0 %v5937
  %6231 = vmatpush1.msra.mxu0 %v5936
  %6232 = vmatprep.subr.mxu0 %v5939
  %6233 = vmatpush1.msra.mxu0 %v5938
  %6234 = vmatprep.subr.mxu0 %v5941
  %6235 = vmatpush1.msra.mxu0 %v5940
  %6236 = vmatprep.subr.mxu0 %v5943
  %6237 = vmatpush1.msra.mxu0 %v5942
  %6238 = vmatprep.subr.mxu0 %v5945
  %6239 = vmatpush1.msra.mxu0 %v5944
  %6240 = vmatprep.subr.mxu0 %v5947
  %6241 = vmatpush1.msra.mxu0 %v5946
  %6242 = vmatprep.subr.mxu0 %v5949
  %6243 = vmatpush1.msra.mxu0 %v5948
  %6244 = vmatprep.subr.mxu0 %v5951
  %6245 = vmatpush1.msra.mxu0 %v5950
  %6246 = vmatprep.subr.mxu0 %v5953
  %6247 = vmatpush1.msra.mxu0 %v5952
  %6248 = vmatprep.subr.mxu0 %v5955
  %6249 = vmatpush1.msra.mxu0 %v5954
  %6250 = vmatprep.subr.mxu0 %v5957
  %6251 = vmatpush1.msra.mxu0 %v5956
  %6252 = vmatprep.subr.mxu0 %v5959
  %6253 = vmatpush1.msra.mxu0 %v5958
  %6254 = vmatprep.subr.mxu0 %v5961
  %6255 = vmatpush1.msra.mxu0 %v5960
  %6256 = vmatprep.subr.mxu0 %v5963
  %6257 = vmatpush1.msra.mxu0 %v5962
  %6258 = vmatprep.subr.mxu0 %v5965
  %6259 = vmatpush1.msra.mxu0 %v5964
  %6260 = vmatprep.subr.mxu0 %v5967
  %6261 = vmatpush1.msra.mxu0 %v5966
  %6262 = vmatprep.subr.mxu0 %v5969
  %6263 = vmatpush1.msra.mxu0 %v5968
  %6264 = vmatprep.subr.mxu0 %v5971
  %6265 = vmatpush1.msra.mxu0 %v5970
  %6266 = vmatprep.subr.mxu0 %v5973
  %6267 = vmatpush1.msra.mxu0 %v5972
  %6268 = vmatprep.subr.mxu0 %v5975
  %6269 = vmatpush1.msra.mxu0 %v5974
  %6270 = vmatprep.subr.mxu0 %v5977
  %6271 = vmatpush1.msra.mxu0 %v5976
  %6272 = vmatprep.subr.mxu0 %v5979
  %6273 = vmatpush1.msra.mxu0 %v5978
  %6274 = vmatprep.subr.mxu0 %v5981
  %6275 = vmatpush1.msra.mxu0 %v5980
  %6276 = vmatprep.subr.mxu0 %v5983
  %6277 = vmatpush1.msra.mxu0 %v5982
  %6278 = vmatprep.subr.mxu0 %v5985
  %6279 = vmatpush1.msra.mxu0 %v5984
  %6280 = vmatprep.subr.mxu0 %v5987
  %6281 = vmatpush1.msra.mxu0 %v5986
  %6282 = vmatprep.subr.mxu0 %v5989
  %6283 = vmatpush1.msra.mxu0 %v5988
  %6284 = vmatprep.subr.mxu0 %v5991
  %6285 = vmatpush1.msra.mxu0 %v5990
  %6286 = vmatprep.mubr.f32.mxu0 %v5484
  %6287 = vmatmul.mubr.f32.gmra.mrb[0].mxu0 %v5482
  %v6288 = vpop.f32.mrb[0].mxu0
  %v6289 = vadd.f32 %v6212, %v6288
  %v6290 = vpop.f32.mrb[0].mxu0
  %v6291 = vadd.f32 %v6214, %v6290
  %6292 = vmatprep.mubr.f32.mxu0 %v5490
  %6293 = vmatmul.mubr.f32.gmra.mrb[0].mxu0 %v5488
  %v6294 = vpop.f32.mrb[0].mxu0
  %v6295 = vadd.f32 %v6218, %v6294
  %v6296 = vpop.f32.mrb[0].mxu0
  %v6297 = vadd.f32 %v6220, %v6296
  %6298 = vdwg.mxu0
  %6299 = vmatprep.subr.mxu0 %v5993
  %6300 = vmatpush1.msra.mxu0 %v5992
  %6301 = vmatprep.subr.mxu0 %v5995
  %6302 = vmatpush1.msra.mxu0 %v5994
  %6303 = vmatprep.subr.mxu0 %v5997
  %6304 = vmatpush1.msra.mxu0 %v5996
  %6305 = vmatprep.subr.mxu0 %v5999
  %6306 = vmatpush1.msra.mxu0 %v5998
  %6307 = vmatprep.subr.mxu0 %v6001
  %6308 = vmatpush1.msra.mxu0 %v6000
  %6309 = vmatprep.subr.mxu0 %v6003
  %6310 = vmatpush1.msra.mxu0 %v6002
  %6311 = vmatprep.subr.mxu0 %v6005
  %6312 = vmatpush1.msra.mxu0 %v6004
  %6313 = vmatprep.subr.mxu0 %v6007
  %6314 = vmatpush1.msra.mxu0 %v6006
  %6315 = vmatprep.subr.mxu0 %v6009
  %6316 = vmatpush1.msra.mxu0 %v6008
  %6317 = vmatprep.subr.mxu0 %v6011
  %6318 = vmatpush1.msra.mxu0 %v6010
  %6319 = vmatprep.subr.mxu0 %v6013
  %6320 = vmatpush1.msra.mxu0 %v6012
  %6321 = vmatprep.subr.mxu0 %v6015
  %6322 = vmatpush1.msra.mxu0 %v6014
  %6323 = vmatprep.subr.mxu0 %v6017
  %6324 = vmatpush1.msra.mxu0 %v6016
  %6325 = vmatprep.subr.mxu0 %v6019
  %6326 = vmatpush1.msra.mxu0 %v6018
  %6327 = vmatprep.subr.mxu0 %v6021
  %6328 = vmatpush1.msra.mxu0 %v6020
  %6329 = vmatprep.subr.mxu0 %v6023
  %6330 = vmatpush1.msra.mxu0 %v6022
  %6331 = vmatprep.subr.mxu0 %v6025
  %6332 = vmatpush1.msra.mxu0 %v6024
  %6333 = vmatprep.subr.mxu0 %v6027
  %6334 = vmatpush1.msra.mxu0 %v6026
  %6335 = vmatprep.subr.mxu0 %v6029
  %6336 = vmatpush1.msra.mxu0 %v6028
  %6337 = vmatprep.subr.mxu0 %v6031
  %6338 = vmatpush1.msra.mxu0 %v6030
  %6339 = vmatprep.subr.mxu0 %v6033
  %6340 = vmatpush1.msra.mxu0 %v6032
  %6341 = vmatprep.subr.mxu0 %v6035
  %6342 = vmatpush1.msra.mxu0 %v6034
  %6343 = vmatprep.subr.mxu0 %v6037
  %6344 = vmatpush1.msra.mxu0 %v6036
  %6345 = vmatprep.subr.mxu0 %v6039
  %6346 = vmatpush1.msra.mxu0 %v6038
  %6347 = vmatprep.subr.mxu0 %v6041
  %6348 = vmatpush1.msra.mxu0 %v6040
  %6349 = vmatprep.subr.mxu0 %v6043
  %6350 = vmatpush1.msra.mxu0 %v6042
  %6351 = vmatprep.subr.mxu0 %v6045
  %6352 = vmatpush1.msra.mxu0 %v6044
  %6353 = vmatprep.subr.mxu0 %v6047
  %6354 = vmatpush1.msra.mxu0 %v6046
  %6355 = vmatprep.subr.mxu0 %v6049
  %6356 = vmatpush1.msra.mxu0 %v6048
  %6357 = vmatprep.subr.mxu0 %v6051
  %6358 = vmatpush1.msra.mxu0 %v6050
  %6359 = vmatprep.subr.mxu0 %v6053
  %6360 = vmatpush1.msra.mxu0 %v6052
  %6361 = vmatprep.subr.mxu0 %v6055
  %6362 = vmatpush1.msra.mxu0 %v6054
  %6363 = vmatprep.mubr.f32.mxu0 %v5792
  %6364 = vmatmul.mubr.f32.gmra.mrb[0].mxu0 %v5790
  %v6365 = vpop.f32.mrb[0].mxu0
  %v6366 = vadd.f32 %v6289, %v6365
  %v6367 = vpop.f32.mrb[0].mxu0
  %v6368 = vadd.f32 %v6291, %v6367
  %6369 = vmatprep.mubr.f32.mxu0 %v5798
  %6370 = vmatmul.mubr.f32.gmra.mrb[0].mxu0 %v5796
  %v6371 = vpop.f32.mrb[0].mxu0
  %v6372 = vadd.f32 %v6295, %v6371
  %v6373 = vpop.f32.mrb[0].mxu0
  %v6374 = vadd.f32 %v6297, %v6373
  %6375 = vdwg.mxu0
  %6376 = vst [vmem:[%s7] sm:$0xff] %v6366
  %6377 = vst [vmem:[%s7 + $0x8] sm:$0xff] %v6368
  %6378 = vst [vmem:[%s7 + $0x10] sm:$0xff] %v6372
  %6379 = vst [vmem:[%s7 + $0x18] sm:$0xff] %v6374
  // Predicated region
  $region30: #{rgb_action_forward.2} parent=0 // pred_check
    _
  $region31: #{rgb_action_forward.2} parent=0 // pred_check_branch
    %6381 = sbr.rel (0) target = $region33
  $region32: #{rgb_action_forward.2} parent=0 // pred_region
    _
  $region33: #{rgb_action_forward.2} parent=0 // pred_fallthru
    _
  // Predicated region
  $region34: #{rgb_action_forward.2} parent=0 // pred_check
    _
  $region35: #{rgb_action_forward.2} parent=0 // pred_check_branch
    %6383 = sbr.rel (0) target = $region37
  $region36: #{rgb_action_forward.2} parent=0 // pred_region
    _
  $region37: #{rgb_action_forward.2} parent=0 // pred_fallthru
    _

</llo_original>
